<compile_context>
chip_gen: v5e
topology: v5e:2x2
jax: 0.10.0
libtpu: 0.0.40
codegen_flags: <defaults>
</compile_context>

<pallas_src>
import functools
import math

import jax
import jax.numpy as jnp
from jax.experimental import pallas as pl
from jax.experimental.pallas import tpu as pltpu

MATMUL_DTYPE = jnp.bfloat16            # MXU-native on v5e/v6e/v7x
VMEM_LIMIT = 48 * 1024 * 1024          # headroom under v7x's 64 MiB physical VMEM
RESIDENT_KV_BYTES = 24 * 1024 * 1024   # cap (incl. double-buffering) for resident K/V


# --------------------------------------------------------------------------
# Kernel 1: QKV projection (query scale pre-folded into the weight)
# --------------------------------------------------------------------------
def _qkv_proj_kernel(x_ref, w_ref, o_ref):
    x = x_ref[0]                                   # (tn, dim)      bf16
    w = w_ref[...]                                 # (dim, 3*hidden) bf16
    o_ref[0] = jnp.dot(x, w, preferred_element_type=jnp.float32).astype(o_ref.dtype)


def qkv_proj(x, w_qkv, *, tn):
    b, n, dim = x.shape
    c3 = w_qkv.shape[1]
    return pl.pallas_call(
        _qkv_proj_kernel,
        out_shape=jax.ShapeDtypeStruct((b, n, c3), MATMUL_DTYPE),
        grid=(b, n // tn),
        in_specs=[
            pl.BlockSpec((1, tn, dim), lambda i, j: (i, j, 0)),
            pl.BlockSpec((dim, c3), lambda i, j: (0, 0)),
        ],
        out_specs=pl.BlockSpec((1, tn, c3), lambda i, j: (i, j, 0)),
        compiler_params=pltpu.CompilerParams(
            dimension_semantics=("parallel", "parallel"),
            vmem_limit_bytes=VMEM_LIMIT,
        ),
    )(x, w_qkv)


# --------------------------------------------------------------------------
# Kernel 2a (fast path): resident K/V, one-pass softmax, fused to_out
# --------------------------------------------------------------------------
def _attn_resident_kernel(q_ref, k_ref, v_ref, wo_ref, o_ref, *, heads, dim_head):
    q = q_ref[0]            # (tq, hidden) bf16, query scale already folded in
    k = k_ref[0]            # (n,  hidden) bf16
    v = v_ref[0]            # (n,  hidden) bf16

    head_out = []
    for h in range(heads):
        sl = slice(h * dim_head, (h + 1) * dim_head)
        # sim_h = q_h @ k_h^T   (contraction over the 32-wide head dim)
        s = jax.lax.dot_general(
            q[:, sl], k[:, sl],
            dimension_numbers=(((1,), (1,)), ((), ())),
            preferred_element_type=jnp.float32)                 # (tq, n) f32
        s = s - jnp.max(s, axis=-1, keepdims=True)              # sim - amax
        p = jnp.exp(s)
        p = p * pl.reciprocal(jnp.sum(p, axis=-1, keepdims=True), approx=True)
        head_out.append(
            jnp.dot(p.astype(v.dtype), v[:, sl],
                    preferred_element_type=jnp.float32).astype(MATMUL_DTYPE))

    attn = jnp.concatenate(head_out, axis=-1)                   # (tq, hidden) lane-dense
    o_ref[0] = jnp.dot(attn, wo_ref[...],
                       preferred_element_type=jnp.float32).astype(o_ref.dtype)


def attention_resident(qkv, w_out, *, heads, dim_head, tq):
    b, n, _ = qkv.shape
    hidden = heads * dim_head
    dim = w_out.shape[1]
    kernel = functools.partial(_attn_resident_kernel, heads=heads, dim_head=dim_head)
    return pl.pallas_call(
        kernel,
        out_shape=jax.ShapeDtypeStruct((b, n, dim), jnp.float32),
        grid=(b, n // tq),
        in_specs=[
            pl.BlockSpec((1, tq, hidden), lambda bi, qi: (bi, qi, 0)),  # Q slice of qkv
            pl.BlockSpec((1, n, hidden), lambda bi, qi: (bi, 0, 1)),    # K slice of qkv
            pl.BlockSpec((1, n, hidden), lambda bi, qi: (bi, 0, 2)),    # V slice of qkv
            pl.BlockSpec((hidden, dim), lambda bi, qi: (0, 0)),         # W_out
        ],
        out_specs=pl.BlockSpec((1, tq, dim), lambda bi, qi: (bi, qi, 0)),
        compiler_params=pltpu.CompilerParams(
            dimension_semantics=("parallel", "parallel"),
            vmem_limit_bytes=VMEM_LIMIT,
        ),
    )(qkv, qkv, qkv, w_out)


# --------------------------------------------------------------------------
# Kernel 2b (fallback): streaming K/V, online softmax, fused to_out
# --------------------------------------------------------------------------
def _attn_stream_kernel(q_ref, k_ref, v_ref, wo_ref, o_ref,
                        m_sc, l_sc, acc_sc, *, heads, dim_head):
    ki = pl.program_id(2)

    @pl.when(ki == 0)
    def _():
        m_sc[...] = jnp.full_like(m_sc, -jnp.inf)
        l_sc[...] = jnp.zeros_like(l_sc)
        acc_sc[...] = jnp.zeros_like(acc_sc)

    q = q_ref[0]            # (tq, hidden) bf16
    k = k_ref[0]            # (tk, hidden) bf16
    v = v_ref[0]            # (tk, hidden) bf16

    for h in range(heads):
        sl = slice(h * dim_head, (h + 1) * dim_head)
        s = jax.lax.dot_general(
            q[:, sl], k[:, sl],
            dimension_numbers=(((1,), (1,)), ((), ())),
            preferred_element_type=jnp.float32)                 # (tq, tk) f32
        m_prev = m_sc[h]                                        # (tq, 1)
        m_new = jnp.maximum(m_prev, jnp.max(s, axis=-1, keepdims=True))
        alpha = jnp.exp(m_prev - m_new)
        p = jnp.exp(s - m_new)
        l_sc[h] = alpha * l_sc[h] + jnp.sum(p, axis=-1, keepdims=True)
        # lane-dense accumulator: each head owns a 32-lane column slice
        acc_sc[:, sl] = alpha * acc_sc[:, sl] + jnp.dot(
            p.astype(v.dtype), v[:, sl], preferred_element_type=jnp.float32)
        m_sc[h] = m_new

    @pl.when(ki == pl.num_programs(2) - 1)
    def _():
        head_out = []
        for h in range(heads):
            sl = slice(h * dim_head, (h + 1) * dim_head)
            inv = pl.reciprocal(l_sc[h], approx=True)           # (tq, 1)
            head_out.append((acc_sc[:, sl] * inv).astype(MATMUL_DTYPE))
        attn = jnp.concatenate(head_out, axis=-1)               # (tq, hidden)
        o_ref[0] = jnp.dot(attn, wo_ref[...],
                           preferred_element_type=jnp.float32).astype(o_ref.dtype)


def attention_streaming(qkv, w_out, *, heads, dim_head, tq, tk):
    b, n, _ = qkv.shape
    hidden = heads * dim_head
    dim = w_out.shape[1]
    kernel = functools.partial(_attn_stream_kernel, heads=heads, dim_head=dim_head)
    return pl.pallas_call(
        kernel,
        out_shape=jax.ShapeDtypeStruct((b, n, dim), jnp.float32),
        grid=(b, n // tq, n // tk),
        in_specs=[
            pl.BlockSpec((1, tq, hidden), lambda bi, qi, ki: (bi, qi, 0)),
            pl.BlockSpec((1, tk, hidden), lambda bi, qi, ki: (bi, ki, 1)),
            pl.BlockSpec((1, tk, hidden), lambda bi, qi, ki: (bi, ki, 2)),
            pl.BlockSpec((hidden, dim), lambda bi, qi, ki: (0, 0)),
        ],
        out_specs=pl.BlockSpec((1, tq, dim), lambda bi, qi, ki: (bi, qi, 0)),
        scratch_shapes=[
            pltpu.VMEM((heads, tq, 1), jnp.float32),    # running max (per head)
            pltpu.VMEM((heads, tq, 1), jnp.float32),    # running sum (per head)
            pltpu.VMEM((tq, hidden), jnp.float32),      # lane-dense f32 accumulator
        ],
        compiler_params=pltpu.CompilerParams(
            dimension_semantics=("parallel", "parallel", "arbitrary"),
            vmem_limit_bytes=VMEM_LIMIT,
        ),
    )(qkv, qkv, qkv, w_out)


# --------------------------------------------------------------------------
# Wrapper = Attention.forward (rotary_emb=None, pos_bias=None)
# --------------------------------------------------------------------------
def _pick_tile(n, target):
    if n <= target:
        return n
    if n % 128 != 0:
        return n  # no clean tiling without tail masking; use the whole axis
    t = max(128, (target // 128) * 128)
    while n % t:
        t -= 128
    return t


def attention_forward(params, x, *, heads, dim_head, pos_bias=None,
                      force_streaming=False):
    # TODO(synk): rotary_emb rotation and pos_bias addition (both None by default)
    # are not implemented.
    assert pos_bias is None
    orig_shape = x.shape
    dim = orig_shape[-1]
    n = orig_shape[-2]
    b = max(1, math.prod(orig_shape[:-2]))
    hidden = heads * dim_head
    x3 = x.reshape(b, n, dim)

    # Fold dim_head**-0.5 into the first `hidden` (query) columns of W_qkv once.
    scale_cols = jnp.concatenate(
        [jnp.full((1, hidden), dim_head ** -0.5, jnp.float32),
         jnp.ones((1, 2 * hidden), jnp.float32)], axis=-1)
    w_qkv = (params["w_qkv"] * scale_cols).astype(MATMUL_DTYPE)
    w_out = params["w_out"].astype(MATMUL_DTYPE)

    tn = _pick_tile(n, 1024)
    qkv = qkv_proj(x3.astype(MATMUL_DTYPE), w_qkv, tn=tn)      # (b, n, 3*hidden) bf16

    # >=256-wide q tiles fill the v6e/v7x 256x256 MXU; keep >=2 parallel grid
    # blocks overall so both v7x TensorCores get work even when b == 1.
    tq = _pick_tile(n, 512)
    if b == 1 and tq == n and n >= 256:
        tq = _pick_tile(n, max(128, (n // 2 // 128) * 128))

    kv_resident_bytes = 2 * 2 * 2 * n * hidden  # K+V, bf16, double-buffered
    if (kv_resident_bytes <= RESIDENT_KV_BYTES) and not force_streaming:
        out = attention_resident(qkv, w_out, heads=heads, dim_head=dim_head, tq=tq)
    else:
        tk = _pick_tile(n, 512)
        out = attention_streaming(qkv, w_out, heads=heads, dim_head=dim_head,
                                  tq=tq, tk=tk)
    return out.reshape(orig_shape[:-1] + (dim,))


# --------------------------------------------------------------------------
# Pure-jnp reference (mirrors the PyTorch forward) and parameter init
# --------------------------------------------------------------------------
def attention_reference(params, x, heads, dim_head):
    b, n, dim = x.shape
    hidden = heads * dim_head
    qkv = x @ params["w_qkv"]
    q, k, v = jnp.split(qkv, 3, axis=-1)
    to_heads = lambda t: jnp.transpose(
        t.reshape(b, n, heads, dim_head), (0, 2, 1, 3))
    q, k, v = map(to_heads, (q, k, v))
    q = q * (dim_head ** -0.5)
    sim = jnp.einsum("bhid,bhjd->bhij", q, k)
    sim = sim - jnp.max(sim, axis=-1, keepdims=True)
    attn = jax.nn.softmax(sim, axis=-1)
    out = jnp.einsum("bhij,bhjd->bhid", attn, v)
    out = jnp.transpose(out, (0, 2, 1, 3)).reshape(b, n, hidden)
    return out @ params["w_out"]


def init_params(key, dim, heads, dim_head):
    hidden = heads * dim_head
    k1, k2 = jax.random.split(key)
    return {
        # stored matmul-ready: (in_features, out_features)
        "w_qkv": (1.0 / math.sqrt(dim)) *
                 jax.random.normal(k1, (dim, 3 * hidden), jnp.float32),
        "w_out": (1.0 / math.sqrt(hidden)) *
                 jax.random.normal(k2, (hidden, dim), jnp.float32),
    }


if __name__ == "__main__":
    B, N, DIM = 2, 256, 128          # small, lane-dense, tile-friendly
    HEADS, DIM_HEAD = 4, 32          # module defaults -> hidden_dim = 128

    key = jax.random.PRNGKey(0)
    kp, kx = jax.random.split(key)
    params = init_params(kp, DIM, HEADS, DIM_HEAD)
    x = jax.random.normal(kx, (B, N, DIM), jnp.float32)

    ref = attention_reference(params, x, HEADS, DIM_HEAD)

    # Fast path (resident K/V, one-pass softmax).
    fwd = jax.jit(functools.partial(attention_forward, heads=HEADS, dim_head=DIM_HEAD))
    out = jax.block_until_ready(fwd(params, x))
    assert out.shape == (B, N, DIM), out.shape
    assert bool(jnp.all(jnp.isfinite(out)))
    err = float(jnp.max(jnp.abs(out - ref)))
    assert err < 6e-2, f"resident path max abs error vs reference: {err}"  # bf16 MXU inputs

    # Streaming fallback path (online softmax) exercised explicitly as well.
    fwd_stream = jax.jit(functools.partial(
        attention_forward, heads=HEADS, dim_head=DIM_HEAD, force_streaming=True))
    out_s = jax.block_until_ready(fwd_stream(params, x))
    err_s = float(jnp.max(jnp.abs(out_s - ref)))
    assert err_s < 6e-2, f"streaming path max abs error vs reference: {err_s}"

    print("KERNEL_OK")
</pallas_src>

<mosaic_0001>
module attributes {stable_mosaic.version = 11 : i64} {
  func.func @_qkv_proj_kernel(%arg0: i32, %arg1: i32, %arg2: memref<1x256x128xbf16, #tpu.memory_space<vmem>>, %arg3: memref<128x384xbf16, #tpu.memory_space<vmem>>, %arg4: memref<1x256x384xbf16, #tpu.memory_space<vmem>>) attributes {dimension_semantics = [#tpu.dimension_semantics<parallel>, #tpu.dimension_semantics<parallel>], iteration_bounds = array<i64: 2, 1>, scalar_prefetch = 0 : i64, scratch_operands = 0 : i64, tpu.core_type = #tpu.core_type<tc>, window_params = [{transform_indices = @transform_0, window_bounds = array<i64: 1, 256, 128>}, {pipeline_mode = #tpu.pipeline_mode<synchronous>, transform_indices = @transform_1, window_bounds = array<i64: 128, 384>}, {transform_indices = @transform_2, window_bounds = array<i64: 1, 256, 384>}]} {
    %c0 = arith.constant 0 : index
    %c0_0 = arith.constant 0 : index
    %c0_1 = arith.constant 0 : index
    %0 = vector.load %arg2[%c0, %c0_0, %c0_1] : memref<1x256x128xbf16, #tpu.memory_space<vmem>>, vector<1x256x128xbf16>
    %1 = vector.shape_cast %0 : vector<1x256x128xbf16> to vector<256x128xbf16>
    %c0_2 = arith.constant 0 : index
    %c0_3 = arith.constant 0 : index
    %2 = vector.load %arg3[%c0_2, %c0_3] : memref<128x384xbf16, #tpu.memory_space<vmem>>, vector<128x384xbf16>
    %cst = arith.constant dense<0.000000e+00> : vector<256x384xf32>
    %3 = tpu.matmul %1, %2, %cst {dimension_numbers = #tpu.dot_dimension_numbers<[1], [0], [0], [1], [0, 0, 1, 1], [], []>} : vector<256x128xbf16>, vector<128x384xbf16>, vector<256x384xf32> -> vector<256x384xf32>
    %4 = arith.truncf %3 : vector<256x384xf32> to vector<256x384xbf16>
    %c0_4 = arith.constant 0 : index
    %c0_5 = arith.constant 0 : index
    %c0_6 = arith.constant 0 : index
    %5 = vector.load %arg4[%c0_4, %c0_5, %c0_6] : memref<1x256x384xbf16, #tpu.memory_space<vmem>>, vector<1x256x384xbf16>
    %6 = vector.shape_cast %5 : vector<1x256x384xbf16> to vector<256x384xbf16>
    %7 = vector.shape_cast %4 : vector<256x384xbf16> to vector<1x256x384xbf16>
    tpu.vector_store %arg4[%c0_4, %c0_5, %c0_6], %7 {strides = array<i32>} : memref<1x256x384xbf16, #tpu.memory_space<vmem>>, vector<1x256x384xbf16>,
    return
  }
  func.func @transform_0(%arg0: i32, %arg1: i32) -> (i32, i32, i32) {
    %c0_i32 = arith.constant 0 : i32
    %c0_i32_0 = arith.constant 0 : i32
    return %arg0, %arg1, %c0_i32 : i32, i32, i32
  }
  func.func @transform_1(%arg0: i32, %arg1: i32) -> (i32, i32) {
    %c0_i32 = arith.constant 0 : i32
    %c0_i32_0 = arith.constant 0 : i32
    %c0_i32_1 = arith.constant 0 : i32
    return %c0_i32, %c0_i32_0 : i32, i32
  }
  func.func @transform_2(%arg0: i32, %arg1: i32) -> (i32, i32, i32) {
    %c0_i32 = arith.constant 0 : i32
    %c0_i32_0 = arith.constant 0 : i32
    return %arg0, %arg1, %c0_i32 : i32, i32, i32
  }
}

module attributes {stable_mosaic.version = 11 : i64} {
  func.func @_attn_resident_kernel(%arg0: i32, %arg1: i32, %arg2: memref<1x256x128xbf16, #tpu.memory_space<vmem>>, %arg3: memref<1x256x128xbf16, #tpu.memory_space<vmem>>, %arg4: memref<1x256x128xbf16, #tpu.memory_space<vmem>>, %arg5: memref<128x128xbf16, #tpu.memory_space<vmem>>, %arg6: memref<1x256x128xf32, #tpu.memory_space<vmem>>) attributes {dimension_semantics = [#tpu.dimension_semantics<parallel>, #tpu.dimension_semantics<parallel>], iteration_bounds = array<i64: 2, 1>, scalar_prefetch = 0 : i64, scratch_operands = 0 : i64, tpu.core_type = #tpu.core_type<tc>, window_params = [{transform_indices = @transform_0, window_bounds = array<i64: 1, 256, 128>}, {transform_indices = @transform_1, window_bounds = array<i64: 1, 256, 128>}, {transform_indices = @transform_2, window_bounds = array<i64: 1, 256, 128>}, {pipeline_mode = #tpu.pipeline_mode<synchronous>, transform_indices = @transform_3, window_bounds = array<i64: 128, 128>}, {transform_indices = @transform_4, window_bounds = array<i64: 1, 256, 128>}]} {
    %c0 = arith.constant 0 : index
    %c0_0 = arith.constant 0 : index
    %c0_1 = arith.constant 0 : index
    %0 = vector.load %arg2[%c0, %c0_0, %c0_1] : memref<1x256x128xbf16, #tpu.memory_space<vmem>>, vector<1x256x128xbf16>
    %1 = vector.shape_cast %0 : vector<1x256x128xbf16> to vector<256x128xbf16>
    %c0_2 = arith.constant 0 : index
    %c0_3 = arith.constant 0 : index
    %c0_4 = arith.constant 0 : index
    %2 = vector.load %arg3[%c0_2, %c0_3, %c0_4] : memref<1x256x128xbf16, #tpu.memory_space<vmem>>, vector<1x256x128xbf16>
    %3 = vector.shape_cast %2 : vector<1x256x128xbf16> to vector<256x128xbf16>
    %c0_5 = arith.constant 0 : index
    %c0_6 = arith.constant 0 : index
    %c0_7 = arith.constant 0 : index
    %4 = vector.load %arg4[%c0_5, %c0_6, %c0_7] : memref<1x256x128xbf16, #tpu.memory_space<vmem>>, vector<1x256x128xbf16>
    %5 = vector.shape_cast %4 : vector<1x256x128xbf16> to vector<256x128xbf16>
    %6 = vector.extract_strided_slice %1 {offsets = [0, 0], sizes = [256, 32], strides = [1, 1]} : vector<256x128xbf16> to vector<256x32xbf16>
    %7 = vector.extract_strided_slice %3 {offsets = [0, 0], sizes = [256, 32], strides = [1, 1]} : vector<256x128xbf16> to vector<256x32xbf16>
    %cst = arith.constant dense<0.000000e+00> : vector<256x256xf32>
    %8 = tpu.matmul %6, %7, %cst {dimension_numbers = #tpu.dot_dimension_numbers<[1], [1], [0], [0], [0, 0, 1, 0], [], []>} : vector<256x32xbf16>, vector<256x32xbf16>, vector<256x256xf32> -> vector<256x256xf32>
    %cst_8 = arith.constant dense<0xFF800000> : vector<256xf32>
    %9 = vector.multi_reduction <maximumf>, %8, %cst_8 [1] : vector<256x256xf32> to vector<256xf32>
    %10 = vector.shape_cast %9 : vector<256xf32> to vector<256x1xf32>
    %11 = vector.broadcast %10 : vector<256x1xf32> to vector<256x256xf32>
    %12 = arith.subf %8, %11 : vector<256x256xf32>
    %13 = math.exp %12 : vector<256x256xf32>
    %cst_9 = arith.constant dense<0.000000e+00> : vector<256xf32>
    %14 = vector.multi_reduction <add>, %13, %cst_9 [1] : vector<256x256xf32> to vector<256xf32>
    %15 = vector.shape_cast %14 : vector<256xf32> to vector<256x1xf32>
    %16 = tpu.reciprocal %15 {approx = true} : vector<256x1xf32> -> vector<256x1xf32>
    %17 = vector.broadcast %16 : vector<256x1xf32> to vector<256x256xf32>
    %18 = arith.mulf %13, %17 : vector<256x256xf32>
    %19 = arith.truncf %18 : vector<256x256xf32> to vector<256x256xbf16>
    %20 = vector.extract_strided_slice %5 {offsets = [0, 0], sizes = [256, 32], strides = [1, 1]} : vector<256x128xbf16> to vector<256x32xbf16>
    %cst_10 = arith.constant dense<0.000000e+00> : vector<256x32xf32>
    %21 = tpu.matmul %19, %20, %cst_10 {dimension_numbers = #tpu.dot_dimension_numbers<[1], [0], [0], [1], [0, 0, 1, 1], [], []>} : vector<256x256xbf16>, vector<256x32xbf16>, vector<256x32xf32> -> vector<256x32xf32>
    %22 = arith.truncf %21 : vector<256x32xf32> to vector<256x32xbf16>
    %23 = vector.extract_strided_slice %1 {offsets = [0, 32], sizes = [256, 32], strides = [1, 1]} : vector<256x128xbf16> to vector<256x32xbf16>
    %24 = vector.extract_strided_slice %3 {offsets = [0, 32], sizes = [256, 32], strides = [1, 1]} : vector<256x128xbf16> to vector<256x32xbf16>
    %cst_11 = arith.constant dense<0.000000e+00> : vector<256x256xf32>
    %25 = tpu.matmul %23, %24, %cst_11 {dimension_numbers = #tpu.dot_dimension_numbers<[1], [1], [0], [0], [0, 0, 1, 0], [], []>} : vector<256x32xbf16>, vector<256x32xbf16>, vector<256x256xf32> -> vector<256x256xf32>
    %cst_12 = arith.constant dense<0xFF800000> : vector<256xf32>
    %26 = vector.multi_reduction <maximumf>, %25, %cst_12 [1] : vector<256x256xf32> to vector<256xf32>
    %27 = vector.shape_cast %26 : vector<256xf32> to vector<256x1xf32>
    %28 = vector.broadcast %27 : vector<256x1xf32> to vector<256x256xf32>
    %29 = arith.subf %25, %28 : vector<256x256xf32>
    %30 = math.exp %29 : vector<256x256xf32>
    %cst_13 = arith.constant dense<0.000000e+00> : vector<256xf32>
    %31 = vector.multi_reduction <add>, %30, %cst_13 [1] : vector<256x256xf32> to vector<256xf32>
    %32 = vector.shape_cast %31 : vector<256xf32> to vector<256x1xf32>
    %33 = tpu.reciprocal %32 {approx = true} : vector<256x1xf32> -> vector<256x1xf32>
    %34 = vector.broadcast %33 : vector<256x1xf32> to vector<256x256xf32>
    %35 = arith.mulf %30, %34 : vector<256x256xf32>
    %36 = arith.truncf %35 : vector<256x256xf32> to vector<256x256xbf16>
    %37 = vector.extract_strided_slice %5 {offsets = [0, 32], sizes = [256, 32], strides = [1, 1]} : vector<256x128xbf16> to vector<256x32xbf16>
    %cst_14 = arith.constant dense<0.000000e+00> : vector<256x32xf32>
    %38 = tpu.matmul %36, %37, %cst_14 {dimension_numbers = #tpu.dot_dimension_numbers<[1], [0], [0], [1], [0, 0, 1, 1], [], []>} : vector<256x256xbf16>, vector<256x32xbf16>, vector<256x32xf32> -> vector<256x32xf32>
    %39 = arith.truncf %38 : vector<256x32xf32> to vector<256x32xbf16>
    %40 = vector.extract_strided_slice %1 {offsets = [0, 64], sizes = [256, 32], strides = [1, 1]} : vector<256x128xbf16> to vector<256x32xbf16>
    %41 = vector.extract_strided_slice %3 {offsets = [0, 64], sizes = [256, 32], strides = [1, 1]} : vector<256x128xbf16> to vector<256x32xbf16>
    %cst_15 = arith.constant dense<0.000000e+00> : vector<256x256xf32>
    %42 = tpu.matmul %40, %41, %cst_15 {dimension_numbers = #tpu.dot_dimension_numbers<[1], [1], [0], [0], [0, 0, 1, 0], [], []>} : vector<256x32xbf16>, vector<256x32xbf16>, vector<256x256xf32> -> vector<256x256xf32>
    %cst_16 = arith.constant dense<0xFF800000> : vector<256xf32>
    %43 = vector.multi_reduction <maximumf>, %42, %cst_16 [1] : vector<256x256xf32> to vector<256xf32>
    %44 = vector.shape_cast %43 : vector<256xf32> to vector<256x1xf32>
    %45 = vector.broadcast %44 : vector<256x1xf32> to vector<256x256xf32>
    %46 = arith.subf %42, %45 : vector<256x256xf32>
    %47 = math.exp %46 : vector<256x256xf32>
    %cst_17 = arith.constant dense<0.000000e+00> : vector<256xf32>
    %48 = vector.multi_reduction <add>, %47, %cst_17 [1] : vector<256x256xf32> to vector<256xf32>
    %49 = vector.shape_cast %48 : vector<256xf32> to vector<256x1xf32>
    %50 = tpu.reciprocal %49 {approx = true} : vector<256x1xf32> -> vector<256x1xf32>
    %51 = vector.broadcast %50 : vector<256x1xf32> to vector<256x256xf32>
    %52 = arith.mulf %47, %51 : vector<256x256xf32>
    %53 = arith.truncf %52 : vector<256x256xf32> to vector<256x256xbf16>
    %54 = vector.extract_strided_slice %5 {offsets = [0, 64], sizes = [256, 32], strides = [1, 1]} : vector<256x128xbf16> to vector<256x32xbf16>
    %cst_18 = arith.constant dense<0.000000e+00> : vector<256x32xf32>
    %55 = tpu.matmul %53, %54, %cst_18 {dimension_numbers = #tpu.dot_dimension_numbers<[1], [0], [0], [1], [0, 0, 1, 1], [], []>} : vector<256x256xbf16>, vector<256x32xbf16>, vector<256x32xf32> -> vector<256x32xf32>
    %56 = arith.truncf %55 : vector<256x32xf32> to vector<256x32xbf16>
    %57 = vector.extract_strided_slice %1 {offsets = [0, 96], sizes = [256, 32], strides = [1, 1]} : vector<256x128xbf16> to vector<256x32xbf16>
    %58 = vector.extract_strided_slice %3 {offsets = [0, 96], sizes = [256, 32], strides = [1, 1]} : vector<256x128xbf16> to vector<256x32xbf16>
    %cst_19 = arith.constant dense<0.000000e+00> : vector<256x256xf32>
    %59 = tpu.matmul %57, %58, %cst_19 {dimension_numbers = #tpu.dot_dimension_numbers<[1], [1], [0], [0], [0, 0, 1, 0], [], []>} : vector<256x32xbf16>, vector<256x32xbf16>, vector<256x256xf32> -> vector<256x256xf32>
    %cst_20 = arith.constant dense<0xFF800000> : vector<256xf32>
    %60 = vector.multi_reduction <maximumf>, %59, %cst_20 [1] : vector<256x256xf32> to vector<256xf32>
    %61 = vector.shape_cast %60 : vector<256xf32> to vector<256x1xf32>
    %62 = vector.broadcast %61 : vector<256x1xf32> to vector<256x256xf32>
    %63 = arith.subf %59, %62 : vector<256x256xf32>
    %64 = math.exp %63 : vector<256x256xf32>
    %cst_21 = arith.constant dense<0.000000e+00> : vector<256xf32>
    %65 = vector.multi_reduction <add>, %64, %cst_21 [1] : vector<256x256xf32> to vector<256xf32>
    %66 = vector.shape_cast %65 : vector<256xf32> to vector<256x1xf32>
    %67 = tpu.reciprocal %66 {approx = true} : vector<256x1xf32> -> vector<256x1xf32>
    %68 = vector.broadcast %67 : vector<256x1xf32> to vector<256x256xf32>
    %69 = arith.mulf %64, %68 : vector<256x256xf32>
    %70 = arith.truncf %69 : vector<256x256xf32> to vector<256x256xbf16>
    %71 = vector.extract_strided_slice %5 {offsets = [0, 96], sizes = [256, 32], strides = [1, 1]} : vector<256x128xbf16> to vector<256x32xbf16>
    %cst_22 = arith.constant dense<0.000000e+00> : vector<256x32xf32>
    %72 = tpu.matmul %70, %71, %cst_22 {dimension_numbers = #tpu.dot_dimension_numbers<[1], [0], [0], [1], [0, 0, 1, 1], [], []>} : vector<256x256xbf16>, vector<256x32xbf16>, vector<256x32xf32> -> vector<256x32xf32>
    %73 = arith.truncf %72 : vector<256x32xf32> to vector<256x32xbf16>
    %74 = tpu.concatenate %22, %39, %56, %73 in 1 : vector<256x32xbf16>, vector<256x32xbf16>, vector<256x32xbf16>, vector<256x32xbf16> -> vector<256x128xbf16>
    %c0_23 = arith.constant 0 : index
    %c0_24 = arith.constant 0 : index
    %75 = vector.load %arg5[%c0_23, %c0_24] : memref<128x128xbf16, #tpu.memory_space<vmem>>, vector<128x128xbf16>
    %cst_25 = arith.constant dense<0.000000e+00> : vector<256x128xf32>
    %76 = tpu.matmul %74, %75, %cst_25 {dimension_numbers = #tpu.dot_dimension_numbers<[1], [0], [0], [1], [0, 0, 1, 1], [], []>} : vector<256x128xbf16>, vector<128x128xbf16>, vector<256x128xf32> -> vector<256x128xf32>
    %c0_26 = arith.constant 0 : index
    %c0_27 = arith.constant 0 : index
    %c0_28 = arith.constant 0 : index
    %77 = vector.load %arg6[%c0_26, %c0_27, %c0_28] : memref<1x256x128xf32, #tpu.memory_space<vmem>>, vector<1x256x128xf32>
    %78 = vector.shape_cast %77 : vector<1x256x128xf32> to vector<256x128xf32>
    %79 = vector.shape_cast %76 : vector<256x128xf32> to vector<1x256x128xf32>
    tpu.vector_store %arg6[%c0_26, %c0_27, %c0_28], %79 {strides = array<i32>} : memref<1x256x128xf32, #tpu.memory_space<vmem>>, vector<1x256x128xf32>,
    return
  }
  func.func @transform_0(%arg0: i32, %arg1: i32) -> (i32, i32, i32) {
    %c0_i32 = arith.constant 0 : i32
    %c0_i32_0 = arith.constant 0 : i32
    return %arg0, %arg1, %c0_i32 : i32, i32, i32
  }
  func.func @transform_1(%arg0: i32, %arg1: i32) -> (i32, i32, i32) {
    %c0_i32 = arith.constant 0 : i32
    %c1_i32 = arith.constant 1 : i32
    %c0_i32_0 = arith.constant 0 : i32
    return %arg0, %c0_i32, %c1_i32 : i32, i32, i32
  }
  func.func @transform_2(%arg0: i32, %arg1: i32) -> (i32, i32, i32) {
    %c0_i32 = arith.constant 0 : i32
    %c2_i32 = arith.constant 2 : i32
    %c0_i32_0 = arith.constant 0 : i32
    return %arg0, %c0_i32, %c2_i32 : i32, i32, i32
  }
  func.func @transform_3(%arg0: i32, %arg1: i32) -> (i32, i32) {
    %c0_i32 = arith.constant 0 : i32
    %c0_i32_0 = arith.constant 0 : i32
    %c0_i32_1 = arith.constant 0 : i32
    return %c0_i32, %c0_i32_0 : i32, i32
  }
  func.func @transform_4(%arg0: i32, %arg1: i32) -> (i32, i32, i32) {
    %c0_i32 = arith.constant 0 : i32
    %c0_i32_0 = arith.constant 0 : i32
    return %arg0, %arg1, %c0_i32 : i32, i32, i32
  }
}

</mosaic_0001>

<llo_original>
// kernel: attention_forward.2
$region0: #{attention_forward.2}
  #allocation0 [shape = 'u32[]', space=smem, size = 0x4, offset = 0x4, fixed_abs, tag = 'smem constant byte address 0x4 - core index']
  #allocation1 [shape = 'u32[72,128]{1,0:T(1,128)}', space=vmem, size = 0x9000, scoped, tag = 'internal scratch']
  %s0 = inlined_call_operand.vmem [shape: bf16[2,256,128], index: 0, kind: input, shape index: {}]
  %s1 = inlined_call_operand.vmem [shape: bf16[128,384], index: 1, kind: input, shape index: {}]
  %s2 = inlined_call_operand.vmem [shape: bf16[2,256,384], index: 2, kind: output, shape index: {}]
  %s3 = sld [smem:[#allocation0]]
  $region41: #{attention_forward.2} parent=0
    _
  %s5 = ssub.s32 1, %s3
  %s6 = scalar_select 0, %s5, %s3
  loop: start=0, step=1, limit=4
  $region2: #{attention_forward.2} parent=0 // loop_pre_header
    _
  $region3: #{attention_forward.2} parent=0 // loop_header
    %s8 = sphi 0, %s12
    %p9 = scmp.ge.s32.totalorder %s8, 4
    %s15 = sphi 0, %s27
    %s16 = sphi 0, %s23
    %s17 = sphi 0, %s15
    %s18 = sphi 0, %s16
    %s19 = sphi 0, %s17
    %s20 = sphi 0, %s18
    %s32 = sphi 0, %s34
    %s35 = sphi 0, %s32
    %s36 = sphi 0, %s35
    %s52 = sphi 0, %s36
    %s56 = sphi 0, %s56
    %s58 = sphi 0, %s56
    %s59 = sphi 0, %s58
    %s73 = sphi 0, %s59
    %s81 = sphi 0, %s83
    %s84 = sphi 0, %s81
    %s85 = sphi 0, %s84
    %s101 = sphi 0, %s85
  $region4: #{attention_forward.2} parent=0 // loop_header_branch
    %11 = sbr.rel (%p9) target = $region8
  $region5: #{attention_forward.2} parent=0 // loop_body
    %s13 = ssub.s32 %s8, 1
    %s14 = ssub.s32 %s8, 2
    %s21 = sadd.s32 1, %s16
    %p22 = scmp.ge.s32.totalorder %s21, 1
    %s23 = scalar_select %p22, 0, %s21
    %s24 = sadd.s32 1, %s15
    %s25 = scalar_select %p22, %s24, %s15
    %p26 = scmp.ge.s32.totalorder %s25, 2
    %s27 = scalar_select %p26, 0, %s25
    %s28 = ssub.s32 %s15, %s27
    %s29 = ssub.s32 %s16, %s23
    %s30 = sor.u32 %s28, %s29
    %p31 = scmp.eq.s32.totalorder %s30, 0
    %s33 = sadd.s32 %s32, 1
    %s34 = scalar_select %p31, %s32, %s33
    %p37 = pneg %p31
    %p38 = scmp.eq.s32.totalorder %s8, 1
    %p39 = por %p37, %p38
    %p40 = scmp.ne.s32.totalorder %s32, %s35
    %p41 = scmp.eq.s32.totalorder %s8, 0
    %p42 = por %p40, %p41
    %p43 = scmp.ne.s32.totalorder %s32, %s35
    %p44 = scmp.eq.s32.totalorder %s13, 1
    %p45 = por %p43, %p44
    %p46 = scmp.ne.s32.totalorder %s35, %s36
    %p47 = scmp.eq.s32.totalorder %s13, 0
    %p48 = por %p46, %p47
    %p49 = scmp.ne.s32.totalorder %s35, %s36
    %p50 = scmp.eq.s32.totalorder %s14, 1
    %p51 = por %p49, %p50
    %p53 = scmp.ne.s32.totalorder %s36, %s52
    %p54 = scmp.eq.s32.totalorder %s14, 0
    %p55 = por %p53, %p54
    %s57 = sadd.s32 %s56, 1
    %p60 = scmp.eq.s32.totalorder %s8, 1
    %p61 = scmp.ne.s32.totalorder %s56, %s58
    %p62 = scmp.eq.s32.totalorder %s8, 0
    %p63 = por %p61, %p62
    %p64 = scmp.ne.s32.totalorder %s56, %s58
    %p65 = scmp.eq.s32.totalorder %s13, 1
    %p66 = por %p64, %p65
    %p67 = scmp.ne.s32.totalorder %s58, %s59
    %p68 = scmp.eq.s32.totalorder %s13, 0
    %p69 = por %p67, %p68
    %p70 = scmp.ne.s32.totalorder %s58, %s59
    %p71 = scmp.eq.s32.totalorder %s14, 1
    %p72 = por %p70, %p71
    %p74 = scmp.ne.s32.totalorder %s59, %s73
    %p75 = scmp.eq.s32.totalorder %s14, 0
    %p76 = por %p74, %p75
    %s77 = ssub.s32 %s15, %s27
    %s78 = ssub.s32 %s16, %s23
    %s79 = sor.u32 %s77, %s78
    %p80 = scmp.eq.s32.totalorder %s79, 0
    %s82 = sadd.s32 %s81, 1
    %s83 = scalar_select %p80, %s81, %s82
    %p86 = pneg %p80
    %p87 = scmp.eq.s32.totalorder %s8, 1
    %p88 = por %p86, %p87
    %p89 = scmp.ne.s32.totalorder %s81, %s84
    %p90 = scmp.eq.s32.totalorder %s8, 0
    %p91 = por %p89, %p90
    %p92 = scmp.ne.s32.totalorder %s81, %s84
    %p93 = scmp.eq.s32.totalorder %s13, 1
    %p94 = por %p92, %p93
    %p95 = scmp.ne.s32.totalorder %s84, %s85
    %p96 = scmp.eq.s32.totalorder %s13, 0
    %p97 = por %p95, %p96
    %p98 = scmp.ne.s32.totalorder %s84, %s85
    %p99 = scmp.eq.s32.totalorder %s14, 1
    %p100 = por %p98, %p99
    %p102 = scmp.ne.s32.totalorder %s85, %s101
    %p103 = scmp.eq.s32.totalorder %s14, 0
    %p104 = por %p102, %p103
    %p105 = scmp.le.s32.totalorder 1, %s8
    %p106 = scmp.lt.s32.totalorder %s8, 3
    %p107 = pnand %p105, %p106
    %p108 = pneg %p107
    // Predicated region
    $region9: #{attention_forward.2} parent=5 // pred_check
      _
    $region10: #{attention_forward.2} parent=5 // pred_check_branch
      %110 = sbr.rel (%p107) target = $region12
    $region11: #{attention_forward.2} parent=5 // pred_region
      %s111 = ssub.s32 %s8, 1
      // Predicated region
      $region13: #{attention_forward.2} parent=11 // pred_check
        %p112 = pneg %p69
      $region14: #{attention_forward.2} parent=11 // pred_check_branch
        %114 = sbr.rel (%p112) target = $region16
      $region15: #{attention_forward.2} parent=11 // pred_region
        _
      $region16: #{attention_forward.2} parent=11 // pred_fallthru
        _
    $region12: #{attention_forward.2} parent=5 // pred_fallthru
      _
    %p115 = scmp.lt.s32.totalorder %s8, 2
    // Predicated region
    $region17: #{attention_forward.2} parent=5 // pred_check
      %p116 = pneg %p115
    $region18: #{attention_forward.2} parent=5 // pred_check_branch
      %118 = sbr.rel (%p116) target = $region20
    $region19: #{attention_forward.2} parent=5 // pred_region
      // Predicated region
      $region21: #{attention_forward.2} parent=19 // pred_check
        %p119 = pneg %p42
      $region22: #{attention_forward.2} parent=19 // pred_check_branch
        %121 = sbr.rel (%p119) target = $region24
      $region23: #{attention_forward.2} parent=19 // pred_region
        %s122 = smul.u32 32, %s16
        %p123 = scmp.lt.s32.totalorder %s15, 1
        %s124 = scalar_select %p123, %s15, 1
        %p125 = scmp.lt.s32.totalorder %s122, 31
        %s126 = scalar_select %p125, %s122, 31
        %s127 = smul.addr %s124, 32
        %s128 = sadd.s32 %s126, %s127
        %s129 = smul.addr %s128, 4
        %s130 = scalar_lea.vmem %s0, %s129
        %s131 = smul.u32 32, %s16
      $region24: #{attention_forward.2} parent=19 // pred_fallthru
        _
    $region20: #{attention_forward.2} parent=5 // pred_fallthru
      _
    %p132 = scmp.le.s32.totalorder 1, %s8
    %p133 = scmp.lt.s32.totalorder %s8, 3
    %p134 = pnand %p132, %p133
    %p135 = pneg %p134
    // Predicated region
    $region25: #{attention_forward.2} parent=5 // pred_check
      _
    $region26: #{attention_forward.2} parent=5 // pred_check_branch
      %137 = sbr.rel (%p134) target = $region28
    $region27: #{attention_forward.2} parent=5 // pred_region
      %s138 = ssub.s32 %s8, 1
      %s139 = smul.u32 32, %s18
      %p140 = scmp.lt.s32.totalorder %s17, 1
      %s141 = scalar_select %p140, %s17, 1
      %p142 = scmp.lt.s32.totalorder %s139, 31
      %s143 = scalar_select %p142, %s139, 31
      %s144 = smul.addr %s141, 32
      %s145 = sadd.s32 %s143, %s144
      %s146 = smul.addr %s145, 4
      %s147 = scalar_lea.vmem %s0, %s146
      %p148 = pneg %p48
      %p149 = pneg %p45
      %p150 = pneg %p69
      %p151 = pneg %p66
      %p152 = pneg %p97
      %p153 = pneg %p94
      %s154 = smul.u32 32, %s18
      %p155 = scmp.lt.s32.totalorder %s17, 1
      %s156 = scalar_select %p155, %s17, 1
      %p157 = scmp.lt.s32.totalorder %s154, 31
      %s158 = scalar_select %p157, %s154, 31
      %s159 = smul.addr %s158, 3
      %s160 = smul.addr %s156, 96
      %s161 = sadd.s32 %s159, %s160
      %s162 = smul.addr %s161, 4
      %s163 = scalar_lea.vmem %s2, %s162
      %s164 = smul.u32 32, %s18
      %p165 = scmp.lt.s32.totalorder %s17, 1
      %s166 = scalar_select %p165, %s17, 1
      %p167 = scmp.lt.s32.totalorder %s164, 31
      %s168 = scalar_select %p167, %s164, 31
      %s169 = smul.addr %s166, 32
      %s170 = sadd.s32 %s168, %s169
      %s171 = smul.addr %s170, 4
      %s172 = scalar_lea.vmem %s0, %s171
      %s173 = smul.u32 32, %s18
      %s174 = smul.u32 32, %s18
      %p175 = scmp.lt.s32.totalorder %s17, 1
      %s176 = scalar_select %p175, %s17, 1
      %p177 = scmp.lt.s32.totalorder %s174, 31
      %s178 = scalar_select %p177, %s174, 31
      %s179 = smul.addr %s178, 3
      %s180 = smul.addr %s176, 96
      %s181 = sadd.s32 %s179, %s180
      %s182 = smul.addr %s181, 4
      %s183 = scalar_lea.vmem %s2, %s182
      %s184 = smul.u32 32, %s18
      %v185 = vld [vmem:[%s172] sm:$0xf]
      %v186 = vld [vmem:[%s172 + $0x4] sm:$0xf]
      %v187 = vld [vmem:[%s172 + $0x8] sm:$0xf]
      %v188 = vld [vmem:[%s172 + $0xc] sm:$0xf]
      %v189 = vld [vmem:[%s172 + $0x10] sm:$0xf]
      %v190 = vld [vmem:[%s172 + $0x14] sm:$0xf]
      %v191 = vld [vmem:[%s172 + $0x18] sm:$0xf]
      %v192 = vld [vmem:[%s172 + $0x1c] sm:$0xf]
      %v193 = vld [vmem:[%s172 + $0x20] sm:$0xf]
      %v194 = vld [vmem:[%s172 + $0x24] sm:$0xf]
      %v195 = vld [vmem:[%s172 + $0x28] sm:$0xf]
      %v196 = vld [vmem:[%s172 + $0x2c] sm:$0xf]
      %v197 = vld [vmem:[%s172 + $0x30] sm:$0xf]
      %v198 = vld [vmem:[%s172 + $0x34] sm:$0xf]
      %v199 = vld [vmem:[%s172 + $0x38] sm:$0xf]
      %v200 = vld [vmem:[%s172 + $0x3c] sm:$0xf]
      %v201 = vld [vmem:[%s172 + $0x40] sm:$0xf]
      %v202 = vld [vmem:[%s172 + $0x44] sm:$0xf]
      %v203 = vld [vmem:[%s172 + $0x48] sm:$0xf]
      %v204 = vld [vmem:[%s172 + $0x4c] sm:$0xf]
      %v205 = vld [vmem:[%s172 + $0x50] sm:$0xf]
      %v206 = vld [vmem:[%s172 + $0x54] sm:$0xf]
      %v207 = vld [vmem:[%s172 + $0x58] sm:$0xf]
      %v208 = vld [vmem:[%s172 + $0x5c] sm:$0xf]
      %v209 = vld [vmem:[%s172 + $0x60] sm:$0xf]
      %v210 = vld [vmem:[%s172 + $0x64] sm:$0xf]
      %v211 = vld [vmem:[%s172 + $0x68] sm:$0xf]
      %v212 = vld [vmem:[%s172 + $0x6c] sm:$0xf]
      %v213 = vld [vmem:[%s172 + $0x70] sm:$0xf]
      %v214 = vld [vmem:[%s172 + $0x74] sm:$0xf]
      %v215 = vld [vmem:[%s172 + $0x78] sm:$0xf]
      %v216 = vld [vmem:[%s172 + $0x7c] sm:$0xf]
      %v217 = vld [vmem:[%s1] sm:$0xff]
      %v218 = vld [vmem:[%s1 + $0x8] sm:$0xf]
      %v219 = vld [vmem:[%s1 + $0xc] sm:$0xff]
      %v220 = vld [vmem:[%s1 + $0x14] sm:$0xf]
      %v221 = vld [vmem:[%s1 + $0x18] sm:$0xff]
      %v222 = vld [vmem:[%s1 + $0x20] sm:$0xf]
      %v223 = vld [vmem:[%s1 + $0x24] sm:$0xff]
      %v224 = vld [vmem:[%s1 + $0x2c] sm:$0xf]
      %v225 = vld [vmem:[%s1 + $0x30] sm:$0xff]
      %v226 = vld [vmem:[%s1 + $0x38] sm:$0xf]
      %v227 = vld [vmem:[%s1 + $0x3c] sm:$0xff]
      %v228 = vld [vmem:[%s1 + $0x44] sm:$0xf]
      %v229 = vld [vmem:[%s1 + $0x48] sm:$0xff]
      %v230 = vld [vmem:[%s1 + $0x50] sm:$0xf]
      %v231 = vld [vmem:[%s1 + $0x54] sm:$0xff]
      %v232 = vld [vmem:[%s1 + $0x5c] sm:$0xf]
      %v233 = vld [vmem:[%s1 + $0x60] sm:$0xff]
      %v234 = vld [vmem:[%s1 + $0x68] sm:$0xf]
      %v235 = vld [vmem:[%s1 + $0x6c] sm:$0xff]
      %v236 = vld [vmem:[%s1 + $0x74] sm:$0xf]
      %v237 = vld [vmem:[%s1 + $0x78] sm:$0xff]
      %v238 = vld [vmem:[%s1 + $0x80] sm:$0xf]
      %v239 = vld [vmem:[%s1 + $0x84] sm:$0xff]
      %v240 = vld [vmem:[%s1 + $0x8c] sm:$0xf]
      %v241 = vld [vmem:[%s1 + $0x90] sm:$0xff]
      %v242 = vld [vmem:[%s1 + $0x98] sm:$0xf]
      %v243 = vld [vmem:[%s1 + $0x9c] sm:$0xff]
      %v244 = vld [vmem:[%s1 + $0xa4] sm:$0xf]
      %v245 = vld [vmem:[%s1 + $0xa8] sm:$0xff]
      %v246 = vld [vmem:[%s1 + $0xb0] sm:$0xf]
      %v247 = vld [vmem:[%s1 + $0xb4] sm:$0xff]
      %v248 = vld [vmem:[%s1 + $0xbc] sm:$0xf]
      %v281 = vunpack.c.l.b16 %v185
      %v282 = vunpack.c.l.b16 %v186
      %v283 = vunpack.c.l.b16 %v187
      %v284 = vunpack.c.l.b16 %v188
      %v285 = vunpack.c.l.b16 %v189
      %v286 = vunpack.c.l.b16 %v190
      %v287 = vunpack.c.l.b16 %v191
      %v288 = vunpack.c.l.b16 %v192
      %v289 = vunpack.c.l.b16 %v193
      %v290 = vunpack.c.l.b16 %v194
      %v291 = vunpack.c.l.b16 %v195
      %v292 = vunpack.c.l.b16 %v196
      %v293 = vunpack.c.l.b16 %v197
      %v294 = vunpack.c.l.b16 %v198
      %v295 = vunpack.c.l.b16 %v199
      %v296 = vunpack.c.l.b16 %v200
      %v297 = vunpack.c.l.b16 %v201
      %v298 = vunpack.c.l.b16 %v202
      %v299 = vunpack.c.l.b16 %v203
      %v300 = vunpack.c.l.b16 %v204
      %v301 = vunpack.c.l.b16 %v205
      %v302 = vunpack.c.l.b16 %v206
      %v303 = vunpack.c.l.b16 %v207
      %v304 = vunpack.c.l.b16 %v208
      %v305 = vunpack.c.l.b16 %v209
      %v306 = vunpack.c.l.b16 %v210
      %v307 = vunpack.c.l.b16 %v211
      %v308 = vunpack.c.l.b16 %v212
      %v309 = vunpack.c.l.b16 %v213
      %v310 = vunpack.c.l.b16 %v214
      %v311 = vunpack.c.l.b16 %v215
      %v312 = vunpack.c.l.b16 %v216
      %v313 = vpack.c.b16 %v282, %v281
      %v314 = vpack.c.b16 %v284, %v283
      %v315 = vpack.c.b16 %v286, %v285
      %v316 = vpack.c.b16 %v288, %v287
      %v317 = vpack.c.b16 %v290, %v289
      %v318 = vpack.c.b16 %v292, %v291
      %v319 = vpack.c.b16 %v294, %v293
      %v320 = vpack.c.b16 %v296, %v295
      %v321 = vpack.c.b16 %v298, %v297
      %v322 = vpack.c.b16 %v300, %v299
      %v323 = vpack.c.b16 %v302, %v301
      %v324 = vpack.c.b16 %v304, %v303
      %v325 = vpack.c.b16 %v306, %v305
      %v326 = vpack.c.b16 %v308, %v307
      %v327 = vpack.c.b16 %v310, %v309
      %v328 = vpack.c.b16 %v312, %v311
      %v377 = vunpack.c.l.b16 %v217
      %v378 = vunpack.c.h.b16 %v217
      %v379 = vunpack.c.l.b16 %v218
      %v380 = vunpack.c.l.b16 %v219
      %v381 = vunpack.c.h.b16 %v219
      %v382 = vunpack.c.l.b16 %v220
      %v383 = vunpack.c.l.b16 %v221
      %v384 = vunpack.c.h.b16 %v221
      %v385 = vunpack.c.l.b16 %v222
      %v386 = vunpack.c.l.b16 %v223
      %v387 = vunpack.c.h.b16 %v223
      %v388 = vunpack.c.l.b16 %v224
      %v389 = vunpack.c.l.b16 %v225
      %v390 = vunpack.c.h.b16 %v225
      %v391 = vunpack.c.l.b16 %v226
      %v392 = vunpack.c.l.b16 %v227
      %v393 = vunpack.c.h.b16 %v227
      %v394 = vunpack.c.l.b16 %v228
      %v395 = vunpack.c.l.b16 %v229
      %v396 = vunpack.c.h.b16 %v229
      %v397 = vunpack.c.l.b16 %v230
      %v398 = vunpack.c.l.b16 %v231
      %v399 = vunpack.c.h.b16 %v231
      %v400 = vunpack.c.l.b16 %v232
      %v401 = vunpack.c.l.b16 %v233
      %v402 = vunpack.c.h.b16 %v233
      %v403 = vunpack.c.l.b16 %v234
      %v404 = vunpack.c.l.b16 %v235
      %v405 = vunpack.c.h.b16 %v235
      %v406 = vunpack.c.l.b16 %v236
      %v407 = vunpack.c.l.b16 %v237
      %v408 = vunpack.c.h.b16 %v237
      %v409 = vunpack.c.l.b16 %v238
      %v410 = vunpack.c.l.b16 %v239
      %v411 = vunpack.c.h.b16 %v239
      %v412 = vunpack.c.l.b16 %v240
      %v413 = vunpack.c.l.b16 %v241
      %v414 = vunpack.c.h.b16 %v241
      %v415 = vunpack.c.l.b16 %v242
      %v416 = vunpack.c.l.b16 %v243
      %v417 = vunpack.c.h.b16 %v243
      %v418 = vunpack.c.l.b16 %v244
      %v419 = vunpack.c.l.b16 %v245
      %v420 = vunpack.c.h.b16 %v245
      %v421 = vunpack.c.l.b16 %v246
      %v422 = vunpack.c.l.b16 %v247
      %v423 = vunpack.c.h.b16 %v247
      %v424 = vunpack.c.l.b16 %v248
      %v425 = vpack.c.b16 %v380, %v377
      %v426 = vpack.c.b16 %v381, %v378
      %v427 = vpack.c.b16 %v382, %v379
      %v428 = vpack.c.b16 %v386, %v383
      %v429 = vpack.c.b16 %v387, %v384
      %v430 = vpack.c.b16 %v388, %v385
      %v431 = vpack.c.b16 %v392, %v389
      %v432 = vpack.c.b16 %v393, %v390
      %v433 = vpack.c.b16 %v394, %v391
      %v434 = vpack.c.b16 %v398, %v395
      %v435 = vpack.c.b16 %v399, %v396
      %v436 = vpack.c.b16 %v400, %v397
      %v437 = vpack.c.b16 %v404, %v401
      %v438 = vpack.c.b16 %v405, %v402
      %v439 = vpack.c.b16 %v406, %v403
      %v440 = vpack.c.b16 %v410, %v407
      %v441 = vpack.c.b16 %v411, %v408
      %v442 = vpack.c.b16 %v412, %v409
      %v443 = vpack.c.b16 %v416, %v413
      %v444 = vpack.c.b16 %v417, %v414
      %v445 = vpack.c.b16 %v418, %v415
      %v446 = vpack.c.b16 %v422, %v419
      %v447 = vpack.c.b16 %v423, %v420
      %v448 = vpack.c.b16 %v424, %v421
      %473 = vmatpush.bf16.msra.mxu0 %v446
      %474 = vmatpush.bf16.msra.mxu0 %v443
      %475 = vmatpush.bf16.msra.mxu0 %v440
      %476 = vmatpush.bf16.msra.mxu0 %v437
      %477 = vmatpush.bf16.msra.mxu0 %v434
      %478 = vmatpush.bf16.msra.mxu0 %v431
      %479 = vmatpush.bf16.msra.mxu0 %v428
      %480 = vmatpush.bf16.msra.mxu0 %v425
      %481 = vmatmul.bf16.gmra.mxu0 %v313
      %v482 = vpop.f32.mrf.mxu0
      %v483 = vadd.f32 0.0, %v482
      %v484 = vpop.f32.mrf.mxu0
      %v485 = vadd.f32 0.0, %v484
      %486 = vmatmul.bf16.gmra.mxu0 %v314
      %v487 = vpop.f32.mrf.mxu0
      %v488 = vadd.f32 0.0, %v487
      %v489 = vpop.f32.mrf.mxu0
      %v490 = vadd.f32 0.0, %v489
      %491 = vmatmul.bf16.gmra.mxu0 %v315
      %v492 = vpop.f32.mrf.mxu0
      %v493 = vadd.f32 0.0, %v492
      %v494 = vpop.f32.mrf.mxu0
      %v495 = vadd.f32 0.0, %v494
      %496 = vmatmul.bf16.gmra.mxu0 %v316
      %v497 = vpop.f32.mrf.mxu0
      %v498 = vadd.f32 0.0, %v497
      %v499 = vpop.f32.mrf.mxu0
      %v500 = vadd.f32 0.0, %v499
      %501 = vmatmul.bf16.gmra.mxu0 %v317
      %v502 = vpop.f32.mrf.mxu0
      %v503 = vadd.f32 0.0, %v502
      %v504 = vpop.f32.mrf.mxu0
      %v505 = vadd.f32 0.0, %v504
      %506 = vmatmul.bf16.gmra.mxu0 %v318
      %v507 = vpop.f32.mrf.mxu0
      %v508 = vadd.f32 0.0, %v507
      %v509 = vpop.f32.mrf.mxu0
      %v510 = vadd.f32 0.0, %v509
      %511 = vmatmul.bf16.gmra.mxu0 %v319
      %v512 = vpop.f32.mrf.mxu0
      %v513 = vadd.f32 0.0, %v512
      %v514 = vpop.f32.mrf.mxu0
      %v515 = vadd.f32 0.0, %v514
      %516 = vmatmul.bf16.gmra.mxu0 %v320
      %v517 = vpop.f32.mrf.mxu0
      %v518 = vadd.f32 0.0, %v517
      %v519 = vpop.f32.mrf.mxu0
      %v520 = vadd.f32 0.0, %v519
      %521 = vmatmul.bf16.gmra.mxu0 %v321
      %v522 = vpop.f32.mrf.mxu0
      %v523 = vadd.f32 0.0, %v522
      %v524 = vpop.f32.mrf.mxu0
      %v525 = vadd.f32 0.0, %v524
      %526 = vmatmul.bf16.gmra.mxu0 %v322
      %v527 = vpop.f32.mrf.mxu0
      %v528 = vadd.f32 0.0, %v527
      %v529 = vpop.f32.mrf.mxu0
      %v530 = vadd.f32 0.0, %v529
      %531 = vmatmul.bf16.gmra.mxu0 %v323
      %v532 = vpop.f32.mrf.mxu0
      %v533 = vadd.f32 0.0, %v532
      %v534 = vpop.f32.mrf.mxu0
      %v535 = vadd.f32 0.0, %v534
      %536 = vmatmul.bf16.gmra.mxu0 %v324
      %v537 = vpop.f32.mrf.mxu0
      %v538 = vadd.f32 0.0, %v537
      %v539 = vpop.f32.mrf.mxu0
      %v540 = vadd.f32 0.0, %v539
      %541 = vmatmul.bf16.gmra.mxu0 %v325
      %v542 = vpop.f32.mrf.mxu0
      %v543 = vadd.f32 0.0, %v542
      %v544 = vpop.f32.mrf.mxu0
      %v545 = vadd.f32 0.0, %v544
      %546 = vmatmul.bf16.gmra.mxu0 %v326
      %v547 = vpop.f32.mrf.mxu0
      %v548 = vadd.f32 0.0, %v547
      %v549 = vpop.f32.mrf.mxu0
      %v550 = vadd.f32 0.0, %v549
      %551 = vmatmul.bf16.gmra.mxu0 %v327
      %v552 = vpop.f32.mrf.mxu0
      %v553 = vadd.f32 0.0, %v552
      %v554 = vpop.f32.mrf.mxu0
      %v555 = vadd.f32 0.0, %v554
      %556 = vmatmul.bf16.gmra.mxu0 %v328
      %v557 = vpop.f32.mrf.mxu0
      %v558 = vadd.f32 0.0, %v557
      %v559 = vpop.f32.mrf.mxu0
      %v560 = vadd.f32 0.0, %v559
      %561 = vdwg.mxu0
      %562 = vmatpush.bf16.msra.mxu0 %v447
      %563 = vmatpush.bf16.msra.mxu0 %v444
      %564 = vmatpush.bf16.msra.mxu0 %v441
      %565 = vmatpush.bf16.msra.mxu0 %v438
      %566 = vmatpush.bf16.msra.mxu0 %v435
      %567 = vmatpush.bf16.msra.mxu0 %v432
      %568 = vmatpush.bf16.msra.mxu0 %v429
      %569 = vmatpush.bf16.msra.mxu0 %v426
      %570 = vmatmul.bf16.gmra.mxu0 %v313
      %v571 = vpop.f32.mrf.mxu0
      %v572 = vadd.f32 0.0, %v571
      %v573 = vpop.f32.mrf.mxu0
      %v574 = vadd.f32 0.0, %v573
      %575 = vmatmul.bf16.gmra.mxu0 %v314
      %v576 = vpop.f32.mrf.mxu0
      %v577 = vadd.f32 0.0, %v576
      %v578 = vpop.f32.mrf.mxu0
      %v579 = vadd.f32 0.0, %v578
      %580 = vmatmul.bf16.gmra.mxu0 %v315
      %v581 = vpop.f32.mrf.mxu0
      %v582 = vadd.f32 0.0, %v581
      %v583 = vpop.f32.mrf.mxu0
      %v584 = vadd.f32 0.0, %v583
      %585 = vmatmul.bf16.gmra.mxu0 %v316
      %v586 = vpop.f32.mrf.mxu0
      %v587 = vadd.f32 0.0, %v586
      %v588 = vpop.f32.mrf.mxu0
      %v589 = vadd.f32 0.0, %v588
      %590 = vmatmul.bf16.gmra.mxu0 %v317
      %v591 = vpop.f32.mrf.mxu0
      %v592 = vadd.f32 0.0, %v591
      %v593 = vpop.f32.mrf.mxu0
      %v594 = vadd.f32 0.0, %v593
      %595 = vmatmul.bf16.gmra.mxu0 %v318
      %v596 = vpop.f32.mrf.mxu0
      %v597 = vadd.f32 0.0, %v596
      %v598 = vpop.f32.mrf.mxu0
      %v599 = vadd.f32 0.0, %v598
      %600 = vmatmul.bf16.gmra.mxu0 %v319
      %v601 = vpop.f32.mrf.mxu0
      %v602 = vadd.f32 0.0, %v601
      %v603 = vpop.f32.mrf.mxu0
      %v604 = vadd.f32 0.0, %v603
      %605 = vmatmul.bf16.gmra.mxu0 %v320
      %v606 = vpop.f32.mrf.mxu0
      %v607 = vadd.f32 0.0, %v606
      %v608 = vpop.f32.mrf.mxu0
      %v609 = vadd.f32 0.0, %v608
      %610 = vmatmul.bf16.gmra.mxu0 %v321
      %v611 = vpop.f32.mrf.mxu0
      %v612 = vadd.f32 0.0, %v611
      %v613 = vpop.f32.mrf.mxu0
      %v614 = vadd.f32 0.0, %v613
      %615 = vmatmul.bf16.gmra.mxu0 %v322
      %v616 = vpop.f32.mrf.mxu0
      %v617 = vadd.f32 0.0, %v616
      %v618 = vpop.f32.mrf.mxu0
      %v619 = vadd.f32 0.0, %v618
      %620 = vmatmul.bf16.gmra.mxu0 %v323
      %v621 = vpop.f32.mrf.mxu0
      %v622 = vadd.f32 0.0, %v621
      %v623 = vpop.f32.mrf.mxu0
      %v624 = vadd.f32 0.0, %v623
      %625 = vmatmul.bf16.gmra.mxu0 %v324
      %v626 = vpop.f32.mrf.mxu0
      %v627 = vadd.f32 0.0, %v626
      %v628 = vpop.f32.mrf.mxu0
      %v629 = vadd.f32 0.0, %v628
      %630 = vmatmul.bf16.gmra.mxu0 %v325
      %v631 = vpop.f32.mrf.mxu0
      %v632 = vadd.f32 0.0, %v631
      %v633 = vpop.f32.mrf.mxu0
      %v634 = vadd.f32 0.0, %v633
      %635 = vmatmul.bf16.gmra.mxu0 %v326
      %v636 = vpop.f32.mrf.mxu0
      %v637 = vadd.f32 0.0, %v636
      %v638 = vpop.f32.mrf.mxu0
      %v639 = vadd.f32 0.0, %v638
      %640 = vmatmul.bf16.gmra.mxu0 %v327
      %v641 = vpop.f32.mrf.mxu0
      %v642 = vadd.f32 0.0, %v641
      %v643 = vpop.f32.mrf.mxu0
      %v644 = vadd.f32 0.0, %v643
      %645 = vmatmul.bf16.gmra.mxu0 %v328
      %v646 = vpop.f32.mrf.mxu0
      %v647 = vadd.f32 0.0, %v646
      %v648 = vpop.f32.mrf.mxu0
      %v649 = vadd.f32 0.0, %v648
      %650 = vdwg.mxu0
      %651 = vmatpush.bf16.msra.mxu0 %v448
      %652 = vmatpush.bf16.msra.mxu0 %v445
      %653 = vmatpush.bf16.msra.mxu0 %v442
      %654 = vmatpush.bf16.msra.mxu0 %v439
      %655 = vmatpush.bf16.msra.mxu0 %v436
      %656 = vmatpush.bf16.msra.mxu0 %v433
      %657 = vmatpush.bf16.msra.mxu0 %v430
      %658 = vmatpush.bf16.msra.mxu0 %v427
      %659 = vmatmul.bf16.gmra.mxu0 %v313
      %v660 = vpop.f32.mrf.mxu0
      %v661 = vadd.f32 0.0, %v660
      %v662 = vpop.f32.mrf.mxu0
      %v663 = vadd.f32 0.0, %v662
      %664 = vmatmul.bf16.gmra.mxu0 %v314
      %v665 = vpop.f32.mrf.mxu0
      %v666 = vadd.f32 0.0, %v665
      %v667 = vpop.f32.mrf.mxu0
      %v668 = vadd.f32 0.0, %v667
      %669 = vmatmul.bf16.gmra.mxu0 %v315
      %v670 = vpop.f32.mrf.mxu0
      %v671 = vadd.f32 0.0, %v670
      %v672 = vpop.f32.mrf.mxu0
      %v673 = vadd.f32 0.0, %v672
      %674 = vmatmul.bf16.gmra.mxu0 %v316
      %v675 = vpop.f32.mrf.mxu0
      %v676 = vadd.f32 0.0, %v675
      %v677 = vpop.f32.mrf.mxu0
      %v678 = vadd.f32 0.0, %v677
      %679 = vmatmul.bf16.gmra.mxu0 %v317
      %v680 = vpop.f32.mrf.mxu0
      %v681 = vadd.f32 0.0, %v680
      %v682 = vpop.f32.mrf.mxu0
      %v683 = vadd.f32 0.0, %v682
      %684 = vmatmul.bf16.gmra.mxu0 %v318
      %v685 = vpop.f32.mrf.mxu0
      %v686 = vadd.f32 0.0, %v685
      %v687 = vpop.f32.mrf.mxu0
      %v688 = vadd.f32 0.0, %v687
      %689 = vmatmul.bf16.gmra.mxu0 %v319
      %v690 = vpop.f32.mrf.mxu0
      %v691 = vadd.f32 0.0, %v690
      %v692 = vpop.f32.mrf.mxu0
      %v693 = vadd.f32 0.0, %v692
      %694 = vmatmul.bf16.gmra.mxu0 %v320
      %v695 = vpop.f32.mrf.mxu0
      %v696 = vadd.f32 0.0, %v695
      %v697 = vpop.f32.mrf.mxu0
      %v698 = vadd.f32 0.0, %v697
      %699 = vmatmul.bf16.gmra.mxu0 %v321
      %v700 = vpop.f32.mrf.mxu0
      %v701 = vadd.f32 0.0, %v700
      %v702 = vpop.f32.mrf.mxu0
      %v703 = vadd.f32 0.0, %v702
      %704 = vmatmul.bf16.gmra.mxu0 %v322
      %v705 = vpop.f32.mrf.mxu0
      %v706 = vadd.f32 0.0, %v705
      %v707 = vpop.f32.mrf.mxu0
      %v708 = vadd.f32 0.0, %v707
      %709 = vmatmul.bf16.gmra.mxu0 %v323
      %v710 = vpop.f32.mrf.mxu0
      %v711 = vadd.f32 0.0, %v710
      %v712 = vpop.f32.mrf.mxu0
      %v713 = vadd.f32 0.0, %v712
      %714 = vmatmul.bf16.gmra.mxu0 %v324
      %v715 = vpop.f32.mrf.mxu0
      %v716 = vadd.f32 0.0, %v715
      %v717 = vpop.f32.mrf.mxu0
      %v718 = vadd.f32 0.0, %v717
      %719 = vmatmul.bf16.gmra.mxu0 %v325
      %v720 = vpop.f32.mrf.mxu0
      %v721 = vadd.f32 0.0, %v720
      %v722 = vpop.f32.mrf.mxu0
      %v723 = vadd.f32 0.0, %v722
      %724 = vmatmul.bf16.gmra.mxu0 %v326
      %v725 = vpop.f32.mrf.mxu0
      %v726 = vadd.f32 0.0, %v725
      %v727 = vpop.f32.mrf.mxu0
      %v728 = vadd.f32 0.0, %v727
      %729 = vmatmul.bf16.gmra.mxu0 %v327
      %v730 = vpop.f32.mrf.mxu0
      %v731 = vadd.f32 0.0, %v730
      %v732 = vpop.f32.mrf.mxu0
      %v733 = vadd.f32 0.0, %v732
      %734 = vmatmul.bf16.gmra.mxu0 %v328
      %v735 = vpop.f32.mrf.mxu0
      %v736 = vadd.f32 0.0, %v735
      %v737 = vpop.f32.mrf.mxu0
      %v738 = vadd.f32 0.0, %v737
      %739 = vdwg.mxu0
      %v740 = vpack.c.bf16 %v572, %v483
      %v741 = vpack.c.bf16 %v661, %v661
      %v742 = vpack.c.bf16 %v574, %v485
      %v743 = vpack.c.bf16 %v663, %v663
      %v744 = vpack.c.bf16 %v577, %v488
      %v745 = vpack.c.bf16 %v666, %v666
      %v746 = vpack.c.bf16 %v579, %v490
      %v747 = vpack.c.bf16 %v668, %v668
      %v748 = vpack.c.bf16 %v582, %v493
      %v749 = vpack.c.bf16 %v671, %v671
      %v750 = vpack.c.bf16 %v584, %v495
      %v751 = vpack.c.bf16 %v673, %v673
      %v752 = vpack.c.bf16 %v587, %v498
      %v753 = vpack.c.bf16 %v676, %v676
      %v754 = vpack.c.bf16 %v589, %v500
      %v755 = vpack.c.bf16 %v678, %v678
      %v756 = vpack.c.bf16 %v592, %v503
      %v757 = vpack.c.bf16 %v681, %v681
      %v758 = vpack.c.bf16 %v594, %v505
      %v759 = vpack.c.bf16 %v683, %v683
      %v760 = vpack.c.bf16 %v597, %v508
      %v761 = vpack.c.bf16 %v686, %v686
      %v762 = vpack.c.bf16 %v599, %v510
      %v763 = vpack.c.bf16 %v688, %v688
      %v764 = vpack.c.bf16 %v602, %v513
      %v765 = vpack.c.bf16 %v691, %v691
      %v766 = vpack.c.bf16 %v604, %v515
      %v767 = vpack.c.bf16 %v693, %v693
      %v768 = vpack.c.bf16 %v607, %v518
      %v769 = vpack.c.bf16 %v696, %v696
      %v770 = vpack.c.bf16 %v609, %v520
      %v771 = vpack.c.bf16 %v698, %v698
      %v772 = vpack.c.bf16 %v612, %v523
      %v773 = vpack.c.bf16 %v701, %v701
      %v774 = vpack.c.bf16 %v614, %v525
      %v775 = vpack.c.bf16 %v703, %v703
      %v776 = vpack.c.bf16 %v617, %v528
      %v777 = vpack.c.bf16 %v706, %v706
      %v778 = vpack.c.bf16 %v619, %v530
      %v779 = vpack.c.bf16 %v708, %v708
      %v780 = vpack.c.bf16 %v622, %v533
      %v781 = vpack.c.bf16 %v711, %v711
      %v782 = vpack.c.bf16 %v624, %v535
      %v783 = vpack.c.bf16 %v713, %v713
      %v784 = vpack.c.bf16 %v627, %v538
      %v785 = vpack.c.bf16 %v716, %v716
      %v786 = vpack.c.bf16 %v629, %v540
      %v787 = vpack.c.bf16 %v718, %v718
      %v788 = vpack.c.bf16 %v632, %v543
      %v789 = vpack.c.bf16 %v721, %v721
      %v790 = vpack.c.bf16 %v634, %v545
      %v791 = vpack.c.bf16 %v723, %v723
      %v792 = vpack.c.bf16 %v637, %v548
      %v793 = vpack.c.bf16 %v726, %v726
      %v794 = vpack.c.bf16 %v639, %v550
      %v795 = vpack.c.bf16 %v728, %v728
      %v796 = vpack.c.bf16 %v642, %v553
      %v797 = vpack.c.bf16 %v731, %v731
      %v798 = vpack.c.bf16 %v644, %v555
      %v799 = vpack.c.bf16 %v733, %v733
      %v800 = vpack.c.bf16 %v647, %v558
      %v801 = vpack.c.bf16 %v736, %v736
      %v802 = vpack.c.bf16 %v649, %v560
      %v803 = vpack.c.bf16 %v738, %v738
      %804 = vst [vmem:[%s183] sm:$0xff] %v740
      %805 = vst [vmem:[%s183 + $0x8] sm:$0xf] %v741
      %806 = vst [vmem:[%s183 + $0xc] sm:$0xff] %v742
      %807 = vst [vmem:[%s183 + $0x14] sm:$0xf] %v743
      %808 = vst [vmem:[%s183 + $0x18] sm:$0xff] %v744
      %809 = vst [vmem:[%s183 + $0x20] sm:$0xf] %v745
      %810 = vst [vmem:[%s183 + $0x24] sm:$0xff] %v746
      %811 = vst [vmem:[%s183 + $0x2c] sm:$0xf] %v747
      %812 = vst [vmem:[%s183 + $0x30] sm:$0xff] %v748
      %813 = vst [vmem:[%s183 + $0x38] sm:$0xf] %v749
      %814 = vst [vmem:[%s183 + $0x3c] sm:$0xff] %v750
      %815 = vst [vmem:[%s183 + $0x44] sm:$0xf] %v751
      %816 = vst [vmem:[%s183 + $0x48] sm:$0xff] %v752
      %817 = vst [vmem:[%s183 + $0x50] sm:$0xf] %v753
      %818 = vst [vmem:[%s183 + $0x54] sm:$0xff] %v754
      %819 = vst [vmem:[%s183 + $0x5c] sm:$0xf] %v755
      %820 = vst [vmem:[%s183 + $0x60] sm:$0xff] %v756
      %821 = vst [vmem:[%s183 + $0x68] sm:$0xf] %v757
      %822 = vst [vmem:[%s183 + $0x6c] sm:$0xff] %v758
      %823 = vst [vmem:[%s183 + $0x74] sm:$0xf] %v759
      %824 = vst [vmem:[%s183 + $0x78] sm:$0xff] %v760
      %825 = vst [vmem:[%s183 + $0x80] sm:$0xf] %v761
      %826 = vst [vmem:[%s183 + $0x84] sm:$0xff] %v762
      %827 = vst [vmem:[%s183 + $0x8c] sm:$0xf] %v763
      %828 = vst [vmem:[%s183 + $0x90] sm:$0xff] %v764
      %829 = vst [vmem:[%s183 + $0x98] sm:$0xf] %v765
      %830 = vst [vmem:[%s183 + $0x9c] sm:$0xff] %v766
      %831 = vst [vmem:[%s183 + $0xa4] sm:$0xf] %v767
      %832 = vst [vmem:[%s183 + $0xa8] sm:$0xff] %v768
      %833 = vst [vmem:[%s183 + $0xb0] sm:$0xf] %v769
      %834 = vst [vmem:[%s183 + $0xb4] sm:$0xff] %v770
      %835 = vst [vmem:[%s183 + $0xbc] sm:$0xf] %v771
      %836 = vst [vmem:[%s183 + $0xc0] sm:$0xff] %v772
      %837 = vst [vmem:[%s183 + $0xc8] sm:$0xf] %v773
      %838 = vst [vmem:[%s183 + $0xcc] sm:$0xff] %v774
      %839 = vst [vmem:[%s183 + $0xd4] sm:$0xf] %v775
      %840 = vst [vmem:[%s183 + $0xd8] sm:$0xff] %v776
      %841 = vst [vmem:[%s183 + $0xe0] sm:$0xf] %v777
      %842 = vst [vmem:[%s183 + $0xe4] sm:$0xff] %v778
      %843 = vst [vmem:[%s183 + $0xec] sm:$0xf] %v779
      %844 = vst [vmem:[%s183 + $0xf0] sm:$0xff] %v780
      %845 = vst [vmem:[%s183 + $0xf8] sm:$0xf] %v781
      %846 = vst [vmem:[%s183 + $0xfc] sm:$0xff] %v782
      %847 = vst [vmem:[%s183 + $0x104] sm:$0xf] %v783
      %848 = vst [vmem:[%s183 + $0x108] sm:$0xff] %v784
      %849 = vst [vmem:[%s183 + $0x110] sm:$0xf] %v785
      %850 = vst [vmem:[%s183 + $0x114] sm:$0xff] %v786
      %851 = vst [vmem:[%s183 + $0x11c] sm:$0xf] %v787
      %852 = vst [vmem:[%s183 + $0x120] sm:$0xff] %v788
      %853 = vst [vmem:[%s183 + $0x128] sm:$0xf] %v789
      %854 = vst [vmem:[%s183 + $0x12c] sm:$0xff] %v790
      %855 = vst [vmem:[%s183 + $0x134] sm:$0xf] %v791
      %856 = vst [vmem:[%s183 + $0x138] sm:$0xff] %v792
      %857 = vst [vmem:[%s183 + $0x140] sm:$0xf] %v793
      %858 = vst [vmem:[%s183 + $0x144] sm:$0xff] %v794
      %859 = vst [vmem:[%s183 + $0x14c] sm:$0xf] %v795
      %860 = vst [vmem:[%s183 + $0x150] sm:$0xff] %v796
      %861 = vst [vmem:[%s183 + $0x158] sm:$0xf] %v797
      %862 = vst [vmem:[%s183 + $0x15c] sm:$0xff] %v798
      %863 = vst [vmem:[%s183 + $0x164] sm:$0xf] %v799
      %864 = vst [vmem:[%s183 + $0x168] sm:$0xff] %v800
      %865 = vst [vmem:[%s183 + $0x170] sm:$0xf] %v801
      %866 = vst [vmem:[%s183 + $0x174] sm:$0xff] %v802
      %867 = vst [vmem:[%s183 + $0x17c] sm:$0xf] %v803
      %s868 = smul.u32 32, %s18
      %p869 = scmp.lt.s32.totalorder %s17, 1
      %s870 = scalar_select %p869, %s17, 1
      %p871 = scmp.lt.s32.totalorder %s868, 31
      %s872 = scalar_select %p871, %s868, 31
      %s873 = smul.addr %s872, 3
      %s874 = smul.addr %s870, 96
      %s875 = sadd.s32 %s873, %s874
      %s876 = smul.addr %s875, 4
      %s877 = scalar_lea.vmem %s2, %s876
      // Predicated region
      $region29: #{attention_forward.2} parent=27 // pred_check
        %p878 = pneg %p94
      $region30: #{attention_forward.2} parent=27 // pred_check_branch
        %880 = sbr.rel (%p878) target = $region32
      $region31: #{attention_forward.2} parent=27 // pred_region
        %s881 = smul.u32 32, %s18
      $region32: #{attention_forward.2} parent=27 // pred_fallthru
        _
    $region28: #{attention_forward.2} parent=5 // pred_fallthru
      _
    %p882 = scmp.le.s32.totalorder 2, %s8
    // Predicated region
    $region33: #{attention_forward.2} parent=5 // pred_check
      %p883 = pneg %p882
    $region34: #{attention_forward.2} parent=5 // pred_check_branch
      %885 = sbr.rel (%p883) target = $region36
    $region35: #{attention_forward.2} parent=5 // pred_region
      %s886 = ssub.s32 %s8, 2
      // Predicated region
      $region37: #{attention_forward.2} parent=35 // pred_check
        %p887 = pneg %p100
      $region38: #{attention_forward.2} parent=35 // pred_check_branch
        %889 = sbr.rel (%p887) target = $region40
      $region39: #{attention_forward.2} parent=35 // pred_region
        %s890 = smul.u32 32, %s20
        %p891 = scmp.lt.s32.totalorder %s19, 1
        %s892 = scalar_select %p891, %s19, 1
        %p893 = scmp.lt.s32.totalorder %s890, 31
        %s894 = scalar_select %p893, %s890, 31
        %s895 = smul.addr %s894, 3
        %s896 = smul.addr %s892, 96
        %s897 = sadd.s32 %s895, %s896
        %s898 = smul.addr %s897, 4
        %s899 = scalar_lea.vmem %s2, %s898
      $region40: #{attention_forward.2} parent=35 // pred_fallthru
        _
    $region36: #{attention_forward.2} parent=5 // pred_fallthru
      _
  $region6: #{attention_forward.2} parent=0 // loop_footer
    %s12 = sadd.s32 1, %s8
  $region7: #{attention_forward.2} parent=0 // loop_footer_branch
    %7 = sbr.rel target = $region3
  $region8: #{attention_forward.2} parent=0 // loop_exit
    _

// kernel: attention_forward.3
$region0: #{attention_forward.3}
  #allocation0 [shape = 'u32[]', space=smem, size = 0x4, offset = 0x4, fixed_abs, tag = 'smem constant byte address 0x4 - core index']
  #allocation1 [shape = 'u32[72,128]{1,0:T(1,128)}', space=vmem, size = 0x9000, scoped, tag = 'internal scratch']
  %s0 = inlined_call_operand.vmem [shape: bf16[2,256,384], index: 0, kind: input, shape index: {}, may-alias: {0,1,2}]
  %s1 = inlined_call_operand.vmem [shape: bf16[2,256,384], index: 1, kind: input, shape index: {}, may-alias: {0,1,2}]
  %s2 = inlined_call_operand.vmem [shape: bf16[2,256,384], index: 2, kind: input, shape index: {}, may-alias: {0,1,2}]
  %s3 = inlined_call_operand.vmem [shape: bf16[128,128], index: 3, kind: input, shape index: {}]
  %s4 = inlined_call_operand.hbm [shape: f32[2,256,128], index: 4, kind: output, shape index: {}]
  %s5 = sld [smem:[#allocation0]]
  $region172: #{attention_forward.3} parent=0
    _
  %s7 = ssub.s32 1, %s5
  %s8 = scalar_select 0, %s7, %s5
  $region1: #{attention_forward.3} parent=0
    #allocation2 [shape = 'u8[131072]{0}', space=vmem, size = 0x20000, scoped, tag = 'input window, operand 0']
    #allocation3 [shape = 'u8[131072]{0}', space=vmem, size = 0x20000, scoped, tag = 'input window, operand 1']
    #allocation4 [shape = 'u8[131072]{0}', space=vmem, size = 0x20000, scoped, tag = 'input window, operand 2']
    #allocation5 [shape = 'u8[262144]{0}', space=vmem, size = 0x40000, scoped, tag = 'output window, operand 0']
    #allocation6 [shape = 's32[2]{0}', space=sflag, size = 0x8, scoped, tag = 'scoped memory for attention_forward.3']
    %9 = vsyncpa [#allocation6], 0
    %s10 = scalar_lea.sflag [#allocation6], 1
    %11 = vsyncpa %s10, 0
    loop: start=0, step=1, limit=4
    $region2: #{attention_forward.3} parent=1 // loop_pre_header
      _
    $region3: #{attention_forward.3} parent=1 // loop_header
      %s13 = sphi 0, %s17
      %p14 = scmp.ge.s32.totalorder %s13, 4
      %s20 = sphi 0, %s32
      %s21 = sphi 0, %s28
      %s22 = sphi 0, %s20
      %s23 = sphi 0, %s21
      %s24 = sphi 0, %s22
      %s25 = sphi 0, %s23
      %s37 = sphi 0, %s39
      %s40 = sphi 0, %s37
      %s41 = sphi 0, %s40
      %s57 = sphi 0, %s41
      %s63 = sphi 0, %s65
      %s66 = sphi 0, %s63
      %s67 = sphi 0, %s66
      %s83 = sphi 0, %s67
      %s89 = sphi 0, %s91
      %s92 = sphi 0, %s89
      %s93 = sphi 0, %s92
      %s109 = sphi 0, %s93
      %s113 = sphi 0, %s113
      %s115 = sphi 0, %s113
      %s116 = sphi 0, %s115
      %s130 = sphi 0, %s116
      %s138 = sphi 0, %s140
      %s141 = sphi 0, %s138
      %s142 = sphi 0, %s141
      %s158 = sphi 0, %s142
    $region4: #{attention_forward.3} parent=1 // loop_header_branch
      %16 = sbr.rel (%p14) target = $region8
    $region5: #{attention_forward.3} parent=1 // loop_body
      %s18 = ssub.s32 %s13, 1
      %s19 = ssub.s32 %s13, 2
      %s26 = sadd.s32 1, %s21
      %p27 = scmp.ge.s32.totalorder %s26, 1
      %s28 = scalar_select %p27, 0, %s26
      %s29 = sadd.s32 1, %s20
      %s30 = scalar_select %p27, %s29, %s20
      %p31 = scmp.ge.s32.totalorder %s30, 2
      %s32 = scalar_select %p31, 0, %s30
      %s33 = ssub.s32 %s20, %s32
      %s34 = ssub.s32 %s21, %s28
      %s35 = sor.u32 %s33, %s34
      %p36 = scmp.eq.s32.totalorder %s35, 0
      %s38 = sadd.s32 %s37, 1
      %s39 = scalar_select %p36, %s37, %s38
      %p42 = pneg %p36
      %p43 = scmp.eq.s32.totalorder %s13, 1
      %p44 = por %p42, %p43
      %p45 = scmp.ne.s32.totalorder %s37, %s40
      %p46 = scmp.eq.s32.totalorder %s13, 0
      %p47 = por %p45, %p46
      %p48 = scmp.ne.s32.totalorder %s37, %s40
      %p49 = scmp.eq.s32.totalorder %s18, 1
      %p50 = por %p48, %p49
      %p51 = scmp.ne.s32.totalorder %s40, %s41
      %p52 = scmp.eq.s32.totalorder %s18, 0
      %p53 = por %p51, %p52
      %p54 = scmp.ne.s32.totalorder %s40, %s41
      %p55 = scmp.eq.s32.totalorder %s19, 1
      %p56 = por %p54, %p55
      %p58 = scmp.ne.s32.totalorder %s41, %s57
      %p59 = scmp.eq.s32.totalorder %s19, 0
      %p60 = por %p58, %p59
      %s61 = ssub.s32 %s20, %s32
      %p62 = scmp.eq.s32.totalorder %s61, 0
      %s64 = sadd.s32 %s63, 1
      %s65 = scalar_select %p62, %s63, %s64
      %p68 = pneg %p62
      %p69 = scmp.eq.s32.totalorder %s13, 1
      %p70 = por %p68, %p69
      %p71 = scmp.ne.s32.totalorder %s63, %s66
      %p72 = scmp.eq.s32.totalorder %s13, 0
      %p73 = por %p71, %p72
      %p74 = scmp.ne.s32.totalorder %s63, %s66
      %p75 = scmp.eq.s32.totalorder %s18, 1
      %p76 = por %p74, %p75
      %p77 = scmp.ne.s32.totalorder %s66, %s67
      %p78 = scmp.eq.s32.totalorder %s18, 0
      %p79 = por %p77, %p78
      %p80 = scmp.ne.s32.totalorder %s66, %s67
      %p81 = scmp.eq.s32.totalorder %s19, 1
      %p82 = por %p80, %p81
      %p84 = scmp.ne.s32.totalorder %s67, %s83
      %p85 = scmp.eq.s32.totalorder %s19, 0
      %p86 = por %p84, %p85
      %s87 = ssub.s32 %s20, %s32
      %p88 = scmp.eq.s32.totalorder %s87, 0
      %s90 = sadd.s32 %s89, 1
      %s91 = scalar_select %p88, %s89, %s90
      %p94 = pneg %p88
      %p95 = scmp.eq.s32.totalorder %s13, 1
      %p96 = por %p94, %p95
      %p97 = scmp.ne.s32.totalorder %s89, %s92
      %p98 = scmp.eq.s32.totalorder %s13, 0
      %p99 = por %p97, %p98
      %p100 = scmp.ne.s32.totalorder %s89, %s92
      %p101 = scmp.eq.s32.totalorder %s18, 1
      %p102 = por %p100, %p101
      %p103 = scmp.ne.s32.totalorder %s92, %s93
      %p104 = scmp.eq.s32.totalorder %s18, 0
      %p105 = por %p103, %p104
      %p106 = scmp.ne.s32.totalorder %s92, %s93
      %p107 = scmp.eq.s32.totalorder %s19, 1
      %p108 = por %p106, %p107
      %p110 = scmp.ne.s32.totalorder %s93, %s109
      %p111 = scmp.eq.s32.totalorder %s19, 0
      %p112 = por %p110, %p111
      %s114 = sadd.s32 %s113, 1
      %p117 = scmp.eq.s32.totalorder %s13, 1
      %p118 = scmp.ne.s32.totalorder %s113, %s115
      %p119 = scmp.eq.s32.totalorder %s13, 0
      %p120 = por %p118, %p119
      %p121 = scmp.ne.s32.totalorder %s113, %s115
      %p122 = scmp.eq.s32.totalorder %s18, 1
      %p123 = por %p121, %p122
      %p124 = scmp.ne.s32.totalorder %s115, %s116
      %p125 = scmp.eq.s32.totalorder %s18, 0
      %p126 = por %p124, %p125
      %p127 = scmp.ne.s32.totalorder %s115, %s116
      %p128 = scmp.eq.s32.totalorder %s19, 1
      %p129 = por %p127, %p128
      %p131 = scmp.ne.s32.totalorder %s116, %s130
      %p132 = scmp.eq.s32.totalorder %s19, 0
      %p133 = por %p131, %p132
      %s134 = ssub.s32 %s20, %s32
      %s135 = ssub.s32 %s21, %s28
      %s136 = sor.u32 %s134, %s135
      %p137 = scmp.eq.s32.totalorder %s136, 0
      %s139 = sadd.s32 %s138, 1
      %s140 = scalar_select %p137, %s138, %s139
      %p143 = pneg %p137
      %p144 = scmp.eq.s32.totalorder %s13, 1
      %p145 = por %p143, %p144
      %p146 = scmp.ne.s32.totalorder %s138, %s141
      %p147 = scmp.eq.s32.totalorder %s13, 0
      %p148 = por %p146, %p147
      %p149 = scmp.ne.s32.totalorder %s138, %s141
      %p150 = scmp.eq.s32.totalorder %s18, 1
      %p151 = por %p149, %p150
      %p152 = scmp.ne.s32.totalorder %s141, %s142
      %p153 = scmp.eq.s32.totalorder %s18, 0
      %p154 = por %p152, %p153
      %p155 = scmp.ne.s32.totalorder %s141, %s142
      %p156 = scmp.eq.s32.totalorder %s19, 1
      %p157 = por %p155, %p156
      %p159 = scmp.ne.s32.totalorder %s142, %s158
      %p160 = scmp.eq.s32.totalorder %s19, 0
      %p161 = por %p159, %p160
      %p162 = scmp.le.s32.totalorder 1, %s13
      %p163 = scmp.lt.s32.totalorder %s13, 3
      %p164 = pnand %p162, %p163
      %p165 = pneg %p164
      // Predicated region
      $region9: #{attention_forward.3} parent=5 // pred_check
        _
      $region10: #{attention_forward.3} parent=5 // pred_check_branch
        %167 = sbr.rel (%p164) target = $region12
      $region11: #{attention_forward.3} parent=5 // pred_region
        %s168 = ssub.s32 %s13, 1
        // Predicated region
        $region13: #{attention_forward.3} parent=11 // pred_check
          %p169 = pneg %p126
        $region14: #{attention_forward.3} parent=11 // pred_check_branch
          %171 = sbr.rel (%p169) target = $region16
        $region15: #{attention_forward.3} parent=11 // pred_region
          _
        $region16: #{attention_forward.3} parent=11 // pred_fallthru
          _
      $region12: #{attention_forward.3} parent=5 // pred_fallthru
        _
      %p172 = scmp.lt.s32.totalorder %s13, 2
      // Predicated region
      $region17: #{attention_forward.3} parent=5 // pred_check
        %p173 = pneg %p172
      $region18: #{attention_forward.3} parent=5 // pred_check_branch
        %175 = sbr.rel (%p173) target = $region20
      $region19: #{attention_forward.3} parent=5 // pred_region
        // Predicated region
        $region21: #{attention_forward.3} parent=19 // pred_check
          %p176 = pneg %p47
        $region22: #{attention_forward.3} parent=19 // pred_check_branch
          %178 = sbr.rel (%p176) target = $region24
        $region23: #{attention_forward.3} parent=19 // pred_region
          %s179 = sand.u32 %s37, 1
          %s180 = sand.u32 %s37, 1
          %s181 = smul.addr %s180, 128
          %s182 = scalar_lea.vmem [#allocation2], %s181
          %s183 = smul.u32 32, %s21
          %s184 = smul.addr %s183, 3
          %s185 = smul.addr %s20, 96
          %s186 = sadd.s32 %s184, %s185
          %s187 = smul.addr %s186, 4
          %s188 = scalar_lea.vmem %s0, %s187
          // Predicated region
          $region25: #{attention_forward.3} parent=23 // pred_check
            _
          $region26: #{attention_forward.3} parent=23 // pred_check_branch
            %190 = sbr.rel (0) target = $region28
          $region27: #{attention_forward.3} parent=23 // pred_region
            // Predicated region
            $region29: #{attention_forward.3} parent=27 // pred_check
              _
            $region30: #{attention_forward.3} parent=27 // pred_check_branch
              %192 = sbr.rel target = $region32
            $region31: #{attention_forward.3} parent=27 // pred_region
              // Predicated region
              $region44: #{attention_forward.3} parent=31 // pred_check
                _
              $region45: #{attention_forward.3} parent=31 // pred_check_branch
                %270 = sbr.rel (0) target = $region47
              $region46: #{attention_forward.3} parent=31 // pred_region
                loop: start=0, step=1, limit=1
                $region48: #{attention_forward.3} parent=46 // loop_pre_header
                  _
                $region49: #{attention_forward.3} parent=46 // loop_header
                  %s272 = sphi 0, %s276
                  %p273 = scmp.ge.s32.totalorder %s272, 1
                  %s277 = sphi %s188, %s188
                  %s278 = sphi %s182, %s182
                $region50: #{attention_forward.3} parent=46 // loop_header_branch
                  %275 = sbr.rel (%p273) target = $region54
                $region51: #{attention_forward.3} parent=46 // loop_body
                  _
                $region52: #{attention_forward.3} parent=46 // loop_footer
                  %s276 = sadd.s32 1, %s272
                $region53: #{attention_forward.3} parent=46 // loop_footer_branch
                  %271 = sbr.rel target = $region49
                $region54: #{attention_forward.3} parent=46 // loop_exit
                  _
                %s280 = ssub.s32 16, 1
                loop: start=0, step=1, limit=1
                $region55: #{attention_forward.3} parent=46 // loop_pre_header
                  _
                $region56: #{attention_forward.3} parent=46 // loop_header
                  %s282 = sphi 0, %s286
                  %p283 = scmp.ge.s32.totalorder %s282, 1
                  %s287 = sphi %s188, %s188
                  %s288 = sphi %s182, %s182
                $region57: #{attention_forward.3} parent=46 // loop_header_branch
                  %285 = sbr.rel (%p283) target = $region61
                $region58: #{attention_forward.3} parent=46 // loop_body
                  %v289 = vld [vmem:[%s287] sm:%s280]
                  %290 = vst [vmem:[%s288] sm:%s280] %v289
                  %v291 = vld [vmem:[%s287 + $0xc] sm:%s280]
                  %292 = vst [vmem:[%s288 + $0x4] sm:%s280] %v291
                  %v293 = vld [vmem:[%s287 + $0x18] sm:%s280]
                  %294 = vst [vmem:[%s288 + $0x8] sm:%s280] %v293
                  %v295 = vld [vmem:[%s287 + $0x24] sm:%s280]
                  %296 = vst [vmem:[%s288 + $0xc] sm:%s280] %v295
                  %v297 = vld [vmem:[%s287 + $0x30] sm:%s280]
                  %298 = vst [vmem:[%s288 + $0x10] sm:%s280] %v297
                  %v299 = vld [vmem:[%s287 + $0x3c] sm:%s280]
                  %300 = vst [vmem:[%s288 + $0x14] sm:%s280] %v299
                  %v301 = vld [vmem:[%s287 + $0x48] sm:%s280]
                  %302 = vst [vmem:[%s288 + $0x18] sm:%s280] %v301
                  %v303 = vld [vmem:[%s287 + $0x54] sm:%s280]
                  %304 = vst [vmem:[%s288 + $0x1c] sm:%s280] %v303
                  %v305 = vld [vmem:[%s287 + $0x60] sm:%s280]
                  %306 = vst [vmem:[%s288 + $0x20] sm:%s280] %v305
                  %v307 = vld [vmem:[%s287 + $0x6c] sm:%s280]
                  %308 = vst [vmem:[%s288 + $0x24] sm:%s280] %v307
                  %v309 = vld [vmem:[%s287 + $0x78] sm:%s280]
                  %310 = vst [vmem:[%s288 + $0x28] sm:%s280] %v309
                  %v311 = vld [vmem:[%s287 + $0x84] sm:%s280]
                  %312 = vst [vmem:[%s288 + $0x2c] sm:%s280] %v311
                  %v313 = vld [vmem:[%s287 + $0x90] sm:%s280]
                  %314 = vst [vmem:[%s288 + $0x30] sm:%s280] %v313
                  %v315 = vld [vmem:[%s287 + $0x9c] sm:%s280]
                  %316 = vst [vmem:[%s288 + $0x34] sm:%s280] %v315
                  %v317 = vld [vmem:[%s287 + $0xa8] sm:%s280]
                  %318 = vst [vmem:[%s288 + $0x38] sm:%s280] %v317
                  %v319 = vld [vmem:[%s287 + $0xb4] sm:%s280]
                  %320 = vst [vmem:[%s288 + $0x3c] sm:%s280] %v319
                  %v321 = vld [vmem:[%s287 + $0xc0] sm:%s280]
                  %322 = vst [vmem:[%s288 + $0x40] sm:%s280] %v321
                  %v323 = vld [vmem:[%s287 + $0xcc] sm:%s280]
                  %324 = vst [vmem:[%s288 + $0x44] sm:%s280] %v323
                  %v325 = vld [vmem:[%s287 + $0xd8] sm:%s280]
                  %326 = vst [vmem:[%s288 + $0x48] sm:%s280] %v325
                  %v327 = vld [vmem:[%s287 + $0xe4] sm:%s280]
                  %328 = vst [vmem:[%s288 + $0x4c] sm:%s280] %v327
                  %v329 = vld [vmem:[%s287 + $0xf0] sm:%s280]
                  %330 = vst [vmem:[%s288 + $0x50] sm:%s280] %v329
                  %v331 = vld [vmem:[%s287 + $0xfc] sm:%s280]
                  %332 = vst [vmem:[%s288 + $0x54] sm:%s280] %v331
                  %v333 = vld [vmem:[%s287 + $0x108] sm:%s280]
                  %334 = vst [vmem:[%s288 + $0x58] sm:%s280] %v333
                  %v335 = vld [vmem:[%s287 + $0x114] sm:%s280]
                  %336 = vst [vmem:[%s288 + $0x5c] sm:%s280] %v335
                  %v337 = vld [vmem:[%s287 + $0x120] sm:%s280]
                  %338 = vst [vmem:[%s288 + $0x60] sm:%s280] %v337
                  %v339 = vld [vmem:[%s287 + $0x12c] sm:%s280]
                  %340 = vst [vmem:[%s288 + $0x64] sm:%s280] %v339
                  %v341 = vld [vmem:[%s287 + $0x138] sm:%s280]
                  %342 = vst [vmem:[%s288 + $0x68] sm:%s280] %v341
                  %v343 = vld [vmem:[%s287 + $0x144] sm:%s280]
                  %344 = vst [vmem:[%s288 + $0x6c] sm:%s280] %v343
                  %v345 = vld [vmem:[%s287 + $0x150] sm:%s280]
                  %346 = vst [vmem:[%s288 + $0x70] sm:%s280] %v345
                  %v347 = vld [vmem:[%s287 + $0x15c] sm:%s280]
                  %348 = vst [vmem:[%s288 + $0x74] sm:%s280] %v347
                  %v349 = vld [vmem:[%s287 + $0x168] sm:%s280]
                  %350 = vst [vmem:[%s288 + $0x78] sm:%s280] %v349
                  %v351 = vld [vmem:[%s287 + $0x174] sm:%s280]
                  %352 = vst [vmem:[%s288 + $0x7c] sm:%s280] %v351
                $region59: #{attention_forward.3} parent=46 // loop_footer
                  %s286 = sadd.s32 1, %s282
                $region60: #{attention_forward.3} parent=46 // loop_footer_branch
                  %281 = sbr.rel target = $region56
                $region61: #{attention_forward.3} parent=46 // loop_exit
                  _
              $region47: #{attention_forward.3} parent=31 // pred_fallthru
                _
            $region32: #{attention_forward.3} parent=27 // pred_fallthru
              _
            // Predicated region
            $region33: #{attention_forward.3} parent=27 // pred_check
              _
            $region34: #{attention_forward.3} parent=27 // pred_check_branch
              %194 = sbr.rel (0) target = $region36
            $region35: #{attention_forward.3} parent=27 // pred_region
              %s196 = ssub.s32 16, 1
              loop: start=0, step=1, limit=1
              $region37: #{attention_forward.3} parent=35 // loop_pre_header
                _
              $region38: #{attention_forward.3} parent=35 // loop_header
                %s198 = sphi 0, %s202
                %p199 = scmp.ge.s32.totalorder %s198, 1
                %s203 = sphi %s188, %s188
                %s204 = sphi %s182, %s182
              $region39: #{attention_forward.3} parent=35 // loop_header_branch
                %201 = sbr.rel (%p199) target = $region43
              $region40: #{attention_forward.3} parent=35 // loop_body
                %v205 = vld [vmem:[%s203] sm:%s196]
                %206 = vst [vmem:[%s204] sm:%s196] %v205
                %v207 = vld [vmem:[%s203 + $0xc] sm:%s196]
                %208 = vst [vmem:[%s204 + $0x4] sm:%s196] %v207
                %v209 = vld [vmem:[%s203 + $0x18] sm:%s196]
                %210 = vst [vmem:[%s204 + $0x8] sm:%s196] %v209
                %v211 = vld [vmem:[%s203 + $0x24] sm:%s196]
                %212 = vst [vmem:[%s204 + $0xc] sm:%s196] %v211
                %v213 = vld [vmem:[%s203 + $0x30] sm:%s196]
                %214 = vst [vmem:[%s204 + $0x10] sm:%s196] %v213
                %v215 = vld [vmem:[%s203 + $0x3c] sm:%s196]
                %216 = vst [vmem:[%s204 + $0x14] sm:%s196] %v215
                %v217 = vld [vmem:[%s203 + $0x48] sm:%s196]
                %218 = vst [vmem:[%s204 + $0x18] sm:%s196] %v217
                %v219 = vld [vmem:[%s203 + $0x54] sm:%s196]
                %220 = vst [vmem:[%s204 + $0x1c] sm:%s196] %v219
                %v221 = vld [vmem:[%s203 + $0x60] sm:%s196]
                %222 = vst [vmem:[%s204 + $0x20] sm:%s196] %v221
                %v223 = vld [vmem:[%s203 + $0x6c] sm:%s196]
                %224 = vst [vmem:[%s204 + $0x24] sm:%s196] %v223
                %v225 = vld [vmem:[%s203 + $0x78] sm:%s196]
                %226 = vst [vmem:[%s204 + $0x28] sm:%s196] %v225
                %v227 = vld [vmem:[%s203 + $0x84] sm:%s196]
                %228 = vst [vmem:[%s204 + $0x2c] sm:%s196] %v227
                %v229 = vld [vmem:[%s203 + $0x90] sm:%s196]
                %230 = vst [vmem:[%s204 + $0x30] sm:%s196] %v229
                %v231 = vld [vmem:[%s203 + $0x9c] sm:%s196]
                %232 = vst [vmem:[%s204 + $0x34] sm:%s196] %v231
                %v233 = vld [vmem:[%s203 + $0xa8] sm:%s196]
                %234 = vst [vmem:[%s204 + $0x38] sm:%s196] %v233
                %v235 = vld [vmem:[%s203 + $0xb4] sm:%s196]
                %236 = vst [vmem:[%s204 + $0x3c] sm:%s196] %v235
                %v237 = vld [vmem:[%s203 + $0xc0] sm:%s196]
                %238 = vst [vmem:[%s204 + $0x40] sm:%s196] %v237
                %v239 = vld [vmem:[%s203 + $0xcc] sm:%s196]
                %240 = vst [vmem:[%s204 + $0x44] sm:%s196] %v239
                %v241 = vld [vmem:[%s203 + $0xd8] sm:%s196]
                %242 = vst [vmem:[%s204 + $0x48] sm:%s196] %v241
                %v243 = vld [vmem:[%s203 + $0xe4] sm:%s196]
                %244 = vst [vmem:[%s204 + $0x4c] sm:%s196] %v243
                %v245 = vld [vmem:[%s203 + $0xf0] sm:%s196]
                %246 = vst [vmem:[%s204 + $0x50] sm:%s196] %v245
                %v247 = vld [vmem:[%s203 + $0xfc] sm:%s196]
                %248 = vst [vmem:[%s204 + $0x54] sm:%s196] %v247
                %v249 = vld [vmem:[%s203 + $0x108] sm:%s196]
                %250 = vst [vmem:[%s204 + $0x58] sm:%s196] %v249
                %v251 = vld [vmem:[%s203 + $0x114] sm:%s196]
                %252 = vst [vmem:[%s204 + $0x5c] sm:%s196] %v251
                %v253 = vld [vmem:[%s203 + $0x120] sm:%s196]
                %254 = vst [vmem:[%s204 + $0x60] sm:%s196] %v253
                %v255 = vld [vmem:[%s203 + $0x12c] sm:%s196]
                %256 = vst [vmem:[%s204 + $0x64] sm:%s196] %v255
                %v257 = vld [vmem:[%s203 + $0x138] sm:%s196]
                %258 = vst [vmem:[%s204 + $0x68] sm:%s196] %v257
                %v259 = vld [vmem:[%s203 + $0x144] sm:%s196]
                %260 = vst [vmem:[%s204 + $0x6c] sm:%s196] %v259
                %v261 = vld [vmem:[%s203 + $0x150] sm:%s196]
                %262 = vst [vmem:[%s204 + $0x70] sm:%s196] %v261
                %v263 = vld [vmem:[%s203 + $0x15c] sm:%s196]
                %264 = vst [vmem:[%s204 + $0x74] sm:%s196] %v263
                %v265 = vld [vmem:[%s203 + $0x168] sm:%s196]
                %266 = vst [vmem:[%s204 + $0x78] sm:%s196] %v265
                %v267 = vld [vmem:[%s203 + $0x174] sm:%s196]
                %268 = vst [vmem:[%s204 + $0x7c] sm:%s196] %v267
              $region41: #{attention_forward.3} parent=35 // loop_footer
                %s202 = sadd.s32 1, %s198
              $region42: #{attention_forward.3} parent=35 // loop_footer_branch
                %197 = sbr.rel target = $region38
              $region43: #{attention_forward.3} parent=35 // loop_exit
                _
            $region36: #{attention_forward.3} parent=27 // pred_fallthru
              _
          $region28: #{attention_forward.3} parent=23 // pred_fallthru
            _
          %353 = vnop
        $region24: #{attention_forward.3} parent=19 // pred_fallthru
          _
        // Predicated region
        $region62: #{attention_forward.3} parent=19 // pred_check
          %p354 = pneg %p73
        $region63: #{attention_forward.3} parent=19 // pred_check_branch
          %356 = sbr.rel (%p354) target = $region65
        $region64: #{attention_forward.3} parent=19 // pred_region
          %s357 = sand.u32 %s63, 1
          %s358 = sand.u32 %s63, 1
          %s359 = smul.addr %s358, 128
          %s360 = scalar_lea.vmem [#allocation3], %s359
          %s361 = smul.addr %s20, 96
          %s362 = sadd.s32 1, %s361
          %s363 = smul.addr %s362, 4
          %s364 = scalar_lea.vmem %s1, %s363
          // Predicated region
          $region66: #{attention_forward.3} parent=64 // pred_check
            _
          $region67: #{attention_forward.3} parent=64 // pred_check_branch
            %366 = sbr.rel (0) target = $region69
          $region68: #{attention_forward.3} parent=64 // pred_region
            // Predicated region
            $region70: #{attention_forward.3} parent=68 // pred_check
              _
            $region71: #{attention_forward.3} parent=68 // pred_check_branch
              %368 = sbr.rel target = $region73
            $region72: #{attention_forward.3} parent=68 // pred_region
              // Predicated region
              $region85: #{attention_forward.3} parent=72 // pred_check
                _
              $region86: #{attention_forward.3} parent=72 // pred_check_branch
                %446 = sbr.rel (0) target = $region88
              $region87: #{attention_forward.3} parent=72 // pred_region
                loop: start=0, step=1, limit=1
                $region89: #{attention_forward.3} parent=87 // loop_pre_header
                  _
                $region90: #{attention_forward.3} parent=87 // loop_header
                  %s448 = sphi 0, %s452
                  %p449 = scmp.ge.s32.totalorder %s448, 1
                  %s453 = sphi %s364, %s364
                  %s454 = sphi %s360, %s360
                $region91: #{attention_forward.3} parent=87 // loop_header_branch
                  %451 = sbr.rel (%p449) target = $region95
                $region92: #{attention_forward.3} parent=87 // loop_body
                  _
                $region93: #{attention_forward.3} parent=87 // loop_footer
                  %s452 = sadd.s32 1, %s448
                $region94: #{attention_forward.3} parent=87 // loop_footer_branch
                  %447 = sbr.rel target = $region90
                $region95: #{attention_forward.3} parent=87 // loop_exit
                  _
                %s456 = ssub.s32 16, 1
                loop: start=0, step=1, limit=1
                $region96: #{attention_forward.3} parent=87 // loop_pre_header
                  _
                $region97: #{attention_forward.3} parent=87 // loop_header
                  %s458 = sphi 0, %s462
                  %p459 = scmp.ge.s32.totalorder %s458, 1
                  %s463 = sphi %s364, %s364
                  %s464 = sphi %s360, %s360
                $region98: #{attention_forward.3} parent=87 // loop_header_branch
                  %461 = sbr.rel (%p459) target = $region102
                $region99: #{attention_forward.3} parent=87 // loop_body
                  %v465 = vld [vmem:[%s463] sm:%s456]
                  %466 = vst [vmem:[%s464] sm:%s456] %v465
                  %v467 = vld [vmem:[%s463 + $0xc] sm:%s456]
                  %468 = vst [vmem:[%s464 + $0x4] sm:%s456] %v467
                  %v469 = vld [vmem:[%s463 + $0x18] sm:%s456]
                  %470 = vst [vmem:[%s464 + $0x8] sm:%s456] %v469
                  %v471 = vld [vmem:[%s463 + $0x24] sm:%s456]
                  %472 = vst [vmem:[%s464 + $0xc] sm:%s456] %v471
                  %v473 = vld [vmem:[%s463 + $0x30] sm:%s456]
                  %474 = vst [vmem:[%s464 + $0x10] sm:%s456] %v473
                  %v475 = vld [vmem:[%s463 + $0x3c] sm:%s456]
                  %476 = vst [vmem:[%s464 + $0x14] sm:%s456] %v475
                  %v477 = vld [vmem:[%s463 + $0x48] sm:%s456]
                  %478 = vst [vmem:[%s464 + $0x18] sm:%s456] %v477
                  %v479 = vld [vmem:[%s463 + $0x54] sm:%s456]
                  %480 = vst [vmem:[%s464 + $0x1c] sm:%s456] %v479
                  %v481 = vld [vmem:[%s463 + $0x60] sm:%s456]
                  %482 = vst [vmem:[%s464 + $0x20] sm:%s456] %v481
                  %v483 = vld [vmem:[%s463 + $0x6c] sm:%s456]
                  %484 = vst [vmem:[%s464 + $0x24] sm:%s456] %v483
                  %v485 = vld [vmem:[%s463 + $0x78] sm:%s456]
                  %486 = vst [vmem:[%s464 + $0x28] sm:%s456] %v485
                  %v487 = vld [vmem:[%s463 + $0x84] sm:%s456]
                  %488 = vst [vmem:[%s464 + $0x2c] sm:%s456] %v487
                  %v489 = vld [vmem:[%s463 + $0x90] sm:%s456]
                  %490 = vst [vmem:[%s464 + $0x30] sm:%s456] %v489
                  %v491 = vld [vmem:[%s463 + $0x9c] sm:%s456]
                  %492 = vst [vmem:[%s464 + $0x34] sm:%s456] %v491
                  %v493 = vld [vmem:[%s463 + $0xa8] sm:%s456]
                  %494 = vst [vmem:[%s464 + $0x38] sm:%s456] %v493
                  %v495 = vld [vmem:[%s463 + $0xb4] sm:%s456]
                  %496 = vst [vmem:[%s464 + $0x3c] sm:%s456] %v495
                  %v497 = vld [vmem:[%s463 + $0xc0] sm:%s456]
                  %498 = vst [vmem:[%s464 + $0x40] sm:%s456] %v497
                  %v499 = vld [vmem:[%s463 + $0xcc] sm:%s456]
                  %500 = vst [vmem:[%s464 + $0x44] sm:%s456] %v499
                  %v501 = vld [vmem:[%s463 + $0xd8] sm:%s456]
                  %502 = vst [vmem:[%s464 + $0x48] sm:%s456] %v501
                  %v503 = vld [vmem:[%s463 + $0xe4] sm:%s456]
                  %504 = vst [vmem:[%s464 + $0x4c] sm:%s456] %v503
                  %v505 = vld [vmem:[%s463 + $0xf0] sm:%s456]
                  %506 = vst [vmem:[%s464 + $0x50] sm:%s456] %v505
                  %v507 = vld [vmem:[%s463 + $0xfc] sm:%s456]
                  %508 = vst [vmem:[%s464 + $0x54] sm:%s456] %v507
                  %v509 = vld [vmem:[%s463 + $0x108] sm:%s456]
                  %510 = vst [vmem:[%s464 + $0x58] sm:%s456] %v509
                  %v511 = vld [vmem:[%s463 + $0x114] sm:%s456]
                  %512 = vst [vmem:[%s464 + $0x5c] sm:%s456] %v511
                  %v513 = vld [vmem:[%s463 + $0x120] sm:%s456]
                  %514 = vst [vmem:[%s464 + $0x60] sm:%s456] %v513
                  %v515 = vld [vmem:[%s463 + $0x12c] sm:%s456]
                  %516 = vst [vmem:[%s464 + $0x64] sm:%s456] %v515
                  %v517 = vld [vmem:[%s463 + $0x138] sm:%s456]
                  %518 = vst [vmem:[%s464 + $0x68] sm:%s456] %v517
                  %v519 = vld [vmem:[%s463 + $0x144] sm:%s456]
                  %520 = vst [vmem:[%s464 + $0x6c] sm:%s456] %v519
                  %v521 = vld [vmem:[%s463 + $0x150] sm:%s456]
                  %522 = vst [vmem:[%s464 + $0x70] sm:%s456] %v521
                  %v523 = vld [vmem:[%s463 + $0x15c] sm:%s456]
                  %524 = vst [vmem:[%s464 + $0x74] sm:%s456] %v523
                  %v525 = vld [vmem:[%s463 + $0x168] sm:%s456]
                  %526 = vst [vmem:[%s464 + $0x78] sm:%s456] %v525
                  %v527 = vld [vmem:[%s463 + $0x174] sm:%s456]
                  %528 = vst [vmem:[%s464 + $0x7c] sm:%s456] %v527
                $region100: #{attention_forward.3} parent=87 // loop_footer
                  %s462 = sadd.s32 1, %s458
                $region101: #{attention_forward.3} parent=87 // loop_footer_branch
                  %457 = sbr.rel target = $region97
                $region102: #{attention_forward.3} parent=87 // loop_exit
                  _
              $region88: #{attention_forward.3} parent=72 // pred_fallthru
                _
            $region73: #{attention_forward.3} parent=68 // pred_fallthru
              _
            // Predicated region
            $region74: #{attention_forward.3} parent=68 // pred_check
              _
            $region75: #{attention_forward.3} parent=68 // pred_check_branch
              %370 = sbr.rel (0) target = $region77
            $region76: #{attention_forward.3} parent=68 // pred_region
              %s372 = ssub.s32 16, 1
              loop: start=0, step=1, limit=1
              $region78: #{attention_forward.3} parent=76 // loop_pre_header
                _
              $region79: #{attention_forward.3} parent=76 // loop_header
                %s374 = sphi 0, %s378
                %p375 = scmp.ge.s32.totalorder %s374, 1
                %s379 = sphi %s364, %s364
                %s380 = sphi %s360, %s360
              $region80: #{attention_forward.3} parent=76 // loop_header_branch
                %377 = sbr.rel (%p375) target = $region84
              $region81: #{attention_forward.3} parent=76 // loop_body
                %v381 = vld [vmem:[%s379] sm:%s372]
                %382 = vst [vmem:[%s380] sm:%s372] %v381
                %v383 = vld [vmem:[%s379 + $0xc] sm:%s372]
                %384 = vst [vmem:[%s380 + $0x4] sm:%s372] %v383
                %v385 = vld [vmem:[%s379 + $0x18] sm:%s372]
                %386 = vst [vmem:[%s380 + $0x8] sm:%s372] %v385
                %v387 = vld [vmem:[%s379 + $0x24] sm:%s372]
                %388 = vst [vmem:[%s380 + $0xc] sm:%s372] %v387
                %v389 = vld [vmem:[%s379 + $0x30] sm:%s372]
                %390 = vst [vmem:[%s380 + $0x10] sm:%s372] %v389
                %v391 = vld [vmem:[%s379 + $0x3c] sm:%s372]
                %392 = vst [vmem:[%s380 + $0x14] sm:%s372] %v391
                %v393 = vld [vmem:[%s379 + $0x48] sm:%s372]
                %394 = vst [vmem:[%s380 + $0x18] sm:%s372] %v393
                %v395 = vld [vmem:[%s379 + $0x54] sm:%s372]
                %396 = vst [vmem:[%s380 + $0x1c] sm:%s372] %v395
                %v397 = vld [vmem:[%s379 + $0x60] sm:%s372]
                %398 = vst [vmem:[%s380 + $0x20] sm:%s372] %v397
                %v399 = vld [vmem:[%s379 + $0x6c] sm:%s372]
                %400 = vst [vmem:[%s380 + $0x24] sm:%s372] %v399
                %v401 = vld [vmem:[%s379 + $0x78] sm:%s372]
                %402 = vst [vmem:[%s380 + $0x28] sm:%s372] %v401
                %v403 = vld [vmem:[%s379 + $0x84] sm:%s372]
                %404 = vst [vmem:[%s380 + $0x2c] sm:%s372] %v403
                %v405 = vld [vmem:[%s379 + $0x90] sm:%s372]
                %406 = vst [vmem:[%s380 + $0x30] sm:%s372] %v405
                %v407 = vld [vmem:[%s379 + $0x9c] sm:%s372]
                %408 = vst [vmem:[%s380 + $0x34] sm:%s372] %v407
                %v409 = vld [vmem:[%s379 + $0xa8] sm:%s372]
                %410 = vst [vmem:[%s380 + $0x38] sm:%s372] %v409
                %v411 = vld [vmem:[%s379 + $0xb4] sm:%s372]
                %412 = vst [vmem:[%s380 + $0x3c] sm:%s372] %v411
                %v413 = vld [vmem:[%s379 + $0xc0] sm:%s372]
                %414 = vst [vmem:[%s380 + $0x40] sm:%s372] %v413
                %v415 = vld [vmem:[%s379 + $0xcc] sm:%s372]
                %416 = vst [vmem:[%s380 + $0x44] sm:%s372] %v415
                %v417 = vld [vmem:[%s379 + $0xd8] sm:%s372]
                %418 = vst [vmem:[%s380 + $0x48] sm:%s372] %v417
                %v419 = vld [vmem:[%s379 + $0xe4] sm:%s372]
                %420 = vst [vmem:[%s380 + $0x4c] sm:%s372] %v419
                %v421 = vld [vmem:[%s379 + $0xf0] sm:%s372]
                %422 = vst [vmem:[%s380 + $0x50] sm:%s372] %v421
                %v423 = vld [vmem:[%s379 + $0xfc] sm:%s372]
                %424 = vst [vmem:[%s380 + $0x54] sm:%s372] %v423
                %v425 = vld [vmem:[%s379 + $0x108] sm:%s372]
                %426 = vst [vmem:[%s380 + $0x58] sm:%s372] %v425
                %v427 = vld [vmem:[%s379 + $0x114] sm:%s372]
                %428 = vst [vmem:[%s380 + $0x5c] sm:%s372] %v427
                %v429 = vld [vmem:[%s379 + $0x120] sm:%s372]
                %430 = vst [vmem:[%s380 + $0x60] sm:%s372] %v429
                %v431 = vld [vmem:[%s379 + $0x12c] sm:%s372]
                %432 = vst [vmem:[%s380 + $0x64] sm:%s372] %v431
                %v433 = vld [vmem:[%s379 + $0x138] sm:%s372]
                %434 = vst [vmem:[%s380 + $0x68] sm:%s372] %v433
                %v435 = vld [vmem:[%s379 + $0x144] sm:%s372]
                %436 = vst [vmem:[%s380 + $0x6c] sm:%s372] %v435
                %v437 = vld [vmem:[%s379 + $0x150] sm:%s372]
                %438 = vst [vmem:[%s380 + $0x70] sm:%s372] %v437
                %v439 = vld [vmem:[%s379 + $0x15c] sm:%s372]
                %440 = vst [vmem:[%s380 + $0x74] sm:%s372] %v439
                %v441 = vld [vmem:[%s379 + $0x168] sm:%s372]
                %442 = vst [vmem:[%s380 + $0x78] sm:%s372] %v441
                %v443 = vld [vmem:[%s379 + $0x174] sm:%s372]
                %444 = vst [vmem:[%s380 + $0x7c] sm:%s372] %v443
              $region82: #{attention_forward.3} parent=76 // loop_footer
                %s378 = sadd.s32 1, %s374
              $region83: #{attention_forward.3} parent=76 // loop_footer_branch
                %373 = sbr.rel target = $region79
              $region84: #{attention_forward.3} parent=76 // loop_exit
                _
            $region77: #{attention_forward.3} parent=68 // pred_fallthru
              _
          $region69: #{attention_forward.3} parent=64 // pred_fallthru
            _
          %529 = vnop
        $region65: #{attention_forward.3} parent=19 // pred_fallthru
          _
        // Predicated region
        $region103: #{attention_forward.3} parent=19 // pred_check
          %p530 = pneg %p99
        $region104: #{attention_forward.3} parent=19 // pred_check_branch
          %532 = sbr.rel (%p530) target = $region106
        $region105: #{attention_forward.3} parent=19 // pred_region
          %s533 = sand.u32 %s89, 1
          %s534 = sand.u32 %s89, 1
          %s535 = smul.addr %s534, 128
          %s536 = scalar_lea.vmem [#allocation4], %s535
          %s537 = smul.addr %s20, 96
          %s538 = sadd.s32 2, %s537
          %s539 = smul.addr %s538, 4
          %s540 = scalar_lea.vmem %s2, %s539
          // Predicated region
          $region107: #{attention_forward.3} parent=105 // pred_check
            _
          $region108: #{attention_forward.3} parent=105 // pred_check_branch
            %542 = sbr.rel (0) target = $region110
          $region109: #{attention_forward.3} parent=105 // pred_region
            // Predicated region
            $region111: #{attention_forward.3} parent=109 // pred_check
              _
            $region112: #{attention_forward.3} parent=109 // pred_check_branch
              %544 = sbr.rel target = $region114
            $region113: #{attention_forward.3} parent=109 // pred_region
              // Predicated region
              $region126: #{attention_forward.3} parent=113 // pred_check
                _
              $region127: #{attention_forward.3} parent=113 // pred_check_branch
                %622 = sbr.rel (0) target = $region129
              $region128: #{attention_forward.3} parent=113 // pred_region
                loop: start=0, step=1, limit=1
                $region130: #{attention_forward.3} parent=128 // loop_pre_header
                  _
                $region131: #{attention_forward.3} parent=128 // loop_header
                  %s624 = sphi 0, %s628
                  %p625 = scmp.ge.s32.totalorder %s624, 1
                  %s629 = sphi %s540, %s540
                  %s630 = sphi %s536, %s536
                $region132: #{attention_forward.3} parent=128 // loop_header_branch
                  %627 = sbr.rel (%p625) target = $region136
                $region133: #{attention_forward.3} parent=128 // loop_body
                  _
                $region134: #{attention_forward.3} parent=128 // loop_footer
                  %s628 = sadd.s32 1, %s624
                $region135: #{attention_forward.3} parent=128 // loop_footer_branch
                  %623 = sbr.rel target = $region131
                $region136: #{attention_forward.3} parent=128 // loop_exit
                  _
                %s632 = ssub.s32 16, 1
                loop: start=0, step=1, limit=1
                $region137: #{attention_forward.3} parent=128 // loop_pre_header
                  _
                $region138: #{attention_forward.3} parent=128 // loop_header
                  %s634 = sphi 0, %s638
                  %p635 = scmp.ge.s32.totalorder %s634, 1
                  %s639 = sphi %s540, %s540
                  %s640 = sphi %s536, %s536
                $region139: #{attention_forward.3} parent=128 // loop_header_branch
                  %637 = sbr.rel (%p635) target = $region143
                $region140: #{attention_forward.3} parent=128 // loop_body
                  %v641 = vld [vmem:[%s639] sm:%s632]
                  %642 = vst [vmem:[%s640] sm:%s632] %v641
                  %v643 = vld [vmem:[%s639 + $0xc] sm:%s632]
                  %644 = vst [vmem:[%s640 + $0x4] sm:%s632] %v643
                  %v645 = vld [vmem:[%s639 + $0x18] sm:%s632]
                  %646 = vst [vmem:[%s640 + $0x8] sm:%s632] %v645
                  %v647 = vld [vmem:[%s639 + $0x24] sm:%s632]
                  %648 = vst [vmem:[%s640 + $0xc] sm:%s632] %v647
                  %v649 = vld [vmem:[%s639 + $0x30] sm:%s632]
                  %650 = vst [vmem:[%s640 + $0x10] sm:%s632] %v649
                  %v651 = vld [vmem:[%s639 + $0x3c] sm:%s632]
                  %652 = vst [vmem:[%s640 + $0x14] sm:%s632] %v651
                  %v653 = vld [vmem:[%s639 + $0x48] sm:%s632]
                  %654 = vst [vmem:[%s640 + $0x18] sm:%s632] %v653
                  %v655 = vld [vmem:[%s639 + $0x54] sm:%s632]
                  %656 = vst [vmem:[%s640 + $0x1c] sm:%s632] %v655
                  %v657 = vld [vmem:[%s639 + $0x60] sm:%s632]
                  %658 = vst [vmem:[%s640 + $0x20] sm:%s632] %v657
                  %v659 = vld [vmem:[%s639 + $0x6c] sm:%s632]
                  %660 = vst [vmem:[%s640 + $0x24] sm:%s632] %v659
                  %v661 = vld [vmem:[%s639 + $0x78] sm:%s632]
                  %662 = vst [vmem:[%s640 + $0x28] sm:%s632] %v661
                  %v663 = vld [vmem:[%s639 + $0x84] sm:%s632]
                  %664 = vst [vmem:[%s640 + $0x2c] sm:%s632] %v663
                  %v665 = vld [vmem:[%s639 + $0x90] sm:%s632]
                  %666 = vst [vmem:[%s640 + $0x30] sm:%s632] %v665
                  %v667 = vld [vmem:[%s639 + $0x9c] sm:%s632]
                  %668 = vst [vmem:[%s640 + $0x34] sm:%s632] %v667
                  %v669 = vld [vmem:[%s639 + $0xa8] sm:%s632]
                  %670 = vst [vmem:[%s640 + $0x38] sm:%s632] %v669
                  %v671 = vld [vmem:[%s639 + $0xb4] sm:%s632]
                  %672 = vst [vmem:[%s640 + $0x3c] sm:%s632] %v671
                  %v673 = vld [vmem:[%s639 + $0xc0] sm:%s632]
                  %674 = vst [vmem:[%s640 + $0x40] sm:%s632] %v673
                  %v675 = vld [vmem:[%s639 + $0xcc] sm:%s632]
                  %676 = vst [vmem:[%s640 + $0x44] sm:%s632] %v675
                  %v677 = vld [vmem:[%s639 + $0xd8] sm:%s632]
                  %678 = vst [vmem:[%s640 + $0x48] sm:%s632] %v677
                  %v679 = vld [vmem:[%s639 + $0xe4] sm:%s632]
                  %680 = vst [vmem:[%s640 + $0x4c] sm:%s632] %v679
                  %v681 = vld [vmem:[%s639 + $0xf0] sm:%s632]
                  %682 = vst [vmem:[%s640 + $0x50] sm:%s632] %v681
                  %v683 = vld [vmem:[%s639 + $0xfc] sm:%s632]
                  %684 = vst [vmem:[%s640 + $0x54] sm:%s632] %v683
                  %v685 = vld [vmem:[%s639 + $0x108] sm:%s632]
                  %686 = vst [vmem:[%s640 + $0x58] sm:%s632] %v685
                  %v687 = vld [vmem:[%s639 + $0x114] sm:%s632]
                  %688 = vst [vmem:[%s640 + $0x5c] sm:%s632] %v687
                  %v689 = vld [vmem:[%s639 + $0x120] sm:%s632]
                  %690 = vst [vmem:[%s640 + $0x60] sm:%s632] %v689
                  %v691 = vld [vmem:[%s639 + $0x12c] sm:%s632]
                  %692 = vst [vmem:[%s640 + $0x64] sm:%s632] %v691
                  %v693 = vld [vmem:[%s639 + $0x138] sm:%s632]
                  %694 = vst [vmem:[%s640 + $0x68] sm:%s632] %v693
                  %v695 = vld [vmem:[%s639 + $0x144] sm:%s632]
                  %696 = vst [vmem:[%s640 + $0x6c] sm:%s632] %v695
                  %v697 = vld [vmem:[%s639 + $0x150] sm:%s632]
                  %698 = vst [vmem:[%s640 + $0x70] sm:%s632] %v697
                  %v699 = vld [vmem:[%s639 + $0x15c] sm:%s632]
                  %700 = vst [vmem:[%s640 + $0x74] sm:%s632] %v699
                  %v701 = vld [vmem:[%s639 + $0x168] sm:%s632]
                  %702 = vst [vmem:[%s640 + $0x78] sm:%s632] %v701
                  %v703 = vld [vmem:[%s639 + $0x174] sm:%s632]
                  %704 = vst [vmem:[%s640 + $0x7c] sm:%s632] %v703
                $region141: #{attention_forward.3} parent=128 // loop_footer
                  %s638 = sadd.s32 1, %s634
                $region142: #{attention_forward.3} parent=128 // loop_footer_branch
                  %633 = sbr.rel target = $region138
                $region143: #{attention_forward.3} parent=128 // loop_exit
                  _
              $region129: #{attention_forward.3} parent=113 // pred_fallthru
                _
            $region114: #{attention_forward.3} parent=109 // pred_fallthru
              _
            // Predicated region
            $region115: #{attention_forward.3} parent=109 // pred_check
              _
            $region116: #{attention_forward.3} parent=109 // pred_check_branch
              %546 = sbr.rel (0) target = $region118
            $region117: #{attention_forward.3} parent=109 // pred_region
              %s548 = ssub.s32 16, 1
              loop: start=0, step=1, limit=1
              $region119: #{attention_forward.3} parent=117 // loop_pre_header
                _
              $region120: #{attention_forward.3} parent=117 // loop_header
                %s550 = sphi 0, %s554
                %p551 = scmp.ge.s32.totalorder %s550, 1
                %s555 = sphi %s540, %s540
                %s556 = sphi %s536, %s536
              $region121: #{attention_forward.3} parent=117 // loop_header_branch
                %553 = sbr.rel (%p551) target = $region125
              $region122: #{attention_forward.3} parent=117 // loop_body
                %v557 = vld [vmem:[%s555] sm:%s548]
                %558 = vst [vmem:[%s556] sm:%s548] %v557
                %v559 = vld [vmem:[%s555 + $0xc] sm:%s548]
                %560 = vst [vmem:[%s556 + $0x4] sm:%s548] %v559
                %v561 = vld [vmem:[%s555 + $0x18] sm:%s548]
                %562 = vst [vmem:[%s556 + $0x8] sm:%s548] %v561
                %v563 = vld [vmem:[%s555 + $0x24] sm:%s548]
                %564 = vst [vmem:[%s556 + $0xc] sm:%s548] %v563
                %v565 = vld [vmem:[%s555 + $0x30] sm:%s548]
                %566 = vst [vmem:[%s556 + $0x10] sm:%s548] %v565
                %v567 = vld [vmem:[%s555 + $0x3c] sm:%s548]
                %568 = vst [vmem:[%s556 + $0x14] sm:%s548] %v567
                %v569 = vld [vmem:[%s555 + $0x48] sm:%s548]
                %570 = vst [vmem:[%s556 + $0x18] sm:%s548] %v569
                %v571 = vld [vmem:[%s555 + $0x54] sm:%s548]
                %572 = vst [vmem:[%s556 + $0x1c] sm:%s548] %v571
                %v573 = vld [vmem:[%s555 + $0x60] sm:%s548]
                %574 = vst [vmem:[%s556 + $0x20] sm:%s548] %v573
                %v575 = vld [vmem:[%s555 + $0x6c] sm:%s548]
                %576 = vst [vmem:[%s556 + $0x24] sm:%s548] %v575
                %v577 = vld [vmem:[%s555 + $0x78] sm:%s548]
                %578 = vst [vmem:[%s556 + $0x28] sm:%s548] %v577
                %v579 = vld [vmem:[%s555 + $0x84] sm:%s548]
                %580 = vst [vmem:[%s556 + $0x2c] sm:%s548] %v579
                %v581 = vld [vmem:[%s555 + $0x90] sm:%s548]
                %582 = vst [vmem:[%s556 + $0x30] sm:%s548] %v581
                %v583 = vld [vmem:[%s555 + $0x9c] sm:%s548]
                %584 = vst [vmem:[%s556 + $0x34] sm:%s548] %v583
                %v585 = vld [vmem:[%s555 + $0xa8] sm:%s548]
                %586 = vst [vmem:[%s556 + $0x38] sm:%s548] %v585
                %v587 = vld [vmem:[%s555 + $0xb4] sm:%s548]
                %588 = vst [vmem:[%s556 + $0x3c] sm:%s548] %v587
                %v589 = vld [vmem:[%s555 + $0xc0] sm:%s548]
                %590 = vst [vmem:[%s556 + $0x40] sm:%s548] %v589
                %v591 = vld [vmem:[%s555 + $0xcc] sm:%s548]
                %592 = vst [vmem:[%s556 + $0x44] sm:%s548] %v591
                %v593 = vld [vmem:[%s555 + $0xd8] sm:%s548]
                %594 = vst [vmem:[%s556 + $0x48] sm:%s548] %v593
                %v595 = vld [vmem:[%s555 + $0xe4] sm:%s548]
                %596 = vst [vmem:[%s556 + $0x4c] sm:%s548] %v595
                %v597 = vld [vmem:[%s555 + $0xf0] sm:%s548]
                %598 = vst [vmem:[%s556 + $0x50] sm:%s548] %v597
                %v599 = vld [vmem:[%s555 + $0xfc] sm:%s548]
                %600 = vst [vmem:[%s556 + $0x54] sm:%s548] %v599
                %v601 = vld [vmem:[%s555 + $0x108] sm:%s548]
                %602 = vst [vmem:[%s556 + $0x58] sm:%s548] %v601
                %v603 = vld [vmem:[%s555 + $0x114] sm:%s548]
                %604 = vst [vmem:[%s556 + $0x5c] sm:%s548] %v603
                %v605 = vld [vmem:[%s555 + $0x120] sm:%s548]
                %606 = vst [vmem:[%s556 + $0x60] sm:%s548] %v605
                %v607 = vld [vmem:[%s555 + $0x12c] sm:%s548]
                %608 = vst [vmem:[%s556 + $0x64] sm:%s548] %v607
                %v609 = vld [vmem:[%s555 + $0x138] sm:%s548]
                %610 = vst [vmem:[%s556 + $0x68] sm:%s548] %v609
                %v611 = vld [vmem:[%s555 + $0x144] sm:%s548]
                %612 = vst [vmem:[%s556 + $0x6c] sm:%s548] %v611
                %v613 = vld [vmem:[%s555 + $0x150] sm:%s548]
                %614 = vst [vmem:[%s556 + $0x70] sm:%s548] %v613
                %v615 = vld [vmem:[%s555 + $0x15c] sm:%s548]
                %616 = vst [vmem:[%s556 + $0x74] sm:%s548] %v615
                %v617 = vld [vmem:[%s555 + $0x168] sm:%s548]
                %618 = vst [vmem:[%s556 + $0x78] sm:%s548] %v617
                %v619 = vld [vmem:[%s555 + $0x174] sm:%s548]
                %620 = vst [vmem:[%s556 + $0x7c] sm:%s548] %v619
              $region123: #{attention_forward.3} parent=117 // loop_footer
                %s554 = sadd.s32 1, %s550
              $region124: #{attention_forward.3} parent=117 // loop_footer_branch
                %549 = sbr.rel target = $region120
              $region125: #{attention_forward.3} parent=117 // loop_exit
                _
            $region118: #{attention_forward.3} parent=109 // pred_fallthru
              _
          $region110: #{attention_forward.3} parent=105 // pred_fallthru
            _
          %705 = vnop
        $region106: #{attention_forward.3} parent=19 // pred_fallthru
          _
      $region20: #{attention_forward.3} parent=5 // pred_fallthru
        _
      %p706 = scmp.le.s32.totalorder 1, %s13
      %p707 = scmp.lt.s32.totalorder %s13, 3
      %p708 = pnand %p706, %p707
      %p709 = pneg %p708
      // Predicated region
      $region144: #{attention_forward.3} parent=5 // pred_check
        _
      $region145: #{attention_forward.3} parent=5 // pred_check_branch
        %711 = sbr.rel (%p708) target = $region147
      $region146: #{attention_forward.3} parent=5 // pred_region
        %s712 = ssub.s32 %s13, 1
        %s713 = sand.u32 %s40, 1
        %s714 = sand.u32 %s40, 1
        %s715 = smul.addr %s714, 128
        %s716 = scalar_lea.vmem [#allocation2], %s715
        // Predicated region
        $region148: #{attention_forward.3} parent=146 // pred_check
          %p717 = pneg %p53
        $region149: #{attention_forward.3} parent=146 // pred_check_branch
          %719 = sbr.rel (%p717) target = $region151
        $region150: #{attention_forward.3} parent=146 // pred_region
          _
        $region151: #{attention_forward.3} parent=146 // pred_fallthru
          _
        %s720 = sand.u32 %s66, 1
        %s721 = sand.u32 %s66, 1
        %s722 = smul.addr %s721, 128
        %s723 = scalar_lea.vmem [#allocation3], %s722
        // Predicated region
        $region152: #{attention_forward.3} parent=146 // pred_check
          %p724 = pneg %p79
        $region153: #{attention_forward.3} parent=146 // pred_check_branch
          %726 = sbr.rel (%p724) target = $region155
        $region154: #{attention_forward.3} parent=146 // pred_region
          _
        $region155: #{attention_forward.3} parent=146 // pred_fallthru
          _
        %s727 = sand.u32 %s92, 1
        %s728 = sand.u32 %s92, 1
        %s729 = smul.addr %s728, 128
        %s730 = scalar_lea.vmem [#allocation4], %s729
        // Predicated region
        $region156: #{attention_forward.3} parent=146 // pred_check
          %p731 = pneg %p105
        $region157: #{attention_forward.3} parent=146 // pred_check_branch
          %733 = sbr.rel (%p731) target = $region159
        $region158: #{attention_forward.3} parent=146 // pred_region
          _
        $region159: #{attention_forward.3} parent=146 // pred_fallthru
          _
        %s734 = sand.u32 %s40, 1
        %s735 = sand.u32 %s40, 1
        %s736 = smul.addr %s735, 128
        %s737 = scalar_lea.vmem [#allocation2], %s736
        %p738 = pneg %p53
        %p739 = pneg %p50
        %s740 = sand.u32 %s66, 1
        %s741 = sand.u32 %s66, 1
        %s742 = smul.addr %s741, 128
        %s743 = scalar_lea.vmem [#allocation3], %s742
        %p744 = pneg %p79
        %p745 = pneg %p76
        %s746 = sand.u32 %s92, 1
        %s747 = sand.u32 %s92, 1
        %s748 = smul.addr %s747, 128
        %s749 = scalar_lea.vmem [#allocation4], %s748
        %p750 = pneg %p105
        %p751 = pneg %p102
        %p752 = pneg %p126
        %p753 = pneg %p123
        %p754 = pneg %p154
        %p755 = pneg %p151
        %s756 = sand.u32 %s141, 1
        %s757 = scalar_lea.sflag [#allocation6], %s756
        %s758 = sand.u32 %s141, 1
        %s759 = smul.addr %s758, 256
        %s760 = scalar_lea.vmem [#allocation5], %s759
        %s761 = smul.u32 32, %s23
        %s762 = smul.u32 32, %s23
        %v763 = vld [vmem:[%s716] sm:$0xf]
        %v764 = vld [vmem:[%s716 + $0x4] sm:$0xf]
        %v765 = vld [vmem:[%s716 + $0x8] sm:$0xf]
        %v766 = vld [vmem:[%s716 + $0xc] sm:$0xf]
        %v767 = vld [vmem:[%s716 + $0x10] sm:$0xf]
        %v768 = vld [vmem:[%s716 + $0x14] sm:$0xf]
        %v769 = vld [vmem:[%s716 + $0x18] sm:$0xf]
        %v770 = vld [vmem:[%s716 + $0x1c] sm:$0xf]
        %v771 = vld [vmem:[%s716 + $0x20] sm:$0xf]
        %v772 = vld [vmem:[%s716 + $0x24] sm:$0xf]
        %v773 = vld [vmem:[%s716 + $0x28] sm:$0xf]
        %v774 = vld [vmem:[%s716 + $0x2c] sm:$0xf]
        %v775 = vld [vmem:[%s716 + $0x30] sm:$0xf]
        %v776 = vld [vmem:[%s716 + $0x34] sm:$0xf]
        %v777 = vld [vmem:[%s716 + $0x38] sm:$0xf]
        %v778 = vld [vmem:[%s716 + $0x3c] sm:$0xf]
        %v779 = vld [vmem:[%s716 + $0x40] sm:$0xf]
        %v780 = vld [vmem:[%s716 + $0x44] sm:$0xf]
        %v781 = vld [vmem:[%s716 + $0x48] sm:$0xf]
        %v782 = vld [vmem:[%s716 + $0x4c] sm:$0xf]
        %v783 = vld [vmem:[%s716 + $0x50] sm:$0xf]
        %v784 = vld [vmem:[%s716 + $0x54] sm:$0xf]
        %v785 = vld [vmem:[%s716 + $0x58] sm:$0xf]
        %v786 = vld [vmem:[%s716 + $0x5c] sm:$0xf]
        %v787 = vld [vmem:[%s716 + $0x60] sm:$0xf]
        %v788 = vld [vmem:[%s716 + $0x64] sm:$0xf]
        %v789 = vld [vmem:[%s716 + $0x68] sm:$0xf]
        %v790 = vld [vmem:[%s716 + $0x6c] sm:$0xf]
        %v791 = vld [vmem:[%s716 + $0x70] sm:$0xf]
        %v792 = vld [vmem:[%s716 + $0x74] sm:$0xf]
        %v793 = vld [vmem:[%s716 + $0x78] sm:$0xf]
        %v794 = vld [vmem:[%s716 + $0x7c] sm:$0xf]
        %v795 = vld [vmem:[%s723] sm:$0xf]
        %v796 = vld [vmem:[%s723 + $0x4] sm:$0xf]
        %v797 = vld [vmem:[%s723 + $0x8] sm:$0xf]
        %v798 = vld [vmem:[%s723 + $0xc] sm:$0xf]
        %v799 = vld [vmem:[%s723 + $0x10] sm:$0xf]
        %v800 = vld [vmem:[%s723 + $0x14] sm:$0xf]
        %v801 = vld [vmem:[%s723 + $0x18] sm:$0xf]
        %v802 = vld [vmem:[%s723 + $0x1c] sm:$0xf]
        %v803 = vld [vmem:[%s723 + $0x20] sm:$0xf]
        %v804 = vld [vmem:[%s723 + $0x24] sm:$0xf]
        %v805 = vld [vmem:[%s723 + $0x28] sm:$0xf]
        %v806 = vld [vmem:[%s723 + $0x2c] sm:$0xf]
        %v807 = vld [vmem:[%s723 + $0x30] sm:$0xf]
        %v808 = vld [vmem:[%s723 + $0x34] sm:$0xf]
        %v809 = vld [vmem:[%s723 + $0x38] sm:$0xf]
        %v810 = vld [vmem:[%s723 + $0x3c] sm:$0xf]
        %v811 = vld [vmem:[%s723 + $0x40] sm:$0xf]
        %v812 = vld [vmem:[%s723 + $0x44] sm:$0xf]
        %v813 = vld [vmem:[%s723 + $0x48] sm:$0xf]
        %v814 = vld [vmem:[%s723 + $0x4c] sm:$0xf]
        %v815 = vld [vmem:[%s723 + $0x50] sm:$0xf]
        %v816 = vld [vmem:[%s723 + $0x54] sm:$0xf]
        %v817 = vld [vmem:[%s723 + $0x58] sm:$0xf]
        %v818 = vld [vmem:[%s723 + $0x5c] sm:$0xf]
        %v819 = vld [vmem:[%s723 + $0x60] sm:$0xf]
        %v820 = vld [vmem:[%s723 + $0x64] sm:$0xf]
        %v821 = vld [vmem:[%s723 + $0x68] sm:$0xf]
        %v822 = vld [vmem:[%s723 + $0x6c] sm:$0xf]
        %v823 = vld [vmem:[%s723 + $0x70] sm:$0xf]
        %v824 = vld [vmem:[%s723 + $0x74] sm:$0xf]
        %v825 = vld [vmem:[%s723 + $0x78] sm:$0xf]
        %v826 = vld [vmem:[%s723 + $0x7c] sm:$0xf]
        %v827 = vld [vmem:[%s730] sm:$0xf]
        %v828 = vld [vmem:[%s730 + $0x4] sm:$0xf]
        %v829 = vld [vmem:[%s730 + $0x8] sm:$0xf]
        %v830 = vld [vmem:[%s730 + $0xc] sm:$0xf]
        %v831 = vld [vmem:[%s730 + $0x10] sm:$0xf]
        %v832 = vld [vmem:[%s730 + $0x14] sm:$0xf]
        %v833 = vld [vmem:[%s730 + $0x18] sm:$0xf]
        %v834 = vld [vmem:[%s730 + $0x1c] sm:$0xf]
        %v835 = vld [vmem:[%s730 + $0x20] sm:$0xf]
        %v836 = vld [vmem:[%s730 + $0x24] sm:$0xf]
        %v837 = vld [vmem:[%s730 + $0x28] sm:$0xf]
        %v838 = vld [vmem:[%s730 + $0x2c] sm:$0xf]
        %v839 = vld [vmem:[%s730 + $0x30] sm:$0xf]
        %v840 = vld [vmem:[%s730 + $0x34] sm:$0xf]
        %v841 = vld [vmem:[%s730 + $0x38] sm:$0xf]
        %v842 = vld [vmem:[%s730 + $0x3c] sm:$0xf]
        %v843 = vld [vmem:[%s730 + $0x40] sm:$0xf]
        %v844 = vld [vmem:[%s730 + $0x44] sm:$0xf]
        %v845 = vld [vmem:[%s730 + $0x48] sm:$0xf]
        %v846 = vld [vmem:[%s730 + $0x4c] sm:$0xf]
        %v847 = vld [vmem:[%s730 + $0x50] sm:$0xf]
        %v848 = vld [vmem:[%s730 + $0x54] sm:$0xf]
        %v849 = vld [vmem:[%s730 + $0x58] sm:$0xf]
        %v850 = vld [vmem:[%s730 + $0x5c] sm:$0xf]
        %v851 = vld [vmem:[%s730 + $0x60] sm:$0xf]
        %v852 = vld [vmem:[%s730 + $0x64] sm:$0xf]
        %v853 = vld [vmem:[%s730 + $0x68] sm:$0xf]
        %v854 = vld [vmem:[%s730 + $0x6c] sm:$0xf]
        %v855 = vld [vmem:[%s730 + $0x70] sm:$0xf]
        %v856 = vld [vmem:[%s730 + $0x74] sm:$0xf]
        %v857 = vld [vmem:[%s730 + $0x78] sm:$0xf]
        %v858 = vld [vmem:[%s730 + $0x7c] sm:$0xf]
        %v891 = vunpack.c.l.b16 %v763
        %v892 = vunpack.c.l.b16 %v764
        %v893 = vunpack.c.l.b16 %v765
        %v894 = vunpack.c.l.b16 %v766
        %v895 = vunpack.c.l.b16 %v767
        %v896 = vunpack.c.l.b16 %v768
        %v897 = vunpack.c.l.b16 %v769
        %v898 = vunpack.c.l.b16 %v770
        %v899 = vunpack.c.l.b16 %v771
        %v900 = vunpack.c.l.b16 %v772
        %v901 = vunpack.c.l.b16 %v773
        %v902 = vunpack.c.l.b16 %v774
        %v903 = vunpack.c.l.b16 %v775
        %v904 = vunpack.c.l.b16 %v776
        %v905 = vunpack.c.l.b16 %v777
        %v906 = vunpack.c.l.b16 %v778
        %v907 = vunpack.c.l.b16 %v779
        %v908 = vunpack.c.l.b16 %v780
        %v909 = vunpack.c.l.b16 %v781
        %v910 = vunpack.c.l.b16 %v782
        %v911 = vunpack.c.l.b16 %v783
        %v912 = vunpack.c.l.b16 %v784
        %v913 = vunpack.c.l.b16 %v785
        %v914 = vunpack.c.l.b16 %v786
        %v915 = vunpack.c.l.b16 %v787
        %v916 = vunpack.c.l.b16 %v788
        %v917 = vunpack.c.l.b16 %v789
        %v918 = vunpack.c.l.b16 %v790
        %v919 = vunpack.c.l.b16 %v791
        %v920 = vunpack.c.l.b16 %v792
        %v921 = vunpack.c.l.b16 %v793
        %v922 = vunpack.c.l.b16 %v794
        %v923 = vpack.c.b16 %v892, %v891
        %v924 = vpack.c.b16 %v894, %v893
        %v925 = vpack.c.b16 %v896, %v895
        %v926 = vpack.c.b16 %v898, %v897
        %v927 = vpack.c.b16 %v900, %v899
        %v928 = vpack.c.b16 %v902, %v901
        %v929 = vpack.c.b16 %v904, %v903
        %v930 = vpack.c.b16 %v906, %v905
        %v931 = vpack.c.b16 %v908, %v907
        %v932 = vpack.c.b16 %v910, %v909
        %v933 = vpack.c.b16 %v912, %v911
        %v934 = vpack.c.b16 %v914, %v913
        %v935 = vpack.c.b16 %v916, %v915
        %v936 = vpack.c.b16 %v918, %v917
        %v937 = vpack.c.b16 %v920, %v919
        %v938 = vpack.c.b16 %v922, %v921
        %v971 = vunpack.c.l.b16 %v795
        %v972 = vunpack.c.l.b16 %v796
        %v973 = vunpack.c.l.b16 %v797
        %v974 = vunpack.c.l.b16 %v798
        %v975 = vunpack.c.l.b16 %v799
        %v976 = vunpack.c.l.b16 %v800
        %v977 = vunpack.c.l.b16 %v801
        %v978 = vunpack.c.l.b16 %v802
        %v979 = vunpack.c.l.b16 %v803
        %v980 = vunpack.c.l.b16 %v804
        %v981 = vunpack.c.l.b16 %v805
        %v982 = vunpack.c.l.b16 %v806
        %v983 = vunpack.c.l.b16 %v807
        %v984 = vunpack.c.l.b16 %v808
        %v985 = vunpack.c.l.b16 %v809
        %v986 = vunpack.c.l.b16 %v810
        %v987 = vunpack.c.l.b16 %v811
        %v988 = vunpack.c.l.b16 %v812
        %v989 = vunpack.c.l.b16 %v813
        %v990 = vunpack.c.l.b16 %v814
        %v991 = vunpack.c.l.b16 %v815
        %v992 = vunpack.c.l.b16 %v816
        %v993 = vunpack.c.l.b16 %v817
        %v994 = vunpack.c.l.b16 %v818
        %v995 = vunpack.c.l.b16 %v819
        %v996 = vunpack.c.l.b16 %v820
        %v997 = vunpack.c.l.b16 %v821
        %v998 = vunpack.c.l.b16 %v822
        %v999 = vunpack.c.l.b16 %v823
        %v1000 = vunpack.c.l.b16 %v824
        %v1001 = vunpack.c.l.b16 %v825
        %v1002 = vunpack.c.l.b16 %v826
        %v1003 = vpack.c.b16 %v972, %v971
        %v1004 = vpack.c.b16 %v974, %v973
        %v1005 = vpack.c.b16 %v976, %v975
        %v1006 = vpack.c.b16 %v978, %v977
        %v1007 = vpack.c.b16 %v980, %v979
        %v1008 = vpack.c.b16 %v982, %v981
        %v1009 = vpack.c.b16 %v984, %v983
        %v1010 = vpack.c.b16 %v986, %v985
        %v1011 = vpack.c.b16 %v988, %v987
        %v1012 = vpack.c.b16 %v990, %v989
        %v1013 = vpack.c.b16 %v992, %v991
        %v1014 = vpack.c.b16 %v994, %v993
        %v1015 = vpack.c.b16 %v996, %v995
        %v1016 = vpack.c.b16 %v998, %v997
        %v1017 = vpack.c.b16 %v1000, %v999
        %v1018 = vpack.c.b16 %v1002, %v1001
        %vm1019 = vcmask 261120
        %v1021 = vsel %vm1019, %v923, 0
        %v1024 = vsel %vm1019, %v924, 0
        %v1027 = vsel %vm1019, %v925, 0
        %v1030 = vsel %vm1019, %v926, 0
        %v1033 = vsel %vm1019, %v927, 0
        %v1036 = vsel %vm1019, %v928, 0
        %v1039 = vsel %vm1019, %v929, 0
        %v1042 = vsel %vm1019, %v930, 0
        %v1045 = vsel %vm1019, %v931, 0
        %v1048 = vsel %vm1019, %v932, 0
        %v1051 = vsel %vm1019, %v933, 0
        %v1054 = vsel %vm1019, %v934, 0
        %v1057 = vsel %vm1019, %v935, 0
        %v1060 = vsel %vm1019, %v936, 0
        %v1063 = vsel %vm1019, %v937, 0
        %v1066 = vsel %vm1019, %v938, 0
        %v1069 = vsel %vm1019, %v1003, 0
        %v1072 = vsel %vm1019, %v1004, 0
        %v1075 = vsel %vm1019, %v1005, 0
        %v1078 = vsel %vm1019, %v1006, 0
        %v1081 = vsel %vm1019, %v1007, 0
        %v1084 = vsel %vm1019, %v1008, 0
        %v1087 = vsel %vm1019, %v1009, 0
        %v1090 = vsel %vm1019, %v1010, 0
        %v1093 = vsel %vm1019, %v1011, 0
        %v1096 = vsel %vm1019, %v1012, 0
        %v1099 = vsel %vm1019, %v1013, 0
        %v1102 = vsel %vm1019, %v1014, 0
        %v1105 = vsel %vm1019, %v1015, 0
        %v1108 = vsel %vm1019, %v1016, 0
        %v1111 = vsel %vm1019, %v1017, 0
        %v1114 = vsel %vm1019, %v1018, 0
        %1116 = vmatpush.bf16.xpose.msra.mxu0 %v1090
        %1117 = vmatpush.bf16.xpose.msra.mxu0 %v1087
        %1118 = vmatpush.bf16.xpose.msra.mxu0 %v1084
        %1119 = vmatpush.bf16.xpose.msra.mxu0 %v1081
        %1120 = vmatpush.bf16.xpose.msra.mxu0 %v1078
        %1121 = vmatpush.bf16.xpose.msra.mxu0 %v1075
        %1122 = vmatpush.bf16.xpose.msra.mxu0 %v1072
        %1123 = vmatpush.bf16.xpose.msra.mxu0 %v1069
        %1124 = vmatmul.bf16.gmra.mxu0 %v1021
        %v1125 = vpop.f32.mrf.mxu0
        %v1126 = vadd.f32 0.0, %v1125
        %v1127 = vpop.f32.mrf.mxu0
        %v1128 = vadd.f32 0.0, %v1127
        %1129 = vmatmul.bf16.gmra.mxu0 %v1024
        %v1130 = vpop.f32.mrf.mxu0
        %v1131 = vadd.f32 0.0, %v1130
        %v1132 = vpop.f32.mrf.mxu0
        %v1133 = vadd.f32 0.0, %v1132
        %1134 = vmatmul.bf16.gmra.mxu0 %v1027
        %v1135 = vpop.f32.mrf.mxu0
        %v1136 = vadd.f32 0.0, %v1135
        %v1137 = vpop.f32.mrf.mxu0
        %v1138 = vadd.f32 0.0, %v1137
        %1139 = vmatmul.bf16.gmra.mxu0 %v1030
        %v1140 = vpop.f32.mrf.mxu0
        %v1141 = vadd.f32 0.0, %v1140
        %v1142 = vpop.f32.mrf.mxu0
        %v1143 = vadd.f32 0.0, %v1142
        %1144 = vmatmul.bf16.gmra.mxu0 %v1033
        %v1145 = vpop.f32.mrf.mxu0
        %v1146 = vadd.f32 0.0, %v1145
        %v1147 = vpop.f32.mrf.mxu0
        %v1148 = vadd.f32 0.0, %v1147
        %1149 = vmatmul.bf16.gmra.mxu0 %v1036
        %v1150 = vpop.f32.mrf.mxu0
        %v1151 = vadd.f32 0.0, %v1150
        %v1152 = vpop.f32.mrf.mxu0
        %v1153 = vadd.f32 0.0, %v1152
        %1154 = vmatmul.bf16.gmra.mxu0 %v1039
        %v1155 = vpop.f32.mrf.mxu0
        %v1156 = vadd.f32 0.0, %v1155
        %v1157 = vpop.f32.mrf.mxu0
        %v1158 = vadd.f32 0.0, %v1157
        %1159 = vmatmul.bf16.gmra.mxu0 %v1042
        %v1160 = vpop.f32.mrf.mxu0
        %v1161 = vadd.f32 0.0, %v1160
        %v1162 = vpop.f32.mrf.mxu0
        %v1163 = vadd.f32 0.0, %v1162
        %1164 = vmatmul.bf16.gmra.mxu0 %v1045
        %v1165 = vpop.f32.mrf.mxu0
        %v1166 = vadd.f32 0.0, %v1165
        %v1167 = vpop.f32.mrf.mxu0
        %v1168 = vadd.f32 0.0, %v1167
        %1169 = vmatmul.bf16.gmra.mxu0 %v1048
        %v1170 = vpop.f32.mrf.mxu0
        %v1171 = vadd.f32 0.0, %v1170
        %v1172 = vpop.f32.mrf.mxu0
        %v1173 = vadd.f32 0.0, %v1172
        %1174 = vmatmul.bf16.gmra.mxu0 %v1051
        %v1175 = vpop.f32.mrf.mxu0
        %v1176 = vadd.f32 0.0, %v1175
        %v1177 = vpop.f32.mrf.mxu0
        %v1178 = vadd.f32 0.0, %v1177
        %1179 = vmatmul.bf16.gmra.mxu0 %v1054
        %v1180 = vpop.f32.mrf.mxu0
        %v1181 = vadd.f32 0.0, %v1180
        %v1182 = vpop.f32.mrf.mxu0
        %v1183 = vadd.f32 0.0, %v1182
        %1184 = vmatmul.bf16.gmra.mxu0 %v1057
        %v1185 = vpop.f32.mrf.mxu0
        %v1186 = vadd.f32 0.0, %v1185
        %v1187 = vpop.f32.mrf.mxu0
        %v1188 = vadd.f32 0.0, %v1187
        %1189 = vmatmul.bf16.gmra.mxu0 %v1060
        %v1190 = vpop.f32.mrf.mxu0
        %v1191 = vadd.f32 0.0, %v1190
        %v1192 = vpop.f32.mrf.mxu0
        %v1193 = vadd.f32 0.0, %v1192
        %1194 = vmatmul.bf16.gmra.mxu0 %v1063
        %v1195 = vpop.f32.mrf.mxu0
        %v1196 = vadd.f32 0.0, %v1195
        %v1197 = vpop.f32.mrf.mxu0
        %v1198 = vadd.f32 0.0, %v1197
        %1199 = vmatmul.bf16.gmra.mxu0 %v1066
        %v1200 = vpop.f32.mrf.mxu0
        %v1201 = vadd.f32 0.0, %v1200
        %v1202 = vpop.f32.mrf.mxu0
        %v1203 = vadd.f32 0.0, %v1202
        %1204 = vdwg.mxu0
        %1205 = vmatpush.bf16.xpose.msra.mxu0 %v1114
        %1206 = vmatpush.bf16.xpose.msra.mxu0 %v1111
        %1207 = vmatpush.bf16.xpose.msra.mxu0 %v1108
        %1208 = vmatpush.bf16.xpose.msra.mxu0 %v1105
        %1209 = vmatpush.bf16.xpose.msra.mxu0 %v1102
        %1210 = vmatpush.bf16.xpose.msra.mxu0 %v1099
        %1211 = vmatpush.bf16.xpose.msra.mxu0 %v1096
        %1212 = vmatpush.bf16.xpose.msra.mxu0 %v1093
        %1213 = vmatmul.bf16.gmra.mxu0 %v1021
        %v1214 = vpop.f32.mrf.mxu0
        %v1215 = vadd.f32 0.0, %v1214
        %v1216 = vpop.f32.mrf.mxu0
        %v1217 = vadd.f32 0.0, %v1216
        %1218 = vmatmul.bf16.gmra.mxu0 %v1024
        %v1219 = vpop.f32.mrf.mxu0
        %v1220 = vadd.f32 0.0, %v1219
        %v1221 = vpop.f32.mrf.mxu0
        %v1222 = vadd.f32 0.0, %v1221
        %1223 = vmatmul.bf16.gmra.mxu0 %v1027
        %v1224 = vpop.f32.mrf.mxu0
        %v1225 = vadd.f32 0.0, %v1224
        %v1226 = vpop.f32.mrf.mxu0
        %v1227 = vadd.f32 0.0, %v1226
        %1228 = vmatmul.bf16.gmra.mxu0 %v1030
        %v1229 = vpop.f32.mrf.mxu0
        %v1230 = vadd.f32 0.0, %v1229
        %v1231 = vpop.f32.mrf.mxu0
        %v1232 = vadd.f32 0.0, %v1231
        %1233 = vmatmul.bf16.gmra.mxu0 %v1033
        %v1234 = vpop.f32.mrf.mxu0
        %v1235 = vadd.f32 0.0, %v1234
        %v1236 = vpop.f32.mrf.mxu0
        %v1237 = vadd.f32 0.0, %v1236
        %1238 = vmatmul.bf16.gmra.mxu0 %v1036
        %v1239 = vpop.f32.mrf.mxu0
        %v1240 = vadd.f32 0.0, %v1239
        %v1241 = vpop.f32.mrf.mxu0
        %v1242 = vadd.f32 0.0, %v1241
        %1243 = vmatmul.bf16.gmra.mxu0 %v1039
        %v1244 = vpop.f32.mrf.mxu0
        %v1245 = vadd.f32 0.0, %v1244
        %v1246 = vpop.f32.mrf.mxu0
        %v1247 = vadd.f32 0.0, %v1246
        %1248 = vmatmul.bf16.gmra.mxu0 %v1042
        %v1249 = vpop.f32.mrf.mxu0
        %v1250 = vadd.f32 0.0, %v1249
        %v1251 = vpop.f32.mrf.mxu0
        %v1252 = vadd.f32 0.0, %v1251
        %1253 = vmatmul.bf16.gmra.mxu0 %v1045
        %v1254 = vpop.f32.mrf.mxu0
        %v1255 = vadd.f32 0.0, %v1254
        %v1256 = vpop.f32.mrf.mxu0
        %v1257 = vadd.f32 0.0, %v1256
        %1258 = vmatmul.bf16.gmra.mxu0 %v1048
        %v1259 = vpop.f32.mrf.mxu0
        %v1260 = vadd.f32 0.0, %v1259
        %v1261 = vpop.f32.mrf.mxu0
        %v1262 = vadd.f32 0.0, %v1261
        %1263 = vmatmul.bf16.gmra.mxu0 %v1051
        %v1264 = vpop.f32.mrf.mxu0
        %v1265 = vadd.f32 0.0, %v1264
        %v1266 = vpop.f32.mrf.mxu0
        %v1267 = vadd.f32 0.0, %v1266
        %1268 = vmatmul.bf16.gmra.mxu0 %v1054
        %v1269 = vpop.f32.mrf.mxu0
        %v1270 = vadd.f32 0.0, %v1269
        %v1271 = vpop.f32.mrf.mxu0
        %v1272 = vadd.f32 0.0, %v1271
        %1273 = vmatmul.bf16.gmra.mxu0 %v1057
        %v1274 = vpop.f32.mrf.mxu0
        %v1275 = vadd.f32 0.0, %v1274
        %v1276 = vpop.f32.mrf.mxu0
        %v1277 = vadd.f32 0.0, %v1276
        %1278 = vmatmul.bf16.gmra.mxu0 %v1060
        %v1279 = vpop.f32.mrf.mxu0
        %v1280 = vadd.f32 0.0, %v1279
        %v1281 = vpop.f32.mrf.mxu0
        %v1282 = vadd.f32 0.0, %v1281
        %1283 = vmatmul.bf16.gmra.mxu0 %v1063
        %v1284 = vpop.f32.mrf.mxu0
        %v1285 = vadd.f32 0.0, %v1284
        %v1286 = vpop.f32.mrf.mxu0
        %v1287 = vadd.f32 0.0, %v1286
        %1288 = vmatmul.bf16.gmra.mxu0 %v1066
        %v1289 = vpop.f32.mrf.mxu0
        %v1290 = vadd.f32 0.0, %v1289
        %v1291 = vpop.f32.mrf.mxu0
        %v1292 = vadd.f32 0.0, %v1291
        %1293 = vdwg.mxu0
        %v1294 = vmax.f32 %v1126, %v1215
        %1295 = vmax.xlane.f32.xlu0 %v1294
        %v1296 = vpop.xlane.xlu0 %1295
        %v1297 = vmax.f32 %v1128, %v1217
        %1298 = vmax.xlane.f32.xlu0 %v1297
        %v1299 = vpop.xlane.xlu0 %1298
        %v1300 = vmax.f32 %v1131, %v1220
        %1301 = vmax.xlane.f32.xlu0 %v1300
        %v1302 = vpop.xlane.xlu0 %1301
        %v1303 = vmax.f32 %v1133, %v1222
        %1304 = vmax.xlane.f32.xlu0 %v1303
        %v1305 = vpop.xlane.xlu0 %1304
        %v1306 = vmax.f32 %v1136, %v1225
        %1307 = vmax.xlane.f32.xlu0 %v1306
        %v1308 = vpop.xlane.xlu0 %1307
        %v1309 = vmax.f32 %v1138, %v1227
        %1310 = vmax.xlane.f32.xlu0 %v1309
        %v1311 = vpop.xlane.xlu0 %1310
        %v1312 = vmax.f32 %v1141, %v1230
        %1313 = vmax.xlane.f32.xlu0 %v1312
        %v1314 = vpop.xlane.xlu0 %1313
        %v1315 = vmax.f32 %v1143, %v1232
        %1316 = vmax.xlane.f32.xlu0 %v1315
        %v1317 = vpop.xlane.xlu0 %1316
        %v1318 = vmax.f32 %v1146, %v1235
        %1319 = vmax.xlane.f32.xlu0 %v1318
        %v1320 = vpop.xlane.xlu0 %1319
        %v1321 = vmax.f32 %v1148, %v1237
        %1322 = vmax.xlane.f32.xlu0 %v1321
        %v1323 = vpop.xlane.xlu0 %1322
        %v1324 = vmax.f32 %v1151, %v1240
        %1325 = vmax.xlane.f32.xlu0 %v1324
        %v1326 = vpop.xlane.xlu0 %1325
        %v1327 = vmax.f32 %v1153, %v1242
        %1328 = vmax.xlane.f32.xlu0 %v1327
        %v1329 = vpop.xlane.xlu0 %1328
        %v1330 = vmax.f32 %v1156, %v1245
        %1331 = vmax.xlane.f32.xlu0 %v1330
        %v1332 = vpop.xlane.xlu0 %1331
        %v1333 = vmax.f32 %v1158, %v1247
        %1334 = vmax.xlane.f32.xlu0 %v1333
        %v1335 = vpop.xlane.xlu0 %1334
        %v1336 = vmax.f32 %v1161, %v1250
        %1337 = vmax.xlane.f32.xlu0 %v1336
        %v1338 = vpop.xlane.xlu0 %1337
        %v1339 = vmax.f32 %v1163, %v1252
        %1340 = vmax.xlane.f32.xlu0 %v1339
        %v1341 = vpop.xlane.xlu0 %1340
        %v1342 = vmax.f32 %v1166, %v1255
        %1343 = vmax.xlane.f32.xlu0 %v1342
        %v1344 = vpop.xlane.xlu0 %1343
        %v1345 = vmax.f32 %v1168, %v1257
        %1346 = vmax.xlane.f32.xlu0 %v1345
        %v1347 = vpop.xlane.xlu0 %1346
        %v1348 = vmax.f32 %v1171, %v1260
        %1349 = vmax.xlane.f32.xlu0 %v1348
        %v1350 = vpop.xlane.xlu0 %1349
        %v1351 = vmax.f32 %v1173, %v1262
        %1352 = vmax.xlane.f32.xlu0 %v1351
        %v1353 = vpop.xlane.xlu0 %1352
        %v1354 = vmax.f32 %v1176, %v1265
        %1355 = vmax.xlane.f32.xlu0 %v1354
        %v1356 = vpop.xlane.xlu0 %1355
        %v1357 = vmax.f32 %v1178, %v1267
        %1358 = vmax.xlane.f32.xlu0 %v1357
        %v1359 = vpop.xlane.xlu0 %1358
        %v1360 = vmax.f32 %v1181, %v1270
        %1361 = vmax.xlane.f32.xlu0 %v1360
        %v1362 = vpop.xlane.xlu0 %1361
        %v1363 = vmax.f32 %v1183, %v1272
        %1364 = vmax.xlane.f32.xlu0 %v1363
        %v1365 = vpop.xlane.xlu0 %1364
        %v1366 = vmax.f32 %v1186, %v1275
        %1367 = vmax.xlane.f32.xlu0 %v1366
        %v1368 = vpop.xlane.xlu0 %1367
        %v1369 = vmax.f32 %v1188, %v1277
        %1370 = vmax.xlane.f32.xlu0 %v1369
        %v1371 = vpop.xlane.xlu0 %1370
        %v1372 = vmax.f32 %v1191, %v1280
        %1373 = vmax.xlane.f32.xlu0 %v1372
        %v1374 = vpop.xlane.xlu0 %1373
        %v1375 = vmax.f32 %v1193, %v1282
        %1376 = vmax.xlane.f32.xlu0 %v1375
        %v1377 = vpop.xlane.xlu0 %1376
        %v1378 = vmax.f32 %v1196, %v1285
        %1379 = vmax.xlane.f32.xlu0 %v1378
        %v1380 = vpop.xlane.xlu0 %1379
        %v1381 = vmax.f32 %v1198, %v1287
        %1382 = vmax.xlane.f32.xlu0 %v1381
        %v1383 = vpop.xlane.xlu0 %1382
        %v1384 = vmax.f32 %v1201, %v1290
        %1385 = vmax.xlane.f32.xlu0 %v1384
        %v1386 = vpop.xlane.xlu0 %1385
        %v1387 = vmax.f32 %v1203, %v1292
        %1388 = vmax.xlane.f32.xlu0 %v1387
        %v1389 = vpop.xlane.xlu0 %1388
        %v1390 = vsub.f32 %v1126, %v1296
        %v1391 = vsub.f32 %v1215, %v1296
        %v1392 = vsub.f32 %v1128, %v1299
        %v1393 = vsub.f32 %v1217, %v1299
        %v1394 = vsub.f32 %v1131, %v1302
        %v1395 = vsub.f32 %v1220, %v1302
        %v1396 = vsub.f32 %v1133, %v1305
        %v1397 = vsub.f32 %v1222, %v1305
        %v1398 = vsub.f32 %v1136, %v1308
        %v1399 = vsub.f32 %v1225, %v1308
        %v1400 = vsub.f32 %v1138, %v1311
        %v1401 = vsub.f32 %v1227, %v1311
        %v1402 = vsub.f32 %v1141, %v1314
        %v1403 = vsub.f32 %v1230, %v1314
        %v1404 = vsub.f32 %v1143, %v1317
        %v1405 = vsub.f32 %v1232, %v1317
        %v1406 = vsub.f32 %v1146, %v1320
        %v1407 = vsub.f32 %v1235, %v1320
        %v1408 = vsub.f32 %v1148, %v1323
        %v1409 = vsub.f32 %v1237, %v1323
        %v1410 = vsub.f32 %v1151, %v1326
        %v1411 = vsub.f32 %v1240, %v1326
        %v1412 = vsub.f32 %v1153, %v1329
        %v1413 = vsub.f32 %v1242, %v1329
        %v1414 = vsub.f32 %v1156, %v1332
        %v1415 = vsub.f32 %v1245, %v1332
        %v1416 = vsub.f32 %v1158, %v1335
        %v1417 = vsub.f32 %v1247, %v1335
        %v1418 = vsub.f32 %v1161, %v1338
        %v1419 = vsub.f32 %v1250, %v1338
        %v1420 = vsub.f32 %v1163, %v1341
        %v1421 = vsub.f32 %v1252, %v1341
        %v1422 = vsub.f32 %v1166, %v1344
        %v1423 = vsub.f32 %v1255, %v1344
        %v1424 = vsub.f32 %v1168, %v1347
        %v1425 = vsub.f32 %v1257, %v1347
        %v1426 = vsub.f32 %v1171, %v1350
        %v1427 = vsub.f32 %v1260, %v1350
        %v1428 = vsub.f32 %v1173, %v1353
        %v1429 = vsub.f32 %v1262, %v1353
        %v1430 = vsub.f32 %v1176, %v1356
        %v1431 = vsub.f32 %v1265, %v1356
        %v1432 = vsub.f32 %v1178, %v1359
        %v1433 = vsub.f32 %v1267, %v1359
        %v1434 = vsub.f32 %v1181, %v1362
        %v1435 = vsub.f32 %v1270, %v1362
        %v1436 = vsub.f32 %v1183, %v1365
        %v1437 = vsub.f32 %v1272, %v1365
        %v1438 = vsub.f32 %v1186, %v1368
        %v1439 = vsub.f32 %v1275, %v1368
        %v1440 = vsub.f32 %v1188, %v1371
        %v1441 = vsub.f32 %v1277, %v1371
        %v1442 = vsub.f32 %v1191, %v1374
        %v1443 = vsub.f32 %v1280, %v1374
        %v1444 = vsub.f32 %v1193, %v1377
        %v1445 = vsub.f32 %v1282, %v1377
        %v1446 = vsub.f32 %v1196, %v1380
        %v1447 = vsub.f32 %v1285, %v1380
        %v1448 = vsub.f32 %v1198, %v1383
        %v1449 = vsub.f32 %v1287, %v1383
        %v1450 = vsub.f32 %v1201, %v1386
        %v1451 = vsub.f32 %v1290, %v1386
        %v1452 = vsub.f32 %v1203, %v1389
        %v1453 = vsub.f32 %v1292, %v1389
        %v1454 = vmul.f32 %v1390, 1.442695
        %v1455 = vpow.pop %v1454
        %v1456 = vmul.f32 %v1391, 1.442695
        %v1457 = vpow.pop %v1456
        %v1458 = vmul.f32 %v1392, 1.442695
        %v1459 = vpow.pop %v1458
        %v1460 = vmul.f32 %v1393, 1.442695
        %v1461 = vpow.pop %v1460
        %v1462 = vmul.f32 %v1394, 1.442695
        %v1463 = vpow.pop %v1462
        %v1464 = vmul.f32 %v1395, 1.442695
        %v1465 = vpow.pop %v1464
        %v1466 = vmul.f32 %v1396, 1.442695
        %v1467 = vpow.pop %v1466
        %v1468 = vmul.f32 %v1397, 1.442695
        %v1469 = vpow.pop %v1468
        %v1470 = vmul.f32 %v1398, 1.442695
        %v1471 = vpow.pop %v1470
        %v1472 = vmul.f32 %v1399, 1.442695
        %v1473 = vpow.pop %v1472
        %v1474 = vmul.f32 %v1400, 1.442695
        %v1475 = vpow.pop %v1474
        %v1476 = vmul.f32 %v1401, 1.442695
        %v1477 = vpow.pop %v1476
        %v1478 = vmul.f32 %v1402, 1.442695
        %v1479 = vpow.pop %v1478
        %v1480 = vmul.f32 %v1403, 1.442695
        %v1481 = vpow.pop %v1480
        %v1482 = vmul.f32 %v1404, 1.442695
        %v1483 = vpow.pop %v1482
        %v1484 = vmul.f32 %v1405, 1.442695
        %v1485 = vpow.pop %v1484
        %v1486 = vmul.f32 %v1406, 1.442695
        %v1487 = vpow.pop %v1486
        %v1488 = vmul.f32 %v1407, 1.442695
        %v1489 = vpow.pop %v1488
        %v1490 = vmul.f32 %v1408, 1.442695
        %v1491 = vpow.pop %v1490
        %v1492 = vmul.f32 %v1409, 1.442695
        %v1493 = vpow.pop %v1492
        %v1494 = vmul.f32 %v1410, 1.442695
        %v1495 = vpow.pop %v1494
        %v1496 = vmul.f32 %v1411, 1.442695
        %v1497 = vpow.pop %v1496
        %v1498 = vmul.f32 %v1412, 1.442695
        %v1499 = vpow.pop %v1498
        %v1500 = vmul.f32 %v1413, 1.442695
        %v1501 = vpow.pop %v1500
        %v1502 = vmul.f32 %v1414, 1.442695
        %v1503 = vpow.pop %v1502
        %v1504 = vmul.f32 %v1415, 1.442695
        %v1505 = vpow.pop %v1504
        %v1506 = vmul.f32 %v1416, 1.442695
        %v1507 = vpow.pop %v1506
        %v1508 = vmul.f32 %v1417, 1.442695
        %v1509 = vpow.pop %v1508
        %v1510 = vmul.f32 %v1418, 1.442695
        %v1511 = vpow.pop %v1510
        %v1512 = vmul.f32 %v1419, 1.442695
        %v1513 = vpow.pop %v1512
        %v1514 = vmul.f32 %v1420, 1.442695
        %v1515 = vpow.pop %v1514
        %v1516 = vmul.f32 %v1421, 1.442695
        %v1517 = vpow.pop %v1516
        %v1518 = vmul.f32 %v1422, 1.442695
        %v1519 = vpow.pop %v1518
        %v1520 = vmul.f32 %v1423, 1.442695
        %v1521 = vpow.pop %v1520
        %v1522 = vmul.f32 %v1424, 1.442695
        %v1523 = vpow.pop %v1522
        %v1524 = vmul.f32 %v1425, 1.442695
        %v1525 = vpow.pop %v1524
        %v1526 = vmul.f32 %v1426, 1.442695
        %v1527 = vpow.pop %v1526
        %v1528 = vmul.f32 %v1427, 1.442695
        %v1529 = vpow.pop %v1528
        %v1530 = vmul.f32 %v1428, 1.442695
        %v1531 = vpow.pop %v1530
        %v1532 = vmul.f32 %v1429, 1.442695
        %v1533 = vpow.pop %v1532
        %v1534 = vmul.f32 %v1430, 1.442695
        %v1535 = vpow.pop %v1534
        %v1536 = vmul.f32 %v1431, 1.442695
        %v1537 = vpow.pop %v1536
        %v1538 = vmul.f32 %v1432, 1.442695
        %v1539 = vpow.pop %v1538
        %v1540 = vmul.f32 %v1433, 1.442695
        %v1541 = vpow.pop %v1540
        %v1542 = vmul.f32 %v1434, 1.442695
        %v1543 = vpow.pop %v1542
        %v1544 = vmul.f32 %v1435, 1.442695
        %v1545 = vpow.pop %v1544
        %v1546 = vmul.f32 %v1436, 1.442695
        %v1547 = vpow.pop %v1546
        %v1548 = vmul.f32 %v1437, 1.442695
        %v1549 = vpow.pop %v1548
        %v1550 = vmul.f32 %v1438, 1.442695
        %v1551 = vpow.pop %v1550
        %v1552 = vmul.f32 %v1439, 1.442695
        %v1553 = vpow.pop %v1552
        %v1554 = vmul.f32 %v1440, 1.442695
        %v1555 = vpow.pop %v1554
        %v1556 = vmul.f32 %v1441, 1.442695
        %v1557 = vpow.pop %v1556
        %v1558 = vmul.f32 %v1442, 1.442695
        %v1559 = vpow.pop %v1558
        %v1560 = vmul.f32 %v1443, 1.442695
        %v1561 = vpow.pop %v1560
        %v1562 = vmul.f32 %v1444, 1.442695
        %v1563 = vpow.pop %v1562
        %v1564 = vmul.f32 %v1445, 1.442695
        %v1565 = vpow.pop %v1564
        %v1566 = vmul.f32 %v1446, 1.442695
        %v1567 = vpow.pop %v1566
        %v1568 = vmul.f32 %v1447, 1.442695
        %v1569 = vpow.pop %v1568
        %v1570 = vmul.f32 %v1448, 1.442695
        %v1571 = vpow.pop %v1570
        %v1572 = vmul.f32 %v1449, 1.442695
        %v1573 = vpow.pop %v1572
        %v1574 = vmul.f32 %v1450, 1.442695
        %v1575 = vpow.pop %v1574
        %v1576 = vmul.f32 %v1451, 1.442695
        %v1577 = vpow.pop %v1576
        %v1578 = vmul.f32 %v1452, 1.442695
        %v1579 = vpow.pop %v1578
        %v1580 = vmul.f32 %v1453, 1.442695
        %v1581 = vpow.pop %v1580
        %v1582 = vadd.f32 %v1455, %v1457
        %1583 = vadd.xlane.f32.xlu0 %v1582
        %v1584 = vpop.xlane.xlu0 %1583
        %v1585 = vadd.f32 %v1459, %v1461
        %1586 = vadd.xlane.f32.xlu0 %v1585
        %v1587 = vpop.xlane.xlu0 %1586
        %v1588 = vadd.f32 %v1463, %v1465
        %1589 = vadd.xlane.f32.xlu0 %v1588
        %v1590 = vpop.xlane.xlu0 %1589
        %v1591 = vadd.f32 %v1467, %v1469
        %1592 = vadd.xlane.f32.xlu0 %v1591
        %v1593 = vpop.xlane.xlu0 %1592
        %v1594 = vadd.f32 %v1471, %v1473
        %1595 = vadd.xlane.f32.xlu0 %v1594
        %v1596 = vpop.xlane.xlu0 %1595
        %v1597 = vadd.f32 %v1475, %v1477
        %1598 = vadd.xlane.f32.xlu0 %v1597
        %v1599 = vpop.xlane.xlu0 %1598
        %v1600 = vadd.f32 %v1479, %v1481
        %1601 = vadd.xlane.f32.xlu0 %v1600
        %v1602 = vpop.xlane.xlu0 %1601
        %v1603 = vadd.f32 %v1483, %v1485
        %1604 = vadd.xlane.f32.xlu0 %v1603
        %v1605 = vpop.xlane.xlu0 %1604
        %v1606 = vadd.f32 %v1487, %v1489
        %1607 = vadd.xlane.f32.xlu0 %v1606
        %v1608 = vpop.xlane.xlu0 %1607
        %v1609 = vadd.f32 %v1491, %v1493
        %1610 = vadd.xlane.f32.xlu0 %v1609
        %v1611 = vpop.xlane.xlu0 %1610
        %v1612 = vadd.f32 %v1495, %v1497
        %1613 = vadd.xlane.f32.xlu0 %v1612
        %v1614 = vpop.xlane.xlu0 %1613
        %v1615 = vadd.f32 %v1499, %v1501
        %1616 = vadd.xlane.f32.xlu0 %v1615
        %v1617 = vpop.xlane.xlu0 %1616
        %v1618 = vadd.f32 %v1503, %v1505
        %1619 = vadd.xlane.f32.xlu0 %v1618
        %v1620 = vpop.xlane.xlu0 %1619
        %v1621 = vadd.f32 %v1507, %v1509
        %1622 = vadd.xlane.f32.xlu0 %v1621
        %v1623 = vpop.xlane.xlu0 %1622
        %v1624 = vadd.f32 %v1511, %v1513
        %1625 = vadd.xlane.f32.xlu0 %v1624
        %v1626 = vpop.xlane.xlu0 %1625
        %v1627 = vadd.f32 %v1515, %v1517
        %1628 = vadd.xlane.f32.xlu0 %v1627
        %v1629 = vpop.xlane.xlu0 %1628
        %v1630 = vadd.f32 %v1519, %v1521
        %1631 = vadd.xlane.f32.xlu0 %v1630
        %v1632 = vpop.xlane.xlu0 %1631
        %v1633 = vadd.f32 %v1523, %v1525
        %1634 = vadd.xlane.f32.xlu0 %v1633
        %v1635 = vpop.xlane.xlu0 %1634
        %v1636 = vadd.f32 %v1527, %v1529
        %1637 = vadd.xlane.f32.xlu0 %v1636
        %v1638 = vpop.xlane.xlu0 %1637
        %v1639 = vadd.f32 %v1531, %v1533
        %1640 = vadd.xlane.f32.xlu0 %v1639
        %v1641 = vpop.xlane.xlu0 %1640
        %v1642 = vadd.f32 %v1535, %v1537
        %1643 = vadd.xlane.f32.xlu0 %v1642
        %v1644 = vpop.xlane.xlu0 %1643
        %v1645 = vadd.f32 %v1539, %v1541
        %1646 = vadd.xlane.f32.xlu0 %v1645
        %v1647 = vpop.xlane.xlu0 %1646
        %v1648 = vadd.f32 %v1543, %v1545
        %1649 = vadd.xlane.f32.xlu0 %v1648
        %v1650 = vpop.xlane.xlu0 %1649
        %v1651 = vadd.f32 %v1547, %v1549
        %1652 = vadd.xlane.f32.xlu0 %v1651
        %v1653 = vpop.xlane.xlu0 %1652
        %v1654 = vadd.f32 %v1551, %v1553
        %1655 = vadd.xlane.f32.xlu0 %v1654
        %v1656 = vpop.xlane.xlu0 %1655
        %v1657 = vadd.f32 %v1555, %v1557
        %1658 = vadd.xlane.f32.xlu0 %v1657
        %v1659 = vpop.xlane.xlu0 %1658
        %v1660 = vadd.f32 %v1559, %v1561
        %1661 = vadd.xlane.f32.xlu0 %v1660
        %v1662 = vpop.xlane.xlu0 %1661
        %v1663 = vadd.f32 %v1563, %v1565
        %1664 = vadd.xlane.f32.xlu0 %v1663
        %v1665 = vpop.xlane.xlu0 %1664
        %v1666 = vadd.f32 %v1567, %v1569
        %1667 = vadd.xlane.f32.xlu0 %v1666
        %v1668 = vpop.xlane.xlu0 %1667
        %v1669 = vadd.f32 %v1571, %v1573
        %1670 = vadd.xlane.f32.xlu0 %v1669
        %v1671 = vpop.xlane.xlu0 %1670
        %v1672 = vadd.f32 %v1575, %v1577
        %1673 = vadd.xlane.f32.xlu0 %v1672
        %v1674 = vpop.xlane.xlu0 %1673
        %v1675 = vadd.f32 %v1579, %v1581
        %1676 = vadd.xlane.f32.xlu0 %v1675
        %v1677 = vpop.xlane.xlu0 %1676
        %v1678 = vrcp.pop %v1584
        %v1679 = vrcp.pop %v1587
        %v1680 = vrcp.pop %v1590
        %v1681 = vrcp.pop %v1593
        %v1682 = vrcp.pop %v1596
        %v1683 = vrcp.pop %v1599
        %v1684 = vrcp.pop %v1602
        %v1685 = vrcp.pop %v1605
        %v1686 = vrcp.pop %v1608
        %v1687 = vrcp.pop %v1611
        %v1688 = vrcp.pop %v1614
        %v1689 = vrcp.pop %v1617
        %v1690 = vrcp.pop %v1620
        %v1691 = vrcp.pop %v1623
        %v1692 = vrcp.pop %v1626
        %v1693 = vrcp.pop %v1629
        %v1694 = vrcp.pop %v1632
        %v1695 = vrcp.pop %v1635
        %v1696 = vrcp.pop %v1638
        %v1697 = vrcp.pop %v1641
        %v1698 = vrcp.pop %v1644
        %v1699 = vrcp.pop %v1647
        %v1700 = vrcp.pop %v1650
        %v1701 = vrcp.pop %v1653
        %v1702 = vrcp.pop %v1656
        %v1703 = vrcp.pop %v1659
        %v1704 = vrcp.pop %v1662
        %v1705 = vrcp.pop %v1665
        %v1706 = vrcp.pop %v1668
        %v1707 = vrcp.pop %v1671
        %v1708 = vrcp.pop %v1674
        %v1709 = vrcp.pop %v1677
        %v1710 = vmul.f32 %v1455, %v1678
        %v1711 = vmul.f32 %v1457, %v1678
        %v1712 = vmul.f32 %v1459, %v1679
        %v1713 = vmul.f32 %v1461, %v1679
        %v1714 = vmul.f32 %v1463, %v1680
        %v1715 = vmul.f32 %v1465, %v1680
        %v1716 = vmul.f32 %v1467, %v1681
        %v1717 = vmul.f32 %v1469, %v1681
        %v1718 = vmul.f32 %v1471, %v1682
        %v1719 = vmul.f32 %v1473, %v1682
        %v1720 = vmul.f32 %v1475, %v1683
        %v1721 = vmul.f32 %v1477, %v1683
        %v1722 = vmul.f32 %v1479, %v1684
        %v1723 = vmul.f32 %v1481, %v1684
        %v1724 = vmul.f32 %v1483, %v1685
        %v1725 = vmul.f32 %v1485, %v1685
        %v1726 = vmul.f32 %v1487, %v1686
        %v1727 = vmul.f32 %v1489, %v1686
        %v1728 = vmul.f32 %v1491, %v1687
        %v1729 = vmul.f32 %v1493, %v1687
        %v1730 = vmul.f32 %v1495, %v1688
        %v1731 = vmul.f32 %v1497, %v1688
        %v1732 = vmul.f32 %v1499, %v1689
        %v1733 = vmul.f32 %v1501, %v1689
        %v1734 = vmul.f32 %v1503, %v1690
        %v1735 = vmul.f32 %v1505, %v1690
        %v1736 = vmul.f32 %v1507, %v1691
        %v1737 = vmul.f32 %v1509, %v1691
        %v1738 = vmul.f32 %v1511, %v1692
        %v1739 = vmul.f32 %v1513, %v1692
        %v1740 = vmul.f32 %v1515, %v1693
        %v1741 = vmul.f32 %v1517, %v1693
        %v1742 = vmul.f32 %v1519, %v1694
        %v1743 = vmul.f32 %v1521, %v1694
        %v1744 = vmul.f32 %v1523, %v1695
        %v1745 = vmul.f32 %v1525, %v1695
        %v1746 = vmul.f32 %v1527, %v1696
        %v1747 = vmul.f32 %v1529, %v1696
        %v1748 = vmul.f32 %v1531, %v1697
        %v1749 = vmul.f32 %v1533, %v1697
        %v1750 = vmul.f32 %v1535, %v1698
        %v1751 = vmul.f32 %v1537, %v1698
        %v1752 = vmul.f32 %v1539, %v1699
        %v1753 = vmul.f32 %v1541, %v1699
        %v1754 = vmul.f32 %v1543, %v1700
        %v1755 = vmul.f32 %v1545, %v1700
        %v1756 = vmul.f32 %v1547, %v1701
        %v1757 = vmul.f32 %v1549, %v1701
        %v1758 = vmul.f32 %v1551, %v1702
        %v1759 = vmul.f32 %v1553, %v1702
        %v1760 = vmul.f32 %v1555, %v1703
        %v1761 = vmul.f32 %v1557, %v1703
        %v1762 = vmul.f32 %v1559, %v1704
        %v1763 = vmul.f32 %v1561, %v1704
        %v1764 = vmul.f32 %v1563, %v1705
        %v1765 = vmul.f32 %v1565, %v1705
        %v1766 = vmul.f32 %v1567, %v1706
        %v1767 = vmul.f32 %v1569, %v1706
        %v1768 = vmul.f32 %v1571, %v1707
        %v1769 = vmul.f32 %v1573, %v1707
        %v1770 = vmul.f32 %v1575, %v1708
        %v1771 = vmul.f32 %v1577, %v1708
        %v1772 = vmul.f32 %v1579, %v1709
        %v1773 = vmul.f32 %v1581, %v1709
        %v1774 = vpack.c.bf16 %v1712, %v1710
        %v1775 = vpack.c.bf16 %v1713, %v1711
        %v1776 = vpack.c.bf16 %v1716, %v1714
        %v1777 = vpack.c.bf16 %v1717, %v1715
        %v1778 = vpack.c.bf16 %v1720, %v1718
        %v1779 = vpack.c.bf16 %v1721, %v1719
        %v1780 = vpack.c.bf16 %v1724, %v1722
        %v1781 = vpack.c.bf16 %v1725, %v1723
        %v1782 = vpack.c.bf16 %v1728, %v1726
        %v1783 = vpack.c.bf16 %v1729, %v1727
        %v1784 = vpack.c.bf16 %v1732, %v1730
        %v1785 = vpack.c.bf16 %v1733, %v1731
        %v1786 = vpack.c.bf16 %v1736, %v1734
        %v1787 = vpack.c.bf16 %v1737, %v1735
        %v1788 = vpack.c.bf16 %v1740, %v1738
        %v1789 = vpack.c.bf16 %v1741, %v1739
        %v1790 = vpack.c.bf16 %v1744, %v1742
        %v1791 = vpack.c.bf16 %v1745, %v1743
        %v1792 = vpack.c.bf16 %v1748, %v1746
        %v1793 = vpack.c.bf16 %v1749, %v1747
        %v1794 = vpack.c.bf16 %v1752, %v1750
        %v1795 = vpack.c.bf16 %v1753, %v1751
        %v1796 = vpack.c.bf16 %v1756, %v1754
        %v1797 = vpack.c.bf16 %v1757, %v1755
        %v1798 = vpack.c.bf16 %v1760, %v1758
        %v1799 = vpack.c.bf16 %v1761, %v1759
        %v1800 = vpack.c.bf16 %v1764, %v1762
        %v1801 = vpack.c.bf16 %v1765, %v1763
        %v1802 = vpack.c.bf16 %v1768, %v1766
        %v1803 = vpack.c.bf16 %v1769, %v1767
        %v1804 = vpack.c.bf16 %v1772, %v1770
        %v1805 = vpack.c.bf16 %v1773, %v1771
        %v1838 = vunpack.c.l.b16 %v827
        %v1839 = vunpack.c.l.b16 %v828
        %v1840 = vunpack.c.l.b16 %v829
        %v1841 = vunpack.c.l.b16 %v830
        %v1842 = vunpack.c.l.b16 %v831
        %v1843 = vunpack.c.l.b16 %v832
        %v1844 = vunpack.c.l.b16 %v833
        %v1845 = vunpack.c.l.b16 %v834
        %v1846 = vunpack.c.l.b16 %v835
        %v1847 = vunpack.c.l.b16 %v836
        %v1848 = vunpack.c.l.b16 %v837
        %v1849 = vunpack.c.l.b16 %v838
        %v1850 = vunpack.c.l.b16 %v839
        %v1851 = vunpack.c.l.b16 %v840
        %v1852 = vunpack.c.l.b16 %v841
        %v1853 = vunpack.c.l.b16 %v842
        %v1854 = vunpack.c.l.b16 %v843
        %v1855 = vunpack.c.l.b16 %v844
        %v1856 = vunpack.c.l.b16 %v845
        %v1857 = vunpack.c.l.b16 %v846
        %v1858 = vunpack.c.l.b16 %v847
        %v1859 = vunpack.c.l.b16 %v848
        %v1860 = vunpack.c.l.b16 %v849
        %v1861 = vunpack.c.l.b16 %v850
        %v1862 = vunpack.c.l.b16 %v851
        %v1863 = vunpack.c.l.b16 %v852
        %v1864 = vunpack.c.l.b16 %v853
        %v1865 = vunpack.c.l.b16 %v854
        %v1866 = vunpack.c.l.b16 %v855
        %v1867 = vunpack.c.l.b16 %v856
        %v1868 = vunpack.c.l.b16 %v857
        %v1869 = vunpack.c.l.b16 %v858
        %v1870 = vpack.c.b16 %v1839, %v1838
        %v1871 = vpack.c.b16 %v1841, %v1840
        %v1872 = vpack.c.b16 %v1843, %v1842
        %v1873 = vpack.c.b16 %v1845, %v1844
        %v1874 = vpack.c.b16 %v1847, %v1846
        %v1875 = vpack.c.b16 %v1849, %v1848
        %v1876 = vpack.c.b16 %v1851, %v1850
        %v1877 = vpack.c.b16 %v1853, %v1852
        %v1878 = vpack.c.b16 %v1855, %v1854
        %v1879 = vpack.c.b16 %v1857, %v1856
        %v1880 = vpack.c.b16 %v1859, %v1858
        %v1881 = vpack.c.b16 %v1861, %v1860
        %v1882 = vpack.c.b16 %v1863, %v1862
        %v1883 = vpack.c.b16 %v1865, %v1864
        %v1884 = vpack.c.b16 %v1867, %v1866
        %v1885 = vpack.c.b16 %v1869, %v1868
        %1902 = vmatpush.bf16.msra.mxu0 %v1877
        %1903 = vmatpush.bf16.msra.mxu0 %v1876
        %1904 = vmatpush.bf16.msra.mxu0 %v1875
        %1905 = vmatpush.bf16.msra.mxu0 %v1874
        %1906 = vmatpush.bf16.msra.mxu0 %v1873
        %1907 = vmatpush.bf16.msra.mxu0 %v1872
        %1908 = vmatpush.bf16.msra.mxu0 %v1871
        %1909 = vmatpush.bf16.msra.mxu0 %v1870
        %1910 = vmatmul.bf16.gmra.mxu0 %v1774
        %v1911 = vpop.f32.mrf.mxu0
        %v1912 = vadd.f32 0.0, %v1911
        %v1913 = vpop.f32.mrf.mxu0
        %v1914 = vadd.f32 0.0, %v1913
        %1915 = vmatmul.bf16.gmra.mxu0 %v1776
        %v1916 = vpop.f32.mrf.mxu0
        %v1917 = vadd.f32 0.0, %v1916
        %v1918 = vpop.f32.mrf.mxu0
        %v1919 = vadd.f32 0.0, %v1918
        %1920 = vmatmul.bf16.gmra.mxu0 %v1778
        %v1921 = vpop.f32.mrf.mxu0
        %v1922 = vadd.f32 0.0, %v1921
        %v1923 = vpop.f32.mrf.mxu0
        %v1924 = vadd.f32 0.0, %v1923
        %1925 = vmatmul.bf16.gmra.mxu0 %v1780
        %v1926 = vpop.f32.mrf.mxu0
        %v1927 = vadd.f32 0.0, %v1926
        %v1928 = vpop.f32.mrf.mxu0
        %v1929 = vadd.f32 0.0, %v1928
        %1930 = vmatmul.bf16.gmra.mxu0 %v1782
        %v1931 = vpop.f32.mrf.mxu0
        %v1932 = vadd.f32 0.0, %v1931
        %v1933 = vpop.f32.mrf.mxu0
        %v1934 = vadd.f32 0.0, %v1933
        %1935 = vmatmul.bf16.gmra.mxu0 %v1784
        %v1936 = vpop.f32.mrf.mxu0
        %v1937 = vadd.f32 0.0, %v1936
        %v1938 = vpop.f32.mrf.mxu0
        %v1939 = vadd.f32 0.0, %v1938
        %1940 = vmatmul.bf16.gmra.mxu0 %v1786
        %v1941 = vpop.f32.mrf.mxu0
        %v1942 = vadd.f32 0.0, %v1941
        %v1943 = vpop.f32.mrf.mxu0
        %v1944 = vadd.f32 0.0, %v1943
        %1945 = vmatmul.bf16.gmra.mxu0 %v1788
        %v1946 = vpop.f32.mrf.mxu0
        %v1947 = vadd.f32 0.0, %v1946
        %v1948 = vpop.f32.mrf.mxu0
        %v1949 = vadd.f32 0.0, %v1948
        %1950 = vmatmul.bf16.gmra.mxu0 %v1790
        %v1951 = vpop.f32.mrf.mxu0
        %v1952 = vadd.f32 0.0, %v1951
        %v1953 = vpop.f32.mrf.mxu0
        %v1954 = vadd.f32 0.0, %v1953
        %1955 = vmatmul.bf16.gmra.mxu0 %v1792
        %v1956 = vpop.f32.mrf.mxu0
        %v1957 = vadd.f32 0.0, %v1956
        %v1958 = vpop.f32.mrf.mxu0
        %v1959 = vadd.f32 0.0, %v1958
        %1960 = vmatmul.bf16.gmra.mxu0 %v1794
        %v1961 = vpop.f32.mrf.mxu0
        %v1962 = vadd.f32 0.0, %v1961
        %v1963 = vpop.f32.mrf.mxu0
        %v1964 = vadd.f32 0.0, %v1963
        %1965 = vmatmul.bf16.gmra.mxu0 %v1796
        %v1966 = vpop.f32.mrf.mxu0
        %v1967 = vadd.f32 0.0, %v1966
        %v1968 = vpop.f32.mrf.mxu0
        %v1969 = vadd.f32 0.0, %v1968
        %1970 = vmatmul.bf16.gmra.mxu0 %v1798
        %v1971 = vpop.f32.mrf.mxu0
        %v1972 = vadd.f32 0.0, %v1971
        %v1973 = vpop.f32.mrf.mxu0
        %v1974 = vadd.f32 0.0, %v1973
        %1975 = vmatmul.bf16.gmra.mxu0 %v1800
        %v1976 = vpop.f32.mrf.mxu0
        %v1977 = vadd.f32 0.0, %v1976
        %v1978 = vpop.f32.mrf.mxu0
        %v1979 = vadd.f32 0.0, %v1978
        %1980 = vmatmul.bf16.gmra.mxu0 %v1802
        %v1981 = vpop.f32.mrf.mxu0
        %v1982 = vadd.f32 0.0, %v1981
        %v1983 = vpop.f32.mrf.mxu0
        %v1984 = vadd.f32 0.0, %v1983
        %1985 = vmatmul.bf16.gmra.mxu0 %v1804
        %v1986 = vpop.f32.mrf.mxu0
        %v1987 = vadd.f32 0.0, %v1986
        %v1988 = vpop.f32.mrf.mxu0
        %v1989 = vadd.f32 0.0, %v1988
        %1990 = vdwg.mxu0
        %1991 = vmatpush.bf16.msra.mxu0 %v1885
        %1992 = vmatpush.bf16.msra.mxu0 %v1884
        %1993 = vmatpush.bf16.msra.mxu0 %v1883
        %1994 = vmatpush.bf16.msra.mxu0 %v1882
        %1995 = vmatpush.bf16.msra.mxu0 %v1881
        %1996 = vmatpush.bf16.msra.mxu0 %v1880
        %1997 = vmatpush.bf16.msra.mxu0 %v1879
        %1998 = vmatpush.bf16.msra.mxu0 %v1878
        %1999 = vmatmul.bf16.gmra.mxu0 %v1775
        %v2000 = vpop.f32.mrf.mxu0
        %v2001 = vadd.f32 %v1912, %v2000
        %v2002 = vpop.f32.mrf.mxu0
        %v2003 = vadd.f32 %v1914, %v2002
        %2004 = vmatmul.bf16.gmra.mxu0 %v1777
        %v2005 = vpop.f32.mrf.mxu0
        %v2006 = vadd.f32 %v1917, %v2005
        %v2007 = vpop.f32.mrf.mxu0
        %v2008 = vadd.f32 %v1919, %v2007
        %2009 = vmatmul.bf16.gmra.mxu0 %v1779
        %v2010 = vpop.f32.mrf.mxu0
        %v2011 = vadd.f32 %v1922, %v2010
        %v2012 = vpop.f32.mrf.mxu0
        %v2013 = vadd.f32 %v1924, %v2012
        %2014 = vmatmul.bf16.gmra.mxu0 %v1781
        %v2015 = vpop.f32.mrf.mxu0
        %v2016 = vadd.f32 %v1927, %v2015
        %v2017 = vpop.f32.mrf.mxu0
        %v2018 = vadd.f32 %v1929, %v2017
        %2019 = vmatmul.bf16.gmra.mxu0 %v1783
        %v2020 = vpop.f32.mrf.mxu0
        %v2021 = vadd.f32 %v1932, %v2020
        %v2022 = vpop.f32.mrf.mxu0
        %v2023 = vadd.f32 %v1934, %v2022
        %2024 = vmatmul.bf16.gmra.mxu0 %v1785
        %v2025 = vpop.f32.mrf.mxu0
        %v2026 = vadd.f32 %v1937, %v2025
        %v2027 = vpop.f32.mrf.mxu0
        %v2028 = vadd.f32 %v1939, %v2027
        %2029 = vmatmul.bf16.gmra.mxu0 %v1787
        %v2030 = vpop.f32.mrf.mxu0
        %v2031 = vadd.f32 %v1942, %v2030
        %v2032 = vpop.f32.mrf.mxu0
        %v2033 = vadd.f32 %v1944, %v2032
        %2034 = vmatmul.bf16.gmra.mxu0 %v1789
        %v2035 = vpop.f32.mrf.mxu0
        %v2036 = vadd.f32 %v1947, %v2035
        %v2037 = vpop.f32.mrf.mxu0
        %v2038 = vadd.f32 %v1949, %v2037
        %2039 = vmatmul.bf16.gmra.mxu0 %v1791
        %v2040 = vpop.f32.mrf.mxu0
        %v2041 = vadd.f32 %v1952, %v2040
        %v2042 = vpop.f32.mrf.mxu0
        %v2043 = vadd.f32 %v1954, %v2042
        %2044 = vmatmul.bf16.gmra.mxu0 %v1793
        %v2045 = vpop.f32.mrf.mxu0
        %v2046 = vadd.f32 %v1957, %v2045
        %v2047 = vpop.f32.mrf.mxu0
        %v2048 = vadd.f32 %v1959, %v2047
        %2049 = vmatmul.bf16.gmra.mxu0 %v1795
        %v2050 = vpop.f32.mrf.mxu0
        %v2051 = vadd.f32 %v1962, %v2050
        %v2052 = vpop.f32.mrf.mxu0
        %v2053 = vadd.f32 %v1964, %v2052
        %2054 = vmatmul.bf16.gmra.mxu0 %v1797
        %v2055 = vpop.f32.mrf.mxu0
        %v2056 = vadd.f32 %v1967, %v2055
        %v2057 = vpop.f32.mrf.mxu0
        %v2058 = vadd.f32 %v1969, %v2057
        %2059 = vmatmul.bf16.gmra.mxu0 %v1799
        %v2060 = vpop.f32.mrf.mxu0
        %v2061 = vadd.f32 %v1972, %v2060
        %v2062 = vpop.f32.mrf.mxu0
        %v2063 = vadd.f32 %v1974, %v2062
        %2064 = vmatmul.bf16.gmra.mxu0 %v1801
        %v2065 = vpop.f32.mrf.mxu0
        %v2066 = vadd.f32 %v1977, %v2065
        %v2067 = vpop.f32.mrf.mxu0
        %v2068 = vadd.f32 %v1979, %v2067
        %2069 = vmatmul.bf16.gmra.mxu0 %v1803
        %v2070 = vpop.f32.mrf.mxu0
        %v2071 = vadd.f32 %v1982, %v2070
        %v2072 = vpop.f32.mrf.mxu0
        %v2073 = vadd.f32 %v1984, %v2072
        %2074 = vmatmul.bf16.gmra.mxu0 %v1805
        %v2075 = vpop.f32.mrf.mxu0
        %v2076 = vadd.f32 %v1987, %v2075
        %v2077 = vpop.f32.mrf.mxu0
        %v2078 = vadd.f32 %v1989, %v2077
        %2079 = vdwg.mxu0
        %v2080 = vpack.c.bf16 %v2001, %v2001
        %v2081 = vpack.c.bf16 %v2003, %v2003
        %v2082 = vpack.c.bf16 %v2006, %v2006
        %v2083 = vpack.c.bf16 %v2008, %v2008
        %v2084 = vpack.c.bf16 %v2011, %v2011
        %v2085 = vpack.c.bf16 %v2013, %v2013
        %v2086 = vpack.c.bf16 %v2016, %v2016
        %v2087 = vpack.c.bf16 %v2018, %v2018
        %v2088 = vpack.c.bf16 %v2021, %v2021
        %v2089 = vpack.c.bf16 %v2023, %v2023
        %v2090 = vpack.c.bf16 %v2026, %v2026
        %v2091 = vpack.c.bf16 %v2028, %v2028
        %v2092 = vpack.c.bf16 %v2031, %v2031
        %v2093 = vpack.c.bf16 %v2033, %v2033
        %v2094 = vpack.c.bf16 %v2036, %v2036
        %v2095 = vpack.c.bf16 %v2038, %v2038
        %v2096 = vpack.c.bf16 %v2041, %v2041
        %v2097 = vpack.c.bf16 %v2043, %v2043
        %v2098 = vpack.c.bf16 %v2046, %v2046
        %v2099 = vpack.c.bf16 %v2048, %v2048
        %v2100 = vpack.c.bf16 %v2051, %v2051
        %v2101 = vpack.c.bf16 %v2053, %v2053
        %v2102 = vpack.c.bf16 %v2056, %v2056
        %v2103 = vpack.c.bf16 %v2058, %v2058
        %v2104 = vpack.c.bf16 %v2061, %v2061
        %v2105 = vpack.c.bf16 %v2063, %v2063
        %v2106 = vpack.c.bf16 %v2066, %v2066
        %v2107 = vpack.c.bf16 %v2068, %v2068
        %v2108 = vpack.c.bf16 %v2071, %v2071
        %v2109 = vpack.c.bf16 %v2073, %v2073
        %v2110 = vpack.c.bf16 %v2076, %v2076
        %v2111 = vpack.c.bf16 %v2078, %v2078
        %2112 = vrot.lane.b32.xlu0 %v923, 96
        %v2113 = vpop.permute.xlu0 %2112
        %2114 = vrot.lane.b32.xlu0 %v924, 96
        %v2115 = vpop.permute.xlu0 %2114
        %2116 = vrot.lane.b32.xlu0 %v925, 96
        %v2117 = vpop.permute.xlu0 %2116
        %2118 = vrot.lane.b32.xlu0 %v926, 96
        %v2119 = vpop.permute.xlu0 %2118
        %2120 = vrot.lane.b32.xlu0 %v927, 96
        %v2121 = vpop.permute.xlu0 %2120
        %2122 = vrot.lane.b32.xlu0 %v928, 96
        %v2123 = vpop.permute.xlu0 %2122
        %2124 = vrot.lane.b32.xlu0 %v929, 96
        %v2125 = vpop.permute.xlu0 %2124
        %2126 = vrot.lane.b32.xlu0 %v930, 96
        %v2127 = vpop.permute.xlu0 %2126
        %2128 = vrot.lane.b32.xlu0 %v931, 96
        %v2129 = vpop.permute.xlu0 %2128
        %2130 = vrot.lane.b32.xlu0 %v932, 96
        %v2131 = vpop.permute.xlu0 %2130
        %2132 = vrot.lane.b32.xlu0 %v933, 96
        %v2133 = vpop.permute.xlu0 %2132
        %2134 = vrot.lane.b32.xlu0 %v934, 96
        %v2135 = vpop.permute.xlu0 %2134
        %2136 = vrot.lane.b32.xlu0 %v935, 96
        %v2137 = vpop.permute.xlu0 %2136
        %2138 = vrot.lane.b32.xlu0 %v936, 96
        %v2139 = vpop.permute.xlu0 %2138
        %2140 = vrot.lane.b32.xlu0 %v937, 96
        %v2141 = vpop.permute.xlu0 %2140
        %2142 = vrot.lane.b32.xlu0 %v938, 96
        %v2143 = vpop.permute.xlu0 %2142
        %2144 = vrot.lane.b32.xlu0 %v1003, 96
        %v2145 = vpop.permute.xlu0 %2144
        %2146 = vrot.lane.b32.xlu0 %v1004, 96
        %v2147 = vpop.permute.xlu0 %2146
        %2148 = vrot.lane.b32.xlu0 %v1005, 96
        %v2149 = vpop.permute.xlu0 %2148
        %2150 = vrot.lane.b32.xlu0 %v1006, 96
        %v2151 = vpop.permute.xlu0 %2150
        %2152 = vrot.lane.b32.xlu0 %v1007, 96
        %v2153 = vpop.permute.xlu0 %2152
        %2154 = vrot.lane.b32.xlu0 %v1008, 96
        %v2155 = vpop.permute.xlu0 %2154
        %2156 = vrot.lane.b32.xlu0 %v1009, 96
        %v2157 = vpop.permute.xlu0 %2156
        %2158 = vrot.lane.b32.xlu0 %v1010, 96
        %v2159 = vpop.permute.xlu0 %2158
        %2160 = vrot.lane.b32.xlu0 %v1011, 96
        %v2161 = vpop.permute.xlu0 %2160
        %2162 = vrot.lane.b32.xlu0 %v1012, 96
        %v2163 = vpop.permute.xlu0 %2162
        %2164 = vrot.lane.b32.xlu0 %v1013, 96
        %v2165 = vpop.permute.xlu0 %2164
        %2166 = vrot.lane.b32.xlu0 %v1014, 96
        %v2167 = vpop.permute.xlu0 %2166
        %2168 = vrot.lane.b32.xlu0 %v1015, 96
        %v2169 = vpop.permute.xlu0 %2168
        %2170 = vrot.lane.b32.xlu0 %v1016, 96
        %v2171 = vpop.permute.xlu0 %2170
        %2172 = vrot.lane.b32.xlu0 %v1017, 96
        %v2173 = vpop.permute.xlu0 %2172
        %2174 = vrot.lane.b32.xlu0 %v1018, 96
        %v2175 = vpop.permute.xlu0 %2174
        %v2177 = vsel %vm1019, %v2113, 0
        %v2180 = vsel %vm1019, %v2115, 0
        %v2183 = vsel %vm1019, %v2117, 0
        %v2186 = vsel %vm1019, %v2119, 0
        %v2189 = vsel %vm1019, %v2121, 0
        %v2192 = vsel %vm1019, %v2123, 0
        %v2195 = vsel %vm1019, %v2125, 0
        %v2198 = vsel %vm1019, %v2127, 0
        %v2201 = vsel %vm1019, %v2129, 0
        %v2204 = vsel %vm1019, %v2131, 0
        %v2207 = vsel %vm1019, %v2133, 0
        %v2210 = vsel %vm1019, %v2135, 0
        %v2213 = vsel %vm1019, %v2137, 0
        %v2216 = vsel %vm1019, %v2139, 0
        %v2219 = vsel %vm1019, %v2141, 0
        %v2222 = vsel %vm1019, %v2143, 0
        %v2225 = vsel %vm1019, %v2145, 0
        %v2228 = vsel %vm1019, %v2147, 0
        %v2231 = vsel %vm1019, %v2149, 0
        %v2234 = vsel %vm1019, %v2151, 0
        %v2237 = vsel %vm1019, %v2153, 0
        %v2240 = vsel %vm1019, %v2155, 0
        %v2243 = vsel %vm1019, %v2157, 0
        %v2246 = vsel %vm1019, %v2159, 0
        %v2249 = vsel %vm1019, %v2161, 0
        %v2252 = vsel %vm1019, %v2163, 0
        %v2255 = vsel %vm1019, %v2165, 0
        %v2258 = vsel %vm1019, %v2167, 0
        %v2261 = vsel %vm1019, %v2169, 0
        %v2264 = vsel %vm1019, %v2171, 0
        %v2267 = vsel %vm1019, %v2173, 0
        %v2270 = vsel %vm1019, %v2175, 0
        %2272 = vmatpush.bf16.xpose.msra.mxu0 %v2246
        %2273 = vmatpush.bf16.xpose.msra.mxu0 %v2243
        %2274 = vmatpush.bf16.xpose.msra.mxu0 %v2240
        %2275 = vmatpush.bf16.xpose.msra.mxu0 %v2237
        %2276 = vmatpush.bf16.xpose.msra.mxu0 %v2234
        %2277 = vmatpush.bf16.xpose.msra.mxu0 %v2231
        %2278 = vmatpush.bf16.xpose.msra.mxu0 %v2228
        %2279 = vmatpush.bf16.xpose.msra.mxu0 %v2225
        %2280 = vmatmul.bf16.gmra.mxu0 %v2177
        %v2281 = vpop.f32.mrf.mxu0
        %v2282 = vadd.f32 0.0, %v2281
        %v2283 = vpop.f32.mrf.mxu0
        %v2284 = vadd.f32 0.0, %v2283
        %2285 = vmatmul.bf16.gmra.mxu0 %v2180
        %v2286 = vpop.f32.mrf.mxu0
        %v2287 = vadd.f32 0.0, %v2286
        %v2288 = vpop.f32.mrf.mxu0
        %v2289 = vadd.f32 0.0, %v2288
        %2290 = vmatmul.bf16.gmra.mxu0 %v2183
        %v2291 = vpop.f32.mrf.mxu0
        %v2292 = vadd.f32 0.0, %v2291
        %v2293 = vpop.f32.mrf.mxu0
        %v2294 = vadd.f32 0.0, %v2293
        %2295 = vmatmul.bf16.gmra.mxu0 %v2186
        %v2296 = vpop.f32.mrf.mxu0
        %v2297 = vadd.f32 0.0, %v2296
        %v2298 = vpop.f32.mrf.mxu0
        %v2299 = vadd.f32 0.0, %v2298
        %2300 = vmatmul.bf16.gmra.mxu0 %v2189
        %v2301 = vpop.f32.mrf.mxu0
        %v2302 = vadd.f32 0.0, %v2301
        %v2303 = vpop.f32.mrf.mxu0
        %v2304 = vadd.f32 0.0, %v2303
        %2305 = vmatmul.bf16.gmra.mxu0 %v2192
        %v2306 = vpop.f32.mrf.mxu0
        %v2307 = vadd.f32 0.0, %v2306
        %v2308 = vpop.f32.mrf.mxu0
        %v2309 = vadd.f32 0.0, %v2308
        %2310 = vmatmul.bf16.gmra.mxu0 %v2195
        %v2311 = vpop.f32.mrf.mxu0
        %v2312 = vadd.f32 0.0, %v2311
        %v2313 = vpop.f32.mrf.mxu0
        %v2314 = vadd.f32 0.0, %v2313
        %2315 = vmatmul.bf16.gmra.mxu0 %v2198
        %v2316 = vpop.f32.mrf.mxu0
        %v2317 = vadd.f32 0.0, %v2316
        %v2318 = vpop.f32.mrf.mxu0
        %v2319 = vadd.f32 0.0, %v2318
        %2320 = vmatmul.bf16.gmra.mxu0 %v2201
        %v2321 = vpop.f32.mrf.mxu0
        %v2322 = vadd.f32 0.0, %v2321
        %v2323 = vpop.f32.mrf.mxu0
        %v2324 = vadd.f32 0.0, %v2323
        %2325 = vmatmul.bf16.gmra.mxu0 %v2204
        %v2326 = vpop.f32.mrf.mxu0
        %v2327 = vadd.f32 0.0, %v2326
        %v2328 = vpop.f32.mrf.mxu0
        %v2329 = vadd.f32 0.0, %v2328
        %2330 = vmatmul.bf16.gmra.mxu0 %v2207
        %v2331 = vpop.f32.mrf.mxu0
        %v2332 = vadd.f32 0.0, %v2331
        %v2333 = vpop.f32.mrf.mxu0
        %v2334 = vadd.f32 0.0, %v2333
        %2335 = vmatmul.bf16.gmra.mxu0 %v2210
        %v2336 = vpop.f32.mrf.mxu0
        %v2337 = vadd.f32 0.0, %v2336
        %v2338 = vpop.f32.mrf.mxu0
        %v2339 = vadd.f32 0.0, %v2338
        %2340 = vmatmul.bf16.gmra.mxu0 %v2213
        %v2341 = vpop.f32.mrf.mxu0
        %v2342 = vadd.f32 0.0, %v2341
        %v2343 = vpop.f32.mrf.mxu0
        %v2344 = vadd.f32 0.0, %v2343
        %2345 = vmatmul.bf16.gmra.mxu0 %v2216
        %v2346 = vpop.f32.mrf.mxu0
        %v2347 = vadd.f32 0.0, %v2346
        %v2348 = vpop.f32.mrf.mxu0
        %v2349 = vadd.f32 0.0, %v2348
        %2350 = vmatmul.bf16.gmra.mxu0 %v2219
        %v2351 = vpop.f32.mrf.mxu0
        %v2352 = vadd.f32 0.0, %v2351
        %v2353 = vpop.f32.mrf.mxu0
        %v2354 = vadd.f32 0.0, %v2353
        %2355 = vmatmul.bf16.gmra.mxu0 %v2222
        %v2356 = vpop.f32.mrf.mxu0
        %v2357 = vadd.f32 0.0, %v2356
        %v2358 = vpop.f32.mrf.mxu0
        %v2359 = vadd.f32 0.0, %v2358
        %2360 = vdwg.mxu0
        %2361 = vmatpush.bf16.xpose.msra.mxu0 %v2270
        %2362 = vmatpush.bf16.xpose.msra.mxu0 %v2267
        %2363 = vmatpush.bf16.xpose.msra.mxu0 %v2264
        %2364 = vmatpush.bf16.xpose.msra.mxu0 %v2261
        %2365 = vmatpush.bf16.xpose.msra.mxu0 %v2258
        %2366 = vmatpush.bf16.xpose.msra.mxu0 %v2255
        %2367 = vmatpush.bf16.xpose.msra.mxu0 %v2252
        %2368 = vmatpush.bf16.xpose.msra.mxu0 %v2249
        %2369 = vmatmul.bf16.gmra.mxu0 %v2177
        %v2370 = vpop.f32.mrf.mxu0
        %v2371 = vadd.f32 0.0, %v2370
        %v2372 = vpop.f32.mrf.mxu0
        %v2373 = vadd.f32 0.0, %v2372
        %2374 = vmatmul.bf16.gmra.mxu0 %v2180
        %v2375 = vpop.f32.mrf.mxu0
        %v2376 = vadd.f32 0.0, %v2375
        %v2377 = vpop.f32.mrf.mxu0
        %v2378 = vadd.f32 0.0, %v2377
        %2379 = vmatmul.bf16.gmra.mxu0 %v2183
        %v2380 = vpop.f32.mrf.mxu0
        %v2381 = vadd.f32 0.0, %v2380
        %v2382 = vpop.f32.mrf.mxu0
        %v2383 = vadd.f32 0.0, %v2382
        %2384 = vmatmul.bf16.gmra.mxu0 %v2186
        %v2385 = vpop.f32.mrf.mxu0
        %v2386 = vadd.f32 0.0, %v2385
        %v2387 = vpop.f32.mrf.mxu0
        %v2388 = vadd.f32 0.0, %v2387
        %2389 = vmatmul.bf16.gmra.mxu0 %v2189
        %v2390 = vpop.f32.mrf.mxu0
        %v2391 = vadd.f32 0.0, %v2390
        %v2392 = vpop.f32.mrf.mxu0
        %v2393 = vadd.f32 0.0, %v2392
        %2394 = vmatmul.bf16.gmra.mxu0 %v2192
        %v2395 = vpop.f32.mrf.mxu0
        %v2396 = vadd.f32 0.0, %v2395
        %v2397 = vpop.f32.mrf.mxu0
        %v2398 = vadd.f32 0.0, %v2397
        %2399 = vmatmul.bf16.gmra.mxu0 %v2195
        %v2400 = vpop.f32.mrf.mxu0
        %v2401 = vadd.f32 0.0, %v2400
        %v2402 = vpop.f32.mrf.mxu0
        %v2403 = vadd.f32 0.0, %v2402
        %2404 = vmatmul.bf16.gmra.mxu0 %v2198
        %v2405 = vpop.f32.mrf.mxu0
        %v2406 = vadd.f32 0.0, %v2405
        %v2407 = vpop.f32.mrf.mxu0
        %v2408 = vadd.f32 0.0, %v2407
        %2409 = vmatmul.bf16.gmra.mxu0 %v2201
        %v2410 = vpop.f32.mrf.mxu0
        %v2411 = vadd.f32 0.0, %v2410
        %v2412 = vpop.f32.mrf.mxu0
        %v2413 = vadd.f32 0.0, %v2412
        %2414 = vmatmul.bf16.gmra.mxu0 %v2204
        %v2415 = vpop.f32.mrf.mxu0
        %v2416 = vadd.f32 0.0, %v2415
        %v2417 = vpop.f32.mrf.mxu0
        %v2418 = vadd.f32 0.0, %v2417
        %2419 = vmatmul.bf16.gmra.mxu0 %v2207
        %v2420 = vpop.f32.mrf.mxu0
        %v2421 = vadd.f32 0.0, %v2420
        %v2422 = vpop.f32.mrf.mxu0
        %v2423 = vadd.f32 0.0, %v2422
        %2424 = vmatmul.bf16.gmra.mxu0 %v2210
        %v2425 = vpop.f32.mrf.mxu0
        %v2426 = vadd.f32 0.0, %v2425
        %v2427 = vpop.f32.mrf.mxu0
        %v2428 = vadd.f32 0.0, %v2427
        %2429 = vmatmul.bf16.gmra.mxu0 %v2213
        %v2430 = vpop.f32.mrf.mxu0
        %v2431 = vadd.f32 0.0, %v2430
        %v2432 = vpop.f32.mrf.mxu0
        %v2433 = vadd.f32 0.0, %v2432
        %2434 = vmatmul.bf16.gmra.mxu0 %v2216
        %v2435 = vpop.f32.mrf.mxu0
        %v2436 = vadd.f32 0.0, %v2435
        %v2437 = vpop.f32.mrf.mxu0
        %v2438 = vadd.f32 0.0, %v2437
        %2439 = vmatmul.bf16.gmra.mxu0 %v2219
        %v2440 = vpop.f32.mrf.mxu0
        %v2441 = vadd.f32 0.0, %v2440
        %v2442 = vpop.f32.mrf.mxu0
        %v2443 = vadd.f32 0.0, %v2442
        %2444 = vmatmul.bf16.gmra.mxu0 %v2222
        %v2445 = vpop.f32.mrf.mxu0
        %v2446 = vadd.f32 0.0, %v2445
        %v2447 = vpop.f32.mrf.mxu0
        %v2448 = vadd.f32 0.0, %v2447
        %2449 = vdwg.mxu0
        %v2450 = vmax.f32 %v2282, %v2371
        %2451 = vmax.xlane.f32.xlu0 %v2450
        %v2452 = vpop.xlane.xlu0 %2451
        %v2453 = vmax.f32 %v2284, %v2373
        %2454 = vmax.xlane.f32.xlu0 %v2453
        %v2455 = vpop.xlane.xlu0 %2454
        %v2456 = vmax.f32 %v2287, %v2376
        %2457 = vmax.xlane.f32.xlu0 %v2456
        %v2458 = vpop.xlane.xlu0 %2457
        %v2459 = vmax.f32 %v2289, %v2378
        %2460 = vmax.xlane.f32.xlu0 %v2459
        %v2461 = vpop.xlane.xlu0 %2460
        %v2462 = vmax.f32 %v2292, %v2381
        %2463 = vmax.xlane.f32.xlu0 %v2462
        %v2464 = vpop.xlane.xlu0 %2463
        %v2465 = vmax.f32 %v2294, %v2383
        %2466 = vmax.xlane.f32.xlu0 %v2465
        %v2467 = vpop.xlane.xlu0 %2466
        %v2468 = vmax.f32 %v2297, %v2386
        %2469 = vmax.xlane.f32.xlu0 %v2468
        %v2470 = vpop.xlane.xlu0 %2469
        %v2471 = vmax.f32 %v2299, %v2388
        %2472 = vmax.xlane.f32.xlu0 %v2471
        %v2473 = vpop.xlane.xlu0 %2472
        %v2474 = vmax.f32 %v2302, %v2391
        %2475 = vmax.xlane.f32.xlu0 %v2474
        %v2476 = vpop.xlane.xlu0 %2475
        %v2477 = vmax.f32 %v2304, %v2393
        %2478 = vmax.xlane.f32.xlu0 %v2477
        %v2479 = vpop.xlane.xlu0 %2478
        %v2480 = vmax.f32 %v2307, %v2396
        %2481 = vmax.xlane.f32.xlu0 %v2480
        %v2482 = vpop.xlane.xlu0 %2481
        %v2483 = vmax.f32 %v2309, %v2398
        %2484 = vmax.xlane.f32.xlu0 %v2483
        %v2485 = vpop.xlane.xlu0 %2484
        %v2486 = vmax.f32 %v2312, %v2401
        %2487 = vmax.xlane.f32.xlu0 %v2486
        %v2488 = vpop.xlane.xlu0 %2487
        %v2489 = vmax.f32 %v2314, %v2403
        %2490 = vmax.xlane.f32.xlu0 %v2489
        %v2491 = vpop.xlane.xlu0 %2490
        %v2492 = vmax.f32 %v2317, %v2406
        %2493 = vmax.xlane.f32.xlu0 %v2492
        %v2494 = vpop.xlane.xlu0 %2493
        %v2495 = vmax.f32 %v2319, %v2408
        %2496 = vmax.xlane.f32.xlu0 %v2495
        %v2497 = vpop.xlane.xlu0 %2496
        %v2498 = vmax.f32 %v2322, %v2411
        %2499 = vmax.xlane.f32.xlu0 %v2498
        %v2500 = vpop.xlane.xlu0 %2499
        %v2501 = vmax.f32 %v2324, %v2413
        %2502 = vmax.xlane.f32.xlu0 %v2501
        %v2503 = vpop.xlane.xlu0 %2502
        %v2504 = vmax.f32 %v2327, %v2416
        %2505 = vmax.xlane.f32.xlu0 %v2504
        %v2506 = vpop.xlane.xlu0 %2505
        %v2507 = vmax.f32 %v2329, %v2418
        %2508 = vmax.xlane.f32.xlu0 %v2507
        %v2509 = vpop.xlane.xlu0 %2508
        %v2510 = vmax.f32 %v2332, %v2421
        %2511 = vmax.xlane.f32.xlu0 %v2510
        %v2512 = vpop.xlane.xlu0 %2511
        %v2513 = vmax.f32 %v2334, %v2423
        %2514 = vmax.xlane.f32.xlu0 %v2513
        %v2515 = vpop.xlane.xlu0 %2514
        %v2516 = vmax.f32 %v2337, %v2426
        %2517 = vmax.xlane.f32.xlu0 %v2516
        %v2518 = vpop.xlane.xlu0 %2517
        %v2519 = vmax.f32 %v2339, %v2428
        %2520 = vmax.xlane.f32.xlu0 %v2519
        %v2521 = vpop.xlane.xlu0 %2520
        %v2522 = vmax.f32 %v2342, %v2431
        %2523 = vmax.xlane.f32.xlu0 %v2522
        %v2524 = vpop.xlane.xlu0 %2523
        %v2525 = vmax.f32 %v2344, %v2433
        %2526 = vmax.xlane.f32.xlu0 %v2525
        %v2527 = vpop.xlane.xlu0 %2526
        %v2528 = vmax.f32 %v2347, %v2436
        %2529 = vmax.xlane.f32.xlu0 %v2528
        %v2530 = vpop.xlane.xlu0 %2529
        %v2531 = vmax.f32 %v2349, %v2438
        %2532 = vmax.xlane.f32.xlu0 %v2531
        %v2533 = vpop.xlane.xlu0 %2532
        %v2534 = vmax.f32 %v2352, %v2441
        %2535 = vmax.xlane.f32.xlu0 %v2534
        %v2536 = vpop.xlane.xlu0 %2535
        %v2537 = vmax.f32 %v2354, %v2443
        %2538 = vmax.xlane.f32.xlu0 %v2537
        %v2539 = vpop.xlane.xlu0 %2538
        %v2540 = vmax.f32 %v2357, %v2446
        %2541 = vmax.xlane.f32.xlu0 %v2540
        %v2542 = vpop.xlane.xlu0 %2541
        %v2543 = vmax.f32 %v2359, %v2448
        %2544 = vmax.xlane.f32.xlu0 %v2543
        %v2545 = vpop.xlane.xlu0 %2544
        %v2546 = vsub.f32 %v2282, %v2452
        %v2547 = vsub.f32 %v2371, %v2452
        %v2548 = vsub.f32 %v2284, %v2455
        %v2549 = vsub.f32 %v2373, %v2455
        %v2550 = vsub.f32 %v2287, %v2458
        %v2551 = vsub.f32 %v2376, %v2458
        %v2552 = vsub.f32 %v2289, %v2461
        %v2553 = vsub.f32 %v2378, %v2461
        %v2554 = vsub.f32 %v2292, %v2464
        %v2555 = vsub.f32 %v2381, %v2464
        %v2556 = vsub.f32 %v2294, %v2467
        %v2557 = vsub.f32 %v2383, %v2467
        %v2558 = vsub.f32 %v2297, %v2470
        %v2559 = vsub.f32 %v2386, %v2470
        %v2560 = vsub.f32 %v2299, %v2473
        %v2561 = vsub.f32 %v2388, %v2473
        %v2562 = vsub.f32 %v2302, %v2476
        %v2563 = vsub.f32 %v2391, %v2476
        %v2564 = vsub.f32 %v2304, %v2479
        %v2565 = vsub.f32 %v2393, %v2479
        %v2566 = vsub.f32 %v2307, %v2482
        %v2567 = vsub.f32 %v2396, %v2482
        %v2568 = vsub.f32 %v2309, %v2485
        %v2569 = vsub.f32 %v2398, %v2485
        %v2570 = vsub.f32 %v2312, %v2488
        %v2571 = vsub.f32 %v2401, %v2488
        %v2572 = vsub.f32 %v2314, %v2491
        %v2573 = vsub.f32 %v2403, %v2491
        %v2574 = vsub.f32 %v2317, %v2494
        %v2575 = vsub.f32 %v2406, %v2494
        %v2576 = vsub.f32 %v2319, %v2497
        %v2577 = vsub.f32 %v2408, %v2497
        %v2578 = vsub.f32 %v2322, %v2500
        %v2579 = vsub.f32 %v2411, %v2500
        %v2580 = vsub.f32 %v2324, %v2503
        %v2581 = vsub.f32 %v2413, %v2503
        %v2582 = vsub.f32 %v2327, %v2506
        %v2583 = vsub.f32 %v2416, %v2506
        %v2584 = vsub.f32 %v2329, %v2509
        %v2585 = vsub.f32 %v2418, %v2509
        %v2586 = vsub.f32 %v2332, %v2512
        %v2587 = vsub.f32 %v2421, %v2512
        %v2588 = vsub.f32 %v2334, %v2515
        %v2589 = vsub.f32 %v2423, %v2515
        %v2590 = vsub.f32 %v2337, %v2518
        %v2591 = vsub.f32 %v2426, %v2518
        %v2592 = vsub.f32 %v2339, %v2521
        %v2593 = vsub.f32 %v2428, %v2521
        %v2594 = vsub.f32 %v2342, %v2524
        %v2595 = vsub.f32 %v2431, %v2524
        %v2596 = vsub.f32 %v2344, %v2527
        %v2597 = vsub.f32 %v2433, %v2527
        %v2598 = vsub.f32 %v2347, %v2530
        %v2599 = vsub.f32 %v2436, %v2530
        %v2600 = vsub.f32 %v2349, %v2533
        %v2601 = vsub.f32 %v2438, %v2533
        %v2602 = vsub.f32 %v2352, %v2536
        %v2603 = vsub.f32 %v2441, %v2536
        %v2604 = vsub.f32 %v2354, %v2539
        %v2605 = vsub.f32 %v2443, %v2539
        %v2606 = vsub.f32 %v2357, %v2542
        %v2607 = vsub.f32 %v2446, %v2542
        %v2608 = vsub.f32 %v2359, %v2545
        %v2609 = vsub.f32 %v2448, %v2545
        %v2610 = vmul.f32 %v2546, 1.442695
        %v2611 = vpow.pop %v2610
        %v2612 = vmul.f32 %v2547, 1.442695
        %v2613 = vpow.pop %v2612
        %v2614 = vmul.f32 %v2548, 1.442695
        %v2615 = vpow.pop %v2614
        %v2616 = vmul.f32 %v2549, 1.442695
        %v2617 = vpow.pop %v2616
        %v2618 = vmul.f32 %v2550, 1.442695
        %v2619 = vpow.pop %v2618
        %v2620 = vmul.f32 %v2551, 1.442695
        %v2621 = vpow.pop %v2620
        %v2622 = vmul.f32 %v2552, 1.442695
        %v2623 = vpow.pop %v2622
        %v2624 = vmul.f32 %v2553, 1.442695
        %v2625 = vpow.pop %v2624
        %v2626 = vmul.f32 %v2554, 1.442695
        %v2627 = vpow.pop %v2626
        %v2628 = vmul.f32 %v2555, 1.442695
        %v2629 = vpow.pop %v2628
        %v2630 = vmul.f32 %v2556, 1.442695
        %v2631 = vpow.pop %v2630
        %v2632 = vmul.f32 %v2557, 1.442695
        %v2633 = vpow.pop %v2632
        %v2634 = vmul.f32 %v2558, 1.442695
        %v2635 = vpow.pop %v2634
        %v2636 = vmul.f32 %v2559, 1.442695
        %v2637 = vpow.pop %v2636
        %v2638 = vmul.f32 %v2560, 1.442695
        %v2639 = vpow.pop %v2638
        %v2640 = vmul.f32 %v2561, 1.442695
        %v2641 = vpow.pop %v2640
        %v2642 = vmul.f32 %v2562, 1.442695
        %v2643 = vpow.pop %v2642
        %v2644 = vmul.f32 %v2563, 1.442695
        %v2645 = vpow.pop %v2644
        %v2646 = vmul.f32 %v2564, 1.442695
        %v2647 = vpow.pop %v2646
        %v2648 = vmul.f32 %v2565, 1.442695
        %v2649 = vpow.pop %v2648
        %v2650 = vmul.f32 %v2566, 1.442695
        %v2651 = vpow.pop %v2650
        %v2652 = vmul.f32 %v2567, 1.442695
        %v2653 = vpow.pop %v2652
        %v2654 = vmul.f32 %v2568, 1.442695
        %v2655 = vpow.pop %v2654
        %v2656 = vmul.f32 %v2569, 1.442695
        %v2657 = vpow.pop %v2656
        %v2658 = vmul.f32 %v2570, 1.442695
        %v2659 = vpow.pop %v2658
        %v2660 = vmul.f32 %v2571, 1.442695
        %v2661 = vpow.pop %v2660
        %v2662 = vmul.f32 %v2572, 1.442695
        %v2663 = vpow.pop %v2662
        %v2664 = vmul.f32 %v2573, 1.442695
        %v2665 = vpow.pop %v2664
        %v2666 = vmul.f32 %v2574, 1.442695
        %v2667 = vpow.pop %v2666
        %v2668 = vmul.f32 %v2575, 1.442695
        %v2669 = vpow.pop %v2668
        %v2670 = vmul.f32 %v2576, 1.442695
        %v2671 = vpow.pop %v2670
        %v2672 = vmul.f32 %v2577, 1.442695
        %v2673 = vpow.pop %v2672
        %v2674 = vmul.f32 %v2578, 1.442695
        %v2675 = vpow.pop %v2674
        %v2676 = vmul.f32 %v2579, 1.442695
        %v2677 = vpow.pop %v2676
        %v2678 = vmul.f32 %v2580, 1.442695
        %v2679 = vpow.pop %v2678
        %v2680 = vmul.f32 %v2581, 1.442695
        %v2681 = vpow.pop %v2680
        %v2682 = vmul.f32 %v2582, 1.442695
        %v2683 = vpow.pop %v2682
        %v2684 = vmul.f32 %v2583, 1.442695
        %v2685 = vpow.pop %v2684
        %v2686 = vmul.f32 %v2584, 1.442695
        %v2687 = vpow.pop %v2686
        %v2688 = vmul.f32 %v2585, 1.442695
        %v2689 = vpow.pop %v2688
        %v2690 = vmul.f32 %v2586, 1.442695
        %v2691 = vpow.pop %v2690
        %v2692 = vmul.f32 %v2587, 1.442695
        %v2693 = vpow.pop %v2692
        %v2694 = vmul.f32 %v2588, 1.442695
        %v2695 = vpow.pop %v2694
        %v2696 = vmul.f32 %v2589, 1.442695
        %v2697 = vpow.pop %v2696
        %v2698 = vmul.f32 %v2590, 1.442695
        %v2699 = vpow.pop %v2698
        %v2700 = vmul.f32 %v2591, 1.442695
        %v2701 = vpow.pop %v2700
        %v2702 = vmul.f32 %v2592, 1.442695
        %v2703 = vpow.pop %v2702
        %v2704 = vmul.f32 %v2593, 1.442695
        %v2705 = vpow.pop %v2704
        %v2706 = vmul.f32 %v2594, 1.442695
        %v2707 = vpow.pop %v2706
        %v2708 = vmul.f32 %v2595, 1.442695
        %v2709 = vpow.pop %v2708
        %v2710 = vmul.f32 %v2596, 1.442695
        %v2711 = vpow.pop %v2710
        %v2712 = vmul.f32 %v2597, 1.442695
        %v2713 = vpow.pop %v2712
        %v2714 = vmul.f32 %v2598, 1.442695
        %v2715 = vpow.pop %v2714
        %v2716 = vmul.f32 %v2599, 1.442695
        %v2717 = vpow.pop %v2716
        %v2718 = vmul.f32 %v2600, 1.442695
        %v2719 = vpow.pop %v2718
        %v2720 = vmul.f32 %v2601, 1.442695
        %v2721 = vpow.pop %v2720
        %v2722 = vmul.f32 %v2602, 1.442695
        %v2723 = vpow.pop %v2722
        %v2724 = vmul.f32 %v2603, 1.442695
        %v2725 = vpow.pop %v2724
        %v2726 = vmul.f32 %v2604, 1.442695
        %v2727 = vpow.pop %v2726
        %v2728 = vmul.f32 %v2605, 1.442695
        %v2729 = vpow.pop %v2728
        %v2730 = vmul.f32 %v2606, 1.442695
        %v2731 = vpow.pop %v2730
        %v2732 = vmul.f32 %v2607, 1.442695
        %v2733 = vpow.pop %v2732
        %v2734 = vmul.f32 %v2608, 1.442695
        %v2735 = vpow.pop %v2734
        %v2736 = vmul.f32 %v2609, 1.442695
        %v2737 = vpow.pop %v2736
        %v2738 = vadd.f32 %v2611, %v2613
        %2739 = vadd.xlane.f32.xlu0 %v2738
        %v2740 = vpop.xlane.xlu0 %2739
        %v2741 = vadd.f32 %v2615, %v2617
        %2742 = vadd.xlane.f32.xlu0 %v2741
        %v2743 = vpop.xlane.xlu0 %2742
        %v2744 = vadd.f32 %v2619, %v2621
        %2745 = vadd.xlane.f32.xlu0 %v2744
        %v2746 = vpop.xlane.xlu0 %2745
        %v2747 = vadd.f32 %v2623, %v2625
        %2748 = vadd.xlane.f32.xlu0 %v2747
        %v2749 = vpop.xlane.xlu0 %2748
        %v2750 = vadd.f32 %v2627, %v2629
        %2751 = vadd.xlane.f32.xlu0 %v2750
        %v2752 = vpop.xlane.xlu0 %2751
        %v2753 = vadd.f32 %v2631, %v2633
        %2754 = vadd.xlane.f32.xlu0 %v2753
        %v2755 = vpop.xlane.xlu0 %2754
        %v2756 = vadd.f32 %v2635, %v2637
        %2757 = vadd.xlane.f32.xlu0 %v2756
        %v2758 = vpop.xlane.xlu0 %2757
        %v2759 = vadd.f32 %v2639, %v2641
        %2760 = vadd.xlane.f32.xlu0 %v2759
        %v2761 = vpop.xlane.xlu0 %2760
        %v2762 = vadd.f32 %v2643, %v2645
        %2763 = vadd.xlane.f32.xlu0 %v2762
        %v2764 = vpop.xlane.xlu0 %2763
        %v2765 = vadd.f32 %v2647, %v2649
        %2766 = vadd.xlane.f32.xlu0 %v2765
        %v2767 = vpop.xlane.xlu0 %2766
        %v2768 = vadd.f32 %v2651, %v2653
        %2769 = vadd.xlane.f32.xlu0 %v2768
        %v2770 = vpop.xlane.xlu0 %2769
        %v2771 = vadd.f32 %v2655, %v2657
        %2772 = vadd.xlane.f32.xlu0 %v2771
        %v2773 = vpop.xlane.xlu0 %2772
        %v2774 = vadd.f32 %v2659, %v2661
        %2775 = vadd.xlane.f32.xlu0 %v2774
        %v2776 = vpop.xlane.xlu0 %2775
        %v2777 = vadd.f32 %v2663, %v2665
        %2778 = vadd.xlane.f32.xlu0 %v2777
        %v2779 = vpop.xlane.xlu0 %2778
        %v2780 = vadd.f32 %v2667, %v2669
        %2781 = vadd.xlane.f32.xlu0 %v2780
        %v2782 = vpop.xlane.xlu0 %2781
        %v2783 = vadd.f32 %v2671, %v2673
        %2784 = vadd.xlane.f32.xlu0 %v2783
        %v2785 = vpop.xlane.xlu0 %2784
        %v2786 = vadd.f32 %v2675, %v2677
        %2787 = vadd.xlane.f32.xlu0 %v2786
        %v2788 = vpop.xlane.xlu0 %2787
        %v2789 = vadd.f32 %v2679, %v2681
        %2790 = vadd.xlane.f32.xlu0 %v2789
        %v2791 = vpop.xlane.xlu0 %2790
        %v2792 = vadd.f32 %v2683, %v2685
        %2793 = vadd.xlane.f32.xlu0 %v2792
        %v2794 = vpop.xlane.xlu0 %2793
        %v2795 = vadd.f32 %v2687, %v2689
        %2796 = vadd.xlane.f32.xlu0 %v2795
        %v2797 = vpop.xlane.xlu0 %2796
        %v2798 = vadd.f32 %v2691, %v2693
        %2799 = vadd.xlane.f32.xlu0 %v2798
        %v2800 = vpop.xlane.xlu0 %2799
        %v2801 = vadd.f32 %v2695, %v2697
        %2802 = vadd.xlane.f32.xlu0 %v2801
        %v2803 = vpop.xlane.xlu0 %2802
        %v2804 = vadd.f32 %v2699, %v2701
        %2805 = vadd.xlane.f32.xlu0 %v2804
        %v2806 = vpop.xlane.xlu0 %2805
        %v2807 = vadd.f32 %v2703, %v2705
        %2808 = vadd.xlane.f32.xlu0 %v2807
        %v2809 = vpop.xlane.xlu0 %2808
        %v2810 = vadd.f32 %v2707, %v2709
        %2811 = vadd.xlane.f32.xlu0 %v2810
        %v2812 = vpop.xlane.xlu0 %2811
        %v2813 = vadd.f32 %v2711, %v2713
        %2814 = vadd.xlane.f32.xlu0 %v2813
        %v2815 = vpop.xlane.xlu0 %2814
        %v2816 = vadd.f32 %v2715, %v2717
        %2817 = vadd.xlane.f32.xlu0 %v2816
        %v2818 = vpop.xlane.xlu0 %2817
        %v2819 = vadd.f32 %v2719, %v2721
        %2820 = vadd.xlane.f32.xlu0 %v2819
        %v2821 = vpop.xlane.xlu0 %2820
        %v2822 = vadd.f32 %v2723, %v2725
        %2823 = vadd.xlane.f32.xlu0 %v2822
        %v2824 = vpop.xlane.xlu0 %2823
        %v2825 = vadd.f32 %v2727, %v2729
        %2826 = vadd.xlane.f32.xlu0 %v2825
        %v2827 = vpop.xlane.xlu0 %2826
        %v2828 = vadd.f32 %v2731, %v2733
        %2829 = vadd.xlane.f32.xlu0 %v2828
        %v2830 = vpop.xlane.xlu0 %2829
        %v2831 = vadd.f32 %v2735, %v2737
        %2832 = vadd.xlane.f32.xlu0 %v2831
        %v2833 = vpop.xlane.xlu0 %2832
        %v2834 = vrcp.pop %v2740
        %v2835 = vrcp.pop %v2743
        %v2836 = vrcp.pop %v2746
        %v2837 = vrcp.pop %v2749
        %v2838 = vrcp.pop %v2752
        %v2839 = vrcp.pop %v2755
        %v2840 = vrcp.pop %v2758
        %v2841 = vrcp.pop %v2761
        %v2842 = vrcp.pop %v2764
        %v2843 = vrcp.pop %v2767
        %v2844 = vrcp.pop %v2770
        %v2845 = vrcp.pop %v2773
        %v2846 = vrcp.pop %v2776
        %v2847 = vrcp.pop %v2779
        %v2848 = vrcp.pop %v2782
        %v2849 = vrcp.pop %v2785
        %v2850 = vrcp.pop %v2788
        %v2851 = vrcp.pop %v2791
        %v2852 = vrcp.pop %v2794
        %v2853 = vrcp.pop %v2797
        %v2854 = vrcp.pop %v2800
        %v2855 = vrcp.pop %v2803
        %v2856 = vrcp.pop %v2806
        %v2857 = vrcp.pop %v2809
        %v2858 = vrcp.pop %v2812
        %v2859 = vrcp.pop %v2815
        %v2860 = vrcp.pop %v2818
        %v2861 = vrcp.pop %v2821
        %v2862 = vrcp.pop %v2824
        %v2863 = vrcp.pop %v2827
        %v2864 = vrcp.pop %v2830
        %v2865 = vrcp.pop %v2833
        %v2866 = vmul.f32 %v2611, %v2834
        %v2867 = vmul.f32 %v2613, %v2834
        %v2868 = vmul.f32 %v2615, %v2835
        %v2869 = vmul.f32 %v2617, %v2835
        %v2870 = vmul.f32 %v2619, %v2836
        %v2871 = vmul.f32 %v2621, %v2836
        %v2872 = vmul.f32 %v2623, %v2837
        %v2873 = vmul.f32 %v2625, %v2837
        %v2874 = vmul.f32 %v2627, %v2838
        %v2875 = vmul.f32 %v2629, %v2838
        %v2876 = vmul.f32 %v2631, %v2839
        %v2877 = vmul.f32 %v2633, %v2839
        %v2878 = vmul.f32 %v2635, %v2840
        %v2879 = vmul.f32 %v2637, %v2840
        %v2880 = vmul.f32 %v2639, %v2841
        %v2881 = vmul.f32 %v2641, %v2841
        %v2882 = vmul.f32 %v2643, %v2842
        %v2883 = vmul.f32 %v2645, %v2842
        %v2884 = vmul.f32 %v2647, %v2843
        %v2885 = vmul.f32 %v2649, %v2843
        %v2886 = vmul.f32 %v2651, %v2844
        %v2887 = vmul.f32 %v2653, %v2844
        %v2888 = vmul.f32 %v2655, %v2845
        %v2889 = vmul.f32 %v2657, %v2845
        %v2890 = vmul.f32 %v2659, %v2846
        %v2891 = vmul.f32 %v2661, %v2846
        %v2892 = vmul.f32 %v2663, %v2847
        %v2893 = vmul.f32 %v2665, %v2847
        %v2894 = vmul.f32 %v2667, %v2848
        %v2895 = vmul.f32 %v2669, %v2848
        %v2896 = vmul.f32 %v2671, %v2849
        %v2897 = vmul.f32 %v2673, %v2849
        %v2898 = vmul.f32 %v2675, %v2850
        %v2899 = vmul.f32 %v2677, %v2850
        %v2900 = vmul.f32 %v2679, %v2851
        %v2901 = vmul.f32 %v2681, %v2851
        %v2902 = vmul.f32 %v2683, %v2852
        %v2903 = vmul.f32 %v2685, %v2852
        %v2904 = vmul.f32 %v2687, %v2853
        %v2905 = vmul.f32 %v2689, %v2853
        %v2906 = vmul.f32 %v2691, %v2854
        %v2907 = vmul.f32 %v2693, %v2854
        %v2908 = vmul.f32 %v2695, %v2855
        %v2909 = vmul.f32 %v2697, %v2855
        %v2910 = vmul.f32 %v2699, %v2856
        %v2911 = vmul.f32 %v2701, %v2856
        %v2912 = vmul.f32 %v2703, %v2857
        %v2913 = vmul.f32 %v2705, %v2857
        %v2914 = vmul.f32 %v2707, %v2858
        %v2915 = vmul.f32 %v2709, %v2858
        %v2916 = vmul.f32 %v2711, %v2859
        %v2917 = vmul.f32 %v2713, %v2859
        %v2918 = vmul.f32 %v2715, %v2860
        %v2919 = vmul.f32 %v2717, %v2860
        %v2920 = vmul.f32 %v2719, %v2861
        %v2921 = vmul.f32 %v2721, %v2861
        %v2922 = vmul.f32 %v2723, %v2862
        %v2923 = vmul.f32 %v2725, %v2862
        %v2924 = vmul.f32 %v2727, %v2863
        %v2925 = vmul.f32 %v2729, %v2863
        %v2926 = vmul.f32 %v2731, %v2864
        %v2927 = vmul.f32 %v2733, %v2864
        %v2928 = vmul.f32 %v2735, %v2865
        %v2929 = vmul.f32 %v2737, %v2865
        %v2930 = vpack.c.bf16 %v2868, %v2866
        %v2931 = vpack.c.bf16 %v2869, %v2867
        %v2932 = vpack.c.bf16 %v2872, %v2870
        %v2933 = vpack.c.bf16 %v2873, %v2871
        %v2934 = vpack.c.bf16 %v2876, %v2874
        %v2935 = vpack.c.bf16 %v2877, %v2875
        %v2936 = vpack.c.bf16 %v2880, %v2878
        %v2937 = vpack.c.bf16 %v2881, %v2879
        %v2938 = vpack.c.bf16 %v2884, %v2882
        %v2939 = vpack.c.bf16 %v2885, %v2883
        %v2940 = vpack.c.bf16 %v2888, %v2886
        %v2941 = vpack.c.bf16 %v2889, %v2887
        %v2942 = vpack.c.bf16 %v2892, %v2890
        %v2943 = vpack.c.bf16 %v2893, %v2891
        %v2944 = vpack.c.bf16 %v2896, %v2894
        %v2945 = vpack.c.bf16 %v2897, %v2895
        %v2946 = vpack.c.bf16 %v2900, %v2898
        %v2947 = vpack.c.bf16 %v2901, %v2899
        %v2948 = vpack.c.bf16 %v2904, %v2902
        %v2949 = vpack.c.bf16 %v2905, %v2903
        %v2950 = vpack.c.bf16 %v2908, %v2906
        %v2951 = vpack.c.bf16 %v2909, %v2907
        %v2952 = vpack.c.bf16 %v2912, %v2910
        %v2953 = vpack.c.bf16 %v2913, %v2911
        %v2954 = vpack.c.bf16 %v2916, %v2914
        %v2955 = vpack.c.bf16 %v2917, %v2915
        %v2956 = vpack.c.bf16 %v2920, %v2918
        %v2957 = vpack.c.bf16 %v2921, %v2919
        %v2958 = vpack.c.bf16 %v2924, %v2922
        %v2959 = vpack.c.bf16 %v2925, %v2923
        %v2960 = vpack.c.bf16 %v2928, %v2926
        %v2961 = vpack.c.bf16 %v2929, %v2927
        %2962 = vrot.lane.b32.xlu0 %v1870, 96
        %v2963 = vpop.permute.xlu0 %2962
        %2964 = vrot.lane.b32.xlu0 %v1871, 96
        %v2965 = vpop.permute.xlu0 %2964
        %2966 = vrot.lane.b32.xlu0 %v1872, 96
        %v2967 = vpop.permute.xlu0 %2966
        %2968 = vrot.lane.b32.xlu0 %v1873, 96
        %v2969 = vpop.permute.xlu0 %2968
        %2970 = vrot.lane.b32.xlu0 %v1874, 96
        %v2971 = vpop.permute.xlu0 %2970
        %2972 = vrot.lane.b32.xlu0 %v1875, 96
        %v2973 = vpop.permute.xlu0 %2972
        %2974 = vrot.lane.b32.xlu0 %v1876, 96
        %v2975 = vpop.permute.xlu0 %2974
        %2976 = vrot.lane.b32.xlu0 %v1877, 96
        %v2977 = vpop.permute.xlu0 %2976
        %2978 = vrot.lane.b32.xlu0 %v1878, 96
        %v2979 = vpop.permute.xlu0 %2978
        %2980 = vrot.lane.b32.xlu0 %v1879, 96
        %v2981 = vpop.permute.xlu0 %2980
        %2982 = vrot.lane.b32.xlu0 %v1880, 96
        %v2983 = vpop.permute.xlu0 %2982
        %2984 = vrot.lane.b32.xlu0 %v1881, 96
        %v2985 = vpop.permute.xlu0 %2984
        %2986 = vrot.lane.b32.xlu0 %v1882, 96
        %v2987 = vpop.permute.xlu0 %2986
        %2988 = vrot.lane.b32.xlu0 %v1883, 96
        %v2989 = vpop.permute.xlu0 %2988
        %2990 = vrot.lane.b32.xlu0 %v1884, 96
        %v2991 = vpop.permute.xlu0 %2990
        %2992 = vrot.lane.b32.xlu0 %v1885, 96
        %v2993 = vpop.permute.xlu0 %2992
        %3010 = vmatpush.bf16.msra.mxu0 %v2977
        %3011 = vmatpush.bf16.msra.mxu0 %v2975
        %3012 = vmatpush.bf16.msra.mxu0 %v2973
        %3013 = vmatpush.bf16.msra.mxu0 %v2971
        %3014 = vmatpush.bf16.msra.mxu0 %v2969
        %3015 = vmatpush.bf16.msra.mxu0 %v2967
        %3016 = vmatpush.bf16.msra.mxu0 %v2965
        %3017 = vmatpush.bf16.msra.mxu0 %v2963
        %3018 = vmatmul.bf16.gmra.mxu0 %v2930
        %v3019 = vpop.f32.mrf.mxu0
        %v3020 = vadd.f32 0.0, %v3019
        %v3021 = vpop.f32.mrf.mxu0
        %v3022 = vadd.f32 0.0, %v3021
        %3023 = vmatmul.bf16.gmra.mxu0 %v2932
        %v3024 = vpop.f32.mrf.mxu0
        %v3025 = vadd.f32 0.0, %v3024
        %v3026 = vpop.f32.mrf.mxu0
        %v3027 = vadd.f32 0.0, %v3026
        %3028 = vmatmul.bf16.gmra.mxu0 %v2934
        %v3029 = vpop.f32.mrf.mxu0
        %v3030 = vadd.f32 0.0, %v3029
        %v3031 = vpop.f32.mrf.mxu0
        %v3032 = vadd.f32 0.0, %v3031
        %3033 = vmatmul.bf16.gmra.mxu0 %v2936
        %v3034 = vpop.f32.mrf.mxu0
        %v3035 = vadd.f32 0.0, %v3034
        %v3036 = vpop.f32.mrf.mxu0
        %v3037 = vadd.f32 0.0, %v3036
        %3038 = vmatmul.bf16.gmra.mxu0 %v2938
        %v3039 = vpop.f32.mrf.mxu0
        %v3040 = vadd.f32 0.0, %v3039
        %v3041 = vpop.f32.mrf.mxu0
        %v3042 = vadd.f32 0.0, %v3041
        %3043 = vmatmul.bf16.gmra.mxu0 %v2940
        %v3044 = vpop.f32.mrf.mxu0
        %v3045 = vadd.f32 0.0, %v3044
        %v3046 = vpop.f32.mrf.mxu0
        %v3047 = vadd.f32 0.0, %v3046
        %3048 = vmatmul.bf16.gmra.mxu0 %v2942
        %v3049 = vpop.f32.mrf.mxu0
        %v3050 = vadd.f32 0.0, %v3049
        %v3051 = vpop.f32.mrf.mxu0
        %v3052 = vadd.f32 0.0, %v3051
        %3053 = vmatmul.bf16.gmra.mxu0 %v2944
        %v3054 = vpop.f32.mrf.mxu0
        %v3055 = vadd.f32 0.0, %v3054
        %v3056 = vpop.f32.mrf.mxu0
        %v3057 = vadd.f32 0.0, %v3056
        %3058 = vmatmul.bf16.gmra.mxu0 %v2946
        %v3059 = vpop.f32.mrf.mxu0
        %v3060 = vadd.f32 0.0, %v3059
        %v3061 = vpop.f32.mrf.mxu0
        %v3062 = vadd.f32 0.0, %v3061
        %3063 = vmatmul.bf16.gmra.mxu0 %v2948
        %v3064 = vpop.f32.mrf.mxu0
        %v3065 = vadd.f32 0.0, %v3064
        %v3066 = vpop.f32.mrf.mxu0
        %v3067 = vadd.f32 0.0, %v3066
        %3068 = vmatmul.bf16.gmra.mxu0 %v2950
        %v3069 = vpop.f32.mrf.mxu0
        %v3070 = vadd.f32 0.0, %v3069
        %v3071 = vpop.f32.mrf.mxu0
        %v3072 = vadd.f32 0.0, %v3071
        %3073 = vmatmul.bf16.gmra.mxu0 %v2952
        %v3074 = vpop.f32.mrf.mxu0
        %v3075 = vadd.f32 0.0, %v3074
        %v3076 = vpop.f32.mrf.mxu0
        %v3077 = vadd.f32 0.0, %v3076
        %3078 = vmatmul.bf16.gmra.mxu0 %v2954
        %v3079 = vpop.f32.mrf.mxu0
        %v3080 = vadd.f32 0.0, %v3079
        %v3081 = vpop.f32.mrf.mxu0
        %v3082 = vadd.f32 0.0, %v3081
        %3083 = vmatmul.bf16.gmra.mxu0 %v2956
        %v3084 = vpop.f32.mrf.mxu0
        %v3085 = vadd.f32 0.0, %v3084
        %v3086 = vpop.f32.mrf.mxu0
        %v3087 = vadd.f32 0.0, %v3086
        %3088 = vmatmul.bf16.gmra.mxu0 %v2958
        %v3089 = vpop.f32.mrf.mxu0
        %v3090 = vadd.f32 0.0, %v3089
        %v3091 = vpop.f32.mrf.mxu0
        %v3092 = vadd.f32 0.0, %v3091
        %3093 = vmatmul.bf16.gmra.mxu0 %v2960
        %v3094 = vpop.f32.mrf.mxu0
        %v3095 = vadd.f32 0.0, %v3094
        %v3096 = vpop.f32.mrf.mxu0
        %v3097 = vadd.f32 0.0, %v3096
        %3098 = vdwg.mxu0
        %3099 = vmatpush.bf16.msra.mxu0 %v2993
        %3100 = vmatpush.bf16.msra.mxu0 %v2991
        %3101 = vmatpush.bf16.msra.mxu0 %v2989
        %3102 = vmatpush.bf16.msra.mxu0 %v2987
        %3103 = vmatpush.bf16.msra.mxu0 %v2985
        %3104 = vmatpush.bf16.msra.mxu0 %v2983
        %3105 = vmatpush.bf16.msra.mxu0 %v2981
        %3106 = vmatpush.bf16.msra.mxu0 %v2979
        %3107 = vmatmul.bf16.gmra.mxu0 %v2931
        %v3108 = vpop.f32.mrf.mxu0
        %v3109 = vadd.f32 %v3020, %v3108
        %v3110 = vpop.f32.mrf.mxu0
        %v3111 = vadd.f32 %v3022, %v3110
        %3112 = vmatmul.bf16.gmra.mxu0 %v2933
        %v3113 = vpop.f32.mrf.mxu0
        %v3114 = vadd.f32 %v3025, %v3113
        %v3115 = vpop.f32.mrf.mxu0
        %v3116 = vadd.f32 %v3027, %v3115
        %3117 = vmatmul.bf16.gmra.mxu0 %v2935
        %v3118 = vpop.f32.mrf.mxu0
        %v3119 = vadd.f32 %v3030, %v3118
        %v3120 = vpop.f32.mrf.mxu0
        %v3121 = vadd.f32 %v3032, %v3120
        %3122 = vmatmul.bf16.gmra.mxu0 %v2937
        %v3123 = vpop.f32.mrf.mxu0
        %v3124 = vadd.f32 %v3035, %v3123
        %v3125 = vpop.f32.mrf.mxu0
        %v3126 = vadd.f32 %v3037, %v3125
        %3127 = vmatmul.bf16.gmra.mxu0 %v2939
        %v3128 = vpop.f32.mrf.mxu0
        %v3129 = vadd.f32 %v3040, %v3128
        %v3130 = vpop.f32.mrf.mxu0
        %v3131 = vadd.f32 %v3042, %v3130
        %3132 = vmatmul.bf16.gmra.mxu0 %v2941
        %v3133 = vpop.f32.mrf.mxu0
        %v3134 = vadd.f32 %v3045, %v3133
        %v3135 = vpop.f32.mrf.mxu0
        %v3136 = vadd.f32 %v3047, %v3135
        %3137 = vmatmul.bf16.gmra.mxu0 %v2943
        %v3138 = vpop.f32.mrf.mxu0
        %v3139 = vadd.f32 %v3050, %v3138
        %v3140 = vpop.f32.mrf.mxu0
        %v3141 = vadd.f32 %v3052, %v3140
        %3142 = vmatmul.bf16.gmra.mxu0 %v2945
        %v3143 = vpop.f32.mrf.mxu0
        %v3144 = vadd.f32 %v3055, %v3143
        %v3145 = vpop.f32.mrf.mxu0
        %v3146 = vadd.f32 %v3057, %v3145
        %3147 = vmatmul.bf16.gmra.mxu0 %v2947
        %v3148 = vpop.f32.mrf.mxu0
        %v3149 = vadd.f32 %v3060, %v3148
        %v3150 = vpop.f32.mrf.mxu0
        %v3151 = vadd.f32 %v3062, %v3150
        %3152 = vmatmul.bf16.gmra.mxu0 %v2949
        %v3153 = vpop.f32.mrf.mxu0
        %v3154 = vadd.f32 %v3065, %v3153
        %v3155 = vpop.f32.mrf.mxu0
        %v3156 = vadd.f32 %v3067, %v3155
        %3157 = vmatmul.bf16.gmra.mxu0 %v2951
        %v3158 = vpop.f32.mrf.mxu0
        %v3159 = vadd.f32 %v3070, %v3158
        %v3160 = vpop.f32.mrf.mxu0
        %v3161 = vadd.f32 %v3072, %v3160
        %3162 = vmatmul.bf16.gmra.mxu0 %v2953
        %v3163 = vpop.f32.mrf.mxu0
        %v3164 = vadd.f32 %v3075, %v3163
        %v3165 = vpop.f32.mrf.mxu0
        %v3166 = vadd.f32 %v3077, %v3165
        %3167 = vmatmul.bf16.gmra.mxu0 %v2955
        %v3168 = vpop.f32.mrf.mxu0
        %v3169 = vadd.f32 %v3080, %v3168
        %v3170 = vpop.f32.mrf.mxu0
        %v3171 = vadd.f32 %v3082, %v3170
        %3172 = vmatmul.bf16.gmra.mxu0 %v2957
        %v3173 = vpop.f32.mrf.mxu0
        %v3174 = vadd.f32 %v3085, %v3173
        %v3175 = vpop.f32.mrf.mxu0
        %v3176 = vadd.f32 %v3087, %v3175
        %3177 = vmatmul.bf16.gmra.mxu0 %v2959
        %v3178 = vpop.f32.mrf.mxu0
        %v3179 = vadd.f32 %v3090, %v3178
        %v3180 = vpop.f32.mrf.mxu0
        %v3181 = vadd.f32 %v3092, %v3180
        %3182 = vmatmul.bf16.gmra.mxu0 %v2961
        %v3183 = vpop.f32.mrf.mxu0
        %v3184 = vadd.f32 %v3095, %v3183
        %v3185 = vpop.f32.mrf.mxu0
        %v3186 = vadd.f32 %v3097, %v3185
        %3187 = vdwg.mxu0
        %v3188 = vpack.c.bf16 %v3109, %v3109
        %v3189 = vpack.c.bf16 %v3111, %v3111
        %v3190 = vpack.c.bf16 %v3114, %v3114
        %v3191 = vpack.c.bf16 %v3116, %v3116
        %v3192 = vpack.c.bf16 %v3119, %v3119
        %v3193 = vpack.c.bf16 %v3121, %v3121
        %v3194 = vpack.c.bf16 %v3124, %v3124
        %v3195 = vpack.c.bf16 %v3126, %v3126
        %v3196 = vpack.c.bf16 %v3129, %v3129
        %v3197 = vpack.c.bf16 %v3131, %v3131
        %v3198 = vpack.c.bf16 %v3134, %v3134
        %v3199 = vpack.c.bf16 %v3136, %v3136
        %v3200 = vpack.c.bf16 %v3139, %v3139
        %v3201 = vpack.c.bf16 %v3141, %v3141
        %v3202 = vpack.c.bf16 %v3144, %v3144
        %v3203 = vpack.c.bf16 %v3146, %v3146
        %v3204 = vpack.c.bf16 %v3149, %v3149
        %v3205 = vpack.c.bf16 %v3151, %v3151
        %v3206 = vpack.c.bf16 %v3154, %v3154
        %v3207 = vpack.c.bf16 %v3156, %v3156
        %v3208 = vpack.c.bf16 %v3159, %v3159
        %v3209 = vpack.c.bf16 %v3161, %v3161
        %v3210 = vpack.c.bf16 %v3164, %v3164
        %v3211 = vpack.c.bf16 %v3166, %v3166
        %v3212 = vpack.c.bf16 %v3169, %v3169
        %v3213 = vpack.c.bf16 %v3171, %v3171
        %v3214 = vpack.c.bf16 %v3174, %v3174
        %v3215 = vpack.c.bf16 %v3176, %v3176
        %v3216 = vpack.c.bf16 %v3179, %v3179
        %v3217 = vpack.c.bf16 %v3181, %v3181
        %v3218 = vpack.c.bf16 %v3184, %v3184
        %v3219 = vpack.c.bf16 %v3186, %v3186
        %3220 = vrot.lane.b32.xlu0 %v923, 64
        %v3221 = vpop.permute.xlu0 %3220
        %3222 = vrot.lane.b32.xlu0 %v924, 64
        %v3223 = vpop.permute.xlu0 %3222
        %3224 = vrot.lane.b32.xlu0 %v925, 64
        %v3225 = vpop.permute.xlu0 %3224
        %3226 = vrot.lane.b32.xlu0 %v926, 64
        %v3227 = vpop.permute.xlu0 %3226
        %3228 = vrot.lane.b32.xlu0 %v927, 64
        %v3229 = vpop.permute.xlu0 %3228
        %3230 = vrot.lane.b32.xlu0 %v928, 64
        %v3231 = vpop.permute.xlu0 %3230
        %3232 = vrot.lane.b32.xlu0 %v929, 64
        %v3233 = vpop.permute.xlu0 %3232
        %3234 = vrot.lane.b32.xlu0 %v930, 64
        %v3235 = vpop.permute.xlu0 %3234
        %3236 = vrot.lane.b32.xlu0 %v931, 64
        %v3237 = vpop.permute.xlu0 %3236
        %3238 = vrot.lane.b32.xlu0 %v932, 64
        %v3239 = vpop.permute.xlu0 %3238
        %3240 = vrot.lane.b32.xlu0 %v933, 64
        %v3241 = vpop.permute.xlu0 %3240
        %3242 = vrot.lane.b32.xlu0 %v934, 64
        %v3243 = vpop.permute.xlu0 %3242
        %3244 = vrot.lane.b32.xlu0 %v935, 64
        %v3245 = vpop.permute.xlu0 %3244
        %3246 = vrot.lane.b32.xlu0 %v936, 64
        %v3247 = vpop.permute.xlu0 %3246
        %3248 = vrot.lane.b32.xlu0 %v937, 64
        %v3249 = vpop.permute.xlu0 %3248
        %3250 = vrot.lane.b32.xlu0 %v938, 64
        %v3251 = vpop.permute.xlu0 %3250
        %3252 = vrot.lane.b32.xlu0 %v1003, 64
        %v3253 = vpop.permute.xlu0 %3252
        %3254 = vrot.lane.b32.xlu0 %v1004, 64
        %v3255 = vpop.permute.xlu0 %3254
        %3256 = vrot.lane.b32.xlu0 %v1005, 64
        %v3257 = vpop.permute.xlu0 %3256
        %3258 = vrot.lane.b32.xlu0 %v1006, 64
        %v3259 = vpop.permute.xlu0 %3258
        %3260 = vrot.lane.b32.xlu0 %v1007, 64
        %v3261 = vpop.permute.xlu0 %3260
        %3262 = vrot.lane.b32.xlu0 %v1008, 64
        %v3263 = vpop.permute.xlu0 %3262
        %3264 = vrot.lane.b32.xlu0 %v1009, 64
        %v3265 = vpop.permute.xlu0 %3264
        %3266 = vrot.lane.b32.xlu0 %v1010, 64
        %v3267 = vpop.permute.xlu0 %3266
        %3268 = vrot.lane.b32.xlu0 %v1011, 64
        %v3269 = vpop.permute.xlu0 %3268
        %3270 = vrot.lane.b32.xlu0 %v1012, 64
        %v3271 = vpop.permute.xlu0 %3270
        %3272 = vrot.lane.b32.xlu0 %v1013, 64
        %v3273 = vpop.permute.xlu0 %3272
        %3274 = vrot.lane.b32.xlu0 %v1014, 64
        %v3275 = vpop.permute.xlu0 %3274
        %3276 = vrot.lane.b32.xlu0 %v1015, 64
        %v3277 = vpop.permute.xlu0 %3276
        %3278 = vrot.lane.b32.xlu0 %v1016, 64
        %v3279 = vpop.permute.xlu0 %3278
        %3280 = vrot.lane.b32.xlu0 %v1017, 64
        %v3281 = vpop.permute.xlu0 %3280
        %3282 = vrot.lane.b32.xlu0 %v1018, 64
        %v3283 = vpop.permute.xlu0 %3282
        %v3285 = vsel %vm1019, %v3221, 0
        %v3288 = vsel %vm1019, %v3223, 0
        %v3291 = vsel %vm1019, %v3225, 0
        %v3294 = vsel %vm1019, %v3227, 0
        %v3297 = vsel %vm1019, %v3229, 0
        %v3300 = vsel %vm1019, %v3231, 0
        %v3303 = vsel %vm1019, %v3233, 0
        %v3306 = vsel %vm1019, %v3235, 0
        %v3309 = vsel %vm1019, %v3237, 0
        %v3312 = vsel %vm1019, %v3239, 0
        %v3315 = vsel %vm1019, %v3241, 0
        %v3318 = vsel %vm1019, %v3243, 0
        %v3321 = vsel %vm1019, %v3245, 0
        %v3324 = vsel %vm1019, %v3247, 0
        %v3327 = vsel %vm1019, %v3249, 0
        %v3330 = vsel %vm1019, %v3251, 0
        %v3333 = vsel %vm1019, %v3253, 0
        %v3336 = vsel %vm1019, %v3255, 0
        %v3339 = vsel %vm1019, %v3257, 0
        %v3342 = vsel %vm1019, %v3259, 0
        %v3345 = vsel %vm1019, %v3261, 0
        %v3348 = vsel %vm1019, %v3263, 0
        %v3351 = vsel %vm1019, %v3265, 0
        %v3354 = vsel %vm1019, %v3267, 0
        %v3357 = vsel %vm1019, %v3269, 0
        %v3360 = vsel %vm1019, %v3271, 0
        %v3363 = vsel %vm1019, %v3273, 0
        %v3366 = vsel %vm1019, %v3275, 0
        %v3369 = vsel %vm1019, %v3277, 0
        %v3372 = vsel %vm1019, %v3279, 0
        %v3375 = vsel %vm1019, %v3281, 0
        %v3378 = vsel %vm1019, %v3283, 0
        %3380 = vmatpush.bf16.xpose.msra.mxu0 %v3354
        %3381 = vmatpush.bf16.xpose.msra.mxu0 %v3351
        %3382 = vmatpush.bf16.xpose.msra.mxu0 %v3348
        %3383 = vmatpush.bf16.xpose.msra.mxu0 %v3345
        %3384 = vmatpush.bf16.xpose.msra.mxu0 %v3342
        %3385 = vmatpush.bf16.xpose.msra.mxu0 %v3339
        %3386 = vmatpush.bf16.xpose.msra.mxu0 %v3336
        %3387 = vmatpush.bf16.xpose.msra.mxu0 %v3333
        %3388 = vmatmul.bf16.gmra.mxu0 %v3285
        %v3389 = vpop.f32.mrf.mxu0
        %v3390 = vadd.f32 0.0, %v3389
        %v3391 = vpop.f32.mrf.mxu0
        %v3392 = vadd.f32 0.0, %v3391
        %3393 = vmatmul.bf16.gmra.mxu0 %v3288
        %v3394 = vpop.f32.mrf.mxu0
        %v3395 = vadd.f32 0.0, %v3394
        %v3396 = vpop.f32.mrf.mxu0
        %v3397 = vadd.f32 0.0, %v3396
        %3398 = vmatmul.bf16.gmra.mxu0 %v3291
        %v3399 = vpop.f32.mrf.mxu0
        %v3400 = vadd.f32 0.0, %v3399
        %v3401 = vpop.f32.mrf.mxu0
        %v3402 = vadd.f32 0.0, %v3401
        %3403 = vmatmul.bf16.gmra.mxu0 %v3294
        %v3404 = vpop.f32.mrf.mxu0
        %v3405 = vadd.f32 0.0, %v3404
        %v3406 = vpop.f32.mrf.mxu0
        %v3407 = vadd.f32 0.0, %v3406
        %3408 = vmatmul.bf16.gmra.mxu0 %v3297
        %v3409 = vpop.f32.mrf.mxu0
        %v3410 = vadd.f32 0.0, %v3409
        %v3411 = vpop.f32.mrf.mxu0
        %v3412 = vadd.f32 0.0, %v3411
        %3413 = vmatmul.bf16.gmra.mxu0 %v3300
        %v3414 = vpop.f32.mrf.mxu0
        %v3415 = vadd.f32 0.0, %v3414
        %v3416 = vpop.f32.mrf.mxu0
        %v3417 = vadd.f32 0.0, %v3416
        %3418 = vmatmul.bf16.gmra.mxu0 %v3303
        %v3419 = vpop.f32.mrf.mxu0
        %v3420 = vadd.f32 0.0, %v3419
        %v3421 = vpop.f32.mrf.mxu0
        %v3422 = vadd.f32 0.0, %v3421
        %3423 = vmatmul.bf16.gmra.mxu0 %v3306
        %v3424 = vpop.f32.mrf.mxu0
        %v3425 = vadd.f32 0.0, %v3424
        %v3426 = vpop.f32.mrf.mxu0
        %v3427 = vadd.f32 0.0, %v3426
        %3428 = vmatmul.bf16.gmra.mxu0 %v3309
        %v3429 = vpop.f32.mrf.mxu0
        %v3430 = vadd.f32 0.0, %v3429
        %v3431 = vpop.f32.mrf.mxu0
        %v3432 = vadd.f32 0.0, %v3431
        %3433 = vmatmul.bf16.gmra.mxu0 %v3312
        %v3434 = vpop.f32.mrf.mxu0
        %v3435 = vadd.f32 0.0, %v3434
        %v3436 = vpop.f32.mrf.mxu0
        %v3437 = vadd.f32 0.0, %v3436
        %3438 = vmatmul.bf16.gmra.mxu0 %v3315
        %v3439 = vpop.f32.mrf.mxu0
        %v3440 = vadd.f32 0.0, %v3439
        %v3441 = vpop.f32.mrf.mxu0
        %v3442 = vadd.f32 0.0, %v3441
        %3443 = vmatmul.bf16.gmra.mxu0 %v3318
        %v3444 = vpop.f32.mrf.mxu0
        %v3445 = vadd.f32 0.0, %v3444
        %v3446 = vpop.f32.mrf.mxu0
        %v3447 = vadd.f32 0.0, %v3446
        %3448 = vmatmul.bf16.gmra.mxu0 %v3321
        %v3449 = vpop.f32.mrf.mxu0
        %v3450 = vadd.f32 0.0, %v3449
        %v3451 = vpop.f32.mrf.mxu0
        %v3452 = vadd.f32 0.0, %v3451
        %3453 = vmatmul.bf16.gmra.mxu0 %v3324
        %v3454 = vpop.f32.mrf.mxu0
        %v3455 = vadd.f32 0.0, %v3454
        %v3456 = vpop.f32.mrf.mxu0
        %v3457 = vadd.f32 0.0, %v3456
        %3458 = vmatmul.bf16.gmra.mxu0 %v3327
        %v3459 = vpop.f32.mrf.mxu0
        %v3460 = vadd.f32 0.0, %v3459
        %v3461 = vpop.f32.mrf.mxu0
        %v3462 = vadd.f32 0.0, %v3461
        %3463 = vmatmul.bf16.gmra.mxu0 %v3330
        %v3464 = vpop.f32.mrf.mxu0
        %v3465 = vadd.f32 0.0, %v3464
        %v3466 = vpop.f32.mrf.mxu0
        %v3467 = vadd.f32 0.0, %v3466
        %3468 = vdwg.mxu0
        %3469 = vmatpush.bf16.xpose.msra.mxu0 %v3378
        %3470 = vmatpush.bf16.xpose.msra.mxu0 %v3375
        %3471 = vmatpush.bf16.xpose.msra.mxu0 %v3372
        %3472 = vmatpush.bf16.xpose.msra.mxu0 %v3369
        %3473 = vmatpush.bf16.xpose.msra.mxu0 %v3366
        %3474 = vmatpush.bf16.xpose.msra.mxu0 %v3363
        %3475 = vmatpush.bf16.xpose.msra.mxu0 %v3360
        %3476 = vmatpush.bf16.xpose.msra.mxu0 %v3357
        %3477 = vmatmul.bf16.gmra.mxu0 %v3285
        %v3478 = vpop.f32.mrf.mxu0
        %v3479 = vadd.f32 0.0, %v3478
        %v3480 = vpop.f32.mrf.mxu0
        %v3481 = vadd.f32 0.0, %v3480
        %3482 = vmatmul.bf16.gmra.mxu0 %v3288
        %v3483 = vpop.f32.mrf.mxu0
        %v3484 = vadd.f32 0.0, %v3483
        %v3485 = vpop.f32.mrf.mxu0
        %v3486 = vadd.f32 0.0, %v3485
        %3487 = vmatmul.bf16.gmra.mxu0 %v3291
        %v3488 = vpop.f32.mrf.mxu0
        %v3489 = vadd.f32 0.0, %v3488
        %v3490 = vpop.f32.mrf.mxu0
        %v3491 = vadd.f32 0.0, %v3490
        %3492 = vmatmul.bf16.gmra.mxu0 %v3294
        %v3493 = vpop.f32.mrf.mxu0
        %v3494 = vadd.f32 0.0, %v3493
        %v3495 = vpop.f32.mrf.mxu0
        %v3496 = vadd.f32 0.0, %v3495
        %3497 = vmatmul.bf16.gmra.mxu0 %v3297
        %v3498 = vpop.f32.mrf.mxu0
        %v3499 = vadd.f32 0.0, %v3498
        %v3500 = vpop.f32.mrf.mxu0
        %v3501 = vadd.f32 0.0, %v3500
        %3502 = vmatmul.bf16.gmra.mxu0 %v3300
        %v3503 = vpop.f32.mrf.mxu0
        %v3504 = vadd.f32 0.0, %v3503
        %v3505 = vpop.f32.mrf.mxu0
        %v3506 = vadd.f32 0.0, %v3505
        %3507 = vmatmul.bf16.gmra.mxu0 %v3303
        %v3508 = vpop.f32.mrf.mxu0
        %v3509 = vadd.f32 0.0, %v3508
        %v3510 = vpop.f32.mrf.mxu0
        %v3511 = vadd.f32 0.0, %v3510
        %3512 = vmatmul.bf16.gmra.mxu0 %v3306
        %v3513 = vpop.f32.mrf.mxu0
        %v3514 = vadd.f32 0.0, %v3513
        %v3515 = vpop.f32.mrf.mxu0
        %v3516 = vadd.f32 0.0, %v3515
        %3517 = vmatmul.bf16.gmra.mxu0 %v3309
        %v3518 = vpop.f32.mrf.mxu0
        %v3519 = vadd.f32 0.0, %v3518
        %v3520 = vpop.f32.mrf.mxu0
        %v3521 = vadd.f32 0.0, %v3520
        %3522 = vmatmul.bf16.gmra.mxu0 %v3312
        %v3523 = vpop.f32.mrf.mxu0
        %v3524 = vadd.f32 0.0, %v3523
        %v3525 = vpop.f32.mrf.mxu0
        %v3526 = vadd.f32 0.0, %v3525
        %3527 = vmatmul.bf16.gmra.mxu0 %v3315
        %v3528 = vpop.f32.mrf.mxu0
        %v3529 = vadd.f32 0.0, %v3528
        %v3530 = vpop.f32.mrf.mxu0
        %v3531 = vadd.f32 0.0, %v3530
        %3532 = vmatmul.bf16.gmra.mxu0 %v3318
        %v3533 = vpop.f32.mrf.mxu0
        %v3534 = vadd.f32 0.0, %v3533
        %v3535 = vpop.f32.mrf.mxu0
        %v3536 = vadd.f32 0.0, %v3535
        %3537 = vmatmul.bf16.gmra.mxu0 %v3321
        %v3538 = vpop.f32.mrf.mxu0
        %v3539 = vadd.f32 0.0, %v3538
        %v3540 = vpop.f32.mrf.mxu0
        %v3541 = vadd.f32 0.0, %v3540
        %3542 = vmatmul.bf16.gmra.mxu0 %v3324
        %v3543 = vpop.f32.mrf.mxu0
        %v3544 = vadd.f32 0.0, %v3543
        %v3545 = vpop.f32.mrf.mxu0
        %v3546 = vadd.f32 0.0, %v3545
        %3547 = vmatmul.bf16.gmra.mxu0 %v3327
        %v3548 = vpop.f32.mrf.mxu0
        %v3549 = vadd.f32 0.0, %v3548
        %v3550 = vpop.f32.mrf.mxu0
        %v3551 = vadd.f32 0.0, %v3550
        %3552 = vmatmul.bf16.gmra.mxu0 %v3330
        %v3553 = vpop.f32.mrf.mxu0
        %v3554 = vadd.f32 0.0, %v3553
        %v3555 = vpop.f32.mrf.mxu0
        %v3556 = vadd.f32 0.0, %v3555
        %3557 = vdwg.mxu0
        %v3558 = vmax.f32 %v3390, %v3479
        %3559 = vmax.xlane.f32.xlu0 %v3558
        %v3560 = vpop.xlane.xlu0 %3559
        %v3561 = vmax.f32 %v3392, %v3481
        %3562 = vmax.xlane.f32.xlu0 %v3561
        %v3563 = vpop.xlane.xlu0 %3562
        %v3564 = vmax.f32 %v3395, %v3484
        %3565 = vmax.xlane.f32.xlu0 %v3564
        %v3566 = vpop.xlane.xlu0 %3565
        %v3567 = vmax.f32 %v3397, %v3486
        %3568 = vmax.xlane.f32.xlu0 %v3567
        %v3569 = vpop.xlane.xlu0 %3568
        %v3570 = vmax.f32 %v3400, %v3489
        %3571 = vmax.xlane.f32.xlu0 %v3570
        %v3572 = vpop.xlane.xlu0 %3571
        %v3573 = vmax.f32 %v3402, %v3491
        %3574 = vmax.xlane.f32.xlu0 %v3573
        %v3575 = vpop.xlane.xlu0 %3574
        %v3576 = vmax.f32 %v3405, %v3494
        %3577 = vmax.xlane.f32.xlu0 %v3576
        %v3578 = vpop.xlane.xlu0 %3577
        %v3579 = vmax.f32 %v3407, %v3496
        %3580 = vmax.xlane.f32.xlu0 %v3579
        %v3581 = vpop.xlane.xlu0 %3580
        %v3582 = vmax.f32 %v3410, %v3499
        %3583 = vmax.xlane.f32.xlu0 %v3582
        %v3584 = vpop.xlane.xlu0 %3583
        %v3585 = vmax.f32 %v3412, %v3501
        %3586 = vmax.xlane.f32.xlu0 %v3585
        %v3587 = vpop.xlane.xlu0 %3586
        %v3588 = vmax.f32 %v3415, %v3504
        %3589 = vmax.xlane.f32.xlu0 %v3588
        %v3590 = vpop.xlane.xlu0 %3589
        %v3591 = vmax.f32 %v3417, %v3506
        %3592 = vmax.xlane.f32.xlu0 %v3591
        %v3593 = vpop.xlane.xlu0 %3592
        %v3594 = vmax.f32 %v3420, %v3509
        %3595 = vmax.xlane.f32.xlu0 %v3594
        %v3596 = vpop.xlane.xlu0 %3595
        %v3597 = vmax.f32 %v3422, %v3511
        %3598 = vmax.xlane.f32.xlu0 %v3597
        %v3599 = vpop.xlane.xlu0 %3598
        %v3600 = vmax.f32 %v3425, %v3514
        %3601 = vmax.xlane.f32.xlu0 %v3600
        %v3602 = vpop.xlane.xlu0 %3601
        %v3603 = vmax.f32 %v3427, %v3516
        %3604 = vmax.xlane.f32.xlu0 %v3603
        %v3605 = vpop.xlane.xlu0 %3604
        %v3606 = vmax.f32 %v3430, %v3519
        %3607 = vmax.xlane.f32.xlu0 %v3606
        %v3608 = vpop.xlane.xlu0 %3607
        %v3609 = vmax.f32 %v3432, %v3521
        %3610 = vmax.xlane.f32.xlu0 %v3609
        %v3611 = vpop.xlane.xlu0 %3610
        %v3612 = vmax.f32 %v3435, %v3524
        %3613 = vmax.xlane.f32.xlu0 %v3612
        %v3614 = vpop.xlane.xlu0 %3613
        %v3615 = vmax.f32 %v3437, %v3526
        %3616 = vmax.xlane.f32.xlu0 %v3615
        %v3617 = vpop.xlane.xlu0 %3616
        %v3618 = vmax.f32 %v3440, %v3529
        %3619 = vmax.xlane.f32.xlu0 %v3618
        %v3620 = vpop.xlane.xlu0 %3619
        %v3621 = vmax.f32 %v3442, %v3531
        %3622 = vmax.xlane.f32.xlu0 %v3621
        %v3623 = vpop.xlane.xlu0 %3622
        %v3624 = vmax.f32 %v3445, %v3534
        %3625 = vmax.xlane.f32.xlu0 %v3624
        %v3626 = vpop.xlane.xlu0 %3625
        %v3627 = vmax.f32 %v3447, %v3536
        %3628 = vmax.xlane.f32.xlu0 %v3627
        %v3629 = vpop.xlane.xlu0 %3628
        %v3630 = vmax.f32 %v3450, %v3539
        %3631 = vmax.xlane.f32.xlu0 %v3630
        %v3632 = vpop.xlane.xlu0 %3631
        %v3633 = vmax.f32 %v3452, %v3541
        %3634 = vmax.xlane.f32.xlu0 %v3633
        %v3635 = vpop.xlane.xlu0 %3634
        %v3636 = vmax.f32 %v3455, %v3544
        %3637 = vmax.xlane.f32.xlu0 %v3636
        %v3638 = vpop.xlane.xlu0 %3637
        %v3639 = vmax.f32 %v3457, %v3546
        %3640 = vmax.xlane.f32.xlu0 %v3639
        %v3641 = vpop.xlane.xlu0 %3640
        %v3642 = vmax.f32 %v3460, %v3549
        %3643 = vmax.xlane.f32.xlu0 %v3642
        %v3644 = vpop.xlane.xlu0 %3643
        %v3645 = vmax.f32 %v3462, %v3551
        %3646 = vmax.xlane.f32.xlu0 %v3645
        %v3647 = vpop.xlane.xlu0 %3646
        %v3648 = vmax.f32 %v3465, %v3554
        %3649 = vmax.xlane.f32.xlu0 %v3648
        %v3650 = vpop.xlane.xlu0 %3649
        %v3651 = vmax.f32 %v3467, %v3556
        %3652 = vmax.xlane.f32.xlu0 %v3651
        %v3653 = vpop.xlane.xlu0 %3652
        %v3654 = vsub.f32 %v3390, %v3560
        %v3655 = vsub.f32 %v3479, %v3560
        %v3656 = vsub.f32 %v3392, %v3563
        %v3657 = vsub.f32 %v3481, %v3563
        %v3658 = vsub.f32 %v3395, %v3566
        %v3659 = vsub.f32 %v3484, %v3566
        %v3660 = vsub.f32 %v3397, %v3569
        %v3661 = vsub.f32 %v3486, %v3569
        %v3662 = vsub.f32 %v3400, %v3572
        %v3663 = vsub.f32 %v3489, %v3572
        %v3664 = vsub.f32 %v3402, %v3575
        %v3665 = vsub.f32 %v3491, %v3575
        %v3666 = vsub.f32 %v3405, %v3578
        %v3667 = vsub.f32 %v3494, %v3578
        %v3668 = vsub.f32 %v3407, %v3581
        %v3669 = vsub.f32 %v3496, %v3581
        %v3670 = vsub.f32 %v3410, %v3584
        %v3671 = vsub.f32 %v3499, %v3584
        %v3672 = vsub.f32 %v3412, %v3587
        %v3673 = vsub.f32 %v3501, %v3587
        %v3674 = vsub.f32 %v3415, %v3590
        %v3675 = vsub.f32 %v3504, %v3590
        %v3676 = vsub.f32 %v3417, %v3593
        %v3677 = vsub.f32 %v3506, %v3593
        %v3678 = vsub.f32 %v3420, %v3596
        %v3679 = vsub.f32 %v3509, %v3596
        %v3680 = vsub.f32 %v3422, %v3599
        %v3681 = vsub.f32 %v3511, %v3599
        %v3682 = vsub.f32 %v3425, %v3602
        %v3683 = vsub.f32 %v3514, %v3602
        %v3684 = vsub.f32 %v3427, %v3605
        %v3685 = vsub.f32 %v3516, %v3605
        %v3686 = vsub.f32 %v3430, %v3608
        %v3687 = vsub.f32 %v3519, %v3608
        %v3688 = vsub.f32 %v3432, %v3611
        %v3689 = vsub.f32 %v3521, %v3611
        %v3690 = vsub.f32 %v3435, %v3614
        %v3691 = vsub.f32 %v3524, %v3614
        %v3692 = vsub.f32 %v3437, %v3617
        %v3693 = vsub.f32 %v3526, %v3617
        %v3694 = vsub.f32 %v3440, %v3620
        %v3695 = vsub.f32 %v3529, %v3620
        %v3696 = vsub.f32 %v3442, %v3623
        %v3697 = vsub.f32 %v3531, %v3623
        %v3698 = vsub.f32 %v3445, %v3626
        %v3699 = vsub.f32 %v3534, %v3626
        %v3700 = vsub.f32 %v3447, %v3629
        %v3701 = vsub.f32 %v3536, %v3629
        %v3702 = vsub.f32 %v3450, %v3632
        %v3703 = vsub.f32 %v3539, %v3632
        %v3704 = vsub.f32 %v3452, %v3635
        %v3705 = vsub.f32 %v3541, %v3635
        %v3706 = vsub.f32 %v3455, %v3638
        %v3707 = vsub.f32 %v3544, %v3638
        %v3708 = vsub.f32 %v3457, %v3641
        %v3709 = vsub.f32 %v3546, %v3641
        %v3710 = vsub.f32 %v3460, %v3644
        %v3711 = vsub.f32 %v3549, %v3644
        %v3712 = vsub.f32 %v3462, %v3647
        %v3713 = vsub.f32 %v3551, %v3647
        %v3714 = vsub.f32 %v3465, %v3650
        %v3715 = vsub.f32 %v3554, %v3650
        %v3716 = vsub.f32 %v3467, %v3653
        %v3717 = vsub.f32 %v3556, %v3653
        %v3718 = vmul.f32 %v3654, 1.442695
        %v3719 = vpow.pop %v3718
        %v3720 = vmul.f32 %v3655, 1.442695
        %v3721 = vpow.pop %v3720
        %v3722 = vmul.f32 %v3656, 1.442695
        %v3723 = vpow.pop %v3722
        %v3724 = vmul.f32 %v3657, 1.442695
        %v3725 = vpow.pop %v3724
        %v3726 = vmul.f32 %v3658, 1.442695
        %v3727 = vpow.pop %v3726
        %v3728 = vmul.f32 %v3659, 1.442695
        %v3729 = vpow.pop %v3728
        %v3730 = vmul.f32 %v3660, 1.442695
        %v3731 = vpow.pop %v3730
        %v3732 = vmul.f32 %v3661, 1.442695
        %v3733 = vpow.pop %v3732
        %v3734 = vmul.f32 %v3662, 1.442695
        %v3735 = vpow.pop %v3734
        %v3736 = vmul.f32 %v3663, 1.442695
        %v3737 = vpow.pop %v3736
        %v3738 = vmul.f32 %v3664, 1.442695
        %v3739 = vpow.pop %v3738
        %v3740 = vmul.f32 %v3665, 1.442695
        %v3741 = vpow.pop %v3740
        %v3742 = vmul.f32 %v3666, 1.442695
        %v3743 = vpow.pop %v3742
        %v3744 = vmul.f32 %v3667, 1.442695
        %v3745 = vpow.pop %v3744
        %v3746 = vmul.f32 %v3668, 1.442695
        %v3747 = vpow.pop %v3746
        %v3748 = vmul.f32 %v3669, 1.442695
        %v3749 = vpow.pop %v3748
        %v3750 = vmul.f32 %v3670, 1.442695
        %v3751 = vpow.pop %v3750
        %v3752 = vmul.f32 %v3671, 1.442695
        %v3753 = vpow.pop %v3752
        %v3754 = vmul.f32 %v3672, 1.442695
        %v3755 = vpow.pop %v3754
        %v3756 = vmul.f32 %v3673, 1.442695
        %v3757 = vpow.pop %v3756
        %v3758 = vmul.f32 %v3674, 1.442695
        %v3759 = vpow.pop %v3758
        %v3760 = vmul.f32 %v3675, 1.442695
        %v3761 = vpow.pop %v3760
        %v3762 = vmul.f32 %v3676, 1.442695
        %v3763 = vpow.pop %v3762
        %v3764 = vmul.f32 %v3677, 1.442695
        %v3765 = vpow.pop %v3764
        %v3766 = vmul.f32 %v3678, 1.442695
        %v3767 = vpow.pop %v3766
        %v3768 = vmul.f32 %v3679, 1.442695
        %v3769 = vpow.pop %v3768
        %v3770 = vmul.f32 %v3680, 1.442695
        %v3771 = vpow.pop %v3770
        %v3772 = vmul.f32 %v3681, 1.442695
        %v3773 = vpow.pop %v3772
        %v3774 = vmul.f32 %v3682, 1.442695
        %v3775 = vpow.pop %v3774
        %v3776 = vmul.f32 %v3683, 1.442695
        %v3777 = vpow.pop %v3776
        %v3778 = vmul.f32 %v3684, 1.442695
        %v3779 = vpow.pop %v3778
        %v3780 = vmul.f32 %v3685, 1.442695
        %v3781 = vpow.pop %v3780
        %v3782 = vmul.f32 %v3686, 1.442695
        %v3783 = vpow.pop %v3782
        %v3784 = vmul.f32 %v3687, 1.442695
        %v3785 = vpow.pop %v3784
        %v3786 = vmul.f32 %v3688, 1.442695
        %v3787 = vpow.pop %v3786
        %v3788 = vmul.f32 %v3689, 1.442695
        %v3789 = vpow.pop %v3788
        %v3790 = vmul.f32 %v3690, 1.442695
        %v3791 = vpow.pop %v3790
        %v3792 = vmul.f32 %v3691, 1.442695
        %v3793 = vpow.pop %v3792
        %v3794 = vmul.f32 %v3692, 1.442695
        %v3795 = vpow.pop %v3794
        %v3796 = vmul.f32 %v3693, 1.442695
        %v3797 = vpow.pop %v3796
        %v3798 = vmul.f32 %v3694, 1.442695
        %v3799 = vpow.pop %v3798
        %v3800 = vmul.f32 %v3695, 1.442695
        %v3801 = vpow.pop %v3800
        %v3802 = vmul.f32 %v3696, 1.442695
        %v3803 = vpow.pop %v3802
        %v3804 = vmul.f32 %v3697, 1.442695
        %v3805 = vpow.pop %v3804
        %v3806 = vmul.f32 %v3698, 1.442695
        %v3807 = vpow.pop %v3806
        %v3808 = vmul.f32 %v3699, 1.442695
        %v3809 = vpow.pop %v3808
        %v3810 = vmul.f32 %v3700, 1.442695
        %v3811 = vpow.pop %v3810
        %v3812 = vmul.f32 %v3701, 1.442695
        %v3813 = vpow.pop %v3812
        %v3814 = vmul.f32 %v3702, 1.442695
        %v3815 = vpow.pop %v3814
        %v3816 = vmul.f32 %v3703, 1.442695
        %v3817 = vpow.pop %v3816
        %v3818 = vmul.f32 %v3704, 1.442695
        %v3819 = vpow.pop %v3818
        %v3820 = vmul.f32 %v3705, 1.442695
        %v3821 = vpow.pop %v3820
        %v3822 = vmul.f32 %v3706, 1.442695
        %v3823 = vpow.pop %v3822
        %v3824 = vmul.f32 %v3707, 1.442695
        %v3825 = vpow.pop %v3824
        %v3826 = vmul.f32 %v3708, 1.442695
        %v3827 = vpow.pop %v3826
        %v3828 = vmul.f32 %v3709, 1.442695
        %v3829 = vpow.pop %v3828
        %v3830 = vmul.f32 %v3710, 1.442695
        %v3831 = vpow.pop %v3830
        %v3832 = vmul.f32 %v3711, 1.442695
        %v3833 = vpow.pop %v3832
        %v3834 = vmul.f32 %v3712, 1.442695
        %v3835 = vpow.pop %v3834
        %v3836 = vmul.f32 %v3713, 1.442695
        %v3837 = vpow.pop %v3836
        %v3838 = vmul.f32 %v3714, 1.442695
        %v3839 = vpow.pop %v3838
        %v3840 = vmul.f32 %v3715, 1.442695
        %v3841 = vpow.pop %v3840
        %v3842 = vmul.f32 %v3716, 1.442695
        %v3843 = vpow.pop %v3842
        %v3844 = vmul.f32 %v3717, 1.442695
        %v3845 = vpow.pop %v3844
        %v3846 = vadd.f32 %v3719, %v3721
        %3847 = vadd.xlane.f32.xlu0 %v3846
        %v3848 = vpop.xlane.xlu0 %3847
        %v3849 = vadd.f32 %v3723, %v3725
        %3850 = vadd.xlane.f32.xlu0 %v3849
        %v3851 = vpop.xlane.xlu0 %3850
        %v3852 = vadd.f32 %v3727, %v3729
        %3853 = vadd.xlane.f32.xlu0 %v3852
        %v3854 = vpop.xlane.xlu0 %3853
        %v3855 = vadd.f32 %v3731, %v3733
        %3856 = vadd.xlane.f32.xlu0 %v3855
        %v3857 = vpop.xlane.xlu0 %3856
        %v3858 = vadd.f32 %v3735, %v3737
        %3859 = vadd.xlane.f32.xlu0 %v3858
        %v3860 = vpop.xlane.xlu0 %3859
        %v3861 = vadd.f32 %v3739, %v3741
        %3862 = vadd.xlane.f32.xlu0 %v3861
        %v3863 = vpop.xlane.xlu0 %3862
        %v3864 = vadd.f32 %v3743, %v3745
        %3865 = vadd.xlane.f32.xlu0 %v3864
        %v3866 = vpop.xlane.xlu0 %3865
        %v3867 = vadd.f32 %v3747, %v3749
        %3868 = vadd.xlane.f32.xlu0 %v3867
        %v3869 = vpop.xlane.xlu0 %3868
        %v3870 = vadd.f32 %v3751, %v3753
        %3871 = vadd.xlane.f32.xlu0 %v3870
        %v3872 = vpop.xlane.xlu0 %3871
        %v3873 = vadd.f32 %v3755, %v3757
        %3874 = vadd.xlane.f32.xlu0 %v3873
        %v3875 = vpop.xlane.xlu0 %3874
        %v3876 = vadd.f32 %v3759, %v3761
        %3877 = vadd.xlane.f32.xlu0 %v3876
        %v3878 = vpop.xlane.xlu0 %3877
        %v3879 = vadd.f32 %v3763, %v3765
        %3880 = vadd.xlane.f32.xlu0 %v3879
        %v3881 = vpop.xlane.xlu0 %3880
        %v3882 = vadd.f32 %v3767, %v3769
        %3883 = vadd.xlane.f32.xlu0 %v3882
        %v3884 = vpop.xlane.xlu0 %3883
        %v3885 = vadd.f32 %v3771, %v3773
        %3886 = vadd.xlane.f32.xlu0 %v3885
        %v3887 = vpop.xlane.xlu0 %3886
        %v3888 = vadd.f32 %v3775, %v3777
        %3889 = vadd.xlane.f32.xlu0 %v3888
        %v3890 = vpop.xlane.xlu0 %3889
        %v3891 = vadd.f32 %v3779, %v3781
        %3892 = vadd.xlane.f32.xlu0 %v3891
        %v3893 = vpop.xlane.xlu0 %3892
        %v3894 = vadd.f32 %v3783, %v3785
        %3895 = vadd.xlane.f32.xlu0 %v3894
        %v3896 = vpop.xlane.xlu0 %3895
        %v3897 = vadd.f32 %v3787, %v3789
        %3898 = vadd.xlane.f32.xlu0 %v3897
        %v3899 = vpop.xlane.xlu0 %3898
        %v3900 = vadd.f32 %v3791, %v3793
        %3901 = vadd.xlane.f32.xlu0 %v3900
        %v3902 = vpop.xlane.xlu0 %3901
        %v3903 = vadd.f32 %v3795, %v3797
        %3904 = vadd.xlane.f32.xlu0 %v3903
        %v3905 = vpop.xlane.xlu0 %3904
        %v3906 = vadd.f32 %v3799, %v3801
        %3907 = vadd.xlane.f32.xlu0 %v3906
        %v3908 = vpop.xlane.xlu0 %3907
        %v3909 = vadd.f32 %v3803, %v3805
        %3910 = vadd.xlane.f32.xlu0 %v3909
        %v3911 = vpop.xlane.xlu0 %3910
        %v3912 = vadd.f32 %v3807, %v3809
        %3913 = vadd.xlane.f32.xlu0 %v3912
        %v3914 = vpop.xlane.xlu0 %3913
        %v3915 = vadd.f32 %v3811, %v3813
        %3916 = vadd.xlane.f32.xlu0 %v3915
        %v3917 = vpop.xlane.xlu0 %3916
        %v3918 = vadd.f32 %v3815, %v3817
        %3919 = vadd.xlane.f32.xlu0 %v3918
        %v3920 = vpop.xlane.xlu0 %3919
        %v3921 = vadd.f32 %v3819, %v3821
        %3922 = vadd.xlane.f32.xlu0 %v3921
        %v3923 = vpop.xlane.xlu0 %3922
        %v3924 = vadd.f32 %v3823, %v3825
        %3925 = vadd.xlane.f32.xlu0 %v3924
        %v3926 = vpop.xlane.xlu0 %3925
        %v3927 = vadd.f32 %v3827, %v3829
        %3928 = vadd.xlane.f32.xlu0 %v3927
        %v3929 = vpop.xlane.xlu0 %3928
        %v3930 = vadd.f32 %v3831, %v3833
        %3931 = vadd.xlane.f32.xlu0 %v3930
        %v3932 = vpop.xlane.xlu0 %3931
        %v3933 = vadd.f32 %v3835, %v3837
        %3934 = vadd.xlane.f32.xlu0 %v3933
        %v3935 = vpop.xlane.xlu0 %3934
        %v3936 = vadd.f32 %v3839, %v3841
        %3937 = vadd.xlane.f32.xlu0 %v3936
        %v3938 = vpop.xlane.xlu0 %3937
        %v3939 = vadd.f32 %v3843, %v3845
        %3940 = vadd.xlane.f32.xlu0 %v3939
        %v3941 = vpop.xlane.xlu0 %3940
        %v3942 = vrcp.pop %v3848
        %v3943 = vrcp.pop %v3851
        %v3944 = vrcp.pop %v3854
        %v3945 = vrcp.pop %v3857
        %v3946 = vrcp.pop %v3860
        %v3947 = vrcp.pop %v3863
        %v3948 = vrcp.pop %v3866
        %v3949 = vrcp.pop %v3869
        %v3950 = vrcp.pop %v3872
        %v3951 = vrcp.pop %v3875
        %v3952 = vrcp.pop %v3878
        %v3953 = vrcp.pop %v3881
        %v3954 = vrcp.pop %v3884
        %v3955 = vrcp.pop %v3887
        %v3956 = vrcp.pop %v3890
        %v3957 = vrcp.pop %v3893
        %v3958 = vrcp.pop %v3896
        %v3959 = vrcp.pop %v3899
        %v3960 = vrcp.pop %v3902
        %v3961 = vrcp.pop %v3905
        %v3962 = vrcp.pop %v3908
        %v3963 = vrcp.pop %v3911
        %v3964 = vrcp.pop %v3914
        %v3965 = vrcp.pop %v3917
        %v3966 = vrcp.pop %v3920
        %v3967 = vrcp.pop %v3923
        %v3968 = vrcp.pop %v3926
        %v3969 = vrcp.pop %v3929
        %v3970 = vrcp.pop %v3932
        %v3971 = vrcp.pop %v3935
        %v3972 = vrcp.pop %v3938
        %v3973 = vrcp.pop %v3941
        %v3974 = vmul.f32 %v3719, %v3942
        %v3975 = vmul.f32 %v3721, %v3942
        %v3976 = vmul.f32 %v3723, %v3943
        %v3977 = vmul.f32 %v3725, %v3943
        %v3978 = vmul.f32 %v3727, %v3944
        %v3979 = vmul.f32 %v3729, %v3944
        %v3980 = vmul.f32 %v3731, %v3945
        %v3981 = vmul.f32 %v3733, %v3945
        %v3982 = vmul.f32 %v3735, %v3946
        %v3983 = vmul.f32 %v3737, %v3946
        %v3984 = vmul.f32 %v3739, %v3947
        %v3985 = vmul.f32 %v3741, %v3947
        %v3986 = vmul.f32 %v3743, %v3948
        %v3987 = vmul.f32 %v3745, %v3948
        %v3988 = vmul.f32 %v3747, %v3949
        %v3989 = vmul.f32 %v3749, %v3949
        %v3990 = vmul.f32 %v3751, %v3950
        %v3991 = vmul.f32 %v3753, %v3950
        %v3992 = vmul.f32 %v3755, %v3951
        %v3993 = vmul.f32 %v3757, %v3951
        %v3994 = vmul.f32 %v3759, %v3952
        %v3995 = vmul.f32 %v3761, %v3952
        %v3996 = vmul.f32 %v3763, %v3953
        %v3997 = vmul.f32 %v3765, %v3953
        %v3998 = vmul.f32 %v3767, %v3954
        %v3999 = vmul.f32 %v3769, %v3954
        %v4000 = vmul.f32 %v3771, %v3955
        %v4001 = vmul.f32 %v3773, %v3955
        %v4002 = vmul.f32 %v3775, %v3956
        %v4003 = vmul.f32 %v3777, %v3956
        %v4004 = vmul.f32 %v3779, %v3957
        %v4005 = vmul.f32 %v3781, %v3957
        %v4006 = vmul.f32 %v3783, %v3958
        %v4007 = vmul.f32 %v3785, %v3958
        %v4008 = vmul.f32 %v3787, %v3959
        %v4009 = vmul.f32 %v3789, %v3959
        %v4010 = vmul.f32 %v3791, %v3960
        %v4011 = vmul.f32 %v3793, %v3960
        %v4012 = vmul.f32 %v3795, %v3961
        %v4013 = vmul.f32 %v3797, %v3961
        %v4014 = vmul.f32 %v3799, %v3962
        %v4015 = vmul.f32 %v3801, %v3962
        %v4016 = vmul.f32 %v3803, %v3963
        %v4017 = vmul.f32 %v3805, %v3963
        %v4018 = vmul.f32 %v3807, %v3964
        %v4019 = vmul.f32 %v3809, %v3964
        %v4020 = vmul.f32 %v3811, %v3965
        %v4021 = vmul.f32 %v3813, %v3965
        %v4022 = vmul.f32 %v3815, %v3966
        %v4023 = vmul.f32 %v3817, %v3966
        %v4024 = vmul.f32 %v3819, %v3967
        %v4025 = vmul.f32 %v3821, %v3967
        %v4026 = vmul.f32 %v3823, %v3968
        %v4027 = vmul.f32 %v3825, %v3968
        %v4028 = vmul.f32 %v3827, %v3969
        %v4029 = vmul.f32 %v3829, %v3969
        %v4030 = vmul.f32 %v3831, %v3970
        %v4031 = vmul.f32 %v3833, %v3970
        %v4032 = vmul.f32 %v3835, %v3971
        %v4033 = vmul.f32 %v3837, %v3971
        %v4034 = vmul.f32 %v3839, %v3972
        %v4035 = vmul.f32 %v3841, %v3972
        %v4036 = vmul.f32 %v3843, %v3973
        %v4037 = vmul.f32 %v3845, %v3973
        %v4038 = vpack.c.bf16 %v3976, %v3974
        %v4039 = vpack.c.bf16 %v3977, %v3975
        %v4040 = vpack.c.bf16 %v3980, %v3978
        %v4041 = vpack.c.bf16 %v3981, %v3979
        %v4042 = vpack.c.bf16 %v3984, %v3982
        %v4043 = vpack.c.bf16 %v3985, %v3983
        %v4044 = vpack.c.bf16 %v3988, %v3986
        %v4045 = vpack.c.bf16 %v3989, %v3987
        %v4046 = vpack.c.bf16 %v3992, %v3990
        %v4047 = vpack.c.bf16 %v3993, %v3991
        %v4048 = vpack.c.bf16 %v3996, %v3994
        %v4049 = vpack.c.bf16 %v3997, %v3995
        %v4050 = vpack.c.bf16 %v4000, %v3998
        %v4051 = vpack.c.bf16 %v4001, %v3999
        %v4052 = vpack.c.bf16 %v4004, %v4002
        %v4053 = vpack.c.bf16 %v4005, %v4003
        %v4054 = vpack.c.bf16 %v4008, %v4006
        %v4055 = vpack.c.bf16 %v4009, %v4007
        %v4056 = vpack.c.bf16 %v4012, %v4010
        %v4057 = vpack.c.bf16 %v4013, %v4011
        %v4058 = vpack.c.bf16 %v4016, %v4014
        %v4059 = vpack.c.bf16 %v4017, %v4015
        %v4060 = vpack.c.bf16 %v4020, %v4018
        %v4061 = vpack.c.bf16 %v4021, %v4019
        %v4062 = vpack.c.bf16 %v4024, %v4022
        %v4063 = vpack.c.bf16 %v4025, %v4023
        %v4064 = vpack.c.bf16 %v4028, %v4026
        %v4065 = vpack.c.bf16 %v4029, %v4027
        %v4066 = vpack.c.bf16 %v4032, %v4030
        %v4067 = vpack.c.bf16 %v4033, %v4031
        %v4068 = vpack.c.bf16 %v4036, %v4034
        %v4069 = vpack.c.bf16 %v4037, %v4035
        %4070 = vrot.lane.b32.xlu0 %v1870, 64
        %v4071 = vpop.permute.xlu0 %4070
        %4072 = vrot.lane.b32.xlu0 %v1871, 64
        %v4073 = vpop.permute.xlu0 %4072
        %4074 = vrot.lane.b32.xlu0 %v1872, 64
        %v4075 = vpop.permute.xlu0 %4074
        %4076 = vrot.lane.b32.xlu0 %v1873, 64
        %v4077 = vpop.permute.xlu0 %4076
        %4078 = vrot.lane.b32.xlu0 %v1874, 64
        %v4079 = vpop.permute.xlu0 %4078
        %4080 = vrot.lane.b32.xlu0 %v1875, 64
        %v4081 = vpop.permute.xlu0 %4080
        %4082 = vrot.lane.b32.xlu0 %v1876, 64
        %v4083 = vpop.permute.xlu0 %4082
        %4084 = vrot.lane.b32.xlu0 %v1877, 64
        %v4085 = vpop.permute.xlu0 %4084
        %4086 = vrot.lane.b32.xlu0 %v1878, 64
        %v4087 = vpop.permute.xlu0 %4086
        %4088 = vrot.lane.b32.xlu0 %v1879, 64
        %v4089 = vpop.permute.xlu0 %4088
        %4090 = vrot.lane.b32.xlu0 %v1880, 64
        %v4091 = vpop.permute.xlu0 %4090
        %4092 = vrot.lane.b32.xlu0 %v1881, 64
        %v4093 = vpop.permute.xlu0 %4092
        %4094 = vrot.lane.b32.xlu0 %v1882, 64
        %v4095 = vpop.permute.xlu0 %4094
        %4096 = vrot.lane.b32.xlu0 %v1883, 64
        %v4097 = vpop.permute.xlu0 %4096
        %4098 = vrot.lane.b32.xlu0 %v1884, 64
        %v4099 = vpop.permute.xlu0 %4098
        %4100 = vrot.lane.b32.xlu0 %v1885, 64
        %v4101 = vpop.permute.xlu0 %4100
        %4118 = vmatpush.bf16.msra.mxu0 %v4085
        %4119 = vmatpush.bf16.msra.mxu0 %v4083
        %4120 = vmatpush.bf16.msra.mxu0 %v4081
        %4121 = vmatpush.bf16.msra.mxu0 %v4079
        %4122 = vmatpush.bf16.msra.mxu0 %v4077
        %4123 = vmatpush.bf16.msra.mxu0 %v4075
        %4124 = vmatpush.bf16.msra.mxu0 %v4073
        %4125 = vmatpush.bf16.msra.mxu0 %v4071
        %4126 = vmatmul.bf16.gmra.mxu0 %v4038
        %v4127 = vpop.f32.mrf.mxu0
        %v4128 = vadd.f32 0.0, %v4127
        %v4129 = vpop.f32.mrf.mxu0
        %v4130 = vadd.f32 0.0, %v4129
        %4131 = vmatmul.bf16.gmra.mxu0 %v4040
        %v4132 = vpop.f32.mrf.mxu0
        %v4133 = vadd.f32 0.0, %v4132
        %v4134 = vpop.f32.mrf.mxu0
        %v4135 = vadd.f32 0.0, %v4134
        %4136 = vmatmul.bf16.gmra.mxu0 %v4042
        %v4137 = vpop.f32.mrf.mxu0
        %v4138 = vadd.f32 0.0, %v4137
        %v4139 = vpop.f32.mrf.mxu0
        %v4140 = vadd.f32 0.0, %v4139
        %4141 = vmatmul.bf16.gmra.mxu0 %v4044
        %v4142 = vpop.f32.mrf.mxu0
        %v4143 = vadd.f32 0.0, %v4142
        %v4144 = vpop.f32.mrf.mxu0
        %v4145 = vadd.f32 0.0, %v4144
        %4146 = vmatmul.bf16.gmra.mxu0 %v4046
        %v4147 = vpop.f32.mrf.mxu0
        %v4148 = vadd.f32 0.0, %v4147
        %v4149 = vpop.f32.mrf.mxu0
        %v4150 = vadd.f32 0.0, %v4149
        %4151 = vmatmul.bf16.gmra.mxu0 %v4048
        %v4152 = vpop.f32.mrf.mxu0
        %v4153 = vadd.f32 0.0, %v4152
        %v4154 = vpop.f32.mrf.mxu0
        %v4155 = vadd.f32 0.0, %v4154
        %4156 = vmatmul.bf16.gmra.mxu0 %v4050
        %v4157 = vpop.f32.mrf.mxu0
        %v4158 = vadd.f32 0.0, %v4157
        %v4159 = vpop.f32.mrf.mxu0
        %v4160 = vadd.f32 0.0, %v4159
        %4161 = vmatmul.bf16.gmra.mxu0 %v4052
        %v4162 = vpop.f32.mrf.mxu0
        %v4163 = vadd.f32 0.0, %v4162
        %v4164 = vpop.f32.mrf.mxu0
        %v4165 = vadd.f32 0.0, %v4164
        %4166 = vmatmul.bf16.gmra.mxu0 %v4054
        %v4167 = vpop.f32.mrf.mxu0
        %v4168 = vadd.f32 0.0, %v4167
        %v4169 = vpop.f32.mrf.mxu0
        %v4170 = vadd.f32 0.0, %v4169
        %4171 = vmatmul.bf16.gmra.mxu0 %v4056
        %v4172 = vpop.f32.mrf.mxu0
        %v4173 = vadd.f32 0.0, %v4172
        %v4174 = vpop.f32.mrf.mxu0
        %v4175 = vadd.f32 0.0, %v4174
        %4176 = vmatmul.bf16.gmra.mxu0 %v4058
        %v4177 = vpop.f32.mrf.mxu0
        %v4178 = vadd.f32 0.0, %v4177
        %v4179 = vpop.f32.mrf.mxu0
        %v4180 = vadd.f32 0.0, %v4179
        %4181 = vmatmul.bf16.gmra.mxu0 %v4060
        %v4182 = vpop.f32.mrf.mxu0
        %v4183 = vadd.f32 0.0, %v4182
        %v4184 = vpop.f32.mrf.mxu0
        %v4185 = vadd.f32 0.0, %v4184
        %4186 = vmatmul.bf16.gmra.mxu0 %v4062
        %v4187 = vpop.f32.mrf.mxu0
        %v4188 = vadd.f32 0.0, %v4187
        %v4189 = vpop.f32.mrf.mxu0
        %v4190 = vadd.f32 0.0, %v4189
        %4191 = vmatmul.bf16.gmra.mxu0 %v4064
        %v4192 = vpop.f32.mrf.mxu0
        %v4193 = vadd.f32 0.0, %v4192
        %v4194 = vpop.f32.mrf.mxu0
        %v4195 = vadd.f32 0.0, %v4194
        %4196 = vmatmul.bf16.gmra.mxu0 %v4066
        %v4197 = vpop.f32.mrf.mxu0
        %v4198 = vadd.f32 0.0, %v4197
        %v4199 = vpop.f32.mrf.mxu0
        %v4200 = vadd.f32 0.0, %v4199
        %4201 = vmatmul.bf16.gmra.mxu0 %v4068
        %v4202 = vpop.f32.mrf.mxu0
        %v4203 = vadd.f32 0.0, %v4202
        %v4204 = vpop.f32.mrf.mxu0
        %v4205 = vadd.f32 0.0, %v4204
        %4206 = vdwg.mxu0
        %4207 = vmatpush.bf16.msra.mxu0 %v4101
        %4208 = vmatpush.bf16.msra.mxu0 %v4099
        %4209 = vmatpush.bf16.msra.mxu0 %v4097
        %4210 = vmatpush.bf16.msra.mxu0 %v4095
        %4211 = vmatpush.bf16.msra.mxu0 %v4093
        %4212 = vmatpush.bf16.msra.mxu0 %v4091
        %4213 = vmatpush.bf16.msra.mxu0 %v4089
        %4214 = vmatpush.bf16.msra.mxu0 %v4087
        %4215 = vmatmul.bf16.gmra.mxu0 %v4039
        %v4216 = vpop.f32.mrf.mxu0
        %v4217 = vadd.f32 %v4128, %v4216
        %v4218 = vpop.f32.mrf.mxu0
        %v4219 = vadd.f32 %v4130, %v4218
        %4220 = vmatmul.bf16.gmra.mxu0 %v4041
        %v4221 = vpop.f32.mrf.mxu0
        %v4222 = vadd.f32 %v4133, %v4221
        %v4223 = vpop.f32.mrf.mxu0
        %v4224 = vadd.f32 %v4135, %v4223
        %4225 = vmatmul.bf16.gmra.mxu0 %v4043
        %v4226 = vpop.f32.mrf.mxu0
        %v4227 = vadd.f32 %v4138, %v4226
        %v4228 = vpop.f32.mrf.mxu0
        %v4229 = vadd.f32 %v4140, %v4228
        %4230 = vmatmul.bf16.gmra.mxu0 %v4045
        %v4231 = vpop.f32.mrf.mxu0
        %v4232 = vadd.f32 %v4143, %v4231
        %v4233 = vpop.f32.mrf.mxu0
        %v4234 = vadd.f32 %v4145, %v4233
        %4235 = vmatmul.bf16.gmra.mxu0 %v4047
        %v4236 = vpop.f32.mrf.mxu0
        %v4237 = vadd.f32 %v4148, %v4236
        %v4238 = vpop.f32.mrf.mxu0
        %v4239 = vadd.f32 %v4150, %v4238
        %4240 = vmatmul.bf16.gmra.mxu0 %v4049
        %v4241 = vpop.f32.mrf.mxu0
        %v4242 = vadd.f32 %v4153, %v4241
        %v4243 = vpop.f32.mrf.mxu0
        %v4244 = vadd.f32 %v4155, %v4243
        %4245 = vmatmul.bf16.gmra.mxu0 %v4051
        %v4246 = vpop.f32.mrf.mxu0
        %v4247 = vadd.f32 %v4158, %v4246
        %v4248 = vpop.f32.mrf.mxu0
        %v4249 = vadd.f32 %v4160, %v4248
        %4250 = vmatmul.bf16.gmra.mxu0 %v4053
        %v4251 = vpop.f32.mrf.mxu0
        %v4252 = vadd.f32 %v4163, %v4251
        %v4253 = vpop.f32.mrf.mxu0
        %v4254 = vadd.f32 %v4165, %v4253
        %4255 = vmatmul.bf16.gmra.mxu0 %v4055
        %v4256 = vpop.f32.mrf.mxu0
        %v4257 = vadd.f32 %v4168, %v4256
        %v4258 = vpop.f32.mrf.mxu0
        %v4259 = vadd.f32 %v4170, %v4258
        %4260 = vmatmul.bf16.gmra.mxu0 %v4057
        %v4261 = vpop.f32.mrf.mxu0
        %v4262 = vadd.f32 %v4173, %v4261
        %v4263 = vpop.f32.mrf.mxu0
        %v4264 = vadd.f32 %v4175, %v4263
        %4265 = vmatmul.bf16.gmra.mxu0 %v4059
        %v4266 = vpop.f32.mrf.mxu0
        %v4267 = vadd.f32 %v4178, %v4266
        %v4268 = vpop.f32.mrf.mxu0
        %v4269 = vadd.f32 %v4180, %v4268
        %4270 = vmatmul.bf16.gmra.mxu0 %v4061
        %v4271 = vpop.f32.mrf.mxu0
        %v4272 = vadd.f32 %v4183, %v4271
        %v4273 = vpop.f32.mrf.mxu0
        %v4274 = vadd.f32 %v4185, %v4273
        %4275 = vmatmul.bf16.gmra.mxu0 %v4063
        %v4276 = vpop.f32.mrf.mxu0
        %v4277 = vadd.f32 %v4188, %v4276
        %v4278 = vpop.f32.mrf.mxu0
        %v4279 = vadd.f32 %v4190, %v4278
        %4280 = vmatmul.bf16.gmra.mxu0 %v4065
        %v4281 = vpop.f32.mrf.mxu0
        %v4282 = vadd.f32 %v4193, %v4281
        %v4283 = vpop.f32.mrf.mxu0
        %v4284 = vadd.f32 %v4195, %v4283
        %4285 = vmatmul.bf16.gmra.mxu0 %v4067
        %v4286 = vpop.f32.mrf.mxu0
        %v4287 = vadd.f32 %v4198, %v4286
        %v4288 = vpop.f32.mrf.mxu0
        %v4289 = vadd.f32 %v4200, %v4288
        %4290 = vmatmul.bf16.gmra.mxu0 %v4069
        %v4291 = vpop.f32.mrf.mxu0
        %v4292 = vadd.f32 %v4203, %v4291
        %v4293 = vpop.f32.mrf.mxu0
        %v4294 = vadd.f32 %v4205, %v4293
        %4295 = vdwg.mxu0
        %v4296 = vpack.c.bf16 %v4217, %v4217
        %v4297 = vpack.c.bf16 %v4219, %v4219
        %v4298 = vpack.c.bf16 %v4222, %v4222
        %v4299 = vpack.c.bf16 %v4224, %v4224
        %v4300 = vpack.c.bf16 %v4227, %v4227
        %v4301 = vpack.c.bf16 %v4229, %v4229
        %v4302 = vpack.c.bf16 %v4232, %v4232
        %v4303 = vpack.c.bf16 %v4234, %v4234
        %v4304 = vpack.c.bf16 %v4237, %v4237
        %v4305 = vpack.c.bf16 %v4239, %v4239
        %v4306 = vpack.c.bf16 %v4242, %v4242
        %v4307 = vpack.c.bf16 %v4244, %v4244
        %v4308 = vpack.c.bf16 %v4247, %v4247
        %v4309 = vpack.c.bf16 %v4249, %v4249
        %v4310 = vpack.c.bf16 %v4252, %v4252
        %v4311 = vpack.c.bf16 %v4254, %v4254
        %v4312 = vpack.c.bf16 %v4257, %v4257
        %v4313 = vpack.c.bf16 %v4259, %v4259
        %v4314 = vpack.c.bf16 %v4262, %v4262
        %v4315 = vpack.c.bf16 %v4264, %v4264
        %v4316 = vpack.c.bf16 %v4267, %v4267
        %v4317 = vpack.c.bf16 %v4269, %v4269
        %v4318 = vpack.c.bf16 %v4272, %v4272
        %v4319 = vpack.c.bf16 %v4274, %v4274
        %v4320 = vpack.c.bf16 %v4277, %v4277
        %v4321 = vpack.c.bf16 %v4279, %v4279
        %v4322 = vpack.c.bf16 %v4282, %v4282
        %v4323 = vpack.c.bf16 %v4284, %v4284
        %v4324 = vpack.c.bf16 %v4287, %v4287
        %v4325 = vpack.c.bf16 %v4289, %v4289
        %v4326 = vpack.c.bf16 %v4292, %v4292
        %v4327 = vpack.c.bf16 %v4294, %v4294
        %4328 = vrot.lane.b32.xlu0 %v923, 32
        %v4329 = vpop.permute.xlu0 %4328
        %4330 = vrot.lane.b32.xlu0 %v924, 32
        %v4331 = vpop.permute.xlu0 %4330
        %4332 = vrot.lane.b32.xlu0 %v925, 32
        %v4333 = vpop.permute.xlu0 %4332
        %4334 = vrot.lane.b32.xlu0 %v926, 32
        %v4335 = vpop.permute.xlu0 %4334
        %4336 = vrot.lane.b32.xlu0 %v927, 32
        %v4337 = vpop.permute.xlu0 %4336
        %4338 = vrot.lane.b32.xlu0 %v928, 32
        %v4339 = vpop.permute.xlu0 %4338
        %4340 = vrot.lane.b32.xlu0 %v929, 32
        %v4341 = vpop.permute.xlu0 %4340
        %4342 = vrot.lane.b32.xlu0 %v930, 32
        %v4343 = vpop.permute.xlu0 %4342
        %4344 = vrot.lane.b32.xlu0 %v931, 32
        %v4345 = vpop.permute.xlu0 %4344
        %4346 = vrot.lane.b32.xlu0 %v932, 32
        %v4347 = vpop.permute.xlu0 %4346
        %4348 = vrot.lane.b32.xlu0 %v933, 32
        %v4349 = vpop.permute.xlu0 %4348
        %4350 = vrot.lane.b32.xlu0 %v934, 32
        %v4351 = vpop.permute.xlu0 %4350
        %4352 = vrot.lane.b32.xlu0 %v935, 32
        %v4353 = vpop.permute.xlu0 %4352
        %4354 = vrot.lane.b32.xlu0 %v936, 32
        %v4355 = vpop.permute.xlu0 %4354
        %4356 = vrot.lane.b32.xlu0 %v937, 32
        %v4357 = vpop.permute.xlu0 %4356
        %4358 = vrot.lane.b32.xlu0 %v938, 32
        %v4359 = vpop.permute.xlu0 %4358
        %4360 = vrot.lane.b32.xlu0 %v1003, 32
        %v4361 = vpop.permute.xlu0 %4360
        %4362 = vrot.lane.b32.xlu0 %v1004, 32
        %v4363 = vpop.permute.xlu0 %4362
        %4364 = vrot.lane.b32.xlu0 %v1005, 32
        %v4365 = vpop.permute.xlu0 %4364
        %4366 = vrot.lane.b32.xlu0 %v1006, 32
        %v4367 = vpop.permute.xlu0 %4366
        %4368 = vrot.lane.b32.xlu0 %v1007, 32
        %v4369 = vpop.permute.xlu0 %4368
        %4370 = vrot.lane.b32.xlu0 %v1008, 32
        %v4371 = vpop.permute.xlu0 %4370
        %4372 = vrot.lane.b32.xlu0 %v1009, 32
        %v4373 = vpop.permute.xlu0 %4372
        %4374 = vrot.lane.b32.xlu0 %v1010, 32
        %v4375 = vpop.permute.xlu0 %4374
        %4376 = vrot.lane.b32.xlu0 %v1011, 32
        %v4377 = vpop.permute.xlu0 %4376
        %4378 = vrot.lane.b32.xlu0 %v1012, 32
        %v4379 = vpop.permute.xlu0 %4378
        %4380 = vrot.lane.b32.xlu0 %v1013, 32
        %v4381 = vpop.permute.xlu0 %4380
        %4382 = vrot.lane.b32.xlu0 %v1014, 32
        %v4383 = vpop.permute.xlu0 %4382
        %4384 = vrot.lane.b32.xlu0 %v1015, 32
        %v4385 = vpop.permute.xlu0 %4384
        %4386 = vrot.lane.b32.xlu0 %v1016, 32
        %v4387 = vpop.permute.xlu0 %4386
        %4388 = vrot.lane.b32.xlu0 %v1017, 32
        %v4389 = vpop.permute.xlu0 %4388
        %4390 = vrot.lane.b32.xlu0 %v1018, 32
        %v4391 = vpop.permute.xlu0 %4390
        %v4393 = vsel %vm1019, %v4329, 0
        %v4396 = vsel %vm1019, %v4331, 0
        %v4399 = vsel %vm1019, %v4333, 0
        %v4402 = vsel %vm1019, %v4335, 0
        %v4405 = vsel %vm1019, %v4337, 0
        %v4408 = vsel %vm1019, %v4339, 0
        %v4411 = vsel %vm1019, %v4341, 0
        %v4414 = vsel %vm1019, %v4343, 0
        %v4417 = vsel %vm1019, %v4345, 0
        %v4420 = vsel %vm1019, %v4347, 0
        %v4423 = vsel %vm1019, %v4349, 0
        %v4426 = vsel %vm1019, %v4351, 0
        %v4429 = vsel %vm1019, %v4353, 0
        %v4432 = vsel %vm1019, %v4355, 0
        %v4435 = vsel %vm1019, %v4357, 0
        %v4438 = vsel %vm1019, %v4359, 0
        %v4441 = vsel %vm1019, %v4361, 0
        %v4444 = vsel %vm1019, %v4363, 0
        %v4447 = vsel %vm1019, %v4365, 0
        %v4450 = vsel %vm1019, %v4367, 0
        %v4453 = vsel %vm1019, %v4369, 0
        %v4456 = vsel %vm1019, %v4371, 0
        %v4459 = vsel %vm1019, %v4373, 0
        %v4462 = vsel %vm1019, %v4375, 0
        %v4465 = vsel %vm1019, %v4377, 0
        %v4468 = vsel %vm1019, %v4379, 0
        %v4471 = vsel %vm1019, %v4381, 0
        %v4474 = vsel %vm1019, %v4383, 0
        %v4477 = vsel %vm1019, %v4385, 0
        %v4480 = vsel %vm1019, %v4387, 0
        %v4483 = vsel %vm1019, %v4389, 0
        %v4486 = vsel %vm1019, %v4391, 0
        %4488 = vmatpush.bf16.xpose.msra.mxu0 %v4462
        %4489 = vmatpush.bf16.xpose.msra.mxu0 %v4459
        %4490 = vmatpush.bf16.xpose.msra.mxu0 %v4456
        %4491 = vmatpush.bf16.xpose.msra.mxu0 %v4453
        %4492 = vmatpush.bf16.xpose.msra.mxu0 %v4450
        %4493 = vmatpush.bf16.xpose.msra.mxu0 %v4447
        %4494 = vmatpush.bf16.xpose.msra.mxu0 %v4444
        %4495 = vmatpush.bf16.xpose.msra.mxu0 %v4441
        %4496 = vmatmul.bf16.gmra.mxu0 %v4393
        %v4497 = vpop.f32.mrf.mxu0
        %v4498 = vadd.f32 0.0, %v4497
        %v4499 = vpop.f32.mrf.mxu0
        %v4500 = vadd.f32 0.0, %v4499
        %4501 = vmatmul.bf16.gmra.mxu0 %v4396
        %v4502 = vpop.f32.mrf.mxu0
        %v4503 = vadd.f32 0.0, %v4502
        %v4504 = vpop.f32.mrf.mxu0
        %v4505 = vadd.f32 0.0, %v4504
        %4506 = vmatmul.bf16.gmra.mxu0 %v4399
        %v4507 = vpop.f32.mrf.mxu0
        %v4508 = vadd.f32 0.0, %v4507
        %v4509 = vpop.f32.mrf.mxu0
        %v4510 = vadd.f32 0.0, %v4509
        %4511 = vmatmul.bf16.gmra.mxu0 %v4402
        %v4512 = vpop.f32.mrf.mxu0
        %v4513 = vadd.f32 0.0, %v4512
        %v4514 = vpop.f32.mrf.mxu0
        %v4515 = vadd.f32 0.0, %v4514
        %4516 = vmatmul.bf16.gmra.mxu0 %v4405
        %v4517 = vpop.f32.mrf.mxu0
        %v4518 = vadd.f32 0.0, %v4517
        %v4519 = vpop.f32.mrf.mxu0
        %v4520 = vadd.f32 0.0, %v4519
        %4521 = vmatmul.bf16.gmra.mxu0 %v4408
        %v4522 = vpop.f32.mrf.mxu0
        %v4523 = vadd.f32 0.0, %v4522
        %v4524 = vpop.f32.mrf.mxu0
        %v4525 = vadd.f32 0.0, %v4524
        %4526 = vmatmul.bf16.gmra.mxu0 %v4411
        %v4527 = vpop.f32.mrf.mxu0
        %v4528 = vadd.f32 0.0, %v4527
        %v4529 = vpop.f32.mrf.mxu0
        %v4530 = vadd.f32 0.0, %v4529
        %4531 = vmatmul.bf16.gmra.mxu0 %v4414
        %v4532 = vpop.f32.mrf.mxu0
        %v4533 = vadd.f32 0.0, %v4532
        %v4534 = vpop.f32.mrf.mxu0
        %v4535 = vadd.f32 0.0, %v4534
        %4536 = vmatmul.bf16.gmra.mxu0 %v4417
        %v4537 = vpop.f32.mrf.mxu0
        %v4538 = vadd.f32 0.0, %v4537
        %v4539 = vpop.f32.mrf.mxu0
        %v4540 = vadd.f32 0.0, %v4539
        %4541 = vmatmul.bf16.gmra.mxu0 %v4420
        %v4542 = vpop.f32.mrf.mxu0
        %v4543 = vadd.f32 0.0, %v4542
        %v4544 = vpop.f32.mrf.mxu0
        %v4545 = vadd.f32 0.0, %v4544
        %4546 = vmatmul.bf16.gmra.mxu0 %v4423
        %v4547 = vpop.f32.mrf.mxu0
        %v4548 = vadd.f32 0.0, %v4547
        %v4549 = vpop.f32.mrf.mxu0
        %v4550 = vadd.f32 0.0, %v4549
        %4551 = vmatmul.bf16.gmra.mxu0 %v4426
        %v4552 = vpop.f32.mrf.mxu0
        %v4553 = vadd.f32 0.0, %v4552
        %v4554 = vpop.f32.mrf.mxu0
        %v4555 = vadd.f32 0.0, %v4554
        %4556 = vmatmul.bf16.gmra.mxu0 %v4429
        %v4557 = vpop.f32.mrf.mxu0
        %v4558 = vadd.f32 0.0, %v4557
        %v4559 = vpop.f32.mrf.mxu0
        %v4560 = vadd.f32 0.0, %v4559
        %4561 = vmatmul.bf16.gmra.mxu0 %v4432
        %v4562 = vpop.f32.mrf.mxu0
        %v4563 = vadd.f32 0.0, %v4562
        %v4564 = vpop.f32.mrf.mxu0
        %v4565 = vadd.f32 0.0, %v4564
        %4566 = vmatmul.bf16.gmra.mxu0 %v4435
        %v4567 = vpop.f32.mrf.mxu0
        %v4568 = vadd.f32 0.0, %v4567
        %v4569 = vpop.f32.mrf.mxu0
        %v4570 = vadd.f32 0.0, %v4569
        %4571 = vmatmul.bf16.gmra.mxu0 %v4438
        %v4572 = vpop.f32.mrf.mxu0
        %v4573 = vadd.f32 0.0, %v4572
        %v4574 = vpop.f32.mrf.mxu0
        %v4575 = vadd.f32 0.0, %v4574
        %4576 = vdwg.mxu0
        %4577 = vmatpush.bf16.xpose.msra.mxu0 %v4486
        %4578 = vmatpush.bf16.xpose.msra.mxu0 %v4483
        %4579 = vmatpush.bf16.xpose.msra.mxu0 %v4480
        %4580 = vmatpush.bf16.xpose.msra.mxu0 %v4477
        %4581 = vmatpush.bf16.xpose.msra.mxu0 %v4474
        %4582 = vmatpush.bf16.xpose.msra.mxu0 %v4471
        %4583 = vmatpush.bf16.xpose.msra.mxu0 %v4468
        %4584 = vmatpush.bf16.xpose.msra.mxu0 %v4465
        %4585 = vmatmul.bf16.gmra.mxu0 %v4393
        %v4586 = vpop.f32.mrf.mxu0
        %v4587 = vadd.f32 0.0, %v4586
        %v4588 = vpop.f32.mrf.mxu0
        %v4589 = vadd.f32 0.0, %v4588
        %4590 = vmatmul.bf16.gmra.mxu0 %v4396
        %v4591 = vpop.f32.mrf.mxu0
        %v4592 = vadd.f32 0.0, %v4591
        %v4593 = vpop.f32.mrf.mxu0
        %v4594 = vadd.f32 0.0, %v4593
        %4595 = vmatmul.bf16.gmra.mxu0 %v4399
        %v4596 = vpop.f32.mrf.mxu0
        %v4597 = vadd.f32 0.0, %v4596
        %v4598 = vpop.f32.mrf.mxu0
        %v4599 = vadd.f32 0.0, %v4598
        %4600 = vmatmul.bf16.gmra.mxu0 %v4402
        %v4601 = vpop.f32.mrf.mxu0
        %v4602 = vadd.f32 0.0, %v4601
        %v4603 = vpop.f32.mrf.mxu0
        %v4604 = vadd.f32 0.0, %v4603
        %4605 = vmatmul.bf16.gmra.mxu0 %v4405
        %v4606 = vpop.f32.mrf.mxu0
        %v4607 = vadd.f32 0.0, %v4606
        %v4608 = vpop.f32.mrf.mxu0
        %v4609 = vadd.f32 0.0, %v4608
        %4610 = vmatmul.bf16.gmra.mxu0 %v4408
        %v4611 = vpop.f32.mrf.mxu0
        %v4612 = vadd.f32 0.0, %v4611
        %v4613 = vpop.f32.mrf.mxu0
        %v4614 = vadd.f32 0.0, %v4613
        %4615 = vmatmul.bf16.gmra.mxu0 %v4411
        %v4616 = vpop.f32.mrf.mxu0
        %v4617 = vadd.f32 0.0, %v4616
        %v4618 = vpop.f32.mrf.mxu0
        %v4619 = vadd.f32 0.0, %v4618
        %4620 = vmatmul.bf16.gmra.mxu0 %v4414
        %v4621 = vpop.f32.mrf.mxu0
        %v4622 = vadd.f32 0.0, %v4621
        %v4623 = vpop.f32.mrf.mxu0
        %v4624 = vadd.f32 0.0, %v4623
        %4625 = vmatmul.bf16.gmra.mxu0 %v4417
        %v4626 = vpop.f32.mrf.mxu0
        %v4627 = vadd.f32 0.0, %v4626
        %v4628 = vpop.f32.mrf.mxu0
        %v4629 = vadd.f32 0.0, %v4628
        %4630 = vmatmul.bf16.gmra.mxu0 %v4420
        %v4631 = vpop.f32.mrf.mxu0
        %v4632 = vadd.f32 0.0, %v4631
        %v4633 = vpop.f32.mrf.mxu0
        %v4634 = vadd.f32 0.0, %v4633
        %4635 = vmatmul.bf16.gmra.mxu0 %v4423
        %v4636 = vpop.f32.mrf.mxu0
        %v4637 = vadd.f32 0.0, %v4636
        %v4638 = vpop.f32.mrf.mxu0
        %v4639 = vadd.f32 0.0, %v4638
        %4640 = vmatmul.bf16.gmra.mxu0 %v4426
        %v4641 = vpop.f32.mrf.mxu0
        %v4642 = vadd.f32 0.0, %v4641
        %v4643 = vpop.f32.mrf.mxu0
        %v4644 = vadd.f32 0.0, %v4643
        %4645 = vmatmul.bf16.gmra.mxu0 %v4429
        %v4646 = vpop.f32.mrf.mxu0
        %v4647 = vadd.f32 0.0, %v4646
        %v4648 = vpop.f32.mrf.mxu0
        %v4649 = vadd.f32 0.0, %v4648
        %4650 = vmatmul.bf16.gmra.mxu0 %v4432
        %v4651 = vpop.f32.mrf.mxu0
        %v4652 = vadd.f32 0.0, %v4651
        %v4653 = vpop.f32.mrf.mxu0
        %v4654 = vadd.f32 0.0, %v4653
        %4655 = vmatmul.bf16.gmra.mxu0 %v4435
        %v4656 = vpop.f32.mrf.mxu0
        %v4657 = vadd.f32 0.0, %v4656
        %v4658 = vpop.f32.mrf.mxu0
        %v4659 = vadd.f32 0.0, %v4658
        %4660 = vmatmul.bf16.gmra.mxu0 %v4438
        %v4661 = vpop.f32.mrf.mxu0
        %v4662 = vadd.f32 0.0, %v4661
        %v4663 = vpop.f32.mrf.mxu0
        %v4664 = vadd.f32 0.0, %v4663
        %4665 = vdwg.mxu0
        %v4666 = vmax.f32 %v4498, %v4587
        %4667 = vmax.xlane.f32.xlu0 %v4666
        %v4668 = vpop.xlane.xlu0 %4667
        %v4669 = vmax.f32 %v4500, %v4589
        %4670 = vmax.xlane.f32.xlu0 %v4669
        %v4671 = vpop.xlane.xlu0 %4670
        %v4672 = vmax.f32 %v4503, %v4592
        %4673 = vmax.xlane.f32.xlu0 %v4672
        %v4674 = vpop.xlane.xlu0 %4673
        %v4675 = vmax.f32 %v4505, %v4594
        %4676 = vmax.xlane.f32.xlu0 %v4675
        %v4677 = vpop.xlane.xlu0 %4676
        %v4678 = vmax.f32 %v4508, %v4597
        %4679 = vmax.xlane.f32.xlu0 %v4678
        %v4680 = vpop.xlane.xlu0 %4679
        %v4681 = vmax.f32 %v4510, %v4599
        %4682 = vmax.xlane.f32.xlu0 %v4681
        %v4683 = vpop.xlane.xlu0 %4682
        %v4684 = vmax.f32 %v4513, %v4602
        %4685 = vmax.xlane.f32.xlu0 %v4684
        %v4686 = vpop.xlane.xlu0 %4685
        %v4687 = vmax.f32 %v4515, %v4604
        %4688 = vmax.xlane.f32.xlu0 %v4687
        %v4689 = vpop.xlane.xlu0 %4688
        %v4690 = vmax.f32 %v4518, %v4607
        %4691 = vmax.xlane.f32.xlu0 %v4690
        %v4692 = vpop.xlane.xlu0 %4691
        %v4693 = vmax.f32 %v4520, %v4609
        %4694 = vmax.xlane.f32.xlu0 %v4693
        %v4695 = vpop.xlane.xlu0 %4694
        %v4696 = vmax.f32 %v4523, %v4612
        %4697 = vmax.xlane.f32.xlu0 %v4696
        %v4698 = vpop.xlane.xlu0 %4697
        %v4699 = vmax.f32 %v4525, %v4614
        %4700 = vmax.xlane.f32.xlu0 %v4699
        %v4701 = vpop.xlane.xlu0 %4700
        %v4702 = vmax.f32 %v4528, %v4617
        %4703 = vmax.xlane.f32.xlu0 %v4702
        %v4704 = vpop.xlane.xlu0 %4703
        %v4705 = vmax.f32 %v4530, %v4619
        %4706 = vmax.xlane.f32.xlu0 %v4705
        %v4707 = vpop.xlane.xlu0 %4706
        %v4708 = vmax.f32 %v4533, %v4622
        %4709 = vmax.xlane.f32.xlu0 %v4708
        %v4710 = vpop.xlane.xlu0 %4709
        %v4711 = vmax.f32 %v4535, %v4624
        %4712 = vmax.xlane.f32.xlu0 %v4711
        %v4713 = vpop.xlane.xlu0 %4712
        %v4714 = vmax.f32 %v4538, %v4627
        %4715 = vmax.xlane.f32.xlu0 %v4714
        %v4716 = vpop.xlane.xlu0 %4715
        %v4717 = vmax.f32 %v4540, %v4629
        %4718 = vmax.xlane.f32.xlu0 %v4717
        %v4719 = vpop.xlane.xlu0 %4718
        %v4720 = vmax.f32 %v4543, %v4632
        %4721 = vmax.xlane.f32.xlu0 %v4720
        %v4722 = vpop.xlane.xlu0 %4721
        %v4723 = vmax.f32 %v4545, %v4634
        %4724 = vmax.xlane.f32.xlu0 %v4723
        %v4725 = vpop.xlane.xlu0 %4724
        %v4726 = vmax.f32 %v4548, %v4637
        %4727 = vmax.xlane.f32.xlu0 %v4726
        %v4728 = vpop.xlane.xlu0 %4727
        %v4729 = vmax.f32 %v4550, %v4639
        %4730 = vmax.xlane.f32.xlu0 %v4729
        %v4731 = vpop.xlane.xlu0 %4730
        %v4732 = vmax.f32 %v4553, %v4642
        %4733 = vmax.xlane.f32.xlu0 %v4732
        %v4734 = vpop.xlane.xlu0 %4733
        %v4735 = vmax.f32 %v4555, %v4644
        %4736 = vmax.xlane.f32.xlu0 %v4735
        %v4737 = vpop.xlane.xlu0 %4736
        %v4738 = vmax.f32 %v4558, %v4647
        %4739 = vmax.xlane.f32.xlu0 %v4738
        %v4740 = vpop.xlane.xlu0 %4739
        %v4741 = vmax.f32 %v4560, %v4649
        %4742 = vmax.xlane.f32.xlu0 %v4741
        %v4743 = vpop.xlane.xlu0 %4742
        %v4744 = vmax.f32 %v4563, %v4652
        %4745 = vmax.xlane.f32.xlu0 %v4744
        %v4746 = vpop.xlane.xlu0 %4745
        %v4747 = vmax.f32 %v4565, %v4654
        %4748 = vmax.xlane.f32.xlu0 %v4747
        %v4749 = vpop.xlane.xlu0 %4748
        %v4750 = vmax.f32 %v4568, %v4657
        %4751 = vmax.xlane.f32.xlu0 %v4750
        %v4752 = vpop.xlane.xlu0 %4751
        %v4753 = vmax.f32 %v4570, %v4659
        %4754 = vmax.xlane.f32.xlu0 %v4753
        %v4755 = vpop.xlane.xlu0 %4754
        %v4756 = vmax.f32 %v4573, %v4662
        %4757 = vmax.xlane.f32.xlu0 %v4756
        %v4758 = vpop.xlane.xlu0 %4757
        %v4759 = vmax.f32 %v4575, %v4664
        %4760 = vmax.xlane.f32.xlu0 %v4759
        %v4761 = vpop.xlane.xlu0 %4760
        %v4762 = vsub.f32 %v4498, %v4668
        %v4763 = vsub.f32 %v4587, %v4668
        %v4764 = vsub.f32 %v4500, %v4671
        %v4765 = vsub.f32 %v4589, %v4671
        %v4766 = vsub.f32 %v4503, %v4674
        %v4767 = vsub.f32 %v4592, %v4674
        %v4768 = vsub.f32 %v4505, %v4677
        %v4769 = vsub.f32 %v4594, %v4677
        %v4770 = vsub.f32 %v4508, %v4680
        %v4771 = vsub.f32 %v4597, %v4680
        %v4772 = vsub.f32 %v4510, %v4683
        %v4773 = vsub.f32 %v4599, %v4683
        %v4774 = vsub.f32 %v4513, %v4686
        %v4775 = vsub.f32 %v4602, %v4686
        %v4776 = vsub.f32 %v4515, %v4689
        %v4777 = vsub.f32 %v4604, %v4689
        %v4778 = vsub.f32 %v4518, %v4692
        %v4779 = vsub.f32 %v4607, %v4692
        %v4780 = vsub.f32 %v4520, %v4695
        %v4781 = vsub.f32 %v4609, %v4695
        %v4782 = vsub.f32 %v4523, %v4698
        %v4783 = vsub.f32 %v4612, %v4698
        %v4784 = vsub.f32 %v4525, %v4701
        %v4785 = vsub.f32 %v4614, %v4701
        %v4786 = vsub.f32 %v4528, %v4704
        %v4787 = vsub.f32 %v4617, %v4704
        %v4788 = vsub.f32 %v4530, %v4707
        %v4789 = vsub.f32 %v4619, %v4707
        %v4790 = vsub.f32 %v4533, %v4710
        %v4791 = vsub.f32 %v4622, %v4710
        %v4792 = vsub.f32 %v4535, %v4713
        %v4793 = vsub.f32 %v4624, %v4713
        %v4794 = vsub.f32 %v4538, %v4716
        %v4795 = vsub.f32 %v4627, %v4716
        %v4796 = vsub.f32 %v4540, %v4719
        %v4797 = vsub.f32 %v4629, %v4719
        %v4798 = vsub.f32 %v4543, %v4722
        %v4799 = vsub.f32 %v4632, %v4722
        %v4800 = vsub.f32 %v4545, %v4725
        %v4801 = vsub.f32 %v4634, %v4725
        %v4802 = vsub.f32 %v4548, %v4728
        %v4803 = vsub.f32 %v4637, %v4728
        %v4804 = vsub.f32 %v4550, %v4731
        %v4805 = vsub.f32 %v4639, %v4731
        %v4806 = vsub.f32 %v4553, %v4734
        %v4807 = vsub.f32 %v4642, %v4734
        %v4808 = vsub.f32 %v4555, %v4737
        %v4809 = vsub.f32 %v4644, %v4737
        %v4810 = vsub.f32 %v4558, %v4740
        %v4811 = vsub.f32 %v4647, %v4740
        %v4812 = vsub.f32 %v4560, %v4743
        %v4813 = vsub.f32 %v4649, %v4743
        %v4814 = vsub.f32 %v4563, %v4746
        %v4815 = vsub.f32 %v4652, %v4746
        %v4816 = vsub.f32 %v4565, %v4749
        %v4817 = vsub.f32 %v4654, %v4749
        %v4818 = vsub.f32 %v4568, %v4752
        %v4819 = vsub.f32 %v4657, %v4752
        %v4820 = vsub.f32 %v4570, %v4755
        %v4821 = vsub.f32 %v4659, %v4755
        %v4822 = vsub.f32 %v4573, %v4758
        %v4823 = vsub.f32 %v4662, %v4758
        %v4824 = vsub.f32 %v4575, %v4761
        %v4825 = vsub.f32 %v4664, %v4761
        %v4826 = vmul.f32 %v4762, 1.442695
        %v4827 = vpow.pop %v4826
        %v4828 = vmul.f32 %v4763, 1.442695
        %v4829 = vpow.pop %v4828
        %v4830 = vmul.f32 %v4764, 1.442695
        %v4831 = vpow.pop %v4830
        %v4832 = vmul.f32 %v4765, 1.442695
        %v4833 = vpow.pop %v4832
        %v4834 = vmul.f32 %v4766, 1.442695
        %v4835 = vpow.pop %v4834
        %v4836 = vmul.f32 %v4767, 1.442695
        %v4837 = vpow.pop %v4836
        %v4838 = vmul.f32 %v4768, 1.442695
        %v4839 = vpow.pop %v4838
        %v4840 = vmul.f32 %v4769, 1.442695
        %v4841 = vpow.pop %v4840
        %v4842 = vmul.f32 %v4770, 1.442695
        %v4843 = vpow.pop %v4842
        %v4844 = vmul.f32 %v4771, 1.442695
        %v4845 = vpow.pop %v4844
        %v4846 = vmul.f32 %v4772, 1.442695
        %v4847 = vpow.pop %v4846
        %v4848 = vmul.f32 %v4773, 1.442695
        %v4849 = vpow.pop %v4848
        %v4850 = vmul.f32 %v4774, 1.442695
        %v4851 = vpow.pop %v4850
        %v4852 = vmul.f32 %v4775, 1.442695
        %v4853 = vpow.pop %v4852
        %v4854 = vmul.f32 %v4776, 1.442695
        %v4855 = vpow.pop %v4854
        %v4856 = vmul.f32 %v4777, 1.442695
        %v4857 = vpow.pop %v4856
        %v4858 = vmul.f32 %v4778, 1.442695
        %v4859 = vpow.pop %v4858
        %v4860 = vmul.f32 %v4779, 1.442695
        %v4861 = vpow.pop %v4860
        %v4862 = vmul.f32 %v4780, 1.442695
        %v4863 = vpow.pop %v4862
        %v4864 = vmul.f32 %v4781, 1.442695
        %v4865 = vpow.pop %v4864
        %v4866 = vmul.f32 %v4782, 1.442695
        %v4867 = vpow.pop %v4866
        %v4868 = vmul.f32 %v4783, 1.442695
        %v4869 = vpow.pop %v4868
        %v4870 = vmul.f32 %v4784, 1.442695
        %v4871 = vpow.pop %v4870
        %v4872 = vmul.f32 %v4785, 1.442695
        %v4873 = vpow.pop %v4872
        %v4874 = vmul.f32 %v4786, 1.442695
        %v4875 = vpow.pop %v4874
        %v4876 = vmul.f32 %v4787, 1.442695
        %v4877 = vpow.pop %v4876
        %v4878 = vmul.f32 %v4788, 1.442695
        %v4879 = vpow.pop %v4878
        %v4880 = vmul.f32 %v4789, 1.442695
        %v4881 = vpow.pop %v4880
        %v4882 = vmul.f32 %v4790, 1.442695
        %v4883 = vpow.pop %v4882
        %v4884 = vmul.f32 %v4791, 1.442695
        %v4885 = vpow.pop %v4884
        %v4886 = vmul.f32 %v4792, 1.442695
        %v4887 = vpow.pop %v4886
        %v4888 = vmul.f32 %v4793, 1.442695
        %v4889 = vpow.pop %v4888
        %v4890 = vmul.f32 %v4794, 1.442695
        %v4891 = vpow.pop %v4890
        %v4892 = vmul.f32 %v4795, 1.442695
        %v4893 = vpow.pop %v4892
        %v4894 = vmul.f32 %v4796, 1.442695
        %v4895 = vpow.pop %v4894
        %v4896 = vmul.f32 %v4797, 1.442695
        %v4897 = vpow.pop %v4896
        %v4898 = vmul.f32 %v4798, 1.442695
        %v4899 = vpow.pop %v4898
        %v4900 = vmul.f32 %v4799, 1.442695
        %v4901 = vpow.pop %v4900
        %v4902 = vmul.f32 %v4800, 1.442695
        %v4903 = vpow.pop %v4902
        %v4904 = vmul.f32 %v4801, 1.442695
        %v4905 = vpow.pop %v4904
        %v4906 = vmul.f32 %v4802, 1.442695
        %v4907 = vpow.pop %v4906
        %v4908 = vmul.f32 %v4803, 1.442695
        %v4909 = vpow.pop %v4908
        %v4910 = vmul.f32 %v4804, 1.442695
        %v4911 = vpow.pop %v4910
        %v4912 = vmul.f32 %v4805, 1.442695
        %v4913 = vpow.pop %v4912
        %v4914 = vmul.f32 %v4806, 1.442695
        %v4915 = vpow.pop %v4914
        %v4916 = vmul.f32 %v4807, 1.442695
        %v4917 = vpow.pop %v4916
        %v4918 = vmul.f32 %v4808, 1.442695
        %v4919 = vpow.pop %v4918
        %v4920 = vmul.f32 %v4809, 1.442695
        %v4921 = vpow.pop %v4920
        %v4922 = vmul.f32 %v4810, 1.442695
        %v4923 = vpow.pop %v4922
        %v4924 = vmul.f32 %v4811, 1.442695
        %v4925 = vpow.pop %v4924
        %v4926 = vmul.f32 %v4812, 1.442695
        %v4927 = vpow.pop %v4926
        %v4928 = vmul.f32 %v4813, 1.442695
        %v4929 = vpow.pop %v4928
        %v4930 = vmul.f32 %v4814, 1.442695
        %v4931 = vpow.pop %v4930
        %v4932 = vmul.f32 %v4815, 1.442695
        %v4933 = vpow.pop %v4932
        %v4934 = vmul.f32 %v4816, 1.442695
        %v4935 = vpow.pop %v4934
        %v4936 = vmul.f32 %v4817, 1.442695
        %v4937 = vpow.pop %v4936
        %v4938 = vmul.f32 %v4818, 1.442695
        %v4939 = vpow.pop %v4938
        %v4940 = vmul.f32 %v4819, 1.442695
        %v4941 = vpow.pop %v4940
        %v4942 = vmul.f32 %v4820, 1.442695
        %v4943 = vpow.pop %v4942
        %v4944 = vmul.f32 %v4821, 1.442695
        %v4945 = vpow.pop %v4944
        %v4946 = vmul.f32 %v4822, 1.442695
        %v4947 = vpow.pop %v4946
        %v4948 = vmul.f32 %v4823, 1.442695
        %v4949 = vpow.pop %v4948
        %v4950 = vmul.f32 %v4824, 1.442695
        %v4951 = vpow.pop %v4950
        %v4952 = vmul.f32 %v4825, 1.442695
        %v4953 = vpow.pop %v4952
        %v4954 = vadd.f32 %v4827, %v4829
        %4955 = vadd.xlane.f32.xlu0 %v4954
        %v4956 = vpop.xlane.xlu0 %4955
        %v4957 = vadd.f32 %v4831, %v4833
        %4958 = vadd.xlane.f32.xlu0 %v4957
        %v4959 = vpop.xlane.xlu0 %4958
        %v4960 = vadd.f32 %v4835, %v4837
        %4961 = vadd.xlane.f32.xlu0 %v4960
        %v4962 = vpop.xlane.xlu0 %4961
        %v4963 = vadd.f32 %v4839, %v4841
        %4964 = vadd.xlane.f32.xlu0 %v4963
        %v4965 = vpop.xlane.xlu0 %4964
        %v4966 = vadd.f32 %v4843, %v4845
        %4967 = vadd.xlane.f32.xlu0 %v4966
        %v4968 = vpop.xlane.xlu0 %4967
        %v4969 = vadd.f32 %v4847, %v4849
        %4970 = vadd.xlane.f32.xlu0 %v4969
        %v4971 = vpop.xlane.xlu0 %4970
        %v4972 = vadd.f32 %v4851, %v4853
        %4973 = vadd.xlane.f32.xlu0 %v4972
        %v4974 = vpop.xlane.xlu0 %4973
        %v4975 = vadd.f32 %v4855, %v4857
        %4976 = vadd.xlane.f32.xlu0 %v4975
        %v4977 = vpop.xlane.xlu0 %4976
        %v4978 = vadd.f32 %v4859, %v4861
        %4979 = vadd.xlane.f32.xlu0 %v4978
        %v4980 = vpop.xlane.xlu0 %4979
        %v4981 = vadd.f32 %v4863, %v4865
        %4982 = vadd.xlane.f32.xlu0 %v4981
        %v4983 = vpop.xlane.xlu0 %4982
        %v4984 = vadd.f32 %v4867, %v4869
        %4985 = vadd.xlane.f32.xlu0 %v4984
        %v4986 = vpop.xlane.xlu0 %4985
        %v4987 = vadd.f32 %v4871, %v4873
        %4988 = vadd.xlane.f32.xlu0 %v4987
        %v4989 = vpop.xlane.xlu0 %4988
        %v4990 = vadd.f32 %v4875, %v4877
        %4991 = vadd.xlane.f32.xlu0 %v4990
        %v4992 = vpop.xlane.xlu0 %4991
        %v4993 = vadd.f32 %v4879, %v4881
        %4994 = vadd.xlane.f32.xlu0 %v4993
        %v4995 = vpop.xlane.xlu0 %4994
        %v4996 = vadd.f32 %v4883, %v4885
        %4997 = vadd.xlane.f32.xlu0 %v4996
        %v4998 = vpop.xlane.xlu0 %4997
        %v4999 = vadd.f32 %v4887, %v4889
        %5000 = vadd.xlane.f32.xlu0 %v4999
        %v5001 = vpop.xlane.xlu0 %5000
        %v5002 = vadd.f32 %v4891, %v4893
        %5003 = vadd.xlane.f32.xlu0 %v5002
        %v5004 = vpop.xlane.xlu0 %5003
        %v5005 = vadd.f32 %v4895, %v4897
        %5006 = vadd.xlane.f32.xlu0 %v5005
        %v5007 = vpop.xlane.xlu0 %5006
        %v5008 = vadd.f32 %v4899, %v4901
        %5009 = vadd.xlane.f32.xlu0 %v5008
        %v5010 = vpop.xlane.xlu0 %5009
        %v5011 = vadd.f32 %v4903, %v4905
        %5012 = vadd.xlane.f32.xlu0 %v5011
        %v5013 = vpop.xlane.xlu0 %5012
        %v5014 = vadd.f32 %v4907, %v4909
        %5015 = vadd.xlane.f32.xlu0 %v5014
        %v5016 = vpop.xlane.xlu0 %5015
        %v5017 = vadd.f32 %v4911, %v4913
        %5018 = vadd.xlane.f32.xlu0 %v5017
        %v5019 = vpop.xlane.xlu0 %5018
        %v5020 = vadd.f32 %v4915, %v4917
        %5021 = vadd.xlane.f32.xlu0 %v5020
        %v5022 = vpop.xlane.xlu0 %5021
        %v5023 = vadd.f32 %v4919, %v4921
        %5024 = vadd.xlane.f32.xlu0 %v5023
        %v5025 = vpop.xlane.xlu0 %5024
        %v5026 = vadd.f32 %v4923, %v4925
        %5027 = vadd.xlane.f32.xlu0 %v5026
        %v5028 = vpop.xlane.xlu0 %5027
        %v5029 = vadd.f32 %v4927, %v4929
        %5030 = vadd.xlane.f32.xlu0 %v5029
        %v5031 = vpop.xlane.xlu0 %5030
        %v5032 = vadd.f32 %v4931, %v4933
        %5033 = vadd.xlane.f32.xlu0 %v5032
        %v5034 = vpop.xlane.xlu0 %5033
        %v5035 = vadd.f32 %v4935, %v4937
        %5036 = vadd.xlane.f32.xlu0 %v5035
        %v5037 = vpop.xlane.xlu0 %5036
        %v5038 = vadd.f32 %v4939, %v4941
        %5039 = vadd.xlane.f32.xlu0 %v5038
        %v5040 = vpop.xlane.xlu0 %5039
        %v5041 = vadd.f32 %v4943, %v4945
        %5042 = vadd.xlane.f32.xlu0 %v5041
        %v5043 = vpop.xlane.xlu0 %5042
        %v5044 = vadd.f32 %v4947, %v4949
        %5045 = vadd.xlane.f32.xlu0 %v5044
        %v5046 = vpop.xlane.xlu0 %5045
        %v5047 = vadd.f32 %v4951, %v4953
        %5048 = vadd.xlane.f32.xlu0 %v5047
        %v5049 = vpop.xlane.xlu0 %5048
        %v5050 = vrcp.pop %v4956
        %v5051 = vrcp.pop %v4959
        %v5052 = vrcp.pop %v4962
        %v5053 = vrcp.pop %v4965
        %v5054 = vrcp.pop %v4968
        %v5055 = vrcp.pop %v4971
        %v5056 = vrcp.pop %v4974
        %v5057 = vrcp.pop %v4977
        %v5058 = vrcp.pop %v4980
        %v5059 = vrcp.pop %v4983
        %v5060 = vrcp.pop %v4986
        %v5061 = vrcp.pop %v4989
        %v5062 = vrcp.pop %v4992
        %v5063 = vrcp.pop %v4995
        %v5064 = vrcp.pop %v4998
        %v5065 = vrcp.pop %v5001
        %v5066 = vrcp.pop %v5004
        %v5067 = vrcp.pop %v5007
        %v5068 = vrcp.pop %v5010
        %v5069 = vrcp.pop %v5013
        %v5070 = vrcp.pop %v5016
        %v5071 = vrcp.pop %v5019
        %v5072 = vrcp.pop %v5022
        %v5073 = vrcp.pop %v5025
        %v5074 = vrcp.pop %v5028
        %v5075 = vrcp.pop %v5031
        %v5076 = vrcp.pop %v5034
        %v5077 = vrcp.pop %v5037
        %v5078 = vrcp.pop %v5040
        %v5079 = vrcp.pop %v5043
        %v5080 = vrcp.pop %v5046
        %v5081 = vrcp.pop %v5049
        %v5082 = vmul.f32 %v4827, %v5050
        %v5083 = vmul.f32 %v4829, %v5050
        %v5084 = vmul.f32 %v4831, %v5051
        %v5085 = vmul.f32 %v4833, %v5051
        %v5086 = vmul.f32 %v4835, %v5052
        %v5087 = vmul.f32 %v4837, %v5052
        %v5088 = vmul.f32 %v4839, %v5053
        %v5089 = vmul.f32 %v4841, %v5053
        %v5090 = vmul.f32 %v4843, %v5054
        %v5091 = vmul.f32 %v4845, %v5054
        %v5092 = vmul.f32 %v4847, %v5055
        %v5093 = vmul.f32 %v4849, %v5055
        %v5094 = vmul.f32 %v4851, %v5056
        %v5095 = vmul.f32 %v4853, %v5056
        %v5096 = vmul.f32 %v4855, %v5057
        %v5097 = vmul.f32 %v4857, %v5057
        %v5098 = vmul.f32 %v4859, %v5058
        %v5099 = vmul.f32 %v4861, %v5058
        %v5100 = vmul.f32 %v4863, %v5059
        %v5101 = vmul.f32 %v4865, %v5059
        %v5102 = vmul.f32 %v4867, %v5060
        %v5103 = vmul.f32 %v4869, %v5060
        %v5104 = vmul.f32 %v4871, %v5061
        %v5105 = vmul.f32 %v4873, %v5061
        %v5106 = vmul.f32 %v4875, %v5062
        %v5107 = vmul.f32 %v4877, %v5062
        %v5108 = vmul.f32 %v4879, %v5063
        %v5109 = vmul.f32 %v4881, %v5063
        %v5110 = vmul.f32 %v4883, %v5064
        %v5111 = vmul.f32 %v4885, %v5064
        %v5112 = vmul.f32 %v4887, %v5065
        %v5113 = vmul.f32 %v4889, %v5065
        %v5114 = vmul.f32 %v4891, %v5066
        %v5115 = vmul.f32 %v4893, %v5066
        %v5116 = vmul.f32 %v4895, %v5067
        %v5117 = vmul.f32 %v4897, %v5067
        %v5118 = vmul.f32 %v4899, %v5068
        %v5119 = vmul.f32 %v4901, %v5068
        %v5120 = vmul.f32 %v4903, %v5069
        %v5121 = vmul.f32 %v4905, %v5069
        %v5122 = vmul.f32 %v4907, %v5070
        %v5123 = vmul.f32 %v4909, %v5070
        %v5124 = vmul.f32 %v4911, %v5071
        %v5125 = vmul.f32 %v4913, %v5071
        %v5126 = vmul.f32 %v4915, %v5072
        %v5127 = vmul.f32 %v4917, %v5072
        %v5128 = vmul.f32 %v4919, %v5073
        %v5129 = vmul.f32 %v4921, %v5073
        %v5130 = vmul.f32 %v4923, %v5074
        %v5131 = vmul.f32 %v4925, %v5074
        %v5132 = vmul.f32 %v4927, %v5075
        %v5133 = vmul.f32 %v4929, %v5075
        %v5134 = vmul.f32 %v4931, %v5076
        %v5135 = vmul.f32 %v4933, %v5076
        %v5136 = vmul.f32 %v4935, %v5077
        %v5137 = vmul.f32 %v4937, %v5077
        %v5138 = vmul.f32 %v4939, %v5078
        %v5139 = vmul.f32 %v4941, %v5078
        %v5140 = vmul.f32 %v4943, %v5079
        %v5141 = vmul.f32 %v4945, %v5079
        %v5142 = vmul.f32 %v4947, %v5080
        %v5143 = vmul.f32 %v4949, %v5080
        %v5144 = vmul.f32 %v4951, %v5081
        %v5145 = vmul.f32 %v4953, %v5081
        %v5146 = vpack.c.bf16 %v5084, %v5082
        %v5147 = vpack.c.bf16 %v5085, %v5083
        %v5148 = vpack.c.bf16 %v5088, %v5086
        %v5149 = vpack.c.bf16 %v5089, %v5087
        %v5150 = vpack.c.bf16 %v5092, %v5090
        %v5151 = vpack.c.bf16 %v5093, %v5091
        %v5152 = vpack.c.bf16 %v5096, %v5094
        %v5153 = vpack.c.bf16 %v5097, %v5095
        %v5154 = vpack.c.bf16 %v5100, %v5098
        %v5155 = vpack.c.bf16 %v5101, %v5099
        %v5156 = vpack.c.bf16 %v5104, %v5102
        %v5157 = vpack.c.bf16 %v5105, %v5103
        %v5158 = vpack.c.bf16 %v5108, %v5106
        %v5159 = vpack.c.bf16 %v5109, %v5107
        %v5160 = vpack.c.bf16 %v5112, %v5110
        %v5161 = vpack.c.bf16 %v5113, %v5111
        %v5162 = vpack.c.bf16 %v5116, %v5114
        %v5163 = vpack.c.bf16 %v5117, %v5115
        %v5164 = vpack.c.bf16 %v5120, %v5118
        %v5165 = vpack.c.bf16 %v5121, %v5119
        %v5166 = vpack.c.bf16 %v5124, %v5122
        %v5167 = vpack.c.bf16 %v5125, %v5123
        %v5168 = vpack.c.bf16 %v5128, %v5126
        %v5169 = vpack.c.bf16 %v5129, %v5127
        %v5170 = vpack.c.bf16 %v5132, %v5130
        %v5171 = vpack.c.bf16 %v5133, %v5131
        %v5172 = vpack.c.bf16 %v5136, %v5134
        %v5173 = vpack.c.bf16 %v5137, %v5135
        %v5174 = vpack.c.bf16 %v5140, %v5138
        %v5175 = vpack.c.bf16 %v5141, %v5139
        %v5176 = vpack.c.bf16 %v5144, %v5142
        %v5177 = vpack.c.bf16 %v5145, %v5143
        %5178 = vrot.lane.b32.xlu0 %v1870, 32
        %v5179 = vpop.permute.xlu0 %5178
        %5180 = vrot.lane.b32.xlu0 %v1871, 32
        %v5181 = vpop.permute.xlu0 %5180
        %5182 = vrot.lane.b32.xlu0 %v1872, 32
        %v5183 = vpop.permute.xlu0 %5182
        %5184 = vrot.lane.b32.xlu0 %v1873, 32
        %v5185 = vpop.permute.xlu0 %5184
        %5186 = vrot.lane.b32.xlu0 %v1874, 32
        %v5187 = vpop.permute.xlu0 %5186
        %5188 = vrot.lane.b32.xlu0 %v1875, 32
        %v5189 = vpop.permute.xlu0 %5188
        %5190 = vrot.lane.b32.xlu0 %v1876, 32
        %v5191 = vpop.permute.xlu0 %5190
        %5192 = vrot.lane.b32.xlu0 %v1877, 32
        %v5193 = vpop.permute.xlu0 %5192
        %5194 = vrot.lane.b32.xlu0 %v1878, 32
        %v5195 = vpop.permute.xlu0 %5194
        %5196 = vrot.lane.b32.xlu0 %v1879, 32
        %v5197 = vpop.permute.xlu0 %5196
        %5198 = vrot.lane.b32.xlu0 %v1880, 32
        %v5199 = vpop.permute.xlu0 %5198
        %5200 = vrot.lane.b32.xlu0 %v1881, 32
        %v5201 = vpop.permute.xlu0 %5200
        %5202 = vrot.lane.b32.xlu0 %v1882, 32
        %v5203 = vpop.permute.xlu0 %5202
        %5204 = vrot.lane.b32.xlu0 %v1883, 32
        %v5205 = vpop.permute.xlu0 %5204
        %5206 = vrot.lane.b32.xlu0 %v1884, 32
        %v5207 = vpop.permute.xlu0 %5206
        %5208 = vrot.lane.b32.xlu0 %v1885, 32
        %v5209 = vpop.permute.xlu0 %5208
        %5226 = vmatpush.bf16.msra.mxu0 %v5193
        %5227 = vmatpush.bf16.msra.mxu0 %v5191
        %5228 = vmatpush.bf16.msra.mxu0 %v5189
        %5229 = vmatpush.bf16.msra.mxu0 %v5187
        %5230 = vmatpush.bf16.msra.mxu0 %v5185
        %5231 = vmatpush.bf16.msra.mxu0 %v5183
        %5232 = vmatpush.bf16.msra.mxu0 %v5181
        %5233 = vmatpush.bf16.msra.mxu0 %v5179
        %5234 = vmatmul.bf16.gmra.mxu0 %v5146
        %v5235 = vpop.f32.mrf.mxu0
        %v5236 = vadd.f32 0.0, %v5235
        %v5237 = vpop.f32.mrf.mxu0
        %v5238 = vadd.f32 0.0, %v5237
        %5239 = vmatmul.bf16.gmra.mxu0 %v5148
        %v5240 = vpop.f32.mrf.mxu0
        %v5241 = vadd.f32 0.0, %v5240
        %v5242 = vpop.f32.mrf.mxu0
        %v5243 = vadd.f32 0.0, %v5242
        %5244 = vmatmul.bf16.gmra.mxu0 %v5150
        %v5245 = vpop.f32.mrf.mxu0
        %v5246 = vadd.f32 0.0, %v5245
        %v5247 = vpop.f32.mrf.mxu0
        %v5248 = vadd.f32 0.0, %v5247
        %5249 = vmatmul.bf16.gmra.mxu0 %v5152
        %v5250 = vpop.f32.mrf.mxu0
        %v5251 = vadd.f32 0.0, %v5250
        %v5252 = vpop.f32.mrf.mxu0
        %v5253 = vadd.f32 0.0, %v5252
        %5254 = vmatmul.bf16.gmra.mxu0 %v5154
        %v5255 = vpop.f32.mrf.mxu0
        %v5256 = vadd.f32 0.0, %v5255
        %v5257 = vpop.f32.mrf.mxu0
        %v5258 = vadd.f32 0.0, %v5257
        %5259 = vmatmul.bf16.gmra.mxu0 %v5156
        %v5260 = vpop.f32.mrf.mxu0
        %v5261 = vadd.f32 0.0, %v5260
        %v5262 = vpop.f32.mrf.mxu0
        %v5263 = vadd.f32 0.0, %v5262
        %5264 = vmatmul.bf16.gmra.mxu0 %v5158
        %v5265 = vpop.f32.mrf.mxu0
        %v5266 = vadd.f32 0.0, %v5265
        %v5267 = vpop.f32.mrf.mxu0
        %v5268 = vadd.f32 0.0, %v5267
        %5269 = vmatmul.bf16.gmra.mxu0 %v5160
        %v5270 = vpop.f32.mrf.mxu0
        %v5271 = vadd.f32 0.0, %v5270
        %v5272 = vpop.f32.mrf.mxu0
        %v5273 = vadd.f32 0.0, %v5272
        %5274 = vmatmul.bf16.gmra.mxu0 %v5162
        %v5275 = vpop.f32.mrf.mxu0
        %v5276 = vadd.f32 0.0, %v5275
        %v5277 = vpop.f32.mrf.mxu0
        %v5278 = vadd.f32 0.0, %v5277
        %5279 = vmatmul.bf16.gmra.mxu0 %v5164
        %v5280 = vpop.f32.mrf.mxu0
        %v5281 = vadd.f32 0.0, %v5280
        %v5282 = vpop.f32.mrf.mxu0
        %v5283 = vadd.f32 0.0, %v5282
        %5284 = vmatmul.bf16.gmra.mxu0 %v5166
        %v5285 = vpop.f32.mrf.mxu0
        %v5286 = vadd.f32 0.0, %v5285
        %v5287 = vpop.f32.mrf.mxu0
        %v5288 = vadd.f32 0.0, %v5287
        %5289 = vmatmul.bf16.gmra.mxu0 %v5168
        %v5290 = vpop.f32.mrf.mxu0
        %v5291 = vadd.f32 0.0, %v5290
        %v5292 = vpop.f32.mrf.mxu0
        %v5293 = vadd.f32 0.0, %v5292
        %5294 = vmatmul.bf16.gmra.mxu0 %v5170
        %v5295 = vpop.f32.mrf.mxu0
        %v5296 = vadd.f32 0.0, %v5295
        %v5297 = vpop.f32.mrf.mxu0
        %v5298 = vadd.f32 0.0, %v5297
        %5299 = vmatmul.bf16.gmra.mxu0 %v5172
        %v5300 = vpop.f32.mrf.mxu0
        %v5301 = vadd.f32 0.0, %v5300
        %v5302 = vpop.f32.mrf.mxu0
        %v5303 = vadd.f32 0.0, %v5302
        %5304 = vmatmul.bf16.gmra.mxu0 %v5174
        %v5305 = vpop.f32.mrf.mxu0
        %v5306 = vadd.f32 0.0, %v5305
        %v5307 = vpop.f32.mrf.mxu0
        %v5308 = vadd.f32 0.0, %v5307
        %5309 = vmatmul.bf16.gmra.mxu0 %v5176
        %v5310 = vpop.f32.mrf.mxu0
        %v5311 = vadd.f32 0.0, %v5310
        %v5312 = vpop.f32.mrf.mxu0
        %v5313 = vadd.f32 0.0, %v5312
        %5314 = vdwg.mxu0
        %5315 = vmatpush.bf16.msra.mxu0 %v5209
        %5316 = vmatpush.bf16.msra.mxu0 %v5207
        %5317 = vmatpush.bf16.msra.mxu0 %v5205
        %5318 = vmatpush.bf16.msra.mxu0 %v5203
        %5319 = vmatpush.bf16.msra.mxu0 %v5201
        %5320 = vmatpush.bf16.msra.mxu0 %v5199
        %5321 = vmatpush.bf16.msra.mxu0 %v5197
        %5322 = vmatpush.bf16.msra.mxu0 %v5195
        %5323 = vmatmul.bf16.gmra.mxu0 %v5147
        %v5324 = vpop.f32.mrf.mxu0
        %v5325 = vadd.f32 %v5236, %v5324
        %v5326 = vpop.f32.mrf.mxu0
        %v5327 = vadd.f32 %v5238, %v5326
        %5328 = vmatmul.bf16.gmra.mxu0 %v5149
        %v5329 = vpop.f32.mrf.mxu0
        %v5330 = vadd.f32 %v5241, %v5329
        %v5331 = vpop.f32.mrf.mxu0
        %v5332 = vadd.f32 %v5243, %v5331
        %5333 = vmatmul.bf16.gmra.mxu0 %v5151
        %v5334 = vpop.f32.mrf.mxu0
        %v5335 = vadd.f32 %v5246, %v5334
        %v5336 = vpop.f32.mrf.mxu0
        %v5337 = vadd.f32 %v5248, %v5336
        %5338 = vmatmul.bf16.gmra.mxu0 %v5153
        %v5339 = vpop.f32.mrf.mxu0
        %v5340 = vadd.f32 %v5251, %v5339
        %v5341 = vpop.f32.mrf.mxu0
        %v5342 = vadd.f32 %v5253, %v5341
        %5343 = vmatmul.bf16.gmra.mxu0 %v5155
        %v5344 = vpop.f32.mrf.mxu0
        %v5345 = vadd.f32 %v5256, %v5344
        %v5346 = vpop.f32.mrf.mxu0
        %v5347 = vadd.f32 %v5258, %v5346
        %5348 = vmatmul.bf16.gmra.mxu0 %v5157
        %v5349 = vpop.f32.mrf.mxu0
        %v5350 = vadd.f32 %v5261, %v5349
        %v5351 = vpop.f32.mrf.mxu0
        %v5352 = vadd.f32 %v5263, %v5351
        %5353 = vmatmul.bf16.gmra.mxu0 %v5159
        %v5354 = vpop.f32.mrf.mxu0
        %v5355 = vadd.f32 %v5266, %v5354
        %v5356 = vpop.f32.mrf.mxu0
        %v5357 = vadd.f32 %v5268, %v5356
        %5358 = vmatmul.bf16.gmra.mxu0 %v5161
        %v5359 = vpop.f32.mrf.mxu0
        %v5360 = vadd.f32 %v5271, %v5359
        %v5361 = vpop.f32.mrf.mxu0
        %v5362 = vadd.f32 %v5273, %v5361
        %5363 = vmatmul.bf16.gmra.mxu0 %v5163
        %v5364 = vpop.f32.mrf.mxu0
        %v5365 = vadd.f32 %v5276, %v5364
        %v5366 = vpop.f32.mrf.mxu0
        %v5367 = vadd.f32 %v5278, %v5366
        %5368 = vmatmul.bf16.gmra.mxu0 %v5165
        %v5369 = vpop.f32.mrf.mxu0
        %v5370 = vadd.f32 %v5281, %v5369
        %v5371 = vpop.f32.mrf.mxu0
        %v5372 = vadd.f32 %v5283, %v5371
        %5373 = vmatmul.bf16.gmra.mxu0 %v5167
        %v5374 = vpop.f32.mrf.mxu0
        %v5375 = vadd.f32 %v5286, %v5374
        %v5376 = vpop.f32.mrf.mxu0
        %v5377 = vadd.f32 %v5288, %v5376
        %5378 = vmatmul.bf16.gmra.mxu0 %v5169
        %v5379 = vpop.f32.mrf.mxu0
        %v5380 = vadd.f32 %v5291, %v5379
        %v5381 = vpop.f32.mrf.mxu0
        %v5382 = vadd.f32 %v5293, %v5381
        %5383 = vmatmul.bf16.gmra.mxu0 %v5171
        %v5384 = vpop.f32.mrf.mxu0
        %v5385 = vadd.f32 %v5296, %v5384
        %v5386 = vpop.f32.mrf.mxu0
        %v5387 = vadd.f32 %v5298, %v5386
        %5388 = vmatmul.bf16.gmra.mxu0 %v5173
        %v5389 = vpop.f32.mrf.mxu0
        %v5390 = vadd.f32 %v5301, %v5389
        %v5391 = vpop.f32.mrf.mxu0
        %v5392 = vadd.f32 %v5303, %v5391
        %5393 = vmatmul.bf16.gmra.mxu0 %v5175
        %v5394 = vpop.f32.mrf.mxu0
        %v5395 = vadd.f32 %v5306, %v5394
        %v5396 = vpop.f32.mrf.mxu0
        %v5397 = vadd.f32 %v5308, %v5396
        %5398 = vmatmul.bf16.gmra.mxu0 %v5177
        %v5399 = vpop.f32.mrf.mxu0
        %v5400 = vadd.f32 %v5311, %v5399
        %v5401 = vpop.f32.mrf.mxu0
        %v5402 = vadd.f32 %v5313, %v5401
        %5403 = vdwg.mxu0
        %v5404 = vpack.c.bf16 %v5325, %v5325
        %v5405 = vpack.c.bf16 %v5327, %v5327
        %v5406 = vpack.c.bf16 %v5330, %v5330
        %v5407 = vpack.c.bf16 %v5332, %v5332
        %v5408 = vpack.c.bf16 %v5335, %v5335
        %v5409 = vpack.c.bf16 %v5337, %v5337
        %v5410 = vpack.c.bf16 %v5340, %v5340
        %v5411 = vpack.c.bf16 %v5342, %v5342
        %v5412 = vpack.c.bf16 %v5345, %v5345
        %v5413 = vpack.c.bf16 %v5347, %v5347
        %v5414 = vpack.c.bf16 %v5350, %v5350
        %v5415 = vpack.c.bf16 %v5352, %v5352
        %v5416 = vpack.c.bf16 %v5355, %v5355
        %v5417 = vpack.c.bf16 %v5357, %v5357
        %v5418 = vpack.c.bf16 %v5360, %v5360
        %v5419 = vpack.c.bf16 %v5362, %v5362
        %v5420 = vpack.c.bf16 %v5365, %v5365
        %v5421 = vpack.c.bf16 %v5367, %v5367
        %v5422 = vpack.c.bf16 %v5370, %v5370
        %v5423 = vpack.c.bf16 %v5372, %v5372
        %v5424 = vpack.c.bf16 %v5375, %v5375
        %v5425 = vpack.c.bf16 %v5377, %v5377
        %v5426 = vpack.c.bf16 %v5380, %v5380
        %v5427 = vpack.c.bf16 %v5382, %v5382
        %v5428 = vpack.c.bf16 %v5385, %v5385
        %v5429 = vpack.c.bf16 %v5387, %v5387
        %v5430 = vpack.c.bf16 %v5390, %v5390
        %v5431 = vpack.c.bf16 %v5392, %v5392
        %v5432 = vpack.c.bf16 %v5395, %v5395
        %v5433 = vpack.c.bf16 %v5397, %v5397
        %v5434 = vpack.c.bf16 %v5400, %v5400
        %v5435 = vpack.c.bf16 %v5402, %v5402
        %v5468 = vunpack.c.l.b16 %v2080
        %v5469 = vunpack.c.l.b16 %v2081
        %v5470 = vunpack.c.l.b16 %v2082
        %v5471 = vunpack.c.l.b16 %v2083
        %v5472 = vunpack.c.l.b16 %v2084
        %v5473 = vunpack.c.l.b16 %v2085
        %v5474 = vunpack.c.l.b16 %v2086
        %v5475 = vunpack.c.l.b16 %v2087
        %v5476 = vunpack.c.l.b16 %v2088
        %v5477 = vunpack.c.l.b16 %v2089
        %v5478 = vunpack.c.l.b16 %v2090
        %v5479 = vunpack.c.l.b16 %v2091
        %v5480 = vunpack.c.l.b16 %v2092
        %v5481 = vunpack.c.l.b16 %v2093
        %v5482 = vunpack.c.l.b16 %v2094
        %v5483 = vunpack.c.l.b16 %v2095
        %v5484 = vunpack.c.l.b16 %v2096
        %v5485 = vunpack.c.l.b16 %v2097
        %v5486 = vunpack.c.l.b16 %v2098
        %v5487 = vunpack.c.l.b16 %v2099
        %v5488 = vunpack.c.l.b16 %v2100
        %v5489 = vunpack.c.l.b16 %v2101
        %v5490 = vunpack.c.l.b16 %v2102
        %v5491 = vunpack.c.l.b16 %v2103
        %v5492 = vunpack.c.l.b16 %v2104
        %v5493 = vunpack.c.l.b16 %v2105
        %v5494 = vunpack.c.l.b16 %v2106
        %v5495 = vunpack.c.l.b16 %v2107
        %v5496 = vunpack.c.l.b16 %v2108
        %v5497 = vunpack.c.l.b16 %v2109
        %v5498 = vunpack.c.l.b16 %v2110
        %v5499 = vunpack.c.l.b16 %v2111
        %v5500 = vpack.c.b16 %v5469, %v5468
        %v5501 = vpack.c.b16 %v5471, %v5470
        %v5502 = vpack.c.b16 %v5473, %v5472
        %v5503 = vpack.c.b16 %v5475, %v5474
        %v5504 = vpack.c.b16 %v5477, %v5476
        %v5505 = vpack.c.b16 %v5479, %v5478
        %v5506 = vpack.c.b16 %v5481, %v5480
        %v5507 = vpack.c.b16 %v5483, %v5482
        %v5508 = vpack.c.b16 %v5485, %v5484
        %v5509 = vpack.c.b16 %v5487, %v5486
        %v5510 = vpack.c.b16 %v5489, %v5488
        %v5511 = vpack.c.b16 %v5491, %v5490
        %v5512 = vpack.c.b16 %v5493, %v5492
        %v5513 = vpack.c.b16 %v5495, %v5494
        %v5514 = vpack.c.b16 %v5497, %v5496
        %v5515 = vpack.c.b16 %v5499, %v5498
        %v5548 = vunpack.c.l.b16 %v3188
        %v5549 = vunpack.c.l.b16 %v3189
        %v5550 = vunpack.c.l.b16 %v3190
        %v5551 = vunpack.c.l.b16 %v3191
        %v5552 = vunpack.c.l.b16 %v3192
        %v5553 = vunpack.c.l.b16 %v3193
        %v5554 = vunpack.c.l.b16 %v3194
        %v5555 = vunpack.c.l.b16 %v3195
        %v5556 = vunpack.c.l.b16 %v3196
        %v5557 = vunpack.c.l.b16 %v3197
        %v5558 = vunpack.c.l.b16 %v3198
        %v5559 = vunpack.c.l.b16 %v3199
        %v5560 = vunpack.c.l.b16 %v3200
        %v5561 = vunpack.c.l.b16 %v3201
        %v5562 = vunpack.c.l.b16 %v3202
        %v5563 = vunpack.c.l.b16 %v3203
        %v5564 = vunpack.c.l.b16 %v3204
        %v5565 = vunpack.c.l.b16 %v3205
        %v5566 = vunpack.c.l.b16 %v3206
        %v5567 = vunpack.c.l.b16 %v3207
        %v5568 = vunpack.c.l.b16 %v3208
        %v5569 = vunpack.c.l.b16 %v3209
        %v5570 = vunpack.c.l.b16 %v3210
        %v5571 = vunpack.c.l.b16 %v3211
        %v5572 = vunpack.c.l.b16 %v3212
        %v5573 = vunpack.c.l.b16 %v3213
        %v5574 = vunpack.c.l.b16 %v3214
        %v5575 = vunpack.c.l.b16 %v3215
        %v5576 = vunpack.c.l.b16 %v3216
        %v5577 = vunpack.c.l.b16 %v3217
        %v5578 = vunpack.c.l.b16 %v3218
        %v5579 = vunpack.c.l.b16 %v3219
        %v5580 = vpack.c.b16 %v5549, %v5548
        %v5581 = vpack.c.b16 %v5551, %v5550
        %v5582 = vpack.c.b16 %v5553, %v5552
        %v5583 = vpack.c.b16 %v5555, %v5554
        %v5584 = vpack.c.b16 %v5557, %v5556
        %v5585 = vpack.c.b16 %v5559, %v5558
        %v5586 = vpack.c.b16 %v5561, %v5560
        %v5587 = vpack.c.b16 %v5563, %v5562
        %v5588 = vpack.c.b16 %v5565, %v5564
        %v5589 = vpack.c.b16 %v5567, %v5566
        %v5590 = vpack.c.b16 %v5569, %v5568
        %v5591 = vpack.c.b16 %v5571, %v5570
        %v5592 = vpack.c.b16 %v5573, %v5572
        %v5593 = vpack.c.b16 %v5575, %v5574
        %v5594 = vpack.c.b16 %v5577, %v5576
        %v5595 = vpack.c.b16 %v5579, %v5578
        %5596 = vrot.lane.b32.xlu0 %v5580, 32
        %v5597 = vpop.permute.xlu0 %5596
        %5598 = vrot.lane.b32.xlu0 %v5581, 32
        %v5599 = vpop.permute.xlu0 %5598
        %5600 = vrot.lane.b32.xlu0 %v5582, 32
        %v5601 = vpop.permute.xlu0 %5600
        %5602 = vrot.lane.b32.xlu0 %v5583, 32
        %v5603 = vpop.permute.xlu0 %5602
        %5604 = vrot.lane.b32.xlu0 %v5584, 32
        %v5605 = vpop.permute.xlu0 %5604
        %5606 = vrot.lane.b32.xlu0 %v5585, 32
        %v5607 = vpop.permute.xlu0 %5606
        %5608 = vrot.lane.b32.xlu0 %v5586, 32
        %v5609 = vpop.permute.xlu0 %5608
        %5610 = vrot.lane.b32.xlu0 %v5587, 32
        %v5611 = vpop.permute.xlu0 %5610
        %5612 = vrot.lane.b32.xlu0 %v5588, 32
        %v5613 = vpop.permute.xlu0 %5612
        %5614 = vrot.lane.b32.xlu0 %v5589, 32
        %v5615 = vpop.permute.xlu0 %5614
        %5616 = vrot.lane.b32.xlu0 %v5590, 32
        %v5617 = vpop.permute.xlu0 %5616
        %5618 = vrot.lane.b32.xlu0 %v5591, 32
        %v5619 = vpop.permute.xlu0 %5618
        %5620 = vrot.lane.b32.xlu0 %v5592, 32
        %v5621 = vpop.permute.xlu0 %5620
        %5622 = vrot.lane.b32.xlu0 %v5593, 32
        %v5623 = vpop.permute.xlu0 %5622
        %5624 = vrot.lane.b32.xlu0 %v5594, 32
        %v5625 = vpop.permute.xlu0 %5624
        %5626 = vrot.lane.b32.xlu0 %v5595, 32
        %v5627 = vpop.permute.xlu0 %5626
        %v5660 = vunpack.c.l.b16 %v4296
        %v5661 = vunpack.c.l.b16 %v4297
        %v5662 = vunpack.c.l.b16 %v4298
        %v5663 = vunpack.c.l.b16 %v4299
        %v5664 = vunpack.c.l.b16 %v4300
        %v5665 = vunpack.c.l.b16 %v4301
        %v5666 = vunpack.c.l.b16 %v4302
        %v5667 = vunpack.c.l.b16 %v4303
        %v5668 = vunpack.c.l.b16 %v4304
        %v5669 = vunpack.c.l.b16 %v4305
        %v5670 = vunpack.c.l.b16 %v4306
        %v5671 = vunpack.c.l.b16 %v4307
        %v5672 = vunpack.c.l.b16 %v4308
        %v5673 = vunpack.c.l.b16 %v4309
        %v5674 = vunpack.c.l.b16 %v4310
        %v5675 = vunpack.c.l.b16 %v4311
        %v5676 = vunpack.c.l.b16 %v4312
        %v5677 = vunpack.c.l.b16 %v4313
        %v5678 = vunpack.c.l.b16 %v4314
        %v5679 = vunpack.c.l.b16 %v4315
        %v5680 = vunpack.c.l.b16 %v4316
        %v5681 = vunpack.c.l.b16 %v4317
        %v5682 = vunpack.c.l.b16 %v4318
        %v5683 = vunpack.c.l.b16 %v4319
        %v5684 = vunpack.c.l.b16 %v4320
        %v5685 = vunpack.c.l.b16 %v4321
        %v5686 = vunpack.c.l.b16 %v4322
        %v5687 = vunpack.c.l.b16 %v4323
        %v5688 = vunpack.c.l.b16 %v4324
        %v5689 = vunpack.c.l.b16 %v4325
        %v5690 = vunpack.c.l.b16 %v4326
        %v5691 = vunpack.c.l.b16 %v4327
        %v5692 = vpack.c.b16 %v5661, %v5660
        %v5693 = vpack.c.b16 %v5663, %v5662
        %v5694 = vpack.c.b16 %v5665, %v5664
        %v5695 = vpack.c.b16 %v5667, %v5666
        %v5696 = vpack.c.b16 %v5669, %v5668
        %v5697 = vpack.c.b16 %v5671, %v5670
        %v5698 = vpack.c.b16 %v5673, %v5672
        %v5699 = vpack.c.b16 %v5675, %v5674
        %v5700 = vpack.c.b16 %v5677, %v5676
        %v5701 = vpack.c.b16 %v5679, %v5678
        %v5702 = vpack.c.b16 %v5681, %v5680
        %v5703 = vpack.c.b16 %v5683, %v5682
        %v5704 = vpack.c.b16 %v5685, %v5684
        %v5705 = vpack.c.b16 %v5687, %v5686
        %v5706 = vpack.c.b16 %v5689, %v5688
        %v5707 = vpack.c.b16 %v5691, %v5690
        %5708 = vrot.lane.b32.xlu0 %v5692, 64
        %v5709 = vpop.permute.xlu0 %5708
        %5710 = vrot.lane.b32.xlu0 %v5693, 64
        %v5711 = vpop.permute.xlu0 %5710
        %5712 = vrot.lane.b32.xlu0 %v5694, 64
        %v5713 = vpop.permute.xlu0 %5712
        %5714 = vrot.lane.b32.xlu0 %v5695, 64
        %v5715 = vpop.permute.xlu0 %5714
        %5716 = vrot.lane.b32.xlu0 %v5696, 64
        %v5717 = vpop.permute.xlu0 %5716
        %5718 = vrot.lane.b32.xlu0 %v5697, 64
        %v5719 = vpop.permute.xlu0 %5718
        %5720 = vrot.lane.b32.xlu0 %v5698, 64
        %v5721 = vpop.permute.xlu0 %5720
        %5722 = vrot.lane.b32.xlu0 %v5699, 64
        %v5723 = vpop.permute.xlu0 %5722
        %5724 = vrot.lane.b32.xlu0 %v5700, 64
        %v5725 = vpop.permute.xlu0 %5724
        %5726 = vrot.lane.b32.xlu0 %v5701, 64
        %v5727 = vpop.permute.xlu0 %5726
        %5728 = vrot.lane.b32.xlu0 %v5702, 64
        %v5729 = vpop.permute.xlu0 %5728
        %5730 = vrot.lane.b32.xlu0 %v5703, 64
        %v5731 = vpop.permute.xlu0 %5730
        %5732 = vrot.lane.b32.xlu0 %v5704, 64
        %v5733 = vpop.permute.xlu0 %5732
        %5734 = vrot.lane.b32.xlu0 %v5705, 64
        %v5735 = vpop.permute.xlu0 %5734
        %5736 = vrot.lane.b32.xlu0 %v5706, 64
        %v5737 = vpop.permute.xlu0 %5736
        %5738 = vrot.lane.b32.xlu0 %v5707, 64
        %v5739 = vpop.permute.xlu0 %5738
        %v5772 = vunpack.c.l.b16 %v5404
        %v5773 = vunpack.c.l.b16 %v5405
        %v5774 = vunpack.c.l.b16 %v5406
        %v5775 = vunpack.c.l.b16 %v5407
        %v5776 = vunpack.c.l.b16 %v5408
        %v5777 = vunpack.c.l.b16 %v5409
        %v5778 = vunpack.c.l.b16 %v5410
        %v5779 = vunpack.c.l.b16 %v5411
        %v5780 = vunpack.c.l.b16 %v5412
        %v5781 = vunpack.c.l.b16 %v5413
        %v5782 = vunpack.c.l.b16 %v5414
        %v5783 = vunpack.c.l.b16 %v5415
        %v5784 = vunpack.c.l.b16 %v5416
        %v5785 = vunpack.c.l.b16 %v5417
        %v5786 = vunpack.c.l.b16 %v5418
        %v5787 = vunpack.c.l.b16 %v5419
        %v5788 = vunpack.c.l.b16 %v5420
        %v5789 = vunpack.c.l.b16 %v5421
        %v5790 = vunpack.c.l.b16 %v5422
        %v5791 = vunpack.c.l.b16 %v5423
        %v5792 = vunpack.c.l.b16 %v5424
        %v5793 = vunpack.c.l.b16 %v5425
        %v5794 = vunpack.c.l.b16 %v5426
        %v5795 = vunpack.c.l.b16 %v5427
        %v5796 = vunpack.c.l.b16 %v5428
        %v5797 = vunpack.c.l.b16 %v5429
        %v5798 = vunpack.c.l.b16 %v5430
        %v5799 = vunpack.c.l.b16 %v5431
        %v5800 = vunpack.c.l.b16 %v5432
        %v5801 = vunpack.c.l.b16 %v5433
        %v5802 = vunpack.c.l.b16 %v5434
        %v5803 = vunpack.c.l.b16 %v5435
        %v5804 = vpack.c.b16 %v5773, %v5772
        %v5805 = vpack.c.b16 %v5775, %v5774
        %v5806 = vpack.c.b16 %v5777, %v5776
        %v5807 = vpack.c.b16 %v5779, %v5778
        %v5808 = vpack.c.b16 %v5781, %v5780
        %v5809 = vpack.c.b16 %v5783, %v5782
        %v5810 = vpack.c.b16 %v5785, %v5784
        %v5811 = vpack.c.b16 %v5787, %v5786
        %v5812 = vpack.c.b16 %v5789, %v5788
        %v5813 = vpack.c.b16 %v5791, %v5790
        %v5814 = vpack.c.b16 %v5793, %v5792
        %v5815 = vpack.c.b16 %v5795, %v5794
        %v5816 = vpack.c.b16 %v5797, %v5796
        %v5817 = vpack.c.b16 %v5799, %v5798
        %v5818 = vpack.c.b16 %v5801, %v5800
        %v5819 = vpack.c.b16 %v5803, %v5802
        %5820 = vrot.lane.b32.xlu0 %v5804, 96
        %v5821 = vpop.permute.xlu0 %5820
        %5822 = vrot.lane.b32.xlu0 %v5805, 96
        %v5823 = vpop.permute.xlu0 %5822
        %5824 = vrot.lane.b32.xlu0 %v5806, 96
        %v5825 = vpop.permute.xlu0 %5824
        %5826 = vrot.lane.b32.xlu0 %v5807, 96
        %v5827 = vpop.permute.xlu0 %5826
        %5828 = vrot.lane.b32.xlu0 %v5808, 96
        %v5829 = vpop.permute.xlu0 %5828
        %5830 = vrot.lane.b32.xlu0 %v5809, 96
        %v5831 = vpop.permute.xlu0 %5830
        %5832 = vrot.lane.b32.xlu0 %v5810, 96
        %v5833 = vpop.permute.xlu0 %5832
        %5834 = vrot.lane.b32.xlu0 %v5811, 96
        %v5835 = vpop.permute.xlu0 %5834
        %5836 = vrot.lane.b32.xlu0 %v5812, 96
        %v5837 = vpop.permute.xlu0 %5836
        %5838 = vrot.lane.b32.xlu0 %v5813, 96
        %v5839 = vpop.permute.xlu0 %5838
        %5840 = vrot.lane.b32.xlu0 %v5814, 96
        %v5841 = vpop.permute.xlu0 %5840
        %5842 = vrot.lane.b32.xlu0 %v5815, 96
        %v5843 = vpop.permute.xlu0 %5842
        %5844 = vrot.lane.b32.xlu0 %v5816, 96
        %v5845 = vpop.permute.xlu0 %5844
        %5846 = vrot.lane.b32.xlu0 %v5817, 96
        %v5847 = vpop.permute.xlu0 %5846
        %5848 = vrot.lane.b32.xlu0 %v5818, 96
        %v5849 = vpop.permute.xlu0 %5848
        %5850 = vrot.lane.b32.xlu0 %v5819, 96
        %v5851 = vpop.permute.xlu0 %5850
        %v5854 = vsel %vm1019, %v5500, %v5597
        %v5857 = vsel %vm1019, %v5501, %v5599
        %v5860 = vsel %vm1019, %v5502, %v5601
        %v5863 = vsel %vm1019, %v5503, %v5603
        %v5866 = vsel %vm1019, %v5504, %v5605
        %v5869 = vsel %vm1019, %v5505, %v5607
        %v5872 = vsel %vm1019, %v5506, %v5609
        %v5875 = vsel %vm1019, %v5507, %v5611
        %v5878 = vsel %vm1019, %v5508, %v5613
        %v5881 = vsel %vm1019, %v5509, %v5615
        %v5884 = vsel %vm1019, %v5510, %v5617
        %v5887 = vsel %vm1019, %v5511, %v5619
        %v5890 = vsel %vm1019, %v5512, %v5621
        %v5893 = vsel %vm1019, %v5513, %v5623
        %v5896 = vsel %vm1019, %v5514, %v5625
        %v5899 = vsel %vm1019, %v5515, %v5627
        %vm5900 = vcmask 523264
        %v5902 = vsel %vm5900, %v5854, %v5709
        %v5904 = vsel %vm5900, %v5857, %v5711
        %v5906 = vsel %vm5900, %v5860, %v5713
        %v5908 = vsel %vm5900, %v5863, %v5715
        %v5910 = vsel %vm5900, %v5866, %v5717
        %v5912 = vsel %vm5900, %v5869, %v5719
        %v5914 = vsel %vm5900, %v5872, %v5721
        %v5916 = vsel %vm5900, %v5875, %v5723
        %v5918 = vsel %vm5900, %v5878, %v5725
        %v5920 = vsel %vm5900, %v5881, %v5727
        %v5922 = vsel %vm5900, %v5884, %v5729
        %v5924 = vsel %vm5900, %v5887, %v5731
        %v5926 = vsel %vm5900, %v5890, %v5733
        %v5928 = vsel %vm5900, %v5893, %v5735
        %v5930 = vsel %vm5900, %v5896, %v5737
        %v5932 = vsel %vm5900, %v5899, %v5739
        %vm5933 = vcmask 785408
        %v5935 = vsel %vm5933, %v5902, %v5821
        %v5938 = vsel %vm5933, %v5904, %v5823
        %v5941 = vsel %vm5933, %v5906, %v5825
        %v5944 = vsel %vm5933, %v5908, %v5827
        %v5947 = vsel %vm5933, %v5910, %v5829
        %v5950 = vsel %vm5933, %v5912, %v5831
        %v5953 = vsel %vm5933, %v5914, %v5833
        %v5956 = vsel %vm5933, %v5916, %v5835
        %v5959 = vsel %vm5933, %v5918, %v5837
        %v5962 = vsel %vm5933, %v5920, %v5839
        %v5965 = vsel %vm5933, %v5922, %v5841
        %v5968 = vsel %vm5933, %v5924, %v5843
        %v5971 = vsel %vm5933, %v5926, %v5845
        %v5974 = vsel %vm5933, %v5928, %v5847
        %v5977 = vsel %vm5933, %v5930, %v5849
        %v5980 = vsel %vm5933, %v5932, %v5851
        %v5982 = vld [vmem:[%s3] sm:$0xf]
        %v5983 = vld [vmem:[%s3 + $0x4] sm:$0xf]
        %v5984 = vld [vmem:[%s3 + $0x8] sm:$0xf]
        %v5985 = vld [vmem:[%s3 + $0xc] sm:$0xf]
        %v5986 = vld [vmem:[%s3 + $0x10] sm:$0xf]
        %v5987 = vld [vmem:[%s3 + $0x14] sm:$0xf]
        %v5988 = vld [vmem:[%s3 + $0x18] sm:$0xf]
        %v5989 = vld [vmem:[%s3 + $0x1c] sm:$0xf]
        %v5990 = vld [vmem:[%s3 + $0x20] sm:$0xf]
        %v5991 = vld [vmem:[%s3 + $0x24] sm:$0xf]
        %v5992 = vld [vmem:[%s3 + $0x28] sm:$0xf]
        %v5993 = vld [vmem:[%s3 + $0x2c] sm:$0xf]
        %v5994 = vld [vmem:[%s3 + $0x30] sm:$0xf]
        %v5995 = vld [vmem:[%s3 + $0x34] sm:$0xf]
        %v5996 = vld [vmem:[%s3 + $0x38] sm:$0xf]
        %v5997 = vld [vmem:[%s3 + $0x3c] sm:$0xf]
        %v6014 = vunpack.c.l.b16 %v5982
        %v6015 = vunpack.c.l.b16 %v5983
        %v6016 = vunpack.c.l.b16 %v5984
        %v6017 = vunpack.c.l.b16 %v5985
        %v6018 = vunpack.c.l.b16 %v5986
        %v6019 = vunpack.c.l.b16 %v5987
        %v6020 = vunpack.c.l.b16 %v5988
        %v6021 = vunpack.c.l.b16 %v5989
        %v6022 = vunpack.c.l.b16 %v5990
        %v6023 = vunpack.c.l.b16 %v5991
        %v6024 = vunpack.c.l.b16 %v5992
        %v6025 = vunpack.c.l.b16 %v5993
        %v6026 = vunpack.c.l.b16 %v5994
        %v6027 = vunpack.c.l.b16 %v5995
        %v6028 = vunpack.c.l.b16 %v5996
        %v6029 = vunpack.c.l.b16 %v5997
        %v6030 = vpack.c.b16 %v6015, %v6014
        %v6031 = vpack.c.b16 %v6017, %v6016
        %v6032 = vpack.c.b16 %v6019, %v6018
        %v6033 = vpack.c.b16 %v6021, %v6020
        %v6034 = vpack.c.b16 %v6023, %v6022
        %v6035 = vpack.c.b16 %v6025, %v6024
        %v6036 = vpack.c.b16 %v6027, %v6026
        %v6037 = vpack.c.b16 %v6029, %v6028
        %6046 = vmatpush.bf16.msra.mxu0 %v6037
        %6047 = vmatpush.bf16.msra.mxu0 %v6036
        %6048 = vmatpush.bf16.msra.mxu0 %v6035
        %6049 = vmatpush.bf16.msra.mxu0 %v6034
        %6050 = vmatpush.bf16.msra.mxu0 %v6033
        %6051 = vmatpush.bf16.msra.mxu0 %v6032
        %6052 = vmatpush.bf16.msra.mxu0 %v6031
        %6053 = vmatpush.bf16.msra.mxu0 %v6030
        %6054 = vmatmul.bf16.gmra.mxu0 %v5935
        %v6055 = vpop.f32.mrf.mxu0
        %v6056 = vadd.f32 0.0, %v6055
        %v6057 = vpop.f32.mrf.mxu0
        %v6058 = vadd.f32 0.0, %v6057
        %6059 = vmatmul.bf16.gmra.mxu0 %v5938
        %v6060 = vpop.f32.mrf.mxu0
        %v6061 = vadd.f32 0.0, %v6060
        %v6062 = vpop.f32.mrf.mxu0
        %v6063 = vadd.f32 0.0, %v6062
        %6064 = vmatmul.bf16.gmra.mxu0 %v5941
        %v6065 = vpop.f32.mrf.mxu0
        %v6066 = vadd.f32 0.0, %v6065
        %v6067 = vpop.f32.mrf.mxu0
        %v6068 = vadd.f32 0.0, %v6067
        %6069 = vmatmul.bf16.gmra.mxu0 %v5944
        %v6070 = vpop.f32.mrf.mxu0
        %v6071 = vadd.f32 0.0, %v6070
        %v6072 = vpop.f32.mrf.mxu0
        %v6073 = vadd.f32 0.0, %v6072
        %6074 = vmatmul.bf16.gmra.mxu0 %v5947
        %v6075 = vpop.f32.mrf.mxu0
        %v6076 = vadd.f32 0.0, %v6075
        %v6077 = vpop.f32.mrf.mxu0
        %v6078 = vadd.f32 0.0, %v6077
        %6079 = vmatmul.bf16.gmra.mxu0 %v5950
        %v6080 = vpop.f32.mrf.mxu0
        %v6081 = vadd.f32 0.0, %v6080
        %v6082 = vpop.f32.mrf.mxu0
        %v6083 = vadd.f32 0.0, %v6082
        %6084 = vmatmul.bf16.gmra.mxu0 %v5953
        %v6085 = vpop.f32.mrf.mxu0
        %v6086 = vadd.f32 0.0, %v6085
        %v6087 = vpop.f32.mrf.mxu0
        %v6088 = vadd.f32 0.0, %v6087
        %6089 = vmatmul.bf16.gmra.mxu0 %v5956
        %v6090 = vpop.f32.mrf.mxu0
        %v6091 = vadd.f32 0.0, %v6090
        %v6092 = vpop.f32.mrf.mxu0
        %v6093 = vadd.f32 0.0, %v6092
        %6094 = vmatmul.bf16.gmra.mxu0 %v5959
        %v6095 = vpop.f32.mrf.mxu0
        %v6096 = vadd.f32 0.0, %v6095
        %v6097 = vpop.f32.mrf.mxu0
        %v6098 = vadd.f32 0.0, %v6097
        %6099 = vmatmul.bf16.gmra.mxu0 %v5962
        %v6100 = vpop.f32.mrf.mxu0
        %v6101 = vadd.f32 0.0, %v6100
        %v6102 = vpop.f32.mrf.mxu0
        %v6103 = vadd.f32 0.0, %v6102
        %6104 = vmatmul.bf16.gmra.mxu0 %v5965
        %v6105 = vpop.f32.mrf.mxu0
        %v6106 = vadd.f32 0.0, %v6105
        %v6107 = vpop.f32.mrf.mxu0
        %v6108 = vadd.f32 0.0, %v6107
        %6109 = vmatmul.bf16.gmra.mxu0 %v5968
        %v6110 = vpop.f32.mrf.mxu0
        %v6111 = vadd.f32 0.0, %v6110
        %v6112 = vpop.f32.mrf.mxu0
        %v6113 = vadd.f32 0.0, %v6112
        %6114 = vmatmul.bf16.gmra.mxu0 %v5971
        %v6115 = vpop.f32.mrf.mxu0
        %v6116 = vadd.f32 0.0, %v6115
        %v6117 = vpop.f32.mrf.mxu0
        %v6118 = vadd.f32 0.0, %v6117
        %6119 = vmatmul.bf16.gmra.mxu0 %v5974
        %v6120 = vpop.f32.mrf.mxu0
        %v6121 = vadd.f32 0.0, %v6120
        %v6122 = vpop.f32.mrf.mxu0
        %v6123 = vadd.f32 0.0, %v6122
        %6124 = vmatmul.bf16.gmra.mxu0 %v5977
        %v6125 = vpop.f32.mrf.mxu0
        %v6126 = vadd.f32 0.0, %v6125
        %v6127 = vpop.f32.mrf.mxu0
        %v6128 = vadd.f32 0.0, %v6127
        %6129 = vmatmul.bf16.gmra.mxu0 %v5980
        %v6130 = vpop.f32.mrf.mxu0
        %v6131 = vadd.f32 0.0, %v6130
        %v6132 = vpop.f32.mrf.mxu0
        %v6133 = vadd.f32 0.0, %v6132
        %6134 = vdwg.mxu0
        %6135 = vst [vmem:[%s760] sm:$0xff] %v6056
        %6136 = vst [vmem:[%s760 + $0x8] sm:$0xff] %v6058
        %6137 = vst [vmem:[%s760 + $0x10] sm:$0xff] %v6061
        %6138 = vst [vmem:[%s760 + $0x18] sm:$0xff] %v6063
        %6139 = vst [vmem:[%s760 + $0x20] sm:$0xff] %v6066
        %6140 = vst [vmem:[%s760 + $0x28] sm:$0xff] %v6068
        %6141 = vst [vmem:[%s760 + $0x30] sm:$0xff] %v6071
        %6142 = vst [vmem:[%s760 + $0x38] sm:$0xff] %v6073
        %6143 = vst [vmem:[%s760 + $0x40] sm:$0xff] %v6076
        %6144 = vst [vmem:[%s760 + $0x48] sm:$0xff] %v6078
        %6145 = vst [vmem:[%s760 + $0x50] sm:$0xff] %v6081
        %6146 = vst [vmem:[%s760 + $0x58] sm:$0xff] %v6083
        %6147 = vst [vmem:[%s760 + $0x60] sm:$0xff] %v6086
        %6148 = vst [vmem:[%s760 + $0x68] sm:$0xff] %v6088
        %6149 = vst [vmem:[%s760 + $0x70] sm:$0xff] %v6091
        %6150 = vst [vmem:[%s760 + $0x78] sm:$0xff] %v6093
        %6151 = vst [vmem:[%s760 + $0x80] sm:$0xff] %v6096
        %6152 = vst [vmem:[%s760 + $0x88] sm:$0xff] %v6098
        %6153 = vst [vmem:[%s760 + $0x90] sm:$0xff] %v6101
        %6154 = vst [vmem:[%s760 + $0x98] sm:$0xff] %v6103
        %6155 = vst [vmem:[%s760 + $0xa0] sm:$0xff] %v6106
        %6156 = vst [vmem:[%s760 + $0xa8] sm:$0xff] %v6108
        %6157 = vst [vmem:[%s760 + $0xb0] sm:$0xff] %v6111
        %6158 = vst [vmem:[%s760 + $0xb8] sm:$0xff] %v6113
        %6159 = vst [vmem:[%s760 + $0xc0] sm:$0xff] %v6116
        %6160 = vst [vmem:[%s760 + $0xc8] sm:$0xff] %v6118
        %6161 = vst [vmem:[%s760 + $0xd0] sm:$0xff] %v6121
        %6162 = vst [vmem:[%s760 + $0xd8] sm:$0xff] %v6123
        %6163 = vst [vmem:[%s760 + $0xe0] sm:$0xff] %v6126
        %6164 = vst [vmem:[%s760 + $0xe8] sm:$0xff] %v6128
        %6165 = vst [vmem:[%s760 + $0xf0] sm:$0xff] %v6131
        %6166 = vst [vmem:[%s760 + $0xf8] sm:$0xff] %v6133
        %s6167 = sand.u32 %s141, 1
        %s6168 = scalar_lea.sflag [#allocation6], %s6167
        %s6169 = sand.u32 %s141, 1
        %s6170 = smul.addr %s6169, 256
        %s6171 = scalar_lea.vmem [#allocation5], %s6170
        // Predicated region
        $region160: #{attention_forward.3} parent=146 // pred_check
          %p6172 = pneg %p151
        $region161: #{attention_forward.3} parent=146 // pred_check_branch
          %6174 = sbr.rel (%p6172) target = $region163
        $region162: #{attention_forward.3} parent=146 // pred_region
          %s6175 = smul.u32 32, %s23
          %6177 = vsyncadd %s6168, 0
          %s6178 = smul.addr %s22, 32
          %s6179 = sadd.s32 %s6175, %s6178
          %s6180 = smul.addr %s6179, 8
          %s6181 = scalar_lea.hbm %s4, %s6180
          %s6182 = sshll.u32 %s6171, 4
          %s6183 = int_to_ptr.vmem [resolvable:$true] %s6182
          %s6184 = sshll.u32 %s6181, 4
          %s6185 = int_to_ptr.hbm [resolvable:$true] %s6184
          %6190 = dma.vmem_to_hbm [thread:$0]  %s6183, 4096, %s6185, %s6168, 128, 128, 8
        $region163: #{attention_forward.3} parent=146 // pred_fallthru
          _
      $region147: #{attention_forward.3} parent=5 // pred_fallthru
        _
      %p6191 = scmp.le.s32.totalorder 2, %s13
      // Predicated region
      $region164: #{attention_forward.3} parent=5 // pred_check
        %p6192 = pneg %p6191
      $region165: #{attention_forward.3} parent=5 // pred_check_branch
        %6194 = sbr.rel (%p6192) target = $region167
      $region166: #{attention_forward.3} parent=5 // pred_region
        %s6195 = ssub.s32 %s13, 2
        // Predicated region
        $region168: #{attention_forward.3} parent=166 // pred_check
          %p6196 = pneg %p157
        $region169: #{attention_forward.3} parent=166 // pred_check_branch
          %6198 = sbr.rel (%p6196) target = $region171
        $region170: #{attention_forward.3} parent=166 // pred_region
          %s6199 = sand.u32 %s142, 1
          %s6200 = scalar_lea.sflag [#allocation6], %s6199
          %s6201 = sand.u32 %s142, 1
          %s6202 = smul.addr %s6201, 256
          %s6203 = scalar_lea.vmem [#allocation5], %s6202
          %6205 = dma.done %s6200, 4096
        $region171: #{attention_forward.3} parent=166 // pred_fallthru
          _
      $region167: #{attention_forward.3} parent=5 // pred_fallthru
        _
    $region6: #{attention_forward.3} parent=1 // loop_footer
      %s17 = sadd.s32 1, %s13
    $region7: #{attention_forward.3} parent=1 // loop_footer_branch
      %12 = sbr.rel target = $region3
    $region8: #{attention_forward.3} parent=1 // loop_exit
      _
    %6206 = vsyncpa [#allocation6], 1
    %s6207 = scalar_lea.sflag [#allocation6], 1
    %6208 = vsyncpa %s6207, 1

</llo_original>
